<compile_context>
chip_gen: v6e
topology: v6e:2x2x1
jax: 0.10.0
libtpu: 0.0.40
codegen_flags: <defaults>
</compile_context>

<pallas_src>
import jax
import jax.numpy as jnp
from jax.experimental import pallas as pl
from jax.experimental.pallas import tpu as pltpu

BN_EPS = 1e-5
HIDDEN = 512
OUT_FEATURES = 784
OUT_PADDED = 896          # 7 * 128 lanes -> unmasked vst on the output
N_LAYERS = 8
N_STREAMED = 6            # layers 2..7 share the (512, 512) shape -> streamed


def _full_spec(shape):
    """Whole-array VMEM block (single grid step, no tiling needed)."""
    return pl.BlockSpec(shape, lambda: (0,) * len(shape))


# ------------------------------ fused kernel ------------------------------- #

def _gen_fused_kernel(z_ref, w1_ref, wmid_hbm, w8_ref, b8_ref,
                      gamma_ref, beta_ref, o_ref, wbuf, sem):
    """(Linear -> BN -> ReLU) x 7  ->  Linear -> Sigmoid, in one kernel."""

    def stream_start(i, slot):
        pltpu.make_async_copy(wmid_hbm.at[i], wbuf.at[slot], sem.at[slot]).start()

    def stream_wait(i, slot):
        pltpu.make_async_copy(wmid_hbm.at[i], wbuf.at[slot], sem.at[slot]).wait()

    def bn_relu(y, layer):
        # BatchNorm1d (training mode): batch mean, biased variance, eps=1e-5.
        mean = jnp.mean(y, axis=0, keepdims=True)
        centered = y - mean
        var = jnp.mean(centered * centered, axis=0, keepdims=True)
        scale = gamma_ref[layer] * jax.lax.rsqrt(var + BN_EPS)     # (1, H)
        return jnp.maximum(centered * scale + beta_ref[layer], 0.0)

    # Prefetch layer-2 weights while the MXU works on layer 1.
    stream_start(0, 0)

    # Layer 1: Linear(d, 512) [bias dropped: cancelled by BN] -> BN -> ReLU.
    x = bn_relu(
        jnp.dot(z_ref[...].astype(jnp.bfloat16), w1_ref[...],
                preferred_element_type=jnp.float32),
        0)

    # Layers 2..7: double-buffered bf16 weight stream from HBM.
    for i in range(N_STREAMED):
        slot = i & 1
        stream_wait(i, slot)
        if i + 1 < N_STREAMED:
            stream_start(i + 1, 1 - slot)
        y = jnp.dot(x.astype(jnp.bfloat16), wbuf[slot],
                    preferred_element_type=jnp.float32)
        x = bn_relu(y, i + 1)

    # Layer 8: Linear(512, 784 padded to 896) + bias -> Sigmoid.
    y = jnp.dot(x.astype(jnp.bfloat16), w8_ref[...],
                preferred_element_type=jnp.float32) + b8_ref[...]
    o_ref[...] = jax.nn.sigmoid(y)


# -------------------------------- wrapper ----------------------------------- #

def generator_mnist_forward(z, params):
    B, d = z.shape
    w1, wmid, w8, b8 = params["w1"], params["wmid"], params["w8"], params["b8"]
    gamma, beta = params["gamma"], params["beta"]

    flops = 2 * B * (d * HIDDEN + N_STREAMED * HIDDEN * HIDDEN + HIDDEN * OUT_PADDED)
    transcendentals = (N_LAYERS - 1) * HIDDEN + B * OUT_PADDED
    bytes_accessed = (z.size * 4 + w1.size * 2 + wmid.size * 2 + w8.size * 2
                      + b8.size * 4 + gamma.size * 4 + beta.size * 4
                      + B * OUT_PADDED * 4)

    out_padded = pl.pallas_call(
        _gen_fused_kernel,
        out_shape=jax.ShapeDtypeStruct((B, OUT_PADDED), jnp.float32),
        in_specs=[
            _full_spec(z.shape),
            _full_spec(w1.shape),
            pl.BlockSpec(memory_space=pl.ANY),     # streamed from HBM in-kernel
            _full_spec(w8.shape),
            _full_spec(b8.shape),
            _full_spec(gamma.shape),
            _full_spec(beta.shape),
        ],
        out_specs=_full_spec((B, OUT_PADDED)),
        scratch_shapes=[
            pltpu.VMEM((2, HIDDEN, HIDDEN), jnp.bfloat16),   # weight double buffer
            pltpu.SemaphoreType.DMA((2,)),
        ],
        compiler_params=pltpu.CompilerParams(vmem_limit_bytes=32 * 1024 * 1024),
        cost_estimate=pl.CostEstimate(flops=flops,
                                      transcendentals=transcendentals,
                                      bytes_accessed=bytes_accessed),
    )(z, w1, wmid, w8, b8, gamma, beta)
    return out_padded[:, :OUT_FEATURES]


# --------------------------- parameter creation ----------------------------- #

def init_params(d, key):
    """Deterministic params matching GeneratorMNIST(d); weights stored bf16."""
    def linear_w(k, fan_in, fan_out):
        bound = 1.0 / jnp.sqrt(jnp.float32(fan_in))
        return jax.random.uniform(k, (fan_in, fan_out), jnp.float32, -bound, bound)

    keys = jax.random.split(key, 9)
    # Layer 1. Hidden-layer biases are omitted: BN subtracts the batch mean,
    # so the bias cancels exactly (zero numerical effect).
    w1 = linear_w(keys[0], d, HIDDEN).astype(jnp.bfloat16)
    # Layers 2..7 stacked (6, 512, 512) for streaming.
    wmid = jnp.stack([linear_w(keys[i], HIDDEN, HIDDEN) for i in range(1, 7)]
                     ).astype(jnp.bfloat16)
    # Layer 8: pad 784 -> 896 output lanes with zeros (sliced off outside).
    w8 = linear_w(keys[7], HIDDEN, OUT_FEATURES)
    w8 = jnp.pad(w8, ((0, 0), (0, OUT_PADDED - OUT_FEATURES))).astype(jnp.bfloat16)
    bound8 = 1.0 / jnp.sqrt(jnp.float32(HIDDEN))
    b8 = jax.random.uniform(keys[8], (1, OUT_FEATURES), jnp.float32, -bound8, bound8)
    b8 = jnp.pad(b8, ((0, 0), (0, OUT_PADDED - OUT_FEATURES)))
    # BatchNorm1d affine params (PyTorch defaults gamma=1, beta=0), stacked.
    gamma = jnp.ones((N_LAYERS - 1, HIDDEN), jnp.float32)
    beta = jnp.zeros((N_LAYERS - 1, HIDDEN), jnp.float32)
    return {"w1": w1, "wmid": wmid, "w8": w8, "b8": b8,
            "gamma": gamma, "beta": beta}


# ------------------------------ JAX reference -------------------------------- #

def reference_forward(z, params):
    """Pure-JAX reference with identical numerics (bf16 weights, f32 accum)."""
    def bn_relu(y, g, b):
        mean = jnp.mean(y, axis=0, keepdims=True)
        c = y - mean
        var = jnp.mean(c * c, axis=0, keepdims=True)
        return jnp.maximum(c * (g * jax.lax.rsqrt(var + BN_EPS)) + b, 0.0)

    x = bn_relu(jnp.dot(z.astype(jnp.bfloat16), params["w1"],
                        preferred_element_type=jnp.float32),
                params["gamma"][0], params["beta"][0])
    for i in range(N_STREAMED):
        y = jnp.dot(x.astype(jnp.bfloat16), params["wmid"][i],
                    preferred_element_type=jnp.float32)
        x = bn_relu(y, params["gamma"][i + 1], params["beta"][i + 1])
    y = jnp.dot(x.astype(jnp.bfloat16), params["w8"],
                preferred_element_type=jnp.float32) + params["b8"]
    return jax.nn.sigmoid(y)[:, :OUT_FEATURES]


# ---------------------------------- main ------------------------------------ #

if __name__ == "__main__":
    d = 32      # latent dim
    B = 8       # batch (>= 2 for training-mode BatchNorm). For MXU utilization
                # the caller should batch latents to >=128 (v5e) / >=256 (v6e/v7x).

    key = jax.random.PRNGKey(0)
    key, kz = jax.random.split(key)
    z = jax.random.normal(kz, (B, d), jnp.float32)
    params = init_params(d, key)

    out = generator_mnist_forward(z, params)
    out = jax.block_until_ready(out)

    assert out.shape == (B, OUT_FEATURES), out.shape
    assert out.dtype == jnp.float32
    assert bool(jnp.all(jnp.isfinite(out)))
    assert bool(jnp.all((out >= 0.0) & (out <= 1.0)))   # sigmoid range

    ref = reference_forward(z, params)
    max_err = float(jnp.max(jnp.abs(out - ref)))
    assert max_err < 2e-2, max_err

    print("KERNEL_OK")
</pallas_src>

<mosaic_0001>
module attributes {stable_mosaic.version = 11 : i64} {
  func.func @_gen_fused_kernel(%arg0: memref<8x32xf32, #tpu.memory_space<vmem>>, %arg1: memref<32x512xbf16, #tpu.memory_space<vmem>>, %arg2: memref<6x512x512xbf16, #tpu.memory_space<any>>, %arg3: memref<512x896xbf16, #tpu.memory_space<vmem>>, %arg4: memref<1x896xf32, #tpu.memory_space<vmem>>, %arg5: memref<7x512xf32, #tpu.memory_space<vmem>>, %arg6: memref<7x512xf32, #tpu.memory_space<vmem>>, %arg7: memref<8x896xf32, #tpu.memory_space<vmem>>, %arg8: memref<2x512x512xbf16, #tpu.memory_space<vmem>>, %arg9: memref<2x!tpu.dma_semaphore, #tpu.memory_space<semaphore_mem>>) attributes {dimension_semantics = [], scalar_prefetch = 0 : i64, scratch_operands = 2 : i64, tpu.core_type = #tpu.core_type<tc>} {
    %c0_i32 = arith.constant 0 : i32
    %c0_i32_0 = arith.constant 0 : i32
    %c0_i32_1 = arith.constant 0 : i32
    %c0_i32_2 = arith.constant 0 : i32
    %c0_i32_3 = arith.constant 0 : i32
    %0 = tpu.memref_slice %arg2[%c0_i32, %c0_i32_2, %c0_i32_3] : memref<6x512x512xbf16, #tpu.memory_space<any>> -> memref<1x512x512xbf16, #tpu.memory_space<any>>
    %1 = tpu.memref_squeeze %0 : memref<1x512x512xbf16, #tpu.memory_space<any>> -> memref<512x512xbf16, #tpu.memory_space<any>>
    %c0_i32_4 = arith.constant 0 : i32
    %c0_i32_5 = arith.constant 0 : i32
    %2 = tpu.memref_slice %arg8[%c0_i32_0, %c0_i32_4, %c0_i32_5] : memref<2x512x512xbf16, #tpu.memory_space<vmem>> -> memref<1x512x512xbf16, #tpu.memory_space<vmem>>
    %3 = tpu.memref_squeeze %2 : memref<1x512x512xbf16, #tpu.memory_space<vmem>> -> memref<512x512xbf16, #tpu.memory_space<vmem>>
    %4 = tpu.memref_slice %arg9[%c0_i32_1] : memref<2x!tpu.dma_semaphore, #tpu.memory_space<semaphore_mem>> -> memref<1x!tpu.dma_semaphore, #tpu.memory_space<semaphore_mem>>
    %5 = tpu.memref_squeeze %4 : memref<1x!tpu.dma_semaphore, #tpu.memory_space<semaphore_mem>> -> memref<!tpu.dma_semaphore, #tpu.memory_space<semaphore_mem>>
    tpu.enqueue_dma source(%1 : memref<512x512xbf16, #tpu.memory_space<any>>) target(%3 : memref<512x512xbf16, #tpu.memory_space<vmem>>) target_semaphore(%5 : memref<!tpu.dma_semaphore, #tpu.memory_space<semaphore_mem>>)
    %c0 = arith.constant 0 : index
    %c0_6 = arith.constant 0 : index
    %6 = vector.load %arg0[%c0, %c0_6] : memref<8x32xf32, #tpu.memory_space<vmem>>, vector<8x32xf32>
    %7 = arith.truncf %6 : vector<8x32xf32> to vector<8x32xbf16>
    %c0_7 = arith.constant 0 : index
    %c0_8 = arith.constant 0 : index
    %8 = vector.load %arg1[%c0_7, %c0_8] : memref<32x512xbf16, #tpu.memory_space<vmem>>, vector<32x512xbf16>
    %cst = arith.constant dense<0.000000e+00> : vector<8x512xf32>
    %9 = tpu.matmul %7, %8, %cst {dimension_numbers = #tpu.dot_dimension_numbers<[1], [0], [0], [1], [0, 0, 1, 1], [], []>} : vector<8x32xbf16>, vector<32x512xbf16>, vector<8x512xf32> -> vector<8x512xf32>
    %cst_9 = arith.constant dense<0.000000e+00> : vector<512xf32>
    %10 = vector.multi_reduction <add>, %9, %cst_9 [0] : vector<8x512xf32> to vector<512xf32>
    %11 = vector.shape_cast %10 : vector<512xf32> to vector<1x512xf32>
    %cst_10 = arith.constant 8.000000e+00 : f32
    %12 = vector.broadcast %cst_10 : f32 to vector<1x512xf32>
    %13 = arith.divf %11, %12 : vector<1x512xf32>
    %14 = vector.broadcast %13 : vector<1x512xf32> to vector<8x512xf32>
    %15 = arith.subf %9, %14 : vector<8x512xf32>
    %16 = arith.mulf %15, %15 : vector<8x512xf32>
    %cst_11 = arith.constant dense<0.000000e+00> : vector<512xf32>
    %17 = vector.multi_reduction <add>, %16, %cst_11 [0] : vector<8x512xf32> to vector<512xf32>
    %18 = vector.shape_cast %17 : vector<512xf32> to vector<1x512xf32>
    %cst_12 = arith.constant 8.000000e+00 : f32
    %19 = vector.broadcast %cst_12 : f32 to vector<1x512xf32>
    %20 = arith.divf %18, %19 : vector<1x512xf32>
    %c0_13 = arith.constant 0 : index
    %c0_14 = arith.constant 0 : index
    %21 = vector.load %arg5[%c0_13, %c0_14] : memref<7x512xf32, #tpu.memory_space<vmem>>, vector<1x512xf32>
    %22 = vector.shape_cast %21 : vector<1x512xf32> to vector<512xf32>
    %cst_15 = arith.constant 9.99999974E-6 : f32
    %23 = vector.broadcast %cst_15 : f32 to vector<1x512xf32>
    %24 = arith.addf %20, %23 : vector<1x512xf32>
    %25 = math.rsqrt %24 : vector<1x512xf32>
    %26 = vector.shape_cast %22 : vector<512xf32> to vector<1x512xf32>
    %27 = arith.mulf %26, %25 : vector<1x512xf32>
    %28 = vector.broadcast %27 : vector<1x512xf32> to vector<8x512xf32>
    %29 = arith.mulf %15, %28 : vector<8x512xf32>
    %c0_16 = arith.constant 0 : index
    %c0_17 = arith.constant 0 : index
    %30 = vector.load %arg6[%c0_16, %c0_17] : memref<7x512xf32, #tpu.memory_space<vmem>>, vector<1x512xf32>
    %31 = vector.shape_cast %30 : vector<1x512xf32> to vector<512xf32>
    %32 = vector.shape_cast %31 : vector<512xf32> to vector<1x512xf32>
    %33 = vector.broadcast %32 : vector<1x512xf32> to vector<8x512xf32>
    %34 = arith.addf %29, %33 : vector<8x512xf32>
    %cst_18 = arith.constant 0.000000e+00 : f32
    %35 = vector.broadcast %cst_18 : f32 to vector<8x512xf32>
    %36 = arith.maximumf %34, %35 : vector<8x512xf32>
    %c0_i32_19 = arith.constant 0 : i32
    %c0_i32_20 = arith.constant 0 : i32
    %c0_i32_21 = arith.constant 0 : i32
    %c0_i32_22 = arith.constant 0 : i32
    %c0_i32_23 = arith.constant 0 : i32
    %37 = tpu.memref_slice %arg2[%c0_i32_19, %c0_i32_22, %c0_i32_23] : memref<6x512x512xbf16, #tpu.memory_space<any>> -> memref<1x512x512xbf16, #tpu.memory_space<any>>
    %38 = tpu.memref_squeeze %37 : memref<1x512x512xbf16, #tpu.memory_space<any>> -> memref<512x512xbf16, #tpu.memory_space<any>>
    %c0_i32_24 = arith.constant 0 : i32
    %c0_i32_25 = arith.constant 0 : i32
    %39 = tpu.memref_slice %arg8[%c0_i32_20, %c0_i32_24, %c0_i32_25] : memref<2x512x512xbf16, #tpu.memory_space<vmem>> -> memref<1x512x512xbf16, #tpu.memory_space<vmem>>
    %40 = tpu.memref_squeeze %39 : memref<1x512x512xbf16, #tpu.memory_space<vmem>> -> memref<512x512xbf16, #tpu.memory_space<vmem>>
    %41 = tpu.memref_slice %arg9[%c0_i32_21] : memref<2x!tpu.dma_semaphore, #tpu.memory_space<semaphore_mem>> -> memref<1x!tpu.dma_semaphore, #tpu.memory_space<semaphore_mem>>
    %42 = tpu.memref_squeeze %41 : memref<1x!tpu.dma_semaphore, #tpu.memory_space<semaphore_mem>> -> memref<!tpu.dma_semaphore, #tpu.memory_space<semaphore_mem>>
    tpu.wait_dma2 semaphore(%42 : memref<!tpu.dma_semaphore, #tpu.memory_space<semaphore_mem>>) src(%38 : memref<512x512xbf16, #tpu.memory_space<any>>) dst(%40 : memref<512x512xbf16, #tpu.memory_space<vmem>>)
    %c1_i32 = arith.constant 1 : i32
    %c1_i32_26 = arith.constant 1 : i32
    %c1_i32_27 = arith.constant 1 : i32
    %c0_i32_28 = arith.constant 0 : i32
    %c0_i32_29 = arith.constant 0 : i32
    %43 = tpu.memref_slice %arg2[%c1_i32, %c0_i32_28, %c0_i32_29] : memref<6x512x512xbf16, #tpu.memory_space<any>> -> memref<1x512x512xbf16, #tpu.memory_space<any>>
    %44 = tpu.memref_squeeze %43 : memref<1x512x512xbf16, #tpu.memory_space<any>> -> memref<512x512xbf16, #tpu.memory_space<any>>
    %c0_i32_30 = arith.constant 0 : i32
    %c0_i32_31 = arith.constant 0 : i32
    %45 = tpu.memref_slice %arg8[%c1_i32_26, %c0_i32_30, %c0_i32_31] : memref<2x512x512xbf16, #tpu.memory_space<vmem>> -> memref<1x512x512xbf16, #tpu.memory_space<vmem>>
    %46 = tpu.memref_squeeze %45 : memref<1x512x512xbf16, #tpu.memory_space<vmem>> -> memref<512x512xbf16, #tpu.memory_space<vmem>>
    %47 = tpu.memref_slice %arg9[%c1_i32_27] : memref<2x!tpu.dma_semaphore, #tpu.memory_space<semaphore_mem>> -> memref<1x!tpu.dma_semaphore, #tpu.memory_space<semaphore_mem>>
    %48 = tpu.memref_squeeze %47 : memref<1x!tpu.dma_semaphore, #tpu.memory_space<semaphore_mem>> -> memref<!tpu.dma_semaphore, #tpu.memory_space<semaphore_mem>>
    tpu.enqueue_dma source(%44 : memref<512x512xbf16, #tpu.memory_space<any>>) target(%46 : memref<512x512xbf16, #tpu.memory_space<vmem>>) target_semaphore(%48 : memref<!tpu.dma_semaphore, #tpu.memory_space<semaphore_mem>>)
    %49 = arith.truncf %36 : vector<8x512xf32> to vector<8x512xbf16>
    %c0_32 = arith.constant 0 : index
    %c0_33 = arith.constant 0 : index
    %c0_34 = arith.constant 0 : index
    %50 = vector.load %arg8[%c0_32, %c0_33, %c0_34] : memref<2x512x512xbf16, #tpu.memory_space<vmem>>, vector<1x512x512xbf16>
    %51 = vector.shape_cast %50 : vector<1x512x512xbf16> to vector<512x512xbf16>
    %cst_35 = arith.constant dense<0.000000e+00> : vector<8x512xf32>
    %52 = tpu.matmul %49, %51, %cst_35 {dimension_numbers = #tpu.dot_dimension_numbers<[1], [0], [0], [1], [0, 0, 1, 1], [], []>} : vector<8x512xbf16>, vector<512x512xbf16>, vector<8x512xf32> -> vector<8x512xf32>
    %cst_36 = arith.constant dense<0.000000e+00> : vector<512xf32>
    %53 = vector.multi_reduction <add>, %52, %cst_36 [0] : vector<8x512xf32> to vector<512xf32>
    %54 = vector.shape_cast %53 : vector<512xf32> to vector<1x512xf32>
    %cst_37 = arith.constant 8.000000e+00 : f32
    %55 = vector.broadcast %cst_37 : f32 to vector<1x512xf32>
    %56 = arith.divf %54, %55 : vector<1x512xf32>
    %57 = vector.broadcast %56 : vector<1x512xf32> to vector<8x512xf32>
    %58 = arith.subf %52, %57 : vector<8x512xf32>
    %59 = arith.mulf %58, %58 : vector<8x512xf32>
    %cst_38 = arith.constant dense<0.000000e+00> : vector<512xf32>
    %60 = vector.multi_reduction <add>, %59, %cst_38 [0] : vector<8x512xf32> to vector<512xf32>
    %61 = vector.shape_cast %60 : vector<512xf32> to vector<1x512xf32>
    %cst_39 = arith.constant 8.000000e+00 : f32
    %62 = vector.broadcast %cst_39 : f32 to vector<1x512xf32>
    %63 = arith.divf %61, %62 : vector<1x512xf32>
    %c1 = arith.constant 1 : index
    %c0_40 = arith.constant 0 : index
    %64 = vector.load %arg5[%c1, %c0_40] : memref<7x512xf32, #tpu.memory_space<vmem>>, vector<1x512xf32>
    %65 = vector.shape_cast %64 : vector<1x512xf32> to vector<512xf32>
    %cst_41 = arith.constant 9.99999974E-6 : f32
    %66 = vector.broadcast %cst_41 : f32 to vector<1x512xf32>
    %67 = arith.addf %63, %66 : vector<1x512xf32>
    %68 = math.rsqrt %67 : vector<1x512xf32>
    %69 = vector.shape_cast %65 : vector<512xf32> to vector<1x512xf32>
    %70 = arith.mulf %69, %68 : vector<1x512xf32>
    %71 = vector.broadcast %70 : vector<1x512xf32> to vector<8x512xf32>
    %72 = arith.mulf %58, %71 : vector<8x512xf32>
    %c1_42 = arith.constant 1 : index
    %c0_43 = arith.constant 0 : index
    %73 = vector.load %arg6[%c1_42, %c0_43] : memref<7x512xf32, #tpu.memory_space<vmem>>, vector<1x512xf32>
    %74 = vector.shape_cast %73 : vector<1x512xf32> to vector<512xf32>
    %75 = vector.shape_cast %74 : vector<512xf32> to vector<1x512xf32>
    %76 = vector.broadcast %75 : vector<1x512xf32> to vector<8x512xf32>
    %77 = arith.addf %72, %76 : vector<8x512xf32>
    %cst_44 = arith.constant 0.000000e+00 : f32
    %78 = vector.broadcast %cst_44 : f32 to vector<8x512xf32>
    %79 = arith.maximumf %77, %78 : vector<8x512xf32>
    %c1_i32_45 = arith.constant 1 : i32
    %c1_i32_46 = arith.constant 1 : i32
    %c1_i32_47 = arith.constant 1 : i32
    %c0_i32_48 = arith.constant 0 : i32
    %c0_i32_49 = arith.constant 0 : i32
    %80 = tpu.memref_slice %arg2[%c1_i32_45, %c0_i32_48, %c0_i32_49] : memref<6x512x512xbf16, #tpu.memory_space<any>> -> memref<1x512x512xbf16, #tpu.memory_space<any>>
    %81 = tpu.memref_squeeze %80 : memref<1x512x512xbf16, #tpu.memory_space<any>> -> memref<512x512xbf16, #tpu.memory_space<any>>
    %c0_i32_50 = arith.constant 0 : i32
    %c0_i32_51 = arith.constant 0 : i32
    %82 = tpu.memref_slice %arg8[%c1_i32_46, %c0_i32_50, %c0_i32_51] : memref<2x512x512xbf16, #tpu.memory_space<vmem>> -> memref<1x512x512xbf16, #tpu.memory_space<vmem>>
    %83 = tpu.memref_squeeze %82 : memref<1x512x512xbf16, #tpu.memory_space<vmem>> -> memref<512x512xbf16, #tpu.memory_space<vmem>>
    %84 = tpu.memref_slice %arg9[%c1_i32_47] : memref<2x!tpu.dma_semaphore, #tpu.memory_space<semaphore_mem>> -> memref<1x!tpu.dma_semaphore, #tpu.memory_space<semaphore_mem>>
    %85 = tpu.memref_squeeze %84 : memref<1x!tpu.dma_semaphore, #tpu.memory_space<semaphore_mem>> -> memref<!tpu.dma_semaphore, #tpu.memory_space<semaphore_mem>>
    tpu.wait_dma2 semaphore(%85 : memref<!tpu.dma_semaphore, #tpu.memory_space<semaphore_mem>>) src(%81 : memref<512x512xbf16, #tpu.memory_space<any>>) dst(%83 : memref<512x512xbf16, #tpu.memory_space<vmem>>)
    %c2_i32 = arith.constant 2 : i32
    %c0_i32_52 = arith.constant 0 : i32
    %c0_i32_53 = arith.constant 0 : i32
    %c0_i32_54 = arith.constant 0 : i32
    %c0_i32_55 = arith.constant 0 : i32
    %86 = tpu.memref_slice %arg2[%c2_i32, %c0_i32_54, %c0_i32_55] : memref<6x512x512xbf16, #tpu.memory_space<any>> -> memref<1x512x512xbf16, #tpu.memory_space<any>>
    %87 = tpu.memref_squeeze %86 : memref<1x512x512xbf16, #tpu.memory_space<any>> -> memref<512x512xbf16, #tpu.memory_space<any>>
    %c0_i32_56 = arith.constant 0 : i32
    %c0_i32_57 = arith.constant 0 : i32
    %88 = tpu.memref_slice %arg8[%c0_i32_52, %c0_i32_56, %c0_i32_57] : memref<2x512x512xbf16, #tpu.memory_space<vmem>> -> memref<1x512x512xbf16, #tpu.memory_space<vmem>>
    %89 = tpu.memref_squeeze %88 : memref<1x512x512xbf16, #tpu.memory_space<vmem>> -> memref<512x512xbf16, #tpu.memory_space<vmem>>
    %90 = tpu.memref_slice %arg9[%c0_i32_53] : memref<2x!tpu.dma_semaphore, #tpu.memory_space<semaphore_mem>> -> memref<1x!tpu.dma_semaphore, #tpu.memory_space<semaphore_mem>>
    %91 = tpu.memref_squeeze %90 : memref<1x!tpu.dma_semaphore, #tpu.memory_space<semaphore_mem>> -> memref<!tpu.dma_semaphore, #tpu.memory_space<semaphore_mem>>
    tpu.enqueue_dma source(%87 : memref<512x512xbf16, #tpu.memory_space<any>>) target(%89 : memref<512x512xbf16, #tpu.memory_space<vmem>>) target_semaphore(%91 : memref<!tpu.dma_semaphore, #tpu.memory_space<semaphore_mem>>)
    %92 = arith.truncf %79 : vector<8x512xf32> to vector<8x512xbf16>
    %c1_58 = arith.constant 1 : index
    %c0_59 = arith.constant 0 : index
    %c0_60 = arith.constant 0 : index
    %93 = vector.load %arg8[%c1_58, %c0_59, %c0_60] : memref<2x512x512xbf16, #tpu.memory_space<vmem>>, vector<1x512x512xbf16>
    %94 = vector.shape_cast %93 : vector<1x512x512xbf16> to vector<512x512xbf16>
    %cst_61 = arith.constant dense<0.000000e+00> : vector<8x512xf32>
    %95 = tpu.matmul %92, %94, %cst_61 {dimension_numbers = #tpu.dot_dimension_numbers<[1], [0], [0], [1], [0, 0, 1, 1], [], []>} : vector<8x512xbf16>, vector<512x512xbf16>, vector<8x512xf32> -> vector<8x512xf32>
    %cst_62 = arith.constant dense<0.000000e+00> : vector<512xf32>
    %96 = vector.multi_reduction <add>, %95, %cst_62 [0] : vector<8x512xf32> to vector<512xf32>
    %97 = vector.shape_cast %96 : vector<512xf32> to vector<1x512xf32>
    %cst_63 = arith.constant 8.000000e+00 : f32
    %98 = vector.broadcast %cst_63 : f32 to vector<1x512xf32>
    %99 = arith.divf %97, %98 : vector<1x512xf32>
    %100 = vector.broadcast %99 : vector<1x512xf32> to vector<8x512xf32>
    %101 = arith.subf %95, %100 : vector<8x512xf32>
    %102 = arith.mulf %101, %101 : vector<8x512xf32>
    %cst_64 = arith.constant dense<0.000000e+00> : vector<512xf32>
    %103 = vector.multi_reduction <add>, %102, %cst_64 [0] : vector<8x512xf32> to vector<512xf32>
    %104 = vector.shape_cast %103 : vector<512xf32> to vector<1x512xf32>
    %cst_65 = arith.constant 8.000000e+00 : f32
    %105 = vector.broadcast %cst_65 : f32 to vector<1x512xf32>
    %106 = arith.divf %104, %105 : vector<1x512xf32>
    %c2 = arith.constant 2 : index
    %c0_66 = arith.constant 0 : index
    %107 = vector.load %arg5[%c2, %c0_66] : memref<7x512xf32, #tpu.memory_space<vmem>>, vector<1x512xf32>
    %108 = vector.shape_cast %107 : vector<1x512xf32> to vector<512xf32>
    %cst_67 = arith.constant 9.99999974E-6 : f32
    %109 = vector.broadcast %cst_67 : f32 to vector<1x512xf32>
    %110 = arith.addf %106, %109 : vector<1x512xf32>
    %111 = math.rsqrt %110 : vector<1x512xf32>
    %112 = vector.shape_cast %108 : vector<512xf32> to vector<1x512xf32>
    %113 = arith.mulf %112, %111 : vector<1x512xf32>
    %114 = vector.broadcast %113 : vector<1x512xf32> to vector<8x512xf32>
    %115 = arith.mulf %101, %114 : vector<8x512xf32>
    %c2_68 = arith.constant 2 : index
    %c0_69 = arith.constant 0 : index
    %116 = vector.load %arg6[%c2_68, %c0_69] : memref<7x512xf32, #tpu.memory_space<vmem>>, vector<1x512xf32>
    %117 = vector.shape_cast %116 : vector<1x512xf32> to vector<512xf32>
    %118 = vector.shape_cast %117 : vector<512xf32> to vector<1x512xf32>
    %119 = vector.broadcast %118 : vector<1x512xf32> to vector<8x512xf32>
    %120 = arith.addf %115, %119 : vector<8x512xf32>
    %cst_70 = arith.constant 0.000000e+00 : f32
    %121 = vector.broadcast %cst_70 : f32 to vector<8x512xf32>
    %122 = arith.maximumf %120, %121 : vector<8x512xf32>
    %c2_i32_71 = arith.constant 2 : i32
    %c0_i32_72 = arith.constant 0 : i32
    %c0_i32_73 = arith.constant 0 : i32
    %c0_i32_74 = arith.constant 0 : i32
    %c0_i32_75 = arith.constant 0 : i32
    %123 = tpu.memref_slice %arg2[%c2_i32_71, %c0_i32_74, %c0_i32_75] : memref<6x512x512xbf16, #tpu.memory_space<any>> -> memref<1x512x512xbf16, #tpu.memory_space<any>>
    %124 = tpu.memref_squeeze %123 : memref<1x512x512xbf16, #tpu.memory_space<any>> -> memref<512x512xbf16, #tpu.memory_space<any>>
    %c0_i32_76 = arith.constant 0 : i32
    %c0_i32_77 = arith.constant 0 : i32
    %125 = tpu.memref_slice %arg8[%c0_i32_72, %c0_i32_76, %c0_i32_77] : memref<2x512x512xbf16, #tpu.memory_space<vmem>> -> memref<1x512x512xbf16, #tpu.memory_space<vmem>>
    %126 = tpu.memref_squeeze %125 : memref<1x512x512xbf16, #tpu.memory_space<vmem>> -> memref<512x512xbf16, #tpu.memory_space<vmem>>
    %127 = tpu.memref_slice %arg9[%c0_i32_73] : memref<2x!tpu.dma_semaphore, #tpu.memory_space<semaphore_mem>> -> memref<1x!tpu.dma_semaphore, #tpu.memory_space<semaphore_mem>>
    %128 = tpu.memref_squeeze %127 : memref<1x!tpu.dma_semaphore, #tpu.memory_space<semaphore_mem>> -> memref<!tpu.dma_semaphore, #tpu.memory_space<semaphore_mem>>
    tpu.wait_dma2 semaphore(%128 : memref<!tpu.dma_semaphore, #tpu.memory_space<semaphore_mem>>) src(%124 : memref<512x512xbf16, #tpu.memory_space<any>>) dst(%126 : memref<512x512xbf16, #tpu.memory_space<vmem>>)
    %c3_i32 = arith.constant 3 : i32
    %c1_i32_78 = arith.constant 1 : i32
    %c1_i32_79 = arith.constant 1 : i32
    %c0_i32_80 = arith.constant 0 : i32
    %c0_i32_81 = arith.constant 0 : i32
    %129 = tpu.memref_slice %arg2[%c3_i32, %c0_i32_80, %c0_i32_81] : memref<6x512x512xbf16, #tpu.memory_space<any>> -> memref<1x512x512xbf16, #tpu.memory_space<any>>
    %130 = tpu.memref_squeeze %129 : memref<1x512x512xbf16, #tpu.memory_space<any>> -> memref<512x512xbf16, #tpu.memory_space<any>>
    %c0_i32_82 = arith.constant 0 : i32
    %c0_i32_83 = arith.constant 0 : i32
    %131 = tpu.memref_slice %arg8[%c1_i32_78, %c0_i32_82, %c0_i32_83] : memref<2x512x512xbf16, #tpu.memory_space<vmem>> -> memref<1x512x512xbf16, #tpu.memory_space<vmem>>
    %132 = tpu.memref_squeeze %131 : memref<1x512x512xbf16, #tpu.memory_space<vmem>> -> memref<512x512xbf16, #tpu.memory_space<vmem>>
    %133 = tpu.memref_slice %arg9[%c1_i32_79] : memref<2x!tpu.dma_semaphore, #tpu.memory_space<semaphore_mem>> -> memref<1x!tpu.dma_semaphore, #tpu.memory_space<semaphore_mem>>
    %134 = tpu.memref_squeeze %133 : memref<1x!tpu.dma_semaphore, #tpu.memory_space<semaphore_mem>> -> memref<!tpu.dma_semaphore, #tpu.memory_space<semaphore_mem>>
    tpu.enqueue_dma source(%130 : memref<512x512xbf16, #tpu.memory_space<any>>) target(%132 : memref<512x512xbf16, #tpu.memory_space<vmem>>) target_semaphore(%134 : memref<!tpu.dma_semaphore, #tpu.memory_space<semaphore_mem>>)
    %135 = arith.truncf %122 : vector<8x512xf32> to vector<8x512xbf16>
    %c0_84 = arith.constant 0 : index
    %c0_85 = arith.constant 0 : index
    %c0_86 = arith.constant 0 : index
    %136 = vector.load %arg8[%c0_84, %c0_85, %c0_86] : memref<2x512x512xbf16, #tpu.memory_space<vmem>>, vector<1x512x512xbf16>
    %137 = vector.shape_cast %136 : vector<1x512x512xbf16> to vector<512x512xbf16>
    %cst_87 = arith.constant dense<0.000000e+00> : vector<8x512xf32>
    %138 = tpu.matmul %135, %137, %cst_87 {dimension_numbers = #tpu.dot_dimension_numbers<[1], [0], [0], [1], [0, 0, 1, 1], [], []>} : vector<8x512xbf16>, vector<512x512xbf16>, vector<8x512xf32> -> vector<8x512xf32>
    %cst_88 = arith.constant dense<0.000000e+00> : vector<512xf32>
    %139 = vector.multi_reduction <add>, %138, %cst_88 [0] : vector<8x512xf32> to vector<512xf32>
    %140 = vector.shape_cast %139 : vector<512xf32> to vector<1x512xf32>
    %cst_89 = arith.constant 8.000000e+00 : f32
    %141 = vector.broadcast %cst_89 : f32 to vector<1x512xf32>
    %142 = arith.divf %140, %141 : vector<1x512xf32>
    %143 = vector.broadcast %142 : vector<1x512xf32> to vector<8x512xf32>
    %144 = arith.subf %138, %143 : vector<8x512xf32>
    %145 = arith.mulf %144, %144 : vector<8x512xf32>
    %cst_90 = arith.constant dense<0.000000e+00> : vector<512xf32>
    %146 = vector.multi_reduction <add>, %145, %cst_90 [0] : vector<8x512xf32> to vector<512xf32>
    %147 = vector.shape_cast %146 : vector<512xf32> to vector<1x512xf32>
    %cst_91 = arith.constant 8.000000e+00 : f32
    %148 = vector.broadcast %cst_91 : f32 to vector<1x512xf32>
    %149 = arith.divf %147, %148 : vector<1x512xf32>
    %c3 = arith.constant 3 : index
    %c0_92 = arith.constant 0 : index
    %150 = vector.load %arg5[%c3, %c0_92] : memref<7x512xf32, #tpu.memory_space<vmem>>, vector<1x512xf32>
    %151 = vector.shape_cast %150 : vector<1x512xf32> to vector<512xf32>
    %cst_93 = arith.constant 9.99999974E-6 : f32
    %152 = vector.broadcast %cst_93 : f32 to vector<1x512xf32>
    %153 = arith.addf %149, %152 : vector<1x512xf32>
    %154 = math.rsqrt %153 : vector<1x512xf32>
    %155 = vector.shape_cast %151 : vector<512xf32> to vector<1x512xf32>
    %156 = arith.mulf %155, %154 : vector<1x512xf32>
    %157 = vector.broadcast %156 : vector<1x512xf32> to vector<8x512xf32>
    %158 = arith.mulf %144, %157 : vector<8x512xf32>
    %c3_94 = arith.constant 3 : index
    %c0_95 = arith.constant 0 : index
    %159 = vector.load %arg6[%c3_94, %c0_95] : memref<7x512xf32, #tpu.memory_space<vmem>>, vector<1x512xf32>
    %160 = vector.shape_cast %159 : vector<1x512xf32> to vector<512xf32>
    %161 = vector.shape_cast %160 : vector<512xf32> to vector<1x512xf32>
    %162 = vector.broadcast %161 : vector<1x512xf32> to vector<8x512xf32>
    %163 = arith.addf %158, %162 : vector<8x512xf32>
    %cst_96 = arith.constant 0.000000e+00 : f32
    %164 = vector.broadcast %cst_96 : f32 to vector<8x512xf32>
    %165 = arith.maximumf %163, %164 : vector<8x512xf32>
    %c3_i32_97 = arith.constant 3 : i32
    %c1_i32_98 = arith.constant 1 : i32
    %c1_i32_99 = arith.constant 1 : i32
    %c0_i32_100 = arith.constant 0 : i32
    %c0_i32_101 = arith.constant 0 : i32
    %166 = tpu.memref_slice %arg2[%c3_i32_97, %c0_i32_100, %c0_i32_101] : memref<6x512x512xbf16, #tpu.memory_space<any>> -> memref<1x512x512xbf16, #tpu.memory_space<any>>
    %167 = tpu.memref_squeeze %166 : memref<1x512x512xbf16, #tpu.memory_space<any>> -> memref<512x512xbf16, #tpu.memory_space<any>>
    %c0_i32_102 = arith.constant 0 : i32
    %c0_i32_103 = arith.constant 0 : i32
    %168 = tpu.memref_slice %arg8[%c1_i32_98, %c0_i32_102, %c0_i32_103] : memref<2x512x512xbf16, #tpu.memory_space<vmem>> -> memref<1x512x512xbf16, #tpu.memory_space<vmem>>
    %169 = tpu.memref_squeeze %168 : memref<1x512x512xbf16, #tpu.memory_space<vmem>> -> memref<512x512xbf16, #tpu.memory_space<vmem>>
    %170 = tpu.memref_slice %arg9[%c1_i32_99] : memref<2x!tpu.dma_semaphore, #tpu.memory_space<semaphore_mem>> -> memref<1x!tpu.dma_semaphore, #tpu.memory_space<semaphore_mem>>
    %171 = tpu.memref_squeeze %170 : memref<1x!tpu.dma_semaphore, #tpu.memory_space<semaphore_mem>> -> memref<!tpu.dma_semaphore, #tpu.memory_space<semaphore_mem>>
    tpu.wait_dma2 semaphore(%171 : memref<!tpu.dma_semaphore, #tpu.memory_space<semaphore_mem>>) src(%167 : memref<512x512xbf16, #tpu.memory_space<any>>) dst(%169 : memref<512x512xbf16, #tpu.memory_space<vmem>>)
    %c4_i32 = arith.constant 4 : i32
    %c0_i32_104 = arith.constant 0 : i32
    %c0_i32_105 = arith.constant 0 : i32
    %c0_i32_106 = arith.constant 0 : i32
    %c0_i32_107 = arith.constant 0 : i32
    %172 = tpu.memref_slice %arg2[%c4_i32, %c0_i32_106, %c0_i32_107] : memref<6x512x512xbf16, #tpu.memory_space<any>> -> memref<1x512x512xbf16, #tpu.memory_space<any>>
    %173 = tpu.memref_squeeze %172 : memref<1x512x512xbf16, #tpu.memory_space<any>> -> memref<512x512xbf16, #tpu.memory_space<any>>
    %c0_i32_108 = arith.constant 0 : i32
    %c0_i32_109 = arith.constant 0 : i32
    %174 = tpu.memref_slice %arg8[%c0_i32_104, %c0_i32_108, %c0_i32_109] : memref<2x512x512xbf16, #tpu.memory_space<vmem>> -> memref<1x512x512xbf16, #tpu.memory_space<vmem>>
    %175 = tpu.memref_squeeze %174 : memref<1x512x512xbf16, #tpu.memory_space<vmem>> -> memref<512x512xbf16, #tpu.memory_space<vmem>>
    %176 = tpu.memref_slice %arg9[%c0_i32_105] : memref<2x!tpu.dma_semaphore, #tpu.memory_space<semaphore_mem>> -> memref<1x!tpu.dma_semaphore, #tpu.memory_space<semaphore_mem>>
    %177 = tpu.memref_squeeze %176 : memref<1x!tpu.dma_semaphore, #tpu.memory_space<semaphore_mem>> -> memref<!tpu.dma_semaphore, #tpu.memory_space<semaphore_mem>>
    tpu.enqueue_dma source(%173 : memref<512x512xbf16, #tpu.memory_space<any>>) target(%175 : memref<512x512xbf16, #tpu.memory_space<vmem>>) target_semaphore(%177 : memref<!tpu.dma_semaphore, #tpu.memory_space<semaphore_mem>>)
    %178 = arith.truncf %165 : vector<8x512xf32> to vector<8x512xbf16>
    %c1_110 = arith.constant 1 : index
    %c0_111 = arith.constant 0 : index
    %c0_112 = arith.constant 0 : index
    %179 = vector.load %arg8[%c1_110, %c0_111, %c0_112] : memref<2x512x512xbf16, #tpu.memory_space<vmem>>, vector<1x512x512xbf16>
    %180 = vector.shape_cast %179 : vector<1x512x512xbf16> to vector<512x512xbf16>
    %cst_113 = arith.constant dense<0.000000e+00> : vector<8x512xf32>
    %181 = tpu.matmul %178, %180, %cst_113 {dimension_numbers = #tpu.dot_dimension_numbers<[1], [0], [0], [1], [0, 0, 1, 1], [], []>} : vector<8x512xbf16>, vector<512x512xbf16>, vector<8x512xf32> -> vector<8x512xf32>
    %cst_114 = arith.constant dense<0.000000e+00> : vector<512xf32>
    %182 = vector.multi_reduction <add>, %181, %cst_114 [0] : vector<8x512xf32> to vector<512xf32>
    %183 = vector.shape_cast %182 : vector<512xf32> to vector<1x512xf32>
    %cst_115 = arith.constant 8.000000e+00 : f32
    %184 = vector.broadcast %cst_115 : f32 to vector<1x512xf32>
    %185 = arith.divf %183, %184 : vector<1x512xf32>
    %186 = vector.broadcast %185 : vector<1x512xf32> to vector<8x512xf32>
    %187 = arith.subf %181, %186 : vector<8x512xf32>
    %188 = arith.mulf %187, %187 : vector<8x512xf32>
    %cst_116 = arith.constant dense<0.000000e+00> : vector<512xf32>
    %189 = vector.multi_reduction <add>, %188, %cst_116 [0] : vector<8x512xf32> to vector<512xf32>
    %190 = vector.shape_cast %189 : vector<512xf32> to vector<1x512xf32>
    %cst_117 = arith.constant 8.000000e+00 : f32
    %191 = vector.broadcast %cst_117 : f32 to vector<1x512xf32>
    %192 = arith.divf %190, %191 : vector<1x512xf32>
    %c4 = arith.constant 4 : index
    %c0_118 = arith.constant 0 : index
    %193 = vector.load %arg5[%c4, %c0_118] : memref<7x512xf32, #tpu.memory_space<vmem>>, vector<1x512xf32>
    %194 = vector.shape_cast %193 : vector<1x512xf32> to vector<512xf32>
    %cst_119 = arith.constant 9.99999974E-6 : f32
    %195 = vector.broadcast %cst_119 : f32 to vector<1x512xf32>
    %196 = arith.addf %192, %195 : vector<1x512xf32>
    %197 = math.rsqrt %196 : vector<1x512xf32>
    %198 = vector.shape_cast %194 : vector<512xf32> to vector<1x512xf32>
    %199 = arith.mulf %198, %197 : vector<1x512xf32>
    %200 = vector.broadcast %199 : vector<1x512xf32> to vector<8x512xf32>
    %201 = arith.mulf %187, %200 : vector<8x512xf32>
    %c4_120 = arith.constant 4 : index
    %c0_121 = arith.constant 0 : index
    %202 = vector.load %arg6[%c4_120, %c0_121] : memref<7x512xf32, #tpu.memory_space<vmem>>, vector<1x512xf32>
    %203 = vector.shape_cast %202 : vector<1x512xf32> to vector<512xf32>
    %204 = vector.shape_cast %203 : vector<512xf32> to vector<1x512xf32>
    %205 = vector.broadcast %204 : vector<1x512xf32> to vector<8x512xf32>
    %206 = arith.addf %201, %205 : vector<8x512xf32>
    %cst_122 = arith.constant 0.000000e+00 : f32
    %207 = vector.broadcast %cst_122 : f32 to vector<8x512xf32>
    %208 = arith.maximumf %206, %207 : vector<8x512xf32>
    %c4_i32_123 = arith.constant 4 : i32
    %c0_i32_124 = arith.constant 0 : i32
    %c0_i32_125 = arith.constant 0 : i32
    %c0_i32_126 = arith.constant 0 : i32
    %c0_i32_127 = arith.constant 0 : i32
    %209 = tpu.memref_slice %arg2[%c4_i32_123, %c0_i32_126, %c0_i32_127] : memref<6x512x512xbf16, #tpu.memory_space<any>> -> memref<1x512x512xbf16, #tpu.memory_space<any>>
    %210 = tpu.memref_squeeze %209 : memref<1x512x512xbf16, #tpu.memory_space<any>> -> memref<512x512xbf16, #tpu.memory_space<any>>
    %c0_i32_128 = arith.constant 0 : i32
    %c0_i32_129 = arith.constant 0 : i32
    %211 = tpu.memref_slice %arg8[%c0_i32_124, %c0_i32_128, %c0_i32_129] : memref<2x512x512xbf16, #tpu.memory_space<vmem>> -> memref<1x512x512xbf16, #tpu.memory_space<vmem>>
    %212 = tpu.memref_squeeze %211 : memref<1x512x512xbf16, #tpu.memory_space<vmem>> -> memref<512x512xbf16, #tpu.memory_space<vmem>>
    %213 = tpu.memref_slice %arg9[%c0_i32_125] : memref<2x!tpu.dma_semaphore, #tpu.memory_space<semaphore_mem>> -> memref<1x!tpu.dma_semaphore, #tpu.memory_space<semaphore_mem>>
    %214 = tpu.memref_squeeze %213 : memref<1x!tpu.dma_semaphore, #tpu.memory_space<semaphore_mem>> -> memref<!tpu.dma_semaphore, #tpu.memory_space<semaphore_mem>>
    tpu.wait_dma2 semaphore(%214 : memref<!tpu.dma_semaphore, #tpu.memory_space<semaphore_mem>>) src(%210 : memref<512x512xbf16, #tpu.memory_space<any>>) dst(%212 : memref<512x512xbf16, #tpu.memory_space<vmem>>)
    %c5_i32 = arith.constant 5 : i32
    %c1_i32_130 = arith.constant 1 : i32
    %c1_i32_131 = arith.constant 1 : i32
    %c0_i32_132 = arith.constant 0 : i32
    %c0_i32_133 = arith.constant 0 : i32
    %215 = tpu.memref_slice %arg2[%c5_i32, %c0_i32_132, %c0_i32_133] : memref<6x512x512xbf16, #tpu.memory_space<any>> -> memref<1x512x512xbf16, #tpu.memory_space<any>>
    %216 = tpu.memref_squeeze %215 : memref<1x512x512xbf16, #tpu.memory_space<any>> -> memref<512x512xbf16, #tpu.memory_space<any>>
    %c0_i32_134 = arith.constant 0 : i32
    %c0_i32_135 = arith.constant 0 : i32
    %217 = tpu.memref_slice %arg8[%c1_i32_130, %c0_i32_134, %c0_i32_135] : memref<2x512x512xbf16, #tpu.memory_space<vmem>> -> memref<1x512x512xbf16, #tpu.memory_space<vmem>>
    %218 = tpu.memref_squeeze %217 : memref<1x512x512xbf16, #tpu.memory_space<vmem>> -> memref<512x512xbf16, #tpu.memory_space<vmem>>
    %219 = tpu.memref_slice %arg9[%c1_i32_131] : memref<2x!tpu.dma_semaphore, #tpu.memory_space<semaphore_mem>> -> memref<1x!tpu.dma_semaphore, #tpu.memory_space<semaphore_mem>>
    %220 = tpu.memref_squeeze %219 : memref<1x!tpu.dma_semaphore, #tpu.memory_space<semaphore_mem>> -> memref<!tpu.dma_semaphore, #tpu.memory_space<semaphore_mem>>
    tpu.enqueue_dma source(%216 : memref<512x512xbf16, #tpu.memory_space<any>>) target(%218 : memref<512x512xbf16, #tpu.memory_space<vmem>>) target_semaphore(%220 : memref<!tpu.dma_semaphore, #tpu.memory_space<semaphore_mem>>)
    %221 = arith.truncf %208 : vector<8x512xf32> to vector<8x512xbf16>
    %c0_136 = arith.constant 0 : index
    %c0_137 = arith.constant 0 : index
    %c0_138 = arith.constant 0 : index
    %222 = vector.load %arg8[%c0_136, %c0_137, %c0_138] : memref<2x512x512xbf16, #tpu.memory_space<vmem>>, vector<1x512x512xbf16>
    %223 = vector.shape_cast %222 : vector<1x512x512xbf16> to vector<512x512xbf16>
    %cst_139 = arith.constant dense<0.000000e+00> : vector<8x512xf32>
    %224 = tpu.matmul %221, %223, %cst_139 {dimension_numbers = #tpu.dot_dimension_numbers<[1], [0], [0], [1], [0, 0, 1, 1], [], []>} : vector<8x512xbf16>, vector<512x512xbf16>, vector<8x512xf32> -> vector<8x512xf32>
    %cst_140 = arith.constant dense<0.000000e+00> : vector<512xf32>
    %225 = vector.multi_reduction <add>, %224, %cst_140 [0] : vector<8x512xf32> to vector<512xf32>
    %226 = vector.shape_cast %225 : vector<512xf32> to vector<1x512xf32>
    %cst_141 = arith.constant 8.000000e+00 : f32
    %227 = vector.broadcast %cst_141 : f32 to vector<1x512xf32>
    %228 = arith.divf %226, %227 : vector<1x512xf32>
    %229 = vector.broadcast %228 : vector<1x512xf32> to vector<8x512xf32>
    %230 = arith.subf %224, %229 : vector<8x512xf32>
    %231 = arith.mulf %230, %230 : vector<8x512xf32>
    %cst_142 = arith.constant dense<0.000000e+00> : vector<512xf32>
    %232 = vector.multi_reduction <add>, %231, %cst_142 [0] : vector<8x512xf32> to vector<512xf32>
    %233 = vector.shape_cast %232 : vector<512xf32> to vector<1x512xf32>
    %cst_143 = arith.constant 8.000000e+00 : f32
    %234 = vector.broadcast %cst_143 : f32 to vector<1x512xf32>
    %235 = arith.divf %233, %234 : vector<1x512xf32>
    %c5 = arith.constant 5 : index
    %c0_144 = arith.constant 0 : index
    %236 = vector.load %arg5[%c5, %c0_144] : memref<7x512xf32, #tpu.memory_space<vmem>>, vector<1x512xf32>
    %237 = vector.shape_cast %236 : vector<1x512xf32> to vector<512xf32>
    %cst_145 = arith.constant 9.99999974E-6 : f32
    %238 = vector.broadcast %cst_145 : f32 to vector<1x512xf32>
    %239 = arith.addf %235, %238 : vector<1x512xf32>
    %240 = math.rsqrt %239 : vector<1x512xf32>
    %241 = vector.shape_cast %237 : vector<512xf32> to vector<1x512xf32>
    %242 = arith.mulf %241, %240 : vector<1x512xf32>
    %243 = vector.broadcast %242 : vector<1x512xf32> to vector<8x512xf32>
    %244 = arith.mulf %230, %243 : vector<8x512xf32>
    %c5_146 = arith.constant 5 : index
    %c0_147 = arith.constant 0 : index
    %245 = vector.load %arg6[%c5_146, %c0_147] : memref<7x512xf32, #tpu.memory_space<vmem>>, vector<1x512xf32>
    %246 = vector.shape_cast %245 : vector<1x512xf32> to vector<512xf32>
    %247 = vector.shape_cast %246 : vector<512xf32> to vector<1x512xf32>
    %248 = vector.broadcast %247 : vector<1x512xf32> to vector<8x512xf32>
    %249 = arith.addf %244, %248 : vector<8x512xf32>
    %cst_148 = arith.constant 0.000000e+00 : f32
    %250 = vector.broadcast %cst_148 : f32 to vector<8x512xf32>
    %251 = arith.maximumf %249, %250 : vector<8x512xf32>
    %c5_i32_149 = arith.constant 5 : i32
    %c1_i32_150 = arith.constant 1 : i32
    %c1_i32_151 = arith.constant 1 : i32
    %c0_i32_152 = arith.constant 0 : i32
    %c0_i32_153 = arith.constant 0 : i32
    %252 = tpu.memref_slice %arg2[%c5_i32_149, %c0_i32_152, %c0_i32_153] : memref<6x512x512xbf16, #tpu.memory_space<any>> -> memref<1x512x512xbf16, #tpu.memory_space<any>>
    %253 = tpu.memref_squeeze %252 : memref<1x512x512xbf16, #tpu.memory_space<any>> -> memref<512x512xbf16, #tpu.memory_space<any>>
    %c0_i32_154 = arith.constant 0 : i32
    %c0_i32_155 = arith.constant 0 : i32
    %254 = tpu.memref_slice %arg8[%c1_i32_150, %c0_i32_154, %c0_i32_155] : memref<2x512x512xbf16, #tpu.memory_space<vmem>> -> memref<1x512x512xbf16, #tpu.memory_space<vmem>>
    %255 = tpu.memref_squeeze %254 : memref<1x512x512xbf16, #tpu.memory_space<vmem>> -> memref<512x512xbf16, #tpu.memory_space<vmem>>
    %256 = tpu.memref_slice %arg9[%c1_i32_151] : memref<2x!tpu.dma_semaphore, #tpu.memory_space<semaphore_mem>> -> memref<1x!tpu.dma_semaphore, #tpu.memory_space<semaphore_mem>>
    %257 = tpu.memref_squeeze %256 : memref<1x!tpu.dma_semaphore, #tpu.memory_space<semaphore_mem>> -> memref<!tpu.dma_semaphore, #tpu.memory_space<semaphore_mem>>
    tpu.wait_dma2 semaphore(%257 : memref<!tpu.dma_semaphore, #tpu.memory_space<semaphore_mem>>) src(%253 : memref<512x512xbf16, #tpu.memory_space<any>>) dst(%255 : memref<512x512xbf16, #tpu.memory_space<vmem>>)
    %258 = arith.truncf %251 : vector<8x512xf32> to vector<8x512xbf16>
    %c1_156 = arith.constant 1 : index
    %c0_157 = arith.constant 0 : index
    %c0_158 = arith.constant 0 : index
    %259 = vector.load %arg8[%c1_156, %c0_157, %c0_158] : memref<2x512x512xbf16, #tpu.memory_space<vmem>>, vector<1x512x512xbf16>
    %260 = vector.shape_cast %259 : vector<1x512x512xbf16> to vector<512x512xbf16>
    %cst_159 = arith.constant dense<0.000000e+00> : vector<8x512xf32>
    %261 = tpu.matmul %258, %260, %cst_159 {dimension_numbers = #tpu.dot_dimension_numbers<[1], [0], [0], [1], [0, 0, 1, 1], [], []>} : vector<8x512xbf16>, vector<512x512xbf16>, vector<8x512xf32> -> vector<8x512xf32>
    %cst_160 = arith.constant dense<0.000000e+00> : vector<512xf32>
    %262 = vector.multi_reduction <add>, %261, %cst_160 [0] : vector<8x512xf32> to vector<512xf32>
    %263 = vector.shape_cast %262 : vector<512xf32> to vector<1x512xf32>
    %cst_161 = arith.constant 8.000000e+00 : f32
    %264 = vector.broadcast %cst_161 : f32 to vector<1x512xf32>
    %265 = arith.divf %263, %264 : vector<1x512xf32>
    %266 = vector.broadcast %265 : vector<1x512xf32> to vector<8x512xf32>
    %267 = arith.subf %261, %266 : vector<8x512xf32>
    %268 = arith.mulf %267, %267 : vector<8x512xf32>
    %cst_162 = arith.constant dense<0.000000e+00> : vector<512xf32>
    %269 = vector.multi_reduction <add>, %268, %cst_162 [0] : vector<8x512xf32> to vector<512xf32>
    %270 = vector.shape_cast %269 : vector<512xf32> to vector<1x512xf32>
    %cst_163 = arith.constant 8.000000e+00 : f32
    %271 = vector.broadcast %cst_163 : f32 to vector<1x512xf32>
    %272 = arith.divf %270, %271 : vector<1x512xf32>
    %c6 = arith.constant 6 : index
    %c0_164 = arith.constant 0 : index
    %273 = vector.load %arg5[%c6, %c0_164] : memref<7x512xf32, #tpu.memory_space<vmem>>, vector<1x512xf32>
    %274 = vector.shape_cast %273 : vector<1x512xf32> to vector<512xf32>
    %cst_165 = arith.constant 9.99999974E-6 : f32
    %275 = vector.broadcast %cst_165 : f32 to vector<1x512xf32>
    %276 = arith.addf %272, %275 : vector<1x512xf32>
    %277 = math.rsqrt %276 : vector<1x512xf32>
    %278 = vector.shape_cast %274 : vector<512xf32> to vector<1x512xf32>
    %279 = arith.mulf %278, %277 : vector<1x512xf32>
    %280 = vector.broadcast %279 : vector<1x512xf32> to vector<8x512xf32>
    %281 = arith.mulf %267, %280 : vector<8x512xf32>
    %c6_166 = arith.constant 6 : index
    %c0_167 = arith.constant 0 : index
    %282 = vector.load %arg6[%c6_166, %c0_167] : memref<7x512xf32, #tpu.memory_space<vmem>>, vector<1x512xf32>
    %283 = vector.shape_cast %282 : vector<1x512xf32> to vector<512xf32>
    %284 = vector.shape_cast %283 : vector<512xf32> to vector<1x512xf32>
    %285 = vector.broadcast %284 : vector<1x512xf32> to vector<8x512xf32>
    %286 = arith.addf %281, %285 : vector<8x512xf32>
    %cst_168 = arith.constant 0.000000e+00 : f32
    %287 = vector.broadcast %cst_168 : f32 to vector<8x512xf32>
    %288 = arith.maximumf %286, %287 : vector<8x512xf32>
    %289 = arith.truncf %288 : vector<8x512xf32> to vector<8x512xbf16>
    %c0_169 = arith.constant 0 : index
    %c0_170 = arith.constant 0 : index
    %290 = vector.load %arg3[%c0_169, %c0_170] : memref<512x896xbf16, #tpu.memory_space<vmem>>, vector<512x896xbf16>
    %cst_171 = arith.constant dense<0.000000e+00> : vector<8x896xf32>
    %291 = tpu.matmul %289, %290, %cst_171 {dimension_numbers = #tpu.dot_dimension_numbers<[1], [0], [0], [1], [0, 0, 1, 1], [], []>} : vector<8x512xbf16>, vector<512x896xbf16>, vector<8x896xf32> -> vector<8x896xf32>
    %c0_172 = arith.constant 0 : index
    %c0_173 = arith.constant 0 : index
    %292 = vector.load %arg4[%c0_172, %c0_173] : memref<1x896xf32, #tpu.memory_space<vmem>>, vector<1x896xf32>
    %293 = vector.broadcast %292 : vector<1x896xf32> to vector<8x896xf32>
    %294 = arith.addf %291, %293 : vector<8x896xf32>
    %295 = arith.negf %294 : vector<8x896xf32>
    %296 = math.exp %295 : vector<8x896xf32>
    %cst_174 = arith.constant 1.000000e+00 : f32
    %297 = vector.broadcast %cst_174 : f32 to vector<8x896xf32>
    %298 = arith.addf %297, %296 : vector<8x896xf32>
    %299 = arith.divf %297, %298 : vector<8x896xf32>
    %c0_175 = arith.constant 0 : index
    %c0_176 = arith.constant 0 : index
    %300 = vector.load %arg7[%c0_175, %c0_176] : memref<8x896xf32, #tpu.memory_space<vmem>>, vector<8x896xf32>
    tpu.vector_store %arg7[%c0_175, %c0_176], %299 {strides = array<i32>} : memref<8x896xf32, #tpu.memory_space<vmem>>, vector<8x896xf32>,
    return
  }
}

</mosaic_0001>

<llo_original>
// kernel: tpu_custom_call.1
$region0: #{tpu_custom_call.1}
  #allocation0 [shape = 'u32[]', space=smem, size = 0x4, offset = 0x4, fixed_abs, tag = 'smem constant byte address 0x4 - core index']
  #allocation1 [shape = 'u32[144,128]{1,0:T(1,128)}', space=vmem, size = 0x12000, scoped, tag = 'internal scratch']
  #allocation2 [shape = 'bf16[2,512,512]{2,1,0:T(8,128)(2,1)}', space=vmem, size = 0x100000, scoped, tag = 'scratch operand']
  #allocation3 [shape = 's32[2]{0}', space=sflag, size = 0x8, scoped, tag = 'scratch operand']
  #allocation16 [shape = 's32[]', space=sflag, size = 0x4, offset = 0, fixed_abs, tag = 'sflag constant byte address 0x0 - dummy sync flag']
  #allocation17 [shape = 's32[]', space=sflag, size = 0x4, offset = 0, fixed_abs, tag = 'sflag constant byte address 0x0 - dummy sync flag']
  #allocation18 [shape = 'u32[]', space=smem, size = 0x4, offset = 0x44, fixed_abs, tag = 'smem constant byte address 0x44 - assertion arg 0']
  #allocation19 [shape = 'u32[]', space=smem, size = 0x4, offset = 0x48, fixed_abs, tag = 'smem constant byte address 0x48 - assertion arg 1']
  #allocation20 [shape = 's32[]', space=sflag, size = 0x4, offset = 0, fixed_abs, tag = 'sflag constant byte address 0x0 - dummy sync flag']
  #allocation21 [shape = 's32[]', space=sflag, size = 0x4, offset = 0, fixed_abs, tag = 'sflag constant byte address 0x0 - dummy sync flag']
  #allocation22 [shape = 's32[]', space=sflag, size = 0x4, offset = 0, fixed_abs, tag = 'sflag constant byte address 0x0 - dummy sync flag']
  #allocation23 [shape = 's32[]', space=sflag, size = 0x4, offset = 0, fixed_abs, tag = 'sflag constant byte address 0x0 - dummy sync flag']
  #allocation24 [shape = 's32[]', space=sflag, size = 0x4, offset = 0, fixed_abs, tag = 'sflag constant byte address 0x0 - dummy sync flag']
  #allocation25 [shape = 's32[]', space=sflag, size = 0x4, offset = 0, fixed_abs, tag = 'sflag constant byte address 0x0 - dummy sync flag']
  #allocation26 [shape = 's32[]', space=sflag, size = 0x4, offset = 0, fixed_abs, tag = 'sflag constant byte address 0x0 - dummy sync flag']
  #allocation27 [shape = 's32[]', space=sflag, size = 0x4, offset = 0, fixed_abs, tag = 'sflag constant byte address 0x0 - dummy sync flag']
  #allocation28 [shape = 's32[]', space=sflag, size = 0x4, offset = 0, fixed_abs, tag = 'sflag constant byte address 0x0 - dummy sync flag']
  #allocation29 [shape = 's32[]', space=sflag, size = 0x4, offset = 0, fixed_abs, tag = 'sflag constant byte address 0x0 - dummy sync flag']
  %s0 = inlined_call_operand.hbm [shape: f32[8,32], index: 0, kind: input, shape index: {}]
  %s1 = inlined_call_operand.hbm [shape: bf16[32,512], index: 1, kind: input, shape index: {}]
  %s2 = inlined_call_operand.hbm [shape: bf16[6,512,512], index: 2, kind: input, shape index: {}]
  %s3 = inlined_call_operand.hbm [shape: bf16[512,896], index: 3, kind: input, shape index: {}]
  %s4 = inlined_call_operand.hbm [shape: f32[1,896], index: 4, kind: input, shape index: {}]
  %s5 = inlined_call_operand.hbm [shape: f32[7,512], index: 5, kind: input, shape index: {}]
  %s6 = inlined_call_operand.hbm [shape: f32[7,512], index: 6, kind: input, shape index: {}]
  %s7 = inlined_call_operand.hbm [shape: f32[8,896], index: 7, kind: output, shape index: {}]
  %s8 = sld [smem:[#allocation0]]
  $region82: #{tpu_custom_call.1} parent=0
    _
  %s10 = ssub.s32 1, %s8
  %s11 = scalar_select 0, %s10, %s8
  $region1: #{tpu_custom_call.1} parent=0
    #allocation4 [shape = 'u8[4096]{0}', space=vmem, size = 0x1000, scoped, tag = 'input window, operand 0, single buffered']
    #allocation5 [shape = 's32[1]{0}', space=sflag, size = 0x4, scoped, tag = 'scoped memory for tpu_custom_call.1']
    #allocation6 [shape = 's32[1]{0}', space=sflag, size = 0x4, scoped, tag = 'scoped memory for tpu_custom_call.1']
    #allocation7 [shape = 'u8[32768]{0}', space=vmem, size = 0x8000, scoped, tag = 'input window, operand 1, single buffered']
    #allocation8 [shape = 's32[1]{0}', space=sflag, size = 0x4, scoped, tag = 'scoped memory for tpu_custom_call.1']
    #allocation9 [shape = 'u8[917504]{0}', space=vmem, size = 0xe0000, scoped, tag = 'input window, operand 3, single buffered']
    #allocation10 [shape = 'u8[3584]{0}', space=vmem, size = 0x1000, scoped, tag = 'input window, operand 4, single buffered']
    #allocation11 [shape = 's32[1]{0}', space=sflag, size = 0x4, scoped, tag = 'scoped memory for tpu_custom_call.1']
    #allocation12 [shape = 'u8[16384]{0}', space=vmem, size = 0x4000, scoped, tag = 'input window, operand 5, single buffered']
    #allocation13 [shape = 'u8[16384]{0}', space=vmem, size = 0x4000, scoped, tag = 'input window, operand 6, single buffered']
    #allocation14 [shape = 's32[1]{0}', space=sflag, size = 0x4, scoped, tag = 'scoped memory for tpu_custom_call.1']
    #allocation15 [shape = 'u8[28672]{0}', space=vmem, size = 0x7000, scoped, tag = 'output window, operand 0, single buffered']
    %12 = vsyncpa [#allocation5], 0
    %13 = vsyncpa [#allocation8], 0
    %14 = vsyncpa [#allocation11], 0
    %15 = vsyncpa [#allocation14], 0
    %16 = vsyncpa [#allocation6], 0
    // Predicated region
    $region2: #{tpu_custom_call.1} parent=1 // pred_check
      _
    $region3: #{tpu_custom_call.1} parent=1 // pred_check_branch
      %18 = sbr.rel (0) target = $region5
    $region4: #{tpu_custom_call.1} parent=1 // pred_region
      %s20 = ssub.s32 128, 128
      %21 = vsyncadd [#allocation5], %s20
      %s23 = sshll.u32 [#allocation4], 4
      %s24 = int_to_ptr.vmem [resolvable:$true] %s23
      %26 = dma.hbm_to_vmem [thread:$0]  %s0, 128, %s24, [#allocation5]
    $region5: #{tpu_custom_call.1} parent=1 // pred_fallthru
      _
    // Predicated region
    $region6: #{tpu_custom_call.1} parent=1 // pred_check
      _
    $region7: #{tpu_custom_call.1} parent=1 // pred_check_branch
      %28 = sbr.rel (0) target = $region9
    $region8: #{tpu_custom_call.1} parent=1 // pred_region
      %s30 = ssub.s32 1024, 1024
      %31 = vsyncadd [#allocation8], %s30
      %s32 = sshll.u32 [#allocation7], 4
      %s33 = int_to_ptr.vmem [resolvable:$true] %s32
      %38 = dma.hbm_to_vmem [thread:$0]  %s1, 1024, %s33, [#allocation8], 256, 256, 16
    $region9: #{tpu_custom_call.1} parent=1 // pred_fallthru
      _
    // Predicated region
    $region10: #{tpu_custom_call.1} parent=1 // pred_check
      _
    $region11: #{tpu_custom_call.1} parent=1 // pred_check_branch
      %40 = sbr.rel (0) target = $region13
    $region12: #{tpu_custom_call.1} parent=1 // pred_region
      %s42 = ssub.s32 28672, 28672
      %43 = vsyncadd [#allocation8], %s42
      %s44 = sshll.u32 [#allocation9], 4
      %s45 = int_to_ptr.vmem [resolvable:$true] %s44
      %50 = dma.hbm_to_vmem [thread:$0]  %s3, 28672, %s45, [#allocation8], 448, 448, 28
    $region13: #{tpu_custom_call.1} parent=1 // pred_fallthru
      _
    // Predicated region
    $region14: #{tpu_custom_call.1} parent=1 // pred_check
      _
    $region15: #{tpu_custom_call.1} parent=1 // pred_check_branch
      %52 = sbr.rel (0) target = $region17
    $region16: #{tpu_custom_call.1} parent=1 // pred_region
      %s54 = ssub.s32 112, 112
      %55 = vsyncadd [#allocation11], %s54
      %s57 = sshll.u32 [#allocation10], 4
      %s58 = int_to_ptr.vmem [resolvable:$true] %s57
      %60 = dma.hbm_to_vmem [thread:$0]  %s4, 112, %s58, [#allocation11]
    $region17: #{tpu_custom_call.1} parent=1 // pred_fallthru
      _
    // Predicated region
    $region18: #{tpu_custom_call.1} parent=1 // pred_check
      _
    $region19: #{tpu_custom_call.1} parent=1 // pred_check_branch
      %62 = sbr.rel (0) target = $region21
    $region20: #{tpu_custom_call.1} parent=1 // pred_region
      %s64 = ssub.s32 512, 512
      %65 = vsyncadd [#allocation11], %s64
      %s67 = sshll.u32 [#allocation12], 4
      %s68 = int_to_ptr.vmem [resolvable:$true] %s67
      %70 = dma.hbm_to_vmem [thread:$0]  %s5, 512, %s68, [#allocation11]
    $region21: #{tpu_custom_call.1} parent=1 // pred_fallthru
      _
    // Predicated region
    $region22: #{tpu_custom_call.1} parent=1 // pred_check
      _
    $region23: #{tpu_custom_call.1} parent=1 // pred_check_branch
      %72 = sbr.rel (0) target = $region25
    $region24: #{tpu_custom_call.1} parent=1 // pred_region
      %s74 = ssub.s32 512, 512
      %75 = vsyncadd [#allocation14], %s74
      %s77 = sshll.u32 [#allocation13], 4
      %s78 = int_to_ptr.vmem [resolvable:$true] %s77
      %80 = dma.hbm_to_vmem [thread:$0]  %s6, 512, %s78, [#allocation14]
    $region25: #{tpu_custom_call.1} parent=1 // pred_fallthru
      _
    // Predicated region
    $region26: #{tpu_custom_call.1} parent=1 // pred_check
      _
    $region27: #{tpu_custom_call.1} parent=1 // pred_check_branch
      %82 = sbr.rel (0) target = $region29
    $region28: #{tpu_custom_call.1} parent=1 // pred_region
      %83 = dma.done [#allocation5], 128
    $region29: #{tpu_custom_call.1} parent=1 // pred_fallthru
      _
    // Predicated region
    $region30: #{tpu_custom_call.1} parent=1 // pred_check
      _
    $region31: #{tpu_custom_call.1} parent=1 // pred_check_branch
      %85 = sbr.rel (0) target = $region33
    $region32: #{tpu_custom_call.1} parent=1 // pred_region
      %86 = dma.done [#allocation8], 1024
    $region33: #{tpu_custom_call.1} parent=1 // pred_fallthru
      _
    // Predicated region
    $region34: #{tpu_custom_call.1} parent=1 // pred_check
      _
    $region35: #{tpu_custom_call.1} parent=1 // pred_check_branch
      %88 = sbr.rel (0) target = $region37
    $region36: #{tpu_custom_call.1} parent=1 // pred_region
      %89 = dma.done [#allocation8], 28672
    $region37: #{tpu_custom_call.1} parent=1 // pred_fallthru
      _
    // Predicated region
    $region38: #{tpu_custom_call.1} parent=1 // pred_check
      _
    $region39: #{tpu_custom_call.1} parent=1 // pred_check_branch
      %91 = sbr.rel (0) target = $region41
    $region40: #{tpu_custom_call.1} parent=1 // pred_region
      %92 = dma.done [#allocation11], 112
    $region41: #{tpu_custom_call.1} parent=1 // pred_fallthru
      _
    // Predicated region
    $region42: #{tpu_custom_call.1} parent=1 // pred_check
      _
    $region43: #{tpu_custom_call.1} parent=1 // pred_check_branch
      %94 = sbr.rel (0) target = $region45
    $region44: #{tpu_custom_call.1} parent=1 // pred_region
      %95 = dma.done [#allocation11], 512
    $region45: #{tpu_custom_call.1} parent=1 // pred_fallthru
      _
    // Predicated region
    $region46: #{tpu_custom_call.1} parent=1 // pred_check
      _
    $region47: #{tpu_custom_call.1} parent=1 // pred_check_branch
      %97 = sbr.rel (0) target = $region49
    $region48: #{tpu_custom_call.1} parent=1 // pred_region
      %98 = dma.done [#allocation14], 512
    $region49: #{tpu_custom_call.1} parent=1 // pred_fallthru
      _
    // Predicated region
    $region50: #{tpu_custom_call.1} parent=1 // pred_check
      _
    $region51: #{tpu_custom_call.1} parent=1 // pred_check_branch
      %101 = sbr.rel target = $region53
    $region52: #{tpu_custom_call.1} parent=1 // pred_region
      %102 = sst [smem:[#allocation18]] [#allocation17]
      %103 = sst [smem:[#allocation19]] [#allocation16]
    $region53: #{tpu_custom_call.1} parent=1 // pred_fallthru
      _
    %105 = shalt.err (0)
    %s107 = sshll.u32 [#allocation2], 4
    %s108 = int_to_ptr.vmem [resolvable:$true] %s107
    %110 = dma.hbm_to_vmem [thread:$0]  %s2, 16384, %s108, [#allocation3]
    %v111 = vld [vmem:[#allocation4] sm:$0xff]
    %v112 = vpack.c.bf16 %v111, %v111
    %v113 = vld [vmem:[#allocation7] sm:$0xff]
    %v114 = vld [vmem:[#allocation7 + $0x8] sm:$0xff]
    %v115 = vld [vmem:[#allocation7 + $0x10] sm:$0xff]
    %v116 = vld [vmem:[#allocation7 + $0x18] sm:$0xff]
    %v117 = vld [vmem:[#allocation7 + $0x20] sm:$0xff]
    %v118 = vld [vmem:[#allocation7 + $0x28] sm:$0xff]
    %v119 = vld [vmem:[#allocation7 + $0x30] sm:$0xff]
    %v120 = vld [vmem:[#allocation7 + $0x38] sm:$0xff]
    %v129 = vunpack.c.l.b16 %v113
    %v130 = vunpack.c.h.b16 %v113
    %v131 = vunpack.c.l.b16 %v114
    %v132 = vunpack.c.h.b16 %v114
    %v133 = vunpack.c.l.b16 %v115
    %v134 = vunpack.c.h.b16 %v115
    %v135 = vunpack.c.l.b16 %v116
    %v136 = vunpack.c.h.b16 %v116
    %v137 = vunpack.c.l.b16 %v117
    %v138 = vunpack.c.h.b16 %v117
    %v139 = vunpack.c.l.b16 %v118
    %v140 = vunpack.c.h.b16 %v118
    %v141 = vunpack.c.l.b16 %v119
    %v142 = vunpack.c.h.b16 %v119
    %v143 = vunpack.c.l.b16 %v120
    %v144 = vunpack.c.h.b16 %v120
    %v145 = vpack.c.b16 %v133, %v129
    %v146 = vpack.c.b16 %v134, %v130
    %v147 = vpack.c.b16 %v135, %v131
    %v148 = vpack.c.b16 %v136, %v132
    %v149 = vpack.c.b16 %v141, %v137
    %v150 = vpack.c.b16 %v142, %v138
    %v151 = vpack.c.b16 %v143, %v139
    %v152 = vpack.c.b16 %v144, %v140
    %vm161 = vcmask 261120
    %v163 = vsel %vm161, %v112, 0
    %165 = vmatprep.subr.bf16.mxu0 0
    %166 = vmatpush1.bf16.msra.mxu0 0
    %167 = vmatprep.subr.bf16.mxu0 0
    %168 = vmatpush1.bf16.msra.mxu0 0
    %169 = vmatprep.subr.bf16.mxu0 0
    %170 = vmatpush1.bf16.msra.mxu0 0
    %171 = vmatprep.subr.bf16.mxu0 0
    %172 = vmatpush1.bf16.msra.mxu0 0
    %173 = vmatprep.subr.bf16.mxu0 0
    %174 = vmatpush1.bf16.msra.mxu0 0
    %175 = vmatprep.subr.bf16.mxu0 0
    %176 = vmatpush1.bf16.msra.mxu0 0
    %177 = vmatprep.subr.bf16.mxu0 %v150
    %178 = vmatpush1.bf16.msra.mxu0 %v149
    %179 = vmatprep.subr.bf16.mxu0 %v146
    %180 = vmatpush1.bf16.msra.mxu0 %v145
    %181 = vmatprep.subr.bf16.mxu0 0
    %182 = vmatpush2.bf16.msra.mxu0 0
    %183 = vmatprep.subr.bf16.mxu0 0
    %184 = vmatpush2.bf16.msra.mxu0 0
    %185 = vmatprep.subr.bf16.mxu0 0
    %186 = vmatpush2.bf16.msra.mxu0 0
    %187 = vmatprep.subr.bf16.mxu0 0
    %188 = vmatpush2.bf16.msra.mxu0 0
    %189 = vmatprep.subr.bf16.mxu0 0
    %190 = vmatpush2.bf16.msra.mxu0 0
    %191 = vmatprep.subr.bf16.mxu0 0
    %192 = vmatpush2.bf16.msra.mxu0 0
    %193 = vmatprep.subr.bf16.mxu0 0
    %194 = vmatpush2.bf16.msra.mxu0 0
    %195 = vmatprep.subr.bf16.mxu0 0
    %196 = vmatpush2.bf16.msra.mxu0 0
    %197 = vmatprep.mubr.bf16.mxu0 0
    %198 = vmatmul.mubr.bf16.gmra.mxu0 %v163
    %v199 = vpop.f32.mrf.mxu0
    %v200 = vadd.f32 0.0, %v199
    %v201 = vpop.f32.mrf.mxu0
    %v202 = vadd.f32 0.0, %v201
    %v203 = vpop.f32.mrf.mxu0
    %v204 = vpop.f32.mrf.mxu0
    %205 = vdwg.mxu0
    %206 = vmatprep.subr.bf16.mxu0 0
    %207 = vmatpush1.bf16.msra.mxu0 0
    %208 = vmatprep.subr.bf16.mxu0 0
    %209 = vmatpush1.bf16.msra.mxu0 0
    %210 = vmatprep.subr.bf16.mxu0 0
    %211 = vmatpush1.bf16.msra.mxu0 0
    %212 = vmatprep.subr.bf16.mxu0 0
    %213 = vmatpush1.bf16.msra.mxu0 0
    %214 = vmatprep.subr.bf16.mxu0 0
    %215 = vmatpush1.bf16.msra.mxu0 0
    %216 = vmatprep.subr.bf16.mxu0 0
    %217 = vmatpush1.bf16.msra.mxu0 0
    %218 = vmatprep.subr.bf16.mxu0 %v152
    %219 = vmatpush1.bf16.msra.mxu0 %v151
    %220 = vmatprep.subr.bf16.mxu0 %v148
    %221 = vmatpush1.bf16.msra.mxu0 %v147
    %222 = vmatprep.subr.bf16.mxu0 0
    %223 = vmatpush2.bf16.msra.mxu0 0
    %224 = vmatprep.subr.bf16.mxu0 0
    %225 = vmatpush2.bf16.msra.mxu0 0
    %226 = vmatprep.subr.bf16.mxu0 0
    %227 = vmatpush2.bf16.msra.mxu0 0
    %228 = vmatprep.subr.bf16.mxu0 0
    %229 = vmatpush2.bf16.msra.mxu0 0
    %230 = vmatprep.subr.bf16.mxu0 0
    %231 = vmatpush2.bf16.msra.mxu0 0
    %232 = vmatprep.subr.bf16.mxu0 0
    %233 = vmatpush2.bf16.msra.mxu0 0
    %234 = vmatprep.subr.bf16.mxu0 0
    %235 = vmatpush2.bf16.msra.mxu0 0
    %236 = vmatprep.subr.bf16.mxu0 0
    %237 = vmatpush2.bf16.msra.mxu0 0
    %238 = vmatprep.mubr.bf16.mxu0 0
    %239 = vmatmul.mubr.bf16.gmra.mxu0 %v163
    %v240 = vpop.f32.mrf.mxu0
    %v241 = vadd.f32 0.0, %v240
    %v242 = vpop.f32.mrf.mxu0
    %v243 = vadd.f32 0.0, %v242
    %v244 = vpop.f32.mrf.mxu0
    %v245 = vpop.f32.mrf.mxu0
    %246 = vdwg.mxu0
    %v247 = vrot.slane %v200, 4
    %v248 = vadd.f32 %v200, %v247
    %v249 = vrot.slane %v248, 2
    %v250 = vadd.f32 %v248, %v249
    %v251 = vrot.slane %v250, 1
    %v252 = vadd.f32 %v250, %v251
    %v253 = vrot.slane %v202, 4
    %v254 = vadd.f32 %v202, %v253
    %v255 = vrot.slane %v254, 2
    %v256 = vadd.f32 %v254, %v255
    %v257 = vrot.slane %v256, 1
    %v258 = vadd.f32 %v256, %v257
    %v259 = vrot.slane %v241, 4
    %v260 = vadd.f32 %v241, %v259
    %v261 = vrot.slane %v260, 2
    %v262 = vadd.f32 %v260, %v261
    %v263 = vrot.slane %v262, 1
    %v264 = vadd.f32 %v262, %v263
    %v265 = vrot.slane %v243, 4
    %v266 = vadd.f32 %v243, %v265
    %v267 = vrot.slane %v266, 2
    %v268 = vadd.f32 %v266, %v267
    %v269 = vrot.slane %v268, 1
    %v270 = vadd.f32 %v268, %v269
    %v271 = vrcp.pop 8.0
    %v272 = vmul.f32 %v252, %v271
    %v273 = vmul.f32 %v258, %v271
    %v274 = vmul.f32 %v264, %v271
    %v275 = vmul.f32 %v270, %v271
    %v276 = vsub.f32 %v200, %v272
    %v277 = vsub.f32 %v202, %v273
    %v278 = vsub.f32 %v241, %v274
    %v279 = vsub.f32 %v243, %v275
    %v280 = vmul.f32 %v276, %v276
    %v281 = vmul.f32 %v277, %v277
    %v282 = vmul.f32 %v278, %v278
    %v283 = vmul.f32 %v279, %v279
    %v284 = vrot.slane %v280, 4
    %v285 = vadd.f32 %v280, %v284
    %v286 = vrot.slane %v285, 2
    %v287 = vadd.f32 %v285, %v286
    %v288 = vrot.slane %v287, 1
    %v289 = vadd.f32 %v287, %v288
    %v290 = vrot.slane %v281, 4
    %v291 = vadd.f32 %v281, %v290
    %v292 = vrot.slane %v291, 2
    %v293 = vadd.f32 %v291, %v292
    %v294 = vrot.slane %v293, 1
    %v295 = vadd.f32 %v293, %v294
    %v296 = vrot.slane %v282, 4
    %v297 = vadd.f32 %v282, %v296
    %v298 = vrot.slane %v297, 2
    %v299 = vadd.f32 %v297, %v298
    %v300 = vrot.slane %v299, 1
    %v301 = vadd.f32 %v299, %v300
    %v302 = vrot.slane %v283, 4
    %v303 = vadd.f32 %v283, %v302
    %v304 = vrot.slane %v303, 2
    %v305 = vadd.f32 %v303, %v304
    %v306 = vrot.slane %v305, 1
    %v307 = vadd.f32 %v305, %v306
    %v308 = vmul.f32 %v289, %v271
    %v309 = vmul.f32 %v295, %v271
    %v310 = vmul.f32 %v301, %v271
    %v311 = vmul.f32 %v307, %v271
    %v312 = vld [vmem:[#allocation12] ss:$8 sm:$0xf]
    %v313 = vadd.f32 %v308, 1e-05
    %v314 = vadd.f32 %v309, 1e-05
    %v315 = vadd.f32 %v310, 1e-05
    %v316 = vadd.f32 %v311, 1e-05
    %v317 = vrsqrt.pop %v313
    %v318 = vrsqrt.pop %v314
    %v319 = vrsqrt.pop %v315
    %v320 = vrsqrt.pop %v316
    %v325 = vcombine.low %v317, %v318
    %v326 = vcombine.low %v319, %v320
    %v328 = vunpack.c.l.s4 1966171168
    %v329 = vunpack.c.0.s8 %v328
    %v330 = vlaneseq
    %v331 = vshrl.u32 %v330, 7
    %v332 = vsub.s32 %v329, %v331
    %v333 = vrot.slane %v325, %v332
    %v335 = vunpack.c.l.s4 1966171168
    %v336 = vunpack.c.0.s8 %v335
    %v337 = vlaneseq
    %v338 = vshrl.u32 %v337, 7
    %v339 = vsub.s32 %v336, %v338
    %v340 = vrot.slane %v326, %v339
    %v341 = vcombine.low %v333, %v340
    %v343 = vunpack.c.l.s4 1966171168
    %v344 = vunpack.c.0.s8 %v343
    %v345 = vlaneseq
    %v346 = vshrl.u32 %v345, 7
    %v347 = vsub.s32 %v344, %v346
    %v348 = vrot.slane %v341, %v347
    %v350 = vmul.f32 %v312, %v348
    %v352 = vlaneseq
    %v353 = vshrl.u32 %v352, 7
    %v354 = vsub.s32 0, %v353
    %v355 = vrot.slane %v350, %v354
    %v356 = vlaneseq
    %v357 = vshrl.u32 %v356, 7
    %v358 = vsub.s32 1, %v357
    %v359 = vrot.slane %v350, %v358
    %v360 = vlaneseq
    %v361 = vshrl.u32 %v360, 7
    %v362 = vsub.s32 2, %v361
    %v363 = vrot.slane %v350, %v362
    %v364 = vlaneseq
    %v365 = vshrl.u32 %v364, 7
    %v366 = vsub.s32 3, %v365
    %v367 = vrot.slane %v350, %v366
    %v372 = vmul.f32 %v276, %v355
    %v373 = vmul.f32 %v277, %v359
    %v374 = vmul.f32 %v278, %v363
    %v375 = vmul.f32 %v279, %v367
    %v376 = vld [vmem:[#allocation13] ss:$8 sm:$0xf]
    %v378 = vlaneseq
    %v379 = vshrl.u32 %v378, 7
    %v380 = vsub.s32 0, %v379
    %v381 = vrot.slane %v376, %v380
    %v382 = vlaneseq
    %v383 = vshrl.u32 %v382, 7
    %v384 = vsub.s32 1, %v383
    %v385 = vrot.slane %v376, %v384
    %v386 = vlaneseq
    %v387 = vshrl.u32 %v386, 7
    %v388 = vsub.s32 2, %v387
    %v389 = vrot.slane %v376, %v388
    %v390 = vlaneseq
    %v391 = vshrl.u32 %v390, 7
    %v392 = vsub.s32 3, %v391
    %v393 = vrot.slane %v376, %v392
    %v398 = vadd.f32 %v372, %v381
    %v399 = vadd.f32 %v373, %v385
    %v400 = vadd.f32 %v374, %v389
    %v401 = vadd.f32 %v375, %v393
    %v402 = vmax.f32 %v398, 0.0
    %v403 = vmax.f32 %v399, 0.0
    %v404 = vmax.f32 %v400, 0.0
    %v405 = vmax.f32 %v401, 0.0
    %s406 = smul.u32 4, 64
    %s407 = smul.u32 %s406, 4
    %s408 = sshll.u32 %s407, 4
    %409 = dma.done [#allocation3], %s408
    %s410 = scalar_lea.hbm %s2, 16384
    %s411 = scalar_lea.vmem [#allocation2], 1024
    %s412 = scalar_lea.sflag [#allocation3], 1
    // Predicated region
    $region54: #{tpu_custom_call.1} parent=1 // pred_check
      _
    $region55: #{tpu_custom_call.1} parent=1 // pred_check_branch
      %414 = sbr.rel target = $region57
    $region56: #{tpu_custom_call.1} parent=1 // pred_region
      %415 = sst [smem:[#allocation18]] [#allocation21]
      %416 = sst [smem:[#allocation19]] [#allocation20]
    $region57: #{tpu_custom_call.1} parent=1 // pred_fallthru
      _
    %418 = shalt.err (0)
    %s420 = sshll.u32 %s411, 4
    %s421 = int_to_ptr.vmem [resolvable:$true] %s420
    %423 = dma.hbm_to_vmem [thread:$0]  %s410, 16384, %s421, %s412
    %v424 = vpack.c.bf16 %v402, %v402
    %v425 = vpack.c.bf16 %v403, %v403
    %v426 = vpack.c.bf16 %v404, %v404
    %v427 = vpack.c.bf16 %v405, %v405
    %v428 = vld [vmem:[#allocation2] sm:$0xff]
    %v429 = vld [vmem:[#allocation2 + $0x8] sm:$0xff]
    %v430 = vld [vmem:[#allocation2 + $0x10] sm:$0xff]
    %v431 = vld [vmem:[#allocation2 + $0x18] sm:$0xff]
    %v432 = vld [vmem:[#allocation2 + $0x20] sm:$0xff]
    %v433 = vld [vmem:[#allocation2 + $0x28] sm:$0xff]
    %v434 = vld [vmem:[#allocation2 + $0x30] sm:$0xff]
    %v435 = vld [vmem:[#allocation2 + $0x38] sm:$0xff]
    %v436 = vld [vmem:[#allocation2 + $0x40] sm:$0xff]
    %v437 = vld [vmem:[#allocation2 + $0x48] sm:$0xff]
    %v438 = vld [vmem:[#allocation2 + $0x50] sm:$0xff]
    %v439 = vld [vmem:[#allocation2 + $0x58] sm:$0xff]
    %v440 = vld [vmem:[#allocation2 + $0x60] sm:$0xff]
    %v441 = vld [vmem:[#allocation2 + $0x68] sm:$0xff]
    %v442 = vld [vmem:[#allocation2 + $0x70] sm:$0xff]
    %v443 = vld [vmem:[#allocation2 + $0x78] sm:$0xff]
    %v444 = vld [vmem:[#allocation2 + $0x80] sm:$0xff]
    %v445 = vld [vmem:[#allocation2 + $0x88] sm:$0xff]
    %v446 = vld [vmem:[#allocation2 + $0x90] sm:$0xff]
    %v447 = vld [vmem:[#allocation2 + $0x98] sm:$0xff]
    %v448 = vld [vmem:[#allocation2 + $0xa0] sm:$0xff]
    %v449 = vld [vmem:[#allocation2 + $0xa8] sm:$0xff]
    %v450 = vld [vmem:[#allocation2 + $0xb0] sm:$0xff]
    %v451 = vld [vmem:[#allocation2 + $0xb8] sm:$0xff]
    %v452 = vld [vmem:[#allocation2 + $0xc0] sm:$0xff]
    %v453 = vld [vmem:[#allocation2 + $0xc8] sm:$0xff]
    %v454 = vld [vmem:[#allocation2 + $0xd0] sm:$0xff]
    %v455 = vld [vmem:[#allocation2 + $0xd8] sm:$0xff]
    %v456 = vld [vmem:[#allocation2 + $0xe0] sm:$0xff]
    %v457 = vld [vmem:[#allocation2 + $0xe8] sm:$0xff]
    %v458 = vld [vmem:[#allocation2 + $0xf0] sm:$0xff]
    %v459 = vld [vmem:[#allocation2 + $0xf8] sm:$0xff]
    %v460 = vld [vmem:[#allocation2 + $0x100] sm:$0xff]
    %v461 = vld [vmem:[#allocation2 + $0x108] sm:$0xff]
    %v462 = vld [vmem:[#allocation2 + $0x110] sm:$0xff]
    %v463 = vld [vmem:[#allocation2 + $0x118] sm:$0xff]
    %v464 = vld [vmem:[#allocation2 + $0x120] sm:$0xff]
    %v465 = vld [vmem:[#allocation2 + $0x128] sm:$0xff]
    %v466 = vld [vmem:[#allocation2 + $0x130] sm:$0xff]
    %v467 = vld [vmem:[#allocation2 + $0x138] sm:$0xff]
    %v468 = vld [vmem:[#allocation2 + $0x140] sm:$0xff]
    %v469 = vld [vmem:[#allocation2 + $0x148] sm:$0xff]
    %v470 = vld [vmem:[#allocation2 + $0x150] sm:$0xff]
    %v471 = vld [vmem:[#allocation2 + $0x158] sm:$0xff]
    %v472 = vld [vmem:[#allocation2 + $0x160] sm:$0xff]
    %v473 = vld [vmem:[#allocation2 + $0x168] sm:$0xff]
    %v474 = vld [vmem:[#allocation2 + $0x170] sm:$0xff]
    %v475 = vld [vmem:[#allocation2 + $0x178] sm:$0xff]
    %v476 = vld [vmem:[#allocation2 + $0x180] sm:$0xff]
    %v477 = vld [vmem:[#allocation2 + $0x188] sm:$0xff]
    %v478 = vld [vmem:[#allocation2 + $0x190] sm:$0xff]
    %v479 = vld [vmem:[#allocation2 + $0x198] sm:$0xff]
    %v480 = vld [vmem:[#allocation2 + $0x1a0] sm:$0xff]
    %v481 = vld [vmem:[#allocation2 + $0x1a8] sm:$0xff]
    %v482 = vld [vmem:[#allocation2 + $0x1b0] sm:$0xff]
    %v483 = vld [vmem:[#allocation2 + $0x1b8] sm:$0xff]
    %v484 = vld [vmem:[#allocation2 + $0x1c0] sm:$0xff]
    %v485 = vld [vmem:[#allocation2 + $0x1c8] sm:$0xff]
    %v486 = vld [vmem:[#allocation2 + $0x1d0] sm:$0xff]
    %v487 = vld [vmem:[#allocation2 + $0x1d8] sm:$0xff]
    %v488 = vld [vmem:[#allocation2 + $0x1e0] sm:$0xff]
    %v489 = vld [vmem:[#allocation2 + $0x1e8] sm:$0xff]
    %v490 = vld [vmem:[#allocation2 + $0x1f0] sm:$0xff]
    %v491 = vld [vmem:[#allocation2 + $0x1f8] sm:$0xff]
    %v492 = vld [vmem:[#allocation2 + $0x200] sm:$0xff]
    %v493 = vld [vmem:[#allocation2 + $0x208] sm:$0xff]
    %v494 = vld [vmem:[#allocation2 + $0x210] sm:$0xff]
    %v495 = vld [vmem:[#allocation2 + $0x218] sm:$0xff]
    %v496 = vld [vmem:[#allocation2 + $0x220] sm:$0xff]
    %v497 = vld [vmem:[#allocation2 + $0x228] sm:$0xff]
    %v498 = vld [vmem:[#allocation2 + $0x230] sm:$0xff]
    %v499 = vld [vmem:[#allocation2 + $0x238] sm:$0xff]
    %v500 = vld [vmem:[#allocation2 + $0x240] sm:$0xff]
    %v501 = vld [vmem:[#allocation2 + $0x248] sm:$0xff]
    %v502 = vld [vmem:[#allocation2 + $0x250] sm:$0xff]
    %v503 = vld [vmem:[#allocation2 + $0x258] sm:$0xff]
    %v504 = vld [vmem:[#allocation2 + $0x260] sm:$0xff]
    %v505 = vld [vmem:[#allocation2 + $0x268] sm:$0xff]
    %v506 = vld [vmem:[#allocation2 + $0x270] sm:$0xff]
    %v507 = vld [vmem:[#allocation2 + $0x278] sm:$0xff]
    %v508 = vld [vmem:[#allocation2 + $0x280] sm:$0xff]
    %v509 = vld [vmem:[#allocation2 + $0x288] sm:$0xff]
    %v510 = vld [vmem:[#allocation2 + $0x290] sm:$0xff]
    %v511 = vld [vmem:[#allocation2 + $0x298] sm:$0xff]
    %v512 = vld [vmem:[#allocation2 + $0x2a0] sm:$0xff]
    %v513 = vld [vmem:[#allocation2 + $0x2a8] sm:$0xff]
    %v514 = vld [vmem:[#allocation2 + $0x2b0] sm:$0xff]
    %v515 = vld [vmem:[#allocation2 + $0x2b8] sm:$0xff]
    %v516 = vld [vmem:[#allocation2 + $0x2c0] sm:$0xff]
    %v517 = vld [vmem:[#allocation2 + $0x2c8] sm:$0xff]
    %v518 = vld [vmem:[#allocation2 + $0x2d0] sm:$0xff]
    %v519 = vld [vmem:[#allocation2 + $0x2d8] sm:$0xff]
    %v520 = vld [vmem:[#allocation2 + $0x2e0] sm:$0xff]
    %v521 = vld [vmem:[#allocation2 + $0x2e8] sm:$0xff]
    %v522 = vld [vmem:[#allocation2 + $0x2f0] sm:$0xff]
    %v523 = vld [vmem:[#allocation2 + $0x2f8] sm:$0xff]
    %v524 = vld [vmem:[#allocation2 + $0x300] sm:$0xff]
    %v525 = vld [vmem:[#allocation2 + $0x308] sm:$0xff]
    %v526 = vld [vmem:[#allocation2 + $0x310] sm:$0xff]
    %v527 = vld [vmem:[#allocation2 + $0x318] sm:$0xff]
    %v528 = vld [vmem:[#allocation2 + $0x320] sm:$0xff]
    %v529 = vld [vmem:[#allocation2 + $0x328] sm:$0xff]
    %v530 = vld [vmem:[#allocation2 + $0x330] sm:$0xff]
    %v531 = vld [vmem:[#allocation2 + $0x338] sm:$0xff]
    %v532 = vld [vmem:[#allocation2 + $0x340] sm:$0xff]
    %v533 = vld [vmem:[#allocation2 + $0x348] sm:$0xff]
    %v534 = vld [vmem:[#allocation2 + $0x350] sm:$0xff]
    %v535 = vld [vmem:[#allocation2 + $0x358] sm:$0xff]
    %v536 = vld [vmem:[#allocation2 + $0x360] sm:$0xff]
    %v537 = vld [vmem:[#allocation2 + $0x368] sm:$0xff]
    %v538 = vld [vmem:[#allocation2 + $0x370] sm:$0xff]
    %v539 = vld [vmem:[#allocation2 + $0x378] sm:$0xff]
    %v540 = vld [vmem:[#allocation2 + $0x380] sm:$0xff]
    %v541 = vld [vmem:[#allocation2 + $0x388] sm:$0xff]
    %v542 = vld [vmem:[#allocation2 + $0x390] sm:$0xff]
    %v543 = vld [vmem:[#allocation2 + $0x398] sm:$0xff]
    %v544 = vld [vmem:[#allocation2 + $0x3a0] sm:$0xff]
    %v545 = vld [vmem:[#allocation2 + $0x3a8] sm:$0xff]
    %v546 = vld [vmem:[#allocation2 + $0x3b0] sm:$0xff]
    %v547 = vld [vmem:[#allocation2 + $0x3b8] sm:$0xff]
    %v548 = vld [vmem:[#allocation2 + $0x3c0] sm:$0xff]
    %v549 = vld [vmem:[#allocation2 + $0x3c8] sm:$0xff]
    %v550 = vld [vmem:[#allocation2 + $0x3d0] sm:$0xff]
    %v551 = vld [vmem:[#allocation2 + $0x3d8] sm:$0xff]
    %v552 = vld [vmem:[#allocation2 + $0x3e0] sm:$0xff]
    %v553 = vld [vmem:[#allocation2 + $0x3e8] sm:$0xff]
    %v554 = vld [vmem:[#allocation2 + $0x3f0] sm:$0xff]
    %v555 = vld [vmem:[#allocation2 + $0x3f8] sm:$0xff]
    %v684 = vunpack.c.l.b16 %v428
    %v685 = vunpack.c.h.b16 %v428
    %v686 = vunpack.c.l.b16 %v429
    %v687 = vunpack.c.h.b16 %v429
    %v688 = vunpack.c.l.b16 %v430
    %v689 = vunpack.c.h.b16 %v430
    %v690 = vunpack.c.l.b16 %v431
    %v691 = vunpack.c.h.b16 %v431
    %v692 = vunpack.c.l.b16 %v432
    %v693 = vunpack.c.h.b16 %v432
    %v694 = vunpack.c.l.b16 %v433
    %v695 = vunpack.c.h.b16 %v433
    %v696 = vunpack.c.l.b16 %v434
    %v697 = vunpack.c.h.b16 %v434
    %v698 = vunpack.c.l.b16 %v435
    %v699 = vunpack.c.h.b16 %v435
    %v700 = vunpack.c.l.b16 %v436
    %v701 = vunpack.c.h.b16 %v436
    %v702 = vunpack.c.l.b16 %v437
    %v703 = vunpack.c.h.b16 %v437
    %v704 = vunpack.c.l.b16 %v438
    %v705 = vunpack.c.h.b16 %v438
    %v706 = vunpack.c.l.b16 %v439
    %v707 = vunpack.c.h.b16 %v439
    %v708 = vunpack.c.l.b16 %v440
    %v709 = vunpack.c.h.b16 %v440
    %v710 = vunpack.c.l.b16 %v441
    %v711 = vunpack.c.h.b16 %v441
    %v712 = vunpack.c.l.b16 %v442
    %v713 = vunpack.c.h.b16 %v442
    %v714 = vunpack.c.l.b16 %v443
    %v715 = vunpack.c.h.b16 %v443
    %v716 = vunpack.c.l.b16 %v444
    %v717 = vunpack.c.h.b16 %v444
    %v718 = vunpack.c.l.b16 %v445
    %v719 = vunpack.c.h.b16 %v445
    %v720 = vunpack.c.l.b16 %v446
    %v721 = vunpack.c.h.b16 %v446
    %v722 = vunpack.c.l.b16 %v447
    %v723 = vunpack.c.h.b16 %v447
    %v724 = vunpack.c.l.b16 %v448
    %v725 = vunpack.c.h.b16 %v448
    %v726 = vunpack.c.l.b16 %v449
    %v727 = vunpack.c.h.b16 %v449
    %v728 = vunpack.c.l.b16 %v450
    %v729 = vunpack.c.h.b16 %v450
    %v730 = vunpack.c.l.b16 %v451
    %v731 = vunpack.c.h.b16 %v451
    %v732 = vunpack.c.l.b16 %v452
    %v733 = vunpack.c.h.b16 %v452
    %v734 = vunpack.c.l.b16 %v453
    %v735 = vunpack.c.h.b16 %v453
    %v736 = vunpack.c.l.b16 %v454
    %v737 = vunpack.c.h.b16 %v454
    %v738 = vunpack.c.l.b16 %v455
    %v739 = vunpack.c.h.b16 %v455
    %v740 = vunpack.c.l.b16 %v456
    %v741 = vunpack.c.h.b16 %v456
    %v742 = vunpack.c.l.b16 %v457
    %v743 = vunpack.c.h.b16 %v457
    %v744 = vunpack.c.l.b16 %v458
    %v745 = vunpack.c.h.b16 %v458
    %v746 = vunpack.c.l.b16 %v459
    %v747 = vunpack.c.h.b16 %v459
    %v748 = vunpack.c.l.b16 %v460
    %v749 = vunpack.c.h.b16 %v460
    %v750 = vunpack.c.l.b16 %v461
    %v751 = vunpack.c.h.b16 %v461
    %v752 = vunpack.c.l.b16 %v462
    %v753 = vunpack.c.h.b16 %v462
    %v754 = vunpack.c.l.b16 %v463
    %v755 = vunpack.c.h.b16 %v463
    %v756 = vunpack.c.l.b16 %v464
    %v757 = vunpack.c.h.b16 %v464
    %v758 = vunpack.c.l.b16 %v465
    %v759 = vunpack.c.h.b16 %v465
    %v760 = vunpack.c.l.b16 %v466
    %v761 = vunpack.c.h.b16 %v466
    %v762 = vunpack.c.l.b16 %v467
    %v763 = vunpack.c.h.b16 %v467
    %v764 = vunpack.c.l.b16 %v468
    %v765 = vunpack.c.h.b16 %v468
    %v766 = vunpack.c.l.b16 %v469
    %v767 = vunpack.c.h.b16 %v469
    %v768 = vunpack.c.l.b16 %v470
    %v769 = vunpack.c.h.b16 %v470
    %v770 = vunpack.c.l.b16 %v471
    %v771 = vunpack.c.h.b16 %v471
    %v772 = vunpack.c.l.b16 %v472
    %v773 = vunpack.c.h.b16 %v472
    %v774 = vunpack.c.l.b16 %v473
    %v775 = vunpack.c.h.b16 %v473
    %v776 = vunpack.c.l.b16 %v474
    %v777 = vunpack.c.h.b16 %v474
    %v778 = vunpack.c.l.b16 %v475
    %v779 = vunpack.c.h.b16 %v475
    %v780 = vunpack.c.l.b16 %v476
    %v781 = vunpack.c.h.b16 %v476
    %v782 = vunpack.c.l.b16 %v477
    %v783 = vunpack.c.h.b16 %v477
    %v784 = vunpack.c.l.b16 %v478
    %v785 = vunpack.c.h.b16 %v478
    %v786 = vunpack.c.l.b16 %v479
    %v787 = vunpack.c.h.b16 %v479
    %v788 = vunpack.c.l.b16 %v480
    %v789 = vunpack.c.h.b16 %v480
    %v790 = vunpack.c.l.b16 %v481
    %v791 = vunpack.c.h.b16 %v481
    %v792 = vunpack.c.l.b16 %v482
    %v793 = vunpack.c.h.b16 %v482
    %v794 = vunpack.c.l.b16 %v483
    %v795 = vunpack.c.h.b16 %v483
    %v796 = vunpack.c.l.b16 %v484
    %v797 = vunpack.c.h.b16 %v484
    %v798 = vunpack.c.l.b16 %v485
    %v799 = vunpack.c.h.b16 %v485
    %v800 = vunpack.c.l.b16 %v486
    %v801 = vunpack.c.h.b16 %v486
    %v802 = vunpack.c.l.b16 %v487
    %v803 = vunpack.c.h.b16 %v487
    %v804 = vunpack.c.l.b16 %v488
    %v805 = vunpack.c.h.b16 %v488
    %v806 = vunpack.c.l.b16 %v489
    %v807 = vunpack.c.h.b16 %v489
    %v808 = vunpack.c.l.b16 %v490
    %v809 = vunpack.c.h.b16 %v490
    %v810 = vunpack.c.l.b16 %v491
    %v811 = vunpack.c.h.b16 %v491
    %v812 = vunpack.c.l.b16 %v492
    %v813 = vunpack.c.h.b16 %v492
    %v814 = vunpack.c.l.b16 %v493
    %v815 = vunpack.c.h.b16 %v493
    %v816 = vunpack.c.l.b16 %v494
    %v817 = vunpack.c.h.b16 %v494
    %v818 = vunpack.c.l.b16 %v495
    %v819 = vunpack.c.h.b16 %v495
    %v820 = vunpack.c.l.b16 %v496
    %v821 = vunpack.c.h.b16 %v496
    %v822 = vunpack.c.l.b16 %v497
    %v823 = vunpack.c.h.b16 %v497
    %v824 = vunpack.c.l.b16 %v498
    %v825 = vunpack.c.h.b16 %v498
    %v826 = vunpack.c.l.b16 %v499
    %v827 = vunpack.c.h.b16 %v499
    %v828 = vunpack.c.l.b16 %v500
    %v829 = vunpack.c.h.b16 %v500
    %v830 = vunpack.c.l.b16 %v501
    %v831 = vunpack.c.h.b16 %v501
    %v832 = vunpack.c.l.b16 %v502
    %v833 = vunpack.c.h.b16 %v502
    %v834 = vunpack.c.l.b16 %v503
    %v835 = vunpack.c.h.b16 %v503
    %v836 = vunpack.c.l.b16 %v504
    %v837 = vunpack.c.h.b16 %v504
    %v838 = vunpack.c.l.b16 %v505
    %v839 = vunpack.c.h.b16 %v505
    %v840 = vunpack.c.l.b16 %v506
    %v841 = vunpack.c.h.b16 %v506
    %v842 = vunpack.c.l.b16 %v507
    %v843 = vunpack.c.h.b16 %v507
    %v844 = vunpack.c.l.b16 %v508
    %v845 = vunpack.c.h.b16 %v508
    %v846 = vunpack.c.l.b16 %v509
    %v847 = vunpack.c.h.b16 %v509
    %v848 = vunpack.c.l.b16 %v510
    %v849 = vunpack.c.h.b16 %v510
    %v850 = vunpack.c.l.b16 %v511
    %v851 = vunpack.c.h.b16 %v511
    %v852 = vunpack.c.l.b16 %v512
    %v853 = vunpack.c.h.b16 %v512
    %v854 = vunpack.c.l.b16 %v513
    %v855 = vunpack.c.h.b16 %v513
    %v856 = vunpack.c.l.b16 %v514
    %v857 = vunpack.c.h.b16 %v514
    %v858 = vunpack.c.l.b16 %v515
    %v859 = vunpack.c.h.b16 %v515
    %v860 = vunpack.c.l.b16 %v516
    %v861 = vunpack.c.h.b16 %v516
    %v862 = vunpack.c.l.b16 %v517
    %v863 = vunpack.c.h.b16 %v517
    %v864 = vunpack.c.l.b16 %v518
    %v865 = vunpack.c.h.b16 %v518
    %v866 = vunpack.c.l.b16 %v519
    %v867 = vunpack.c.h.b16 %v519
    %v868 = vunpack.c.l.b16 %v520
    %v869 = vunpack.c.h.b16 %v520
    %v870 = vunpack.c.l.b16 %v521
    %v871 = vunpack.c.h.b16 %v521
    %v872 = vunpack.c.l.b16 %v522
    %v873 = vunpack.c.h.b16 %v522
    %v874 = vunpack.c.l.b16 %v523
    %v875 = vunpack.c.h.b16 %v523
    %v876 = vunpack.c.l.b16 %v524
    %v877 = vunpack.c.h.b16 %v524
    %v878 = vunpack.c.l.b16 %v525
    %v879 = vunpack.c.h.b16 %v525
    %v880 = vunpack.c.l.b16 %v526
    %v881 = vunpack.c.h.b16 %v526
    %v882 = vunpack.c.l.b16 %v527
    %v883 = vunpack.c.h.b16 %v527
    %v884 = vunpack.c.l.b16 %v528
    %v885 = vunpack.c.h.b16 %v528
    %v886 = vunpack.c.l.b16 %v529
    %v887 = vunpack.c.h.b16 %v529
    %v888 = vunpack.c.l.b16 %v530
    %v889 = vunpack.c.h.b16 %v530
    %v890 = vunpack.c.l.b16 %v531
    %v891 = vunpack.c.h.b16 %v531
    %v892 = vunpack.c.l.b16 %v532
    %v893 = vunpack.c.h.b16 %v532
    %v894 = vunpack.c.l.b16 %v533
    %v895 = vunpack.c.h.b16 %v533
    %v896 = vunpack.c.l.b16 %v534
    %v897 = vunpack.c.h.b16 %v534
    %v898 = vunpack.c.l.b16 %v535
    %v899 = vunpack.c.h.b16 %v535
    %v900 = vunpack.c.l.b16 %v536
    %v901 = vunpack.c.h.b16 %v536
    %v902 = vunpack.c.l.b16 %v537
    %v903 = vunpack.c.h.b16 %v537
    %v904 = vunpack.c.l.b16 %v538
    %v905 = vunpack.c.h.b16 %v538
    %v906 = vunpack.c.l.b16 %v539
    %v907 = vunpack.c.h.b16 %v539
    %v908 = vunpack.c.l.b16 %v540
    %v909 = vunpack.c.h.b16 %v540
    %v910 = vunpack.c.l.b16 %v541
    %v911 = vunpack.c.h.b16 %v541
    %v912 = vunpack.c.l.b16 %v542
    %v913 = vunpack.c.h.b16 %v542
    %v914 = vunpack.c.l.b16 %v543
    %v915 = vunpack.c.h.b16 %v543
    %v916 = vunpack.c.l.b16 %v544
    %v917 = vunpack.c.h.b16 %v544
    %v918 = vunpack.c.l.b16 %v545
    %v919 = vunpack.c.h.b16 %v545
    %v920 = vunpack.c.l.b16 %v546
    %v921 = vunpack.c.h.b16 %v546
    %v922 = vunpack.c.l.b16 %v547
    %v923 = vunpack.c.h.b16 %v547
    %v924 = vunpack.c.l.b16 %v548
    %v925 = vunpack.c.h.b16 %v548
    %v926 = vunpack.c.l.b16 %v549
    %v927 = vunpack.c.h.b16 %v549
    %v928 = vunpack.c.l.b16 %v550
    %v929 = vunpack.c.h.b16 %v550
    %v930 = vunpack.c.l.b16 %v551
    %v931 = vunpack.c.h.b16 %v551
    %v932 = vunpack.c.l.b16 %v552
    %v933 = vunpack.c.h.b16 %v552
    %v934 = vunpack.c.l.b16 %v553
    %v935 = vunpack.c.h.b16 %v553
    %v936 = vunpack.c.l.b16 %v554
    %v937 = vunpack.c.h.b16 %v554
    %v938 = vunpack.c.l.b16 %v555
    %v939 = vunpack.c.h.b16 %v555
    %v940 = vpack.c.b16 %v688, %v684
    %v941 = vpack.c.b16 %v689, %v685
    %v942 = vpack.c.b16 %v690, %v686
    %v943 = vpack.c.b16 %v691, %v687
    %v944 = vpack.c.b16 %v696, %v692
    %v945 = vpack.c.b16 %v697, %v693
    %v946 = vpack.c.b16 %v698, %v694
    %v947 = vpack.c.b16 %v699, %v695
    %v948 = vpack.c.b16 %v704, %v700
    %v949 = vpack.c.b16 %v705, %v701
    %v950 = vpack.c.b16 %v706, %v702
    %v951 = vpack.c.b16 %v707, %v703
    %v952 = vpack.c.b16 %v712, %v708
    %v953 = vpack.c.b16 %v713, %v709
    %v954 = vpack.c.b16 %v714, %v710
    %v955 = vpack.c.b16 %v715, %v711
    %v956 = vpack.c.b16 %v720, %v716
    %v957 = vpack.c.b16 %v721, %v717
    %v958 = vpack.c.b16 %v722, %v718
    %v959 = vpack.c.b16 %v723, %v719
    %v960 = vpack.c.b16 %v728, %v724
    %v961 = vpack.c.b16 %v729, %v725
    %v962 = vpack.c.b16 %v730, %v726
    %v963 = vpack.c.b16 %v731, %v727
    %v964 = vpack.c.b16 %v736, %v732
    %v965 = vpack.c.b16 %v737, %v733
    %v966 = vpack.c.b16 %v738, %v734
    %v967 = vpack.c.b16 %v739, %v735
    %v968 = vpack.c.b16 %v744, %v740
    %v969 = vpack.c.b16 %v745, %v741
    %v970 = vpack.c.b16 %v746, %v742
    %v971 = vpack.c.b16 %v747, %v743
    %v972 = vpack.c.b16 %v752, %v748
    %v973 = vpack.c.b16 %v753, %v749
    %v974 = vpack.c.b16 %v754, %v750
    %v975 = vpack.c.b16 %v755, %v751
    %v976 = vpack.c.b16 %v760, %v756
    %v977 = vpack.c.b16 %v761, %v757
    %v978 = vpack.c.b16 %v762, %v758
    %v979 = vpack.c.b16 %v763, %v759
    %v980 = vpack.c.b16 %v768, %v764
    %v981 = vpack.c.b16 %v769, %v765
    %v982 = vpack.c.b16 %v770, %v766
    %v983 = vpack.c.b16 %v771, %v767
    %v984 = vpack.c.b16 %v776, %v772
    %v985 = vpack.c.b16 %v777, %v773
    %v986 = vpack.c.b16 %v778, %v774
    %v987 = vpack.c.b16 %v779, %v775
    %v988 = vpack.c.b16 %v784, %v780
    %v989 = vpack.c.b16 %v785, %v781
    %v990 = vpack.c.b16 %v786, %v782
    %v991 = vpack.c.b16 %v787, %v783
    %v992 = vpack.c.b16 %v792, %v788
    %v993 = vpack.c.b16 %v793, %v789
    %v994 = vpack.c.b16 %v794, %v790
    %v995 = vpack.c.b16 %v795, %v791
    %v996 = vpack.c.b16 %v800, %v796
    %v997 = vpack.c.b16 %v801, %v797
    %v998 = vpack.c.b16 %v802, %v798
    %v999 = vpack.c.b16 %v803, %v799
    %v1000 = vpack.c.b16 %v808, %v804
    %v1001 = vpack.c.b16 %v809, %v805
    %v1002 = vpack.c.b16 %v810, %v806
    %v1003 = vpack.c.b16 %v811, %v807
    %v1004 = vpack.c.b16 %v816, %v812
    %v1005 = vpack.c.b16 %v817, %v813
    %v1006 = vpack.c.b16 %v818, %v814
    %v1007 = vpack.c.b16 %v819, %v815
    %v1008 = vpack.c.b16 %v824, %v820
    %v1009 = vpack.c.b16 %v825, %v821
    %v1010 = vpack.c.b16 %v826, %v822
    %v1011 = vpack.c.b16 %v827, %v823
    %v1012 = vpack.c.b16 %v832, %v828
    %v1013 = vpack.c.b16 %v833, %v829
    %v1014 = vpack.c.b16 %v834, %v830
    %v1015 = vpack.c.b16 %v835, %v831
    %v1016 = vpack.c.b16 %v840, %v836
    %v1017 = vpack.c.b16 %v841, %v837
    %v1018 = vpack.c.b16 %v842, %v838
    %v1019 = vpack.c.b16 %v843, %v839
    %v1020 = vpack.c.b16 %v848, %v844
    %v1021 = vpack.c.b16 %v849, %v845
    %v1022 = vpack.c.b16 %v850, %v846
    %v1023 = vpack.c.b16 %v851, %v847
    %v1024 = vpack.c.b16 %v856, %v852
    %v1025 = vpack.c.b16 %v857, %v853
    %v1026 = vpack.c.b16 %v858, %v854
    %v1027 = vpack.c.b16 %v859, %v855
    %v1028 = vpack.c.b16 %v864, %v860
    %v1029 = vpack.c.b16 %v865, %v861
    %v1030 = vpack.c.b16 %v866, %v862
    %v1031 = vpack.c.b16 %v867, %v863
    %v1032 = vpack.c.b16 %v872, %v868
    %v1033 = vpack.c.b16 %v873, %v869
    %v1034 = vpack.c.b16 %v874, %v870
    %v1035 = vpack.c.b16 %v875, %v871
    %v1036 = vpack.c.b16 %v880, %v876
    %v1037 = vpack.c.b16 %v881, %v877
    %v1038 = vpack.c.b16 %v882, %v878
    %v1039 = vpack.c.b16 %v883, %v879
    %v1040 = vpack.c.b16 %v888, %v884
    %v1041 = vpack.c.b16 %v889, %v885
    %v1042 = vpack.c.b16 %v890, %v886
    %v1043 = vpack.c.b16 %v891, %v887
    %v1044 = vpack.c.b16 %v896, %v892
    %v1045 = vpack.c.b16 %v897, %v893
    %v1046 = vpack.c.b16 %v898, %v894
    %v1047 = vpack.c.b16 %v899, %v895
    %v1048 = vpack.c.b16 %v904, %v900
    %v1049 = vpack.c.b16 %v905, %v901
    %v1050 = vpack.c.b16 %v906, %v902
    %v1051 = vpack.c.b16 %v907, %v903
    %v1052 = vpack.c.b16 %v912, %v908
    %v1053 = vpack.c.b16 %v913, %v909
    %v1054 = vpack.c.b16 %v914, %v910
    %v1055 = vpack.c.b16 %v915, %v911
    %v1056 = vpack.c.b16 %v920, %v916
    %v1057 = vpack.c.b16 %v921, %v917
    %v1058 = vpack.c.b16 %v922, %v918
    %v1059 = vpack.c.b16 %v923, %v919
    %v1060 = vpack.c.b16 %v928, %v924
    %v1061 = vpack.c.b16 %v929, %v925
    %v1062 = vpack.c.b16 %v930, %v926
    %v1063 = vpack.c.b16 %v931, %v927
    %v1064 = vpack.c.b16 %v936, %v932
    %v1065 = vpack.c.b16 %v937, %v933
    %v1066 = vpack.c.b16 %v938, %v934
    %v1067 = vpack.c.b16 %v939, %v935
    %1196 = vmatprep.subr.bf16.mxu0 %v969
    %1197 = vmatpush1.bf16.msra.mxu0 %v968
    %1198 = vmatprep.subr.bf16.mxu0 %v965
    %1199 = vmatpush1.bf16.msra.mxu0 %v964
    %1200 = vmatprep.subr.bf16.mxu0 %v961
    %1201 = vmatpush1.bf16.msra.mxu0 %v960
    %1202 = vmatprep.subr.bf16.mxu0 %v957
    %1203 = vmatpush1.bf16.msra.mxu0 %v956
    %1204 = vmatprep.subr.bf16.mxu0 %v953
    %1205 = vmatpush1.bf16.msra.mxu0 %v952
    %1206 = vmatprep.subr.bf16.mxu0 %v949
    %1207 = vmatpush1.bf16.msra.mxu0 %v948
    %1208 = vmatprep.subr.bf16.mxu0 %v945
    %1209 = vmatpush1.bf16.msra.mxu0 %v944
    %1210 = vmatprep.subr.bf16.mxu0 %v941
    %1211 = vmatpush1.bf16.msra.mxu0 %v940
    %1212 = vmatprep.subr.bf16.mxu0 %v1001
    %1213 = vmatpush2.bf16.msra.mxu0 %v1000
    %1214 = vmatprep.subr.bf16.mxu0 %v997
    %1215 = vmatpush2.bf16.msra.mxu0 %v996
    %1216 = vmatprep.subr.bf16.mxu0 %v993
    %1217 = vmatpush2.bf16.msra.mxu0 %v992
    %1218 = vmatprep.subr.bf16.mxu0 %v989
    %1219 = vmatpush2.bf16.msra.mxu0 %v988
    %1220 = vmatprep.subr.bf16.mxu0 %v985
    %1221 = vmatpush2.bf16.msra.mxu0 %v984
    %1222 = vmatprep.subr.bf16.mxu0 %v981
    %1223 = vmatpush2.bf16.msra.mxu0 %v980
    %1224 = vmatprep.subr.bf16.mxu0 %v977
    %1225 = vmatpush2.bf16.msra.mxu0 %v976
    %1226 = vmatprep.subr.bf16.mxu0 %v973
    %1227 = vmatpush2.bf16.msra.mxu0 %v972
    %1228 = vmatprep.mubr.bf16.mxu0 %v425
    %1229 = vmatmul.mubr.bf16.gmra.mxu0 %v424
    %v1230 = vpop.f32.mrf.mxu0
    %v1231 = vadd.f32 0.0, %v1230
    %v1232 = vpop.f32.mrf.mxu0
    %v1233 = vadd.f32 0.0, %v1232
    %v1234 = vpop.f32.mrf.mxu0
    %v1235 = vpop.f32.mrf.mxu0
    %1236 = vdwg.mxu0
    %1237 = vmatprep.subr.bf16.mxu0 %v1033
    %1238 = vmatpush1.bf16.msra.mxu0 %v1032
    %1239 = vmatprep.subr.bf16.mxu0 %v1029
    %1240 = vmatpush1.bf16.msra.mxu0 %v1028
    %1241 = vmatprep.subr.bf16.mxu0 %v1025
    %1242 = vmatpush1.bf16.msra.mxu0 %v1024
    %1243 = vmatprep.subr.bf16.mxu0 %v1021
    %1244 = vmatpush1.bf16.msra.mxu0 %v1020
    %1245 = vmatprep.subr.bf16.mxu0 %v1017
    %1246 = vmatpush1.bf16.msra.mxu0 %v1016
    %1247 = vmatprep.subr.bf16.mxu0 %v1013
    %1248 = vmatpush1.bf16.msra.mxu0 %v1012
    %1249 = vmatprep.subr.bf16.mxu0 %v1009
    %1250 = vmatpush1.bf16.msra.mxu0 %v1008
    %1251 = vmatprep.subr.bf16.mxu0 %v1005
    %1252 = vmatpush1.bf16.msra.mxu0 %v1004
    %1253 = vmatprep.subr.bf16.mxu0 %v1065
    %1254 = vmatpush2.bf16.msra.mxu0 %v1064
    %1255 = vmatprep.subr.bf16.mxu0 %v1061
    %1256 = vmatpush2.bf16.msra.mxu0 %v1060
    %1257 = vmatprep.subr.bf16.mxu0 %v1057
    %1258 = vmatpush2.bf16.msra.mxu0 %v1056
    %1259 = vmatprep.subr.bf16.mxu0 %v1053
    %1260 = vmatpush2.bf16.msra.mxu0 %v1052
    %1261 = vmatprep.subr.bf16.mxu0 %v1049
    %1262 = vmatpush2.bf16.msra.mxu0 %v1048
    %1263 = vmatprep.subr.bf16.mxu0 %v1045
    %1264 = vmatpush2.bf16.msra.mxu0 %v1044
    %1265 = vmatprep.subr.bf16.mxu0 %v1041
    %1266 = vmatpush2.bf16.msra.mxu0 %v1040
    %1267 = vmatprep.subr.bf16.mxu0 %v1037
    %1268 = vmatpush2.bf16.msra.mxu0 %v1036
    %1269 = vmatprep.mubr.bf16.mxu0 %v427
    %1270 = vmatmul.mubr.bf16.gmra.mxu0 %v426
    %v1271 = vpop.f32.mrf.mxu0
    %v1272 = vadd.f32 %v1231, %v1271
    %v1273 = vpop.f32.mrf.mxu0
    %v1274 = vadd.f32 %v1233, %v1273
    %v1275 = vpop.f32.mrf.mxu0
    %v1276 = vpop.f32.mrf.mxu0
    %1277 = vdwg.mxu0
    %1278 = vmatprep.subr.bf16.mxu0 %v971
    %1279 = vmatpush1.bf16.msra.mxu0 %v970
    %1280 = vmatprep.subr.bf16.mxu0 %v967
    %1281 = vmatpush1.bf16.msra.mxu0 %v966
    %1282 = vmatprep.subr.bf16.mxu0 %v963
    %1283 = vmatpush1.bf16.msra.mxu0 %v962
    %1284 = vmatprep.subr.bf16.mxu0 %v959
    %1285 = vmatpush1.bf16.msra.mxu0 %v958
    %1286 = vmatprep.subr.bf16.mxu0 %v955
    %1287 = vmatpush1.bf16.msra.mxu0 %v954
    %1288 = vmatprep.subr.bf16.mxu0 %v951
    %1289 = vmatpush1.bf16.msra.mxu0 %v950
    %1290 = vmatprep.subr.bf16.mxu0 %v947
    %1291 = vmatpush1.bf16.msra.mxu0 %v946
    %1292 = vmatprep.subr.bf16.mxu0 %v943
    %1293 = vmatpush1.bf16.msra.mxu0 %v942
    %1294 = vmatprep.subr.bf16.mxu0 %v1003
    %1295 = vmatpush2.bf16.msra.mxu0 %v1002
    %1296 = vmatprep.subr.bf16.mxu0 %v999
    %1297 = vmatpush2.bf16.msra.mxu0 %v998
    %1298 = vmatprep.subr.bf16.mxu0 %v995
    %1299 = vmatpush2.bf16.msra.mxu0 %v994
    %1300 = vmatprep.subr.bf16.mxu0 %v991
    %1301 = vmatpush2.bf16.msra.mxu0 %v990
    %1302 = vmatprep.subr.bf16.mxu0 %v987
    %1303 = vmatpush2.bf16.msra.mxu0 %v986
    %1304 = vmatprep.subr.bf16.mxu0 %v983
    %1305 = vmatpush2.bf16.msra.mxu0 %v982
    %1306 = vmatprep.subr.bf16.mxu0 %v979
    %1307 = vmatpush2.bf16.msra.mxu0 %v978
    %1308 = vmatprep.subr.bf16.mxu0 %v975
    %1309 = vmatpush2.bf16.msra.mxu0 %v974
    %1310 = vmatprep.mubr.bf16.mxu0 %v425
    %1311 = vmatmul.mubr.bf16.gmra.mxu0 %v424
    %v1312 = vpop.f32.mrf.mxu0
    %v1313 = vadd.f32 0.0, %v1312
    %v1314 = vpop.f32.mrf.mxu0
    %v1315 = vadd.f32 0.0, %v1314
    %v1316 = vpop.f32.mrf.mxu0
    %v1317 = vpop.f32.mrf.mxu0
    %1318 = vdwg.mxu0
    %1319 = vmatprep.subr.bf16.mxu0 %v1035
    %1320 = vmatpush1.bf16.msra.mxu0 %v1034
    %1321 = vmatprep.subr.bf16.mxu0 %v1031
    %1322 = vmatpush1.bf16.msra.mxu0 %v1030
    %1323 = vmatprep.subr.bf16.mxu0 %v1027
    %1324 = vmatpush1.bf16.msra.mxu0 %v1026
    %1325 = vmatprep.subr.bf16.mxu0 %v1023
    %1326 = vmatpush1.bf16.msra.mxu0 %v1022
    %1327 = vmatprep.subr.bf16.mxu0 %v1019
    %1328 = vmatpush1.bf16.msra.mxu0 %v1018
    %1329 = vmatprep.subr.bf16.mxu0 %v1015
    %1330 = vmatpush1.bf16.msra.mxu0 %v1014
    %1331 = vmatprep.subr.bf16.mxu0 %v1011
    %1332 = vmatpush1.bf16.msra.mxu0 %v1010
    %1333 = vmatprep.subr.bf16.mxu0 %v1007
    %1334 = vmatpush1.bf16.msra.mxu0 %v1006
    %1335 = vmatprep.subr.bf16.mxu0 %v1067
    %1336 = vmatpush2.bf16.msra.mxu0 %v1066
    %1337 = vmatprep.subr.bf16.mxu0 %v1063
    %1338 = vmatpush2.bf16.msra.mxu0 %v1062
    %1339 = vmatprep.subr.bf16.mxu0 %v1059
    %1340 = vmatpush2.bf16.msra.mxu0 %v1058
    %1341 = vmatprep.subr.bf16.mxu0 %v1055
    %1342 = vmatpush2.bf16.msra.mxu0 %v1054
    %1343 = vmatprep.subr.bf16.mxu0 %v1051
    %1344 = vmatpush2.bf16.msra.mxu0 %v1050
    %1345 = vmatprep.subr.bf16.mxu0 %v1047
    %1346 = vmatpush2.bf16.msra.mxu0 %v1046
    %1347 = vmatprep.subr.bf16.mxu0 %v1043
    %1348 = vmatpush2.bf16.msra.mxu0 %v1042
    %1349 = vmatprep.subr.bf16.mxu0 %v1039
    %1350 = vmatpush2.bf16.msra.mxu0 %v1038
    %1351 = vmatprep.mubr.bf16.mxu0 %v427
    %1352 = vmatmul.mubr.bf16.gmra.mxu0 %v426
    %v1353 = vpop.f32.mrf.mxu0
    %v1354 = vadd.f32 %v1313, %v1353
    %v1355 = vpop.f32.mrf.mxu0
    %v1356 = vadd.f32 %v1315, %v1355
    %v1357 = vpop.f32.mrf.mxu0
    %v1358 = vpop.f32.mrf.mxu0
    %1359 = vdwg.mxu0
    %v1360 = vrot.slane %v1272, 4
    %v1361 = vadd.f32 %v1272, %v1360
    %v1362 = vrot.slane %v1361, 2
    %v1363 = vadd.f32 %v1361, %v1362
    %v1364 = vrot.slane %v1363, 1
    %v1365 = vadd.f32 %v1363, %v1364
    %v1366 = vrot.slane %v1274, 4
    %v1367 = vadd.f32 %v1274, %v1366
    %v1368 = vrot.slane %v1367, 2
    %v1369 = vadd.f32 %v1367, %v1368
    %v1370 = vrot.slane %v1369, 1
    %v1371 = vadd.f32 %v1369, %v1370
    %v1372 = vrot.slane %v1354, 4
    %v1373 = vadd.f32 %v1354, %v1372
    %v1374 = vrot.slane %v1373, 2
    %v1375 = vadd.f32 %v1373, %v1374
    %v1376 = vrot.slane %v1375, 1
    %v1377 = vadd.f32 %v1375, %v1376
    %v1378 = vrot.slane %v1356, 4
    %v1379 = vadd.f32 %v1356, %v1378
    %v1380 = vrot.slane %v1379, 2
    %v1381 = vadd.f32 %v1379, %v1380
    %v1382 = vrot.slane %v1381, 1
    %v1383 = vadd.f32 %v1381, %v1382
    %v1384 = vmul.f32 %v1365, %v271
    %v1385 = vmul.f32 %v1371, %v271
    %v1386 = vmul.f32 %v1377, %v271
    %v1387 = vmul.f32 %v1383, %v271
    %v1388 = vsub.f32 %v1272, %v1384
    %v1389 = vsub.f32 %v1274, %v1385
    %v1390 = vsub.f32 %v1354, %v1386
    %v1391 = vsub.f32 %v1356, %v1387
    %v1392 = vmul.f32 %v1388, %v1388
    %v1393 = vmul.f32 %v1389, %v1389
    %v1394 = vmul.f32 %v1390, %v1390
    %v1395 = vmul.f32 %v1391, %v1391
    %v1396 = vrot.slane %v1392, 4
    %v1397 = vadd.f32 %v1392, %v1396
    %v1398 = vrot.slane %v1397, 2
    %v1399 = vadd.f32 %v1397, %v1398
    %v1400 = vrot.slane %v1399, 1
    %v1401 = vadd.f32 %v1399, %v1400
    %v1402 = vrot.slane %v1393, 4
    %v1403 = vadd.f32 %v1393, %v1402
    %v1404 = vrot.slane %v1403, 2
    %v1405 = vadd.f32 %v1403, %v1404
    %v1406 = vrot.slane %v1405, 1
    %v1407 = vadd.f32 %v1405, %v1406
    %v1408 = vrot.slane %v1394, 4
    %v1409 = vadd.f32 %v1394, %v1408
    %v1410 = vrot.slane %v1409, 2
    %v1411 = vadd.f32 %v1409, %v1410
    %v1412 = vrot.slane %v1411, 1
    %v1413 = vadd.f32 %v1411, %v1412
    %v1414 = vrot.slane %v1395, 4
    %v1415 = vadd.f32 %v1395, %v1414
    %v1416 = vrot.slane %v1415, 2
    %v1417 = vadd.f32 %v1415, %v1416
    %v1418 = vrot.slane %v1417, 1
    %v1419 = vadd.f32 %v1417, %v1418
    %v1420 = vmul.f32 %v1401, %v271
    %v1421 = vmul.f32 %v1407, %v271
    %v1422 = vmul.f32 %v1413, %v271
    %v1423 = vmul.f32 %v1419, %v271
    %s1424 = scalar_lea.vmem [#allocation12], 1
    %v1425 = vld [vmem:[%s1424] ss:$8 sm:$0xf]
    %v1426 = vadd.f32 %v1420, 1e-05
    %v1427 = vadd.f32 %v1421, 1e-05
    %v1428 = vadd.f32 %v1422, 1e-05
    %v1429 = vadd.f32 %v1423, 1e-05
    %v1430 = vrsqrt.pop %v1426
    %v1431 = vrsqrt.pop %v1427
    %v1432 = vrsqrt.pop %v1428
    %v1433 = vrsqrt.pop %v1429
    %v1438 = vcombine.low %v1430, %v1431
    %v1439 = vcombine.low %v1432, %v1433
    %v1441 = vunpack.c.l.s4 1966171168
    %v1442 = vunpack.c.0.s8 %v1441
    %v1443 = vlaneseq
    %v1444 = vshrl.u32 %v1443, 7
    %v1445 = vsub.s32 %v1442, %v1444
    %v1446 = vrot.slane %v1438, %v1445
    %v1448 = vunpack.c.l.s4 1966171168
    %v1449 = vunpack.c.0.s8 %v1448
    %v1450 = vlaneseq
    %v1451 = vshrl.u32 %v1450, 7
    %v1452 = vsub.s32 %v1449, %v1451
    %v1453 = vrot.slane %v1439, %v1452
    %v1454 = vcombine.low %v1446, %v1453
    %v1456 = vunpack.c.l.s4 1966171168
    %v1457 = vunpack.c.0.s8 %v1456
    %v1458 = vlaneseq
    %v1459 = vshrl.u32 %v1458, 7
    %v1460 = vsub.s32 %v1457, %v1459
    %v1461 = vrot.slane %v1454, %v1460
    %v1463 = vmul.f32 %v1425, %v1461
    %v1465 = vlaneseq
    %v1466 = vshrl.u32 %v1465, 7
    %v1467 = vsub.s32 0, %v1466
    %v1468 = vrot.slane %v1463, %v1467
    %v1469 = vlaneseq
    %v1470 = vshrl.u32 %v1469, 7
    %v1471 = vsub.s32 1, %v1470
    %v1472 = vrot.slane %v1463, %v1471
    %v1473 = vlaneseq
    %v1474 = vshrl.u32 %v1473, 7
    %v1475 = vsub.s32 2, %v1474
    %v1476 = vrot.slane %v1463, %v1475
    %v1477 = vlaneseq
    %v1478 = vshrl.u32 %v1477, 7
    %v1479 = vsub.s32 3, %v1478
    %v1480 = vrot.slane %v1463, %v1479
    %v1485 = vmul.f32 %v1388, %v1468
    %v1486 = vmul.f32 %v1389, %v1472
    %v1487 = vmul.f32 %v1390, %v1476
    %v1488 = vmul.f32 %v1391, %v1480
    %s1489 = scalar_lea.vmem [#allocation13], 1
    %v1490 = vld [vmem:[%s1489] ss:$8 sm:$0xf]
    %v1492 = vlaneseq
    %v1493 = vshrl.u32 %v1492, 7
    %v1494 = vsub.s32 0, %v1493
    %v1495 = vrot.slane %v1490, %v1494
    %v1496 = vlaneseq
    %v1497 = vshrl.u32 %v1496, 7
    %v1498 = vsub.s32 1, %v1497
    %v1499 = vrot.slane %v1490, %v1498
    %v1500 = vlaneseq
    %v1501 = vshrl.u32 %v1500, 7
    %v1502 = vsub.s32 2, %v1501
    %v1503 = vrot.slane %v1490, %v1502
    %v1504 = vlaneseq
    %v1505 = vshrl.u32 %v1504, 7
    %v1506 = vsub.s32 3, %v1505
    %v1507 = vrot.slane %v1490, %v1506
    %v1512 = vadd.f32 %v1485, %v1495
    %v1513 = vadd.f32 %v1486, %v1499
    %v1514 = vadd.f32 %v1487, %v1503
    %v1515 = vadd.f32 %v1488, %v1507
    %v1516 = vmax.f32 %v1512, 0.0
    %v1517 = vmax.f32 %v1513, 0.0
    %v1518 = vmax.f32 %v1514, 0.0
    %v1519 = vmax.f32 %v1515, 0.0
    %s1520 = sshll.u32 %s407, 4
    %1521 = dma.done %s412, %s1520
    %s1522 = scalar_lea.hbm %s2, 32768
    // Predicated region
    $region58: #{tpu_custom_call.1} parent=1 // pred_check
      _
    $region59: #{tpu_custom_call.1} parent=1 // pred_check_branch
      %1524 = sbr.rel target = $region61
    $region60: #{tpu_custom_call.1} parent=1 // pred_region
      %1525 = sst [smem:[#allocation18]] [#allocation23]
      %1526 = sst [smem:[#allocation19]] [#allocation22]
    $region61: #{tpu_custom_call.1} parent=1 // pred_fallthru
      _
    %1528 = shalt.err (0)
    %s1530 = sshll.u32 [#allocation2], 4
    %s1531 = int_to_ptr.vmem [resolvable:$true] %s1530
    %1533 = dma.hbm_to_vmem [thread:$0]  %s1522, 16384, %s1531, [#allocation3]
    %v1534 = vpack.c.bf16 %v1516, %v1516
    %v1535 = vpack.c.bf16 %v1517, %v1517
    %v1536 = vpack.c.bf16 %v1518, %v1518
    %v1537 = vpack.c.bf16 %v1519, %v1519
    %v1538 = vld [vmem:[%s411] sm:$0xff]
    %v1539 = vld [vmem:[%s411 + $0x8] sm:$0xff]
    %v1540 = vld [vmem:[%s411 + $0x10] sm:$0xff]
    %v1541 = vld [vmem:[%s411 + $0x18] sm:$0xff]
    %v1542 = vld [vmem:[%s411 + $0x20] sm:$0xff]
    %v1543 = vld [vmem:[%s411 + $0x28] sm:$0xff]
    %v1544 = vld [vmem:[%s411 + $0x30] sm:$0xff]
    %v1545 = vld [vmem:[%s411 + $0x38] sm:$0xff]
    %v1546 = vld [vmem:[%s411 + $0x40] sm:$0xff]
    %v1547 = vld [vmem:[%s411 + $0x48] sm:$0xff]
    %v1548 = vld [vmem:[%s411 + $0x50] sm:$0xff]
    %v1549 = vld [vmem:[%s411 + $0x58] sm:$0xff]
    %v1550 = vld [vmem:[%s411 + $0x60] sm:$0xff]
    %v1551 = vld [vmem:[%s411 + $0x68] sm:$0xff]
    %v1552 = vld [vmem:[%s411 + $0x70] sm:$0xff]
    %v1553 = vld [vmem:[%s411 + $0x78] sm:$0xff]
    %v1554 = vld [vmem:[%s411 + $0x80] sm:$0xff]
    %v1555 = vld [vmem:[%s411 + $0x88] sm:$0xff]
    %v1556 = vld [vmem:[%s411 + $0x90] sm:$0xff]
    %v1557 = vld [vmem:[%s411 + $0x98] sm:$0xff]
    %v1558 = vld [vmem:[%s411 + $0xa0] sm:$0xff]
    %v1559 = vld [vmem:[%s411 + $0xa8] sm:$0xff]
    %v1560 = vld [vmem:[%s411 + $0xb0] sm:$0xff]
    %v1561 = vld [vmem:[%s411 + $0xb8] sm:$0xff]
    %v1562 = vld [vmem:[%s411 + $0xc0] sm:$0xff]
    %v1563 = vld [vmem:[%s411 + $0xc8] sm:$0xff]
    %v1564 = vld [vmem:[%s411 + $0xd0] sm:$0xff]
    %v1565 = vld [vmem:[%s411 + $0xd8] sm:$0xff]
    %v1566 = vld [vmem:[%s411 + $0xe0] sm:$0xff]
    %v1567 = vld [vmem:[%s411 + $0xe8] sm:$0xff]
    %v1568 = vld [vmem:[%s411 + $0xf0] sm:$0xff]
    %v1569 = vld [vmem:[%s411 + $0xf8] sm:$0xff]
    %v1570 = vld [vmem:[%s411 + $0x100] sm:$0xff]
    %v1571 = vld [vmem:[%s411 + $0x108] sm:$0xff]
    %v1572 = vld [vmem:[%s411 + $0x110] sm:$0xff]
    %v1573 = vld [vmem:[%s411 + $0x118] sm:$0xff]
    %v1574 = vld [vmem:[%s411 + $0x120] sm:$0xff]
    %v1575 = vld [vmem:[%s411 + $0x128] sm:$0xff]
    %v1576 = vld [vmem:[%s411 + $0x130] sm:$0xff]
    %v1577 = vld [vmem:[%s411 + $0x138] sm:$0xff]
    %v1578 = vld [vmem:[%s411 + $0x140] sm:$0xff]
    %v1579 = vld [vmem:[%s411 + $0x148] sm:$0xff]
    %v1580 = vld [vmem:[%s411 + $0x150] sm:$0xff]
    %v1581 = vld [vmem:[%s411 + $0x158] sm:$0xff]
    %v1582 = vld [vmem:[%s411 + $0x160] sm:$0xff]
    %v1583 = vld [vmem:[%s411 + $0x168] sm:$0xff]
    %v1584 = vld [vmem:[%s411 + $0x170] sm:$0xff]
    %v1585 = vld [vmem:[%s411 + $0x178] sm:$0xff]
    %v1586 = vld [vmem:[%s411 + $0x180] sm:$0xff]
    %v1587 = vld [vmem:[%s411 + $0x188] sm:$0xff]
    %v1588 = vld [vmem:[%s411 + $0x190] sm:$0xff]
    %v1589 = vld [vmem:[%s411 + $0x198] sm:$0xff]
    %v1590 = vld [vmem:[%s411 + $0x1a0] sm:$0xff]
    %v1591 = vld [vmem:[%s411 + $0x1a8] sm:$0xff]
    %v1592 = vld [vmem:[%s411 + $0x1b0] sm:$0xff]
    %v1593 = vld [vmem:[%s411 + $0x1b8] sm:$0xff]
    %v1594 = vld [vmem:[%s411 + $0x1c0] sm:$0xff]
    %v1595 = vld [vmem:[%s411 + $0x1c8] sm:$0xff]
    %v1596 = vld [vmem:[%s411 + $0x1d0] sm:$0xff]
    %v1597 = vld [vmem:[%s411 + $0x1d8] sm:$0xff]
    %v1598 = vld [vmem:[%s411 + $0x1e0] sm:$0xff]
    %v1599 = vld [vmem:[%s411 + $0x1e8] sm:$0xff]
    %v1600 = vld [vmem:[%s411 + $0x1f0] sm:$0xff]
    %v1601 = vld [vmem:[%s411 + $0x1f8] sm:$0xff]
    %v1602 = vld [vmem:[%s411 + $0x200] sm:$0xff]
    %v1603 = vld [vmem:[%s411 + $0x208] sm:$0xff]
    %v1604 = vld [vmem:[%s411 + $0x210] sm:$0xff]
    %v1605 = vld [vmem:[%s411 + $0x218] sm:$0xff]
    %v1606 = vld [vmem:[%s411 + $0x220] sm:$0xff]
    %v1607 = vld [vmem:[%s411 + $0x228] sm:$0xff]
    %v1608 = vld [vmem:[%s411 + $0x230] sm:$0xff]
    %v1609 = vld [vmem:[%s411 + $0x238] sm:$0xff]
    %v1610 = vld [vmem:[%s411 + $0x240] sm:$0xff]
    %v1611 = vld [vmem:[%s411 + $0x248] sm:$0xff]
    %v1612 = vld [vmem:[%s411 + $0x250] sm:$0xff]
    %v1613 = vld [vmem:[%s411 + $0x258] sm:$0xff]
    %v1614 = vld [vmem:[%s411 + $0x260] sm:$0xff]
    %v1615 = vld [vmem:[%s411 + $0x268] sm:$0xff]
    %v1616 = vld [vmem:[%s411 + $0x270] sm:$0xff]
    %v1617 = vld [vmem:[%s411 + $0x278] sm:$0xff]
    %v1618 = vld [vmem:[%s411 + $0x280] sm:$0xff]
    %v1619 = vld [vmem:[%s411 + $0x288] sm:$0xff]
    %v1620 = vld [vmem:[%s411 + $0x290] sm:$0xff]
    %v1621 = vld [vmem:[%s411 + $0x298] sm:$0xff]
    %v1622 = vld [vmem:[%s411 + $0x2a0] sm:$0xff]
    %v1623 = vld [vmem:[%s411 + $0x2a8] sm:$0xff]
    %v1624 = vld [vmem:[%s411 + $0x2b0] sm:$0xff]
    %v1625 = vld [vmem:[%s411 + $0x2b8] sm:$0xff]
    %v1626 = vld [vmem:[%s411 + $0x2c0] sm:$0xff]
    %v1627 = vld [vmem:[%s411 + $0x2c8] sm:$0xff]
    %v1628 = vld [vmem:[%s411 + $0x2d0] sm:$0xff]
    %v1629 = vld [vmem:[%s411 + $0x2d8] sm:$0xff]
    %v1630 = vld [vmem:[%s411 + $0x2e0] sm:$0xff]
    %v1631 = vld [vmem:[%s411 + $0x2e8] sm:$0xff]
    %v1632 = vld [vmem:[%s411 + $0x2f0] sm:$0xff]
    %v1633 = vld [vmem:[%s411 + $0x2f8] sm:$0xff]
    %v1634 = vld [vmem:[%s411 + $0x300] sm:$0xff]
    %v1635 = vld [vmem:[%s411 + $0x308] sm:$0xff]
    %v1636 = vld [vmem:[%s411 + $0x310] sm:$0xff]
    %v1637 = vld [vmem:[%s411 + $0x318] sm:$0xff]
    %v1638 = vld [vmem:[%s411 + $0x320] sm:$0xff]
    %v1639 = vld [vmem:[%s411 + $0x328] sm:$0xff]
    %v1640 = vld [vmem:[%s411 + $0x330] sm:$0xff]
    %v1641 = vld [vmem:[%s411 + $0x338] sm:$0xff]
    %v1642 = vld [vmem:[%s411 + $0x340] sm:$0xff]
    %v1643 = vld [vmem:[%s411 + $0x348] sm:$0xff]
    %v1644 = vld [vmem:[%s411 + $0x350] sm:$0xff]
    %v1645 = vld [vmem:[%s411 + $0x358] sm:$0xff]
    %v1646 = vld [vmem:[%s411 + $0x360] sm:$0xff]
    %v1647 = vld [vmem:[%s411 + $0x368] sm:$0xff]
    %v1648 = vld [vmem:[%s411 + $0x370] sm:$0xff]
    %v1649 = vld [vmem:[%s411 + $0x378] sm:$0xff]
    %v1650 = vld [vmem:[%s411 + $0x380] sm:$0xff]
    %v1651 = vld [vmem:[%s411 + $0x388] sm:$0xff]
    %v1652 = vld [vmem:[%s411 + $0x390] sm:$0xff]
    %v1653 = vld [vmem:[%s411 + $0x398] sm:$0xff]
    %v1654 = vld [vmem:[%s411 + $0x3a0] sm:$0xff]
    %v1655 = vld [vmem:[%s411 + $0x3a8] sm:$0xff]
    %v1656 = vld [vmem:[%s411 + $0x3b0] sm:$0xff]
    %v1657 = vld [vmem:[%s411 + $0x3b8] sm:$0xff]
    %v1658 = vld [vmem:[%s411 + $0x3c0] sm:$0xff]
    %v1659 = vld [vmem:[%s411 + $0x3c8] sm:$0xff]
    %v1660 = vld [vmem:[%s411 + $0x3d0] sm:$0xff]
    %v1661 = vld [vmem:[%s411 + $0x3d8] sm:$0xff]
    %v1662 = vld [vmem:[%s411 + $0x3e0] sm:$0xff]
    %v1663 = vld [vmem:[%s411 + $0x3e8] sm:$0xff]
    %v1664 = vld [vmem:[%s411 + $0x3f0] sm:$0xff]
    %v1665 = vld [vmem:[%s411 + $0x3f8] sm:$0xff]
    %v1794 = vunpack.c.l.b16 %v1538
    %v1795 = vunpack.c.h.b16 %v1538
    %v1796 = vunpack.c.l.b16 %v1539
    %v1797 = vunpack.c.h.b16 %v1539
    %v1798 = vunpack.c.l.b16 %v1540
    %v1799 = vunpack.c.h.b16 %v1540
    %v1800 = vunpack.c.l.b16 %v1541
    %v1801 = vunpack.c.h.b16 %v1541
    %v1802 = vunpack.c.l.b16 %v1542
    %v1803 = vunpack.c.h.b16 %v1542
    %v1804 = vunpack.c.l.b16 %v1543
    %v1805 = vunpack.c.h.b16 %v1543
    %v1806 = vunpack.c.l.b16 %v1544
    %v1807 = vunpack.c.h.b16 %v1544
    %v1808 = vunpack.c.l.b16 %v1545
    %v1809 = vunpack.c.h.b16 %v1545
    %v1810 = vunpack.c.l.b16 %v1546
    %v1811 = vunpack.c.h.b16 %v1546
    %v1812 = vunpack.c.l.b16 %v1547
    %v1813 = vunpack.c.h.b16 %v1547
    %v1814 = vunpack.c.l.b16 %v1548
    %v1815 = vunpack.c.h.b16 %v1548
    %v1816 = vunpack.c.l.b16 %v1549
    %v1817 = vunpack.c.h.b16 %v1549
    %v1818 = vunpack.c.l.b16 %v1550
    %v1819 = vunpack.c.h.b16 %v1550
    %v1820 = vunpack.c.l.b16 %v1551
    %v1821 = vunpack.c.h.b16 %v1551
    %v1822 = vunpack.c.l.b16 %v1552
    %v1823 = vunpack.c.h.b16 %v1552
    %v1824 = vunpack.c.l.b16 %v1553
    %v1825 = vunpack.c.h.b16 %v1553
    %v1826 = vunpack.c.l.b16 %v1554
    %v1827 = vunpack.c.h.b16 %v1554
    %v1828 = vunpack.c.l.b16 %v1555
    %v1829 = vunpack.c.h.b16 %v1555
    %v1830 = vunpack.c.l.b16 %v1556
    %v1831 = vunpack.c.h.b16 %v1556
    %v1832 = vunpack.c.l.b16 %v1557
    %v1833 = vunpack.c.h.b16 %v1557
    %v1834 = vunpack.c.l.b16 %v1558
    %v1835 = vunpack.c.h.b16 %v1558
    %v1836 = vunpack.c.l.b16 %v1559
    %v1837 = vunpack.c.h.b16 %v1559
    %v1838 = vunpack.c.l.b16 %v1560
    %v1839 = vunpack.c.h.b16 %v1560
    %v1840 = vunpack.c.l.b16 %v1561
    %v1841 = vunpack.c.h.b16 %v1561
    %v1842 = vunpack.c.l.b16 %v1562
    %v1843 = vunpack.c.h.b16 %v1562
    %v1844 = vunpack.c.l.b16 %v1563
    %v1845 = vunpack.c.h.b16 %v1563
    %v1846 = vunpack.c.l.b16 %v1564
    %v1847 = vunpack.c.h.b16 %v1564
    %v1848 = vunpack.c.l.b16 %v1565
    %v1849 = vunpack.c.h.b16 %v1565
    %v1850 = vunpack.c.l.b16 %v1566
    %v1851 = vunpack.c.h.b16 %v1566
    %v1852 = vunpack.c.l.b16 %v1567
    %v1853 = vunpack.c.h.b16 %v1567
    %v1854 = vunpack.c.l.b16 %v1568
    %v1855 = vunpack.c.h.b16 %v1568
    %v1856 = vunpack.c.l.b16 %v1569
    %v1857 = vunpack.c.h.b16 %v1569
    %v1858 = vunpack.c.l.b16 %v1570
    %v1859 = vunpack.c.h.b16 %v1570
    %v1860 = vunpack.c.l.b16 %v1571
    %v1861 = vunpack.c.h.b16 %v1571
    %v1862 = vunpack.c.l.b16 %v1572
    %v1863 = vunpack.c.h.b16 %v1572
    %v1864 = vunpack.c.l.b16 %v1573
    %v1865 = vunpack.c.h.b16 %v1573
    %v1866 = vunpack.c.l.b16 %v1574
    %v1867 = vunpack.c.h.b16 %v1574
    %v1868 = vunpack.c.l.b16 %v1575
    %v1869 = vunpack.c.h.b16 %v1575
    %v1870 = vunpack.c.l.b16 %v1576
    %v1871 = vunpack.c.h.b16 %v1576
    %v1872 = vunpack.c.l.b16 %v1577
    %v1873 = vunpack.c.h.b16 %v1577
    %v1874 = vunpack.c.l.b16 %v1578
    %v1875 = vunpack.c.h.b16 %v1578
    %v1876 = vunpack.c.l.b16 %v1579
    %v1877 = vunpack.c.h.b16 %v1579
    %v1878 = vunpack.c.l.b16 %v1580
    %v1879 = vunpack.c.h.b16 %v1580
    %v1880 = vunpack.c.l.b16 %v1581
    %v1881 = vunpack.c.h.b16 %v1581
    %v1882 = vunpack.c.l.b16 %v1582
    %v1883 = vunpack.c.h.b16 %v1582
    %v1884 = vunpack.c.l.b16 %v1583
    %v1885 = vunpack.c.h.b16 %v1583
    %v1886 = vunpack.c.l.b16 %v1584
    %v1887 = vunpack.c.h.b16 %v1584
    %v1888 = vunpack.c.l.b16 %v1585
    %v1889 = vunpack.c.h.b16 %v1585
    %v1890 = vunpack.c.l.b16 %v1586
    %v1891 = vunpack.c.h.b16 %v1586
    %v1892 = vunpack.c.l.b16 %v1587
    %v1893 = vunpack.c.h.b16 %v1587
    %v1894 = vunpack.c.l.b16 %v1588
    %v1895 = vunpack.c.h.b16 %v1588
    %v1896 = vunpack.c.l.b16 %v1589
    %v1897 = vunpack.c.h.b16 %v1589
    %v1898 = vunpack.c.l.b16 %v1590
    %v1899 = vunpack.c.h.b16 %v1590
    %v1900 = vunpack.c.l.b16 %v1591
    %v1901 = vunpack.c.h.b16 %v1591
    %v1902 = vunpack.c.l.b16 %v1592
    %v1903 = vunpack.c.h.b16 %v1592
    %v1904 = vunpack.c.l.b16 %v1593
    %v1905 = vunpack.c.h.b16 %v1593
    %v1906 = vunpack.c.l.b16 %v1594
    %v1907 = vunpack.c.h.b16 %v1594
    %v1908 = vunpack.c.l.b16 %v1595
    %v1909 = vunpack.c.h.b16 %v1595
    %v1910 = vunpack.c.l.b16 %v1596
    %v1911 = vunpack.c.h.b16 %v1596
    %v1912 = vunpack.c.l.b16 %v1597
    %v1913 = vunpack.c.h.b16 %v1597
    %v1914 = vunpack.c.l.b16 %v1598
    %v1915 = vunpack.c.h.b16 %v1598
    %v1916 = vunpack.c.l.b16 %v1599
    %v1917 = vunpack.c.h.b16 %v1599
    %v1918 = vunpack.c.l.b16 %v1600
    %v1919 = vunpack.c.h.b16 %v1600
    %v1920 = vunpack.c.l.b16 %v1601
    %v1921 = vunpack.c.h.b16 %v1601
    %v1922 = vunpack.c.l.b16 %v1602
    %v1923 = vunpack.c.h.b16 %v1602
    %v1924 = vunpack.c.l.b16 %v1603
    %v1925 = vunpack.c.h.b16 %v1603
    %v1926 = vunpack.c.l.b16 %v1604
    %v1927 = vunpack.c.h.b16 %v1604
    %v1928 = vunpack.c.l.b16 %v1605
    %v1929 = vunpack.c.h.b16 %v1605
    %v1930 = vunpack.c.l.b16 %v1606
    %v1931 = vunpack.c.h.b16 %v1606
    %v1932 = vunpack.c.l.b16 %v1607
    %v1933 = vunpack.c.h.b16 %v1607
    %v1934 = vunpack.c.l.b16 %v1608
    %v1935 = vunpack.c.h.b16 %v1608
    %v1936 = vunpack.c.l.b16 %v1609
    %v1937 = vunpack.c.h.b16 %v1609
    %v1938 = vunpack.c.l.b16 %v1610
    %v1939 = vunpack.c.h.b16 %v1610
    %v1940 = vunpack.c.l.b16 %v1611
    %v1941 = vunpack.c.h.b16 %v1611
    %v1942 = vunpack.c.l.b16 %v1612
    %v1943 = vunpack.c.h.b16 %v1612
    %v1944 = vunpack.c.l.b16 %v1613
    %v1945 = vunpack.c.h.b16 %v1613
    %v1946 = vunpack.c.l.b16 %v1614
    %v1947 = vunpack.c.h.b16 %v1614
    %v1948 = vunpack.c.l.b16 %v1615
    %v1949 = vunpack.c.h.b16 %v1615
    %v1950 = vunpack.c.l.b16 %v1616
    %v1951 = vunpack.c.h.b16 %v1616
    %v1952 = vunpack.c.l.b16 %v1617
    %v1953 = vunpack.c.h.b16 %v1617
    %v1954 = vunpack.c.l.b16 %v1618
    %v1955 = vunpack.c.h.b16 %v1618
    %v1956 = vunpack.c.l.b16 %v1619
    %v1957 = vunpack.c.h.b16 %v1619
    %v1958 = vunpack.c.l.b16 %v1620
    %v1959 = vunpack.c.h.b16 %v1620
    %v1960 = vunpack.c.l.b16 %v1621
    %v1961 = vunpack.c.h.b16 %v1621
    %v1962 = vunpack.c.l.b16 %v1622
    %v1963 = vunpack.c.h.b16 %v1622
    %v1964 = vunpack.c.l.b16 %v1623
    %v1965 = vunpack.c.h.b16 %v1623
    %v1966 = vunpack.c.l.b16 %v1624
    %v1967 = vunpack.c.h.b16 %v1624
    %v1968 = vunpack.c.l.b16 %v1625
    %v1969 = vunpack.c.h.b16 %v1625
    %v1970 = vunpack.c.l.b16 %v1626
    %v1971 = vunpack.c.h.b16 %v1626
    %v1972 = vunpack.c.l.b16 %v1627
    %v1973 = vunpack.c.h.b16 %v1627
    %v1974 = vunpack.c.l.b16 %v1628
    %v1975 = vunpack.c.h.b16 %v1628
    %v1976 = vunpack.c.l.b16 %v1629
    %v1977 = vunpack.c.h.b16 %v1629
    %v1978 = vunpack.c.l.b16 %v1630
    %v1979 = vunpack.c.h.b16 %v1630
    %v1980 = vunpack.c.l.b16 %v1631
    %v1981 = vunpack.c.h.b16 %v1631
    %v1982 = vunpack.c.l.b16 %v1632
    %v1983 = vunpack.c.h.b16 %v1632
    %v1984 = vunpack.c.l.b16 %v1633
    %v1985 = vunpack.c.h.b16 %v1633
    %v1986 = vunpack.c.l.b16 %v1634
    %v1987 = vunpack.c.h.b16 %v1634
    %v1988 = vunpack.c.l.b16 %v1635
    %v1989 = vunpack.c.h.b16 %v1635
    %v1990 = vunpack.c.l.b16 %v1636
    %v1991 = vunpack.c.h.b16 %v1636
    %v1992 = vunpack.c.l.b16 %v1637
    %v1993 = vunpack.c.h.b16 %v1637
    %v1994 = vunpack.c.l.b16 %v1638
    %v1995 = vunpack.c.h.b16 %v1638
    %v1996 = vunpack.c.l.b16 %v1639
    %v1997 = vunpack.c.h.b16 %v1639
    %v1998 = vunpack.c.l.b16 %v1640
    %v1999 = vunpack.c.h.b16 %v1640
    %v2000 = vunpack.c.l.b16 %v1641
    %v2001 = vunpack.c.h.b16 %v1641
    %v2002 = vunpack.c.l.b16 %v1642
    %v2003 = vunpack.c.h.b16 %v1642
    %v2004 = vunpack.c.l.b16 %v1643
    %v2005 = vunpack.c.h.b16 %v1643
    %v2006 = vunpack.c.l.b16 %v1644
    %v2007 = vunpack.c.h.b16 %v1644
    %v2008 = vunpack.c.l.b16 %v1645
    %v2009 = vunpack.c.h.b16 %v1645
    %v2010 = vunpack.c.l.b16 %v1646
    %v2011 = vunpack.c.h.b16 %v1646
    %v2012 = vunpack.c.l.b16 %v1647
    %v2013 = vunpack.c.h.b16 %v1647
    %v2014 = vunpack.c.l.b16 %v1648
    %v2015 = vunpack.c.h.b16 %v1648
    %v2016 = vunpack.c.l.b16 %v1649
    %v2017 = vunpack.c.h.b16 %v1649
    %v2018 = vunpack.c.l.b16 %v1650
    %v2019 = vunpack.c.h.b16 %v1650
    %v2020 = vunpack.c.l.b16 %v1651
    %v2021 = vunpack.c.h.b16 %v1651
    %v2022 = vunpack.c.l.b16 %v1652
    %v2023 = vunpack.c.h.b16 %v1652
    %v2024 = vunpack.c.l.b16 %v1653
    %v2025 = vunpack.c.h.b16 %v1653
    %v2026 = vunpack.c.l.b16 %v1654
    %v2027 = vunpack.c.h.b16 %v1654
    %v2028 = vunpack.c.l.b16 %v1655
    %v2029 = vunpack.c.h.b16 %v1655
    %v2030 = vunpack.c.l.b16 %v1656
    %v2031 = vunpack.c.h.b16 %v1656
    %v2032 = vunpack.c.l.b16 %v1657
    %v2033 = vunpack.c.h.b16 %v1657
    %v2034 = vunpack.c.l.b16 %v1658
    %v2035 = vunpack.c.h.b16 %v1658
    %v2036 = vunpack.c.l.b16 %v1659
    %v2037 = vunpack.c.h.b16 %v1659
    %v2038 = vunpack.c.l.b16 %v1660
    %v2039 = vunpack.c.h.b16 %v1660
    %v2040 = vunpack.c.l.b16 %v1661
    %v2041 = vunpack.c.h.b16 %v1661
    %v2042 = vunpack.c.l.b16 %v1662
    %v2043 = vunpack.c.h.b16 %v1662
    %v2044 = vunpack.c.l.b16 %v1663
    %v2045 = vunpack.c.h.b16 %v1663
    %v2046 = vunpack.c.l.b16 %v1664
    %v2047 = vunpack.c.h.b16 %v1664
    %v2048 = vunpack.c.l.b16 %v1665
    %v2049 = vunpack.c.h.b16 %v1665
    %v2050 = vpack.c.b16 %v1798, %v1794
    %v2051 = vpack.c.b16 %v1799, %v1795
    %v2052 = vpack.c.b16 %v1800, %v1796
    %v2053 = vpack.c.b16 %v1801, %v1797
    %v2054 = vpack.c.b16 %v1806, %v1802
    %v2055 = vpack.c.b16 %v1807, %v1803
    %v2056 = vpack.c.b16 %v1808, %v1804
    %v2057 = vpack.c.b16 %v1809, %v1805
    %v2058 = vpack.c.b16 %v1814, %v1810
    %v2059 = vpack.c.b16 %v1815, %v1811
    %v2060 = vpack.c.b16 %v1816, %v1812
    %v2061 = vpack.c.b16 %v1817, %v1813
    %v2062 = vpack.c.b16 %v1822, %v1818
    %v2063 = vpack.c.b16 %v1823, %v1819
    %v2064 = vpack.c.b16 %v1824, %v1820
    %v2065 = vpack.c.b16 %v1825, %v1821
    %v2066 = vpack.c.b16 %v1830, %v1826
    %v2067 = vpack.c.b16 %v1831, %v1827
    %v2068 = vpack.c.b16 %v1832, %v1828
    %v2069 = vpack.c.b16 %v1833, %v1829
    %v2070 = vpack.c.b16 %v1838, %v1834
    %v2071 = vpack.c.b16 %v1839, %v1835
    %v2072 = vpack.c.b16 %v1840, %v1836
    %v2073 = vpack.c.b16 %v1841, %v1837
    %v2074 = vpack.c.b16 %v1846, %v1842
    %v2075 = vpack.c.b16 %v1847, %v1843
    %v2076 = vpack.c.b16 %v1848, %v1844
    %v2077 = vpack.c.b16 %v1849, %v1845
    %v2078 = vpack.c.b16 %v1854, %v1850
    %v2079 = vpack.c.b16 %v1855, %v1851
    %v2080 = vpack.c.b16 %v1856, %v1852
    %v2081 = vpack.c.b16 %v1857, %v1853
    %v2082 = vpack.c.b16 %v1862, %v1858
    %v2083 = vpack.c.b16 %v1863, %v1859
    %v2084 = vpack.c.b16 %v1864, %v1860
    %v2085 = vpack.c.b16 %v1865, %v1861
    %v2086 = vpack.c.b16 %v1870, %v1866
    %v2087 = vpack.c.b16 %v1871, %v1867
    %v2088 = vpack.c.b16 %v1872, %v1868
    %v2089 = vpack.c.b16 %v1873, %v1869
    %v2090 = vpack.c.b16 %v1878, %v1874
    %v2091 = vpack.c.b16 %v1879, %v1875
    %v2092 = vpack.c.b16 %v1880, %v1876
    %v2093 = vpack.c.b16 %v1881, %v1877
    %v2094 = vpack.c.b16 %v1886, %v1882
    %v2095 = vpack.c.b16 %v1887, %v1883
    %v2096 = vpack.c.b16 %v1888, %v1884
    %v2097 = vpack.c.b16 %v1889, %v1885
    %v2098 = vpack.c.b16 %v1894, %v1890
    %v2099 = vpack.c.b16 %v1895, %v1891
    %v2100 = vpack.c.b16 %v1896, %v1892
    %v2101 = vpack.c.b16 %v1897, %v1893
    %v2102 = vpack.c.b16 %v1902, %v1898
    %v2103 = vpack.c.b16 %v1903, %v1899
    %v2104 = vpack.c.b16 %v1904, %v1900
    %v2105 = vpack.c.b16 %v1905, %v1901
    %v2106 = vpack.c.b16 %v1910, %v1906
    %v2107 = vpack.c.b16 %v1911, %v1907
    %v2108 = vpack.c.b16 %v1912, %v1908
    %v2109 = vpack.c.b16 %v1913, %v1909
    %v2110 = vpack.c.b16 %v1918, %v1914
    %v2111 = vpack.c.b16 %v1919, %v1915
    %v2112 = vpack.c.b16 %v1920, %v1916
    %v2113 = vpack.c.b16 %v1921, %v1917
    %v2114 = vpack.c.b16 %v1926, %v1922
    %v2115 = vpack.c.b16 %v1927, %v1923
    %v2116 = vpack.c.b16 %v1928, %v1924
    %v2117 = vpack.c.b16 %v1929, %v1925
    %v2118 = vpack.c.b16 %v1934, %v1930
    %v2119 = vpack.c.b16 %v1935, %v1931
    %v2120 = vpack.c.b16 %v1936, %v1932
    %v2121 = vpack.c.b16 %v1937, %v1933
    %v2122 = vpack.c.b16 %v1942, %v1938
    %v2123 = vpack.c.b16 %v1943, %v1939
    %v2124 = vpack.c.b16 %v1944, %v1940
    %v2125 = vpack.c.b16 %v1945, %v1941
    %v2126 = vpack.c.b16 %v1950, %v1946
    %v2127 = vpack.c.b16 %v1951, %v1947
    %v2128 = vpack.c.b16 %v1952, %v1948
    %v2129 = vpack.c.b16 %v1953, %v1949
    %v2130 = vpack.c.b16 %v1958, %v1954
    %v2131 = vpack.c.b16 %v1959, %v1955
    %v2132 = vpack.c.b16 %v1960, %v1956
    %v2133 = vpack.c.b16 %v1961, %v1957
    %v2134 = vpack.c.b16 %v1966, %v1962
    %v2135 = vpack.c.b16 %v1967, %v1963
    %v2136 = vpack.c.b16 %v1968, %v1964
    %v2137 = vpack.c.b16 %v1969, %v1965
    %v2138 = vpack.c.b16 %v1974, %v1970
    %v2139 = vpack.c.b16 %v1975, %v1971
    %v2140 = vpack.c.b16 %v1976, %v1972
    %v2141 = vpack.c.b16 %v1977, %v1973
    %v2142 = vpack.c.b16 %v1982, %v1978
    %v2143 = vpack.c.b16 %v1983, %v1979
    %v2144 = vpack.c.b16 %v1984, %v1980
    %v2145 = vpack.c.b16 %v1985, %v1981
    %v2146 = vpack.c.b16 %v1990, %v1986
    %v2147 = vpack.c.b16 %v1991, %v1987
    %v2148 = vpack.c.b16 %v1992, %v1988
    %v2149 = vpack.c.b16 %v1993, %v1989
    %v2150 = vpack.c.b16 %v1998, %v1994
    %v2151 = vpack.c.b16 %v1999, %v1995
    %v2152 = vpack.c.b16 %v2000, %v1996
    %v2153 = vpack.c.b16 %v2001, %v1997
    %v2154 = vpack.c.b16 %v2006, %v2002
    %v2155 = vpack.c.b16 %v2007, %v2003
    %v2156 = vpack.c.b16 %v2008, %v2004
    %v2157 = vpack.c.b16 %v2009, %v2005
    %v2158 = vpack.c.b16 %v2014, %v2010
    %v2159 = vpack.c.b16 %v2015, %v2011
    %v2160 = vpack.c.b16 %v2016, %v2012
    %v2161 = vpack.c.b16 %v2017, %v2013
    %v2162 = vpack.c.b16 %v2022, %v2018
    %v2163 = vpack.c.b16 %v2023, %v2019
    %v2164 = vpack.c.b16 %v2024, %v2020
    %v2165 = vpack.c.b16 %v2025, %v2021
    %v2166 = vpack.c.b16 %v2030, %v2026
    %v2167 = vpack.c.b16 %v2031, %v2027
    %v2168 = vpack.c.b16 %v2032, %v2028
    %v2169 = vpack.c.b16 %v2033, %v2029
    %v2170 = vpack.c.b16 %v2038, %v2034
    %v2171 = vpack.c.b16 %v2039, %v2035
    %v2172 = vpack.c.b16 %v2040, %v2036
    %v2173 = vpack.c.b16 %v2041, %v2037
    %v2174 = vpack.c.b16 %v2046, %v2042
    %v2175 = vpack.c.b16 %v2047, %v2043
    %v2176 = vpack.c.b16 %v2048, %v2044
    %v2177 = vpack.c.b16 %v2049, %v2045
    %2306 = vmatprep.subr.bf16.mxu0 %v2079
    %2307 = vmatpush1.bf16.msra.mxu0 %v2078
    %2308 = vmatprep.subr.bf16.mxu0 %v2075
    %2309 = vmatpush1.bf16.msra.mxu0 %v2074
    %2310 = vmatprep.subr.bf16.mxu0 %v2071
    %2311 = vmatpush1.bf16.msra.mxu0 %v2070
    %2312 = vmatprep.subr.bf16.mxu0 %v2067
    %2313 = vmatpush1.bf16.msra.mxu0 %v2066
    %2314 = vmatprep.subr.bf16.mxu0 %v2063
    %2315 = vmatpush1.bf16.msra.mxu0 %v2062
    %2316 = vmatprep.subr.bf16.mxu0 %v2059
    %2317 = vmatpush1.bf16.msra.mxu0 %v2058
    %2318 = vmatprep.subr.bf16.mxu0 %v2055
    %2319 = vmatpush1.bf16.msra.mxu0 %v2054
    %2320 = vmatprep.subr.bf16.mxu0 %v2051
    %2321 = vmatpush1.bf16.msra.mxu0 %v2050
    %2322 = vmatprep.subr.bf16.mxu0 %v2111
    %2323 = vmatpush2.bf16.msra.mxu0 %v2110
    %2324 = vmatprep.subr.bf16.mxu0 %v2107
    %2325 = vmatpush2.bf16.msra.mxu0 %v2106
    %2326 = vmatprep.subr.bf16.mxu0 %v2103
    %2327 = vmatpush2.bf16.msra.mxu0 %v2102
    %2328 = vmatprep.subr.bf16.mxu0 %v2099
    %2329 = vmatpush2.bf16.msra.mxu0 %v2098
    %2330 = vmatprep.subr.bf16.mxu0 %v2095
    %2331 = vmatpush2.bf16.msra.mxu0 %v2094
    %2332 = vmatprep.subr.bf16.mxu0 %v2091
    %2333 = vmatpush2.bf16.msra.mxu0 %v2090
    %2334 = vmatprep.subr.bf16.mxu0 %v2087
    %2335 = vmatpush2.bf16.msra.mxu0 %v2086
    %2336 = vmatprep.subr.bf16.mxu0 %v2083
    %2337 = vmatpush2.bf16.msra.mxu0 %v2082
    %2338 = vmatprep.mubr.bf16.mxu0 %v1535
    %2339 = vmatmul.mubr.bf16.gmra.mxu0 %v1534
    %v2340 = vpop.f32.mrf.mxu0
    %v2341 = vadd.f32 0.0, %v2340
    %v2342 = vpop.f32.mrf.mxu0
    %v2343 = vadd.f32 0.0, %v2342
    %v2344 = vpop.f32.mrf.mxu0
    %v2345 = vpop.f32.mrf.mxu0
    %2346 = vdwg.mxu0
    %2347 = vmatprep.subr.bf16.mxu0 %v2143
    %2348 = vmatpush1.bf16.msra.mxu0 %v2142
    %2349 = vmatprep.subr.bf16.mxu0 %v2139
    %2350 = vmatpush1.bf16.msra.mxu0 %v2138
    %2351 = vmatprep.subr.bf16.mxu0 %v2135
    %2352 = vmatpush1.bf16.msra.mxu0 %v2134
    %2353 = vmatprep.subr.bf16.mxu0 %v2131
    %2354 = vmatpush1.bf16.msra.mxu0 %v2130
    %2355 = vmatprep.subr.bf16.mxu0 %v2127
    %2356 = vmatpush1.bf16.msra.mxu0 %v2126
    %2357 = vmatprep.subr.bf16.mxu0 %v2123
    %2358 = vmatpush1.bf16.msra.mxu0 %v2122
    %2359 = vmatprep.subr.bf16.mxu0 %v2119
    %2360 = vmatpush1.bf16.msra.mxu0 %v2118
    %2361 = vmatprep.subr.bf16.mxu0 %v2115
    %2362 = vmatpush1.bf16.msra.mxu0 %v2114
    %2363 = vmatprep.subr.bf16.mxu0 %v2175
    %2364 = vmatpush2.bf16.msra.mxu0 %v2174
    %2365 = vmatprep.subr.bf16.mxu0 %v2171
    %2366 = vmatpush2.bf16.msra.mxu0 %v2170
    %2367 = vmatprep.subr.bf16.mxu0 %v2167
    %2368 = vmatpush2.bf16.msra.mxu0 %v2166
    %2369 = vmatprep.subr.bf16.mxu0 %v2163
    %2370 = vmatpush2.bf16.msra.mxu0 %v2162
    %2371 = vmatprep.subr.bf16.mxu0 %v2159
    %2372 = vmatpush2.bf16.msra.mxu0 %v2158
    %2373 = vmatprep.subr.bf16.mxu0 %v2155
    %2374 = vmatpush2.bf16.msra.mxu0 %v2154
    %2375 = vmatprep.subr.bf16.mxu0 %v2151
    %2376 = vmatpush2.bf16.msra.mxu0 %v2150
    %2377 = vmatprep.subr.bf16.mxu0 %v2147
    %2378 = vmatpush2.bf16.msra.mxu0 %v2146
    %2379 = vmatprep.mubr.bf16.mxu0 %v1537
    %2380 = vmatmul.mubr.bf16.gmra.mxu0 %v1536
    %v2381 = vpop.f32.mrf.mxu0
    %v2382 = vadd.f32 %v2341, %v2381
    %v2383 = vpop.f32.mrf.mxu0
    %v2384 = vadd.f32 %v2343, %v2383
    %v2385 = vpop.f32.mrf.mxu0
    %v2386 = vpop.f32.mrf.mxu0
    %2387 = vdwg.mxu0
    %2388 = vmatprep.subr.bf16.mxu0 %v2081
    %2389 = vmatpush1.bf16.msra.mxu0 %v2080
    %2390 = vmatprep.subr.bf16.mxu0 %v2077
    %2391 = vmatpush1.bf16.msra.mxu0 %v2076
    %2392 = vmatprep.subr.bf16.mxu0 %v2073
    %2393 = vmatpush1.bf16.msra.mxu0 %v2072
    %2394 = vmatprep.subr.bf16.mxu0 %v2069
    %2395 = vmatpush1.bf16.msra.mxu0 %v2068
    %2396 = vmatprep.subr.bf16.mxu0 %v2065
    %2397 = vmatpush1.bf16.msra.mxu0 %v2064
    %2398 = vmatprep.subr.bf16.mxu0 %v2061
    %2399 = vmatpush1.bf16.msra.mxu0 %v2060
    %2400 = vmatprep.subr.bf16.mxu0 %v2057
    %2401 = vmatpush1.bf16.msra.mxu0 %v2056
    %2402 = vmatprep.subr.bf16.mxu0 %v2053
    %2403 = vmatpush1.bf16.msra.mxu0 %v2052
    %2404 = vmatprep.subr.bf16.mxu0 %v2113
    %2405 = vmatpush2.bf16.msra.mxu0 %v2112
    %2406 = vmatprep.subr.bf16.mxu0 %v2109
    %2407 = vmatpush2.bf16.msra.mxu0 %v2108
    %2408 = vmatprep.subr.bf16.mxu0 %v2105
    %2409 = vmatpush2.bf16.msra.mxu0 %v2104
    %2410 = vmatprep.subr.bf16.mxu0 %v2101
    %2411 = vmatpush2.bf16.msra.mxu0 %v2100
    %2412 = vmatprep.subr.bf16.mxu0 %v2097
    %2413 = vmatpush2.bf16.msra.mxu0 %v2096
    %2414 = vmatprep.subr.bf16.mxu0 %v2093
    %2415 = vmatpush2.bf16.msra.mxu0 %v2092
    %2416 = vmatprep.subr.bf16.mxu0 %v2089
    %2417 = vmatpush2.bf16.msra.mxu0 %v2088
    %2418 = vmatprep.subr.bf16.mxu0 %v2085
    %2419 = vmatpush2.bf16.msra.mxu0 %v2084
    %2420 = vmatprep.mubr.bf16.mxu0 %v1535
    %2421 = vmatmul.mubr.bf16.gmra.mxu0 %v1534
    %v2422 = vpop.f32.mrf.mxu0
    %v2423 = vadd.f32 0.0, %v2422
    %v2424 = vpop.f32.mrf.mxu0
    %v2425 = vadd.f32 0.0, %v2424
    %v2426 = vpop.f32.mrf.mxu0
    %v2427 = vpop.f32.mrf.mxu0
    %2428 = vdwg.mxu0
    %2429 = vmatprep.subr.bf16.mxu0 %v2145
    %2430 = vmatpush1.bf16.msra.mxu0 %v2144
    %2431 = vmatprep.subr.bf16.mxu0 %v2141
    %2432 = vmatpush1.bf16.msra.mxu0 %v2140
    %2433 = vmatprep.subr.bf16.mxu0 %v2137
    %2434 = vmatpush1.bf16.msra.mxu0 %v2136
    %2435 = vmatprep.subr.bf16.mxu0 %v2133
    %2436 = vmatpush1.bf16.msra.mxu0 %v2132
    %2437 = vmatprep.subr.bf16.mxu0 %v2129
    %2438 = vmatpush1.bf16.msra.mxu0 %v2128
    %2439 = vmatprep.subr.bf16.mxu0 %v2125
    %2440 = vmatpush1.bf16.msra.mxu0 %v2124
    %2441 = vmatprep.subr.bf16.mxu0 %v2121
    %2442 = vmatpush1.bf16.msra.mxu0 %v2120
    %2443 = vmatprep.subr.bf16.mxu0 %v2117
    %2444 = vmatpush1.bf16.msra.mxu0 %v2116
    %2445 = vmatprep.subr.bf16.mxu0 %v2177
    %2446 = vmatpush2.bf16.msra.mxu0 %v2176
    %2447 = vmatprep.subr.bf16.mxu0 %v2173
    %2448 = vmatpush2.bf16.msra.mxu0 %v2172
    %2449 = vmatprep.subr.bf16.mxu0 %v2169
    %2450 = vmatpush2.bf16.msra.mxu0 %v2168
    %2451 = vmatprep.subr.bf16.mxu0 %v2165
    %2452 = vmatpush2.bf16.msra.mxu0 %v2164
    %2453 = vmatprep.subr.bf16.mxu0 %v2161
    %2454 = vmatpush2.bf16.msra.mxu0 %v2160
    %2455 = vmatprep.subr.bf16.mxu0 %v2157
    %2456 = vmatpush2.bf16.msra.mxu0 %v2156
    %2457 = vmatprep.subr.bf16.mxu0 %v2153
    %2458 = vmatpush2.bf16.msra.mxu0 %v2152
    %2459 = vmatprep.subr.bf16.mxu0 %v2149
    %2460 = vmatpush2.bf16.msra.mxu0 %v2148
    %2461 = vmatprep.mubr.bf16.mxu0 %v1537
    %2462 = vmatmul.mubr.bf16.gmra.mxu0 %v1536
    %v2463 = vpop.f32.mrf.mxu0
    %v2464 = vadd.f32 %v2423, %v2463
    %v2465 = vpop.f32.mrf.mxu0
    %v2466 = vadd.f32 %v2425, %v2465
    %v2467 = vpop.f32.mrf.mxu0
    %v2468 = vpop.f32.mrf.mxu0
    %2469 = vdwg.mxu0
    %v2470 = vrot.slane %v2382, 4
    %v2471 = vadd.f32 %v2382, %v2470
    %v2472 = vrot.slane %v2471, 2
    %v2473 = vadd.f32 %v2471, %v2472
    %v2474 = vrot.slane %v2473, 1
    %v2475 = vadd.f32 %v2473, %v2474
    %v2476 = vrot.slane %v2384, 4
    %v2477 = vadd.f32 %v2384, %v2476
    %v2478 = vrot.slane %v2477, 2
    %v2479 = vadd.f32 %v2477, %v2478
    %v2480 = vrot.slane %v2479, 1
    %v2481 = vadd.f32 %v2479, %v2480
    %v2482 = vrot.slane %v2464, 4
    %v2483 = vadd.f32 %v2464, %v2482
    %v2484 = vrot.slane %v2483, 2
    %v2485 = vadd.f32 %v2483, %v2484
    %v2486 = vrot.slane %v2485, 1
    %v2487 = vadd.f32 %v2485, %v2486
    %v2488 = vrot.slane %v2466, 4
    %v2489 = vadd.f32 %v2466, %v2488
    %v2490 = vrot.slane %v2489, 2
    %v2491 = vadd.f32 %v2489, %v2490
    %v2492 = vrot.slane %v2491, 1
    %v2493 = vadd.f32 %v2491, %v2492
    %v2494 = vmul.f32 %v2475, %v271
    %v2495 = vmul.f32 %v2481, %v271
    %v2496 = vmul.f32 %v2487, %v271
    %v2497 = vmul.f32 %v2493, %v271
    %v2498 = vsub.f32 %v2382, %v2494
    %v2499 = vsub.f32 %v2384, %v2495
    %v2500 = vsub.f32 %v2464, %v2496
    %v2501 = vsub.f32 %v2466, %v2497
    %v2502 = vmul.f32 %v2498, %v2498
    %v2503 = vmul.f32 %v2499, %v2499
    %v2504 = vmul.f32 %v2500, %v2500
    %v2505 = vmul.f32 %v2501, %v2501
    %v2506 = vrot.slane %v2502, 4
    %v2507 = vadd.f32 %v2502, %v2506
    %v2508 = vrot.slane %v2507, 2
    %v2509 = vadd.f32 %v2507, %v2508
    %v2510 = vrot.slane %v2509, 1
    %v2511 = vadd.f32 %v2509, %v2510
    %v2512 = vrot.slane %v2503, 4
    %v2513 = vadd.f32 %v2503, %v2512
    %v2514 = vrot.slane %v2513, 2
    %v2515 = vadd.f32 %v2513, %v2514
    %v2516 = vrot.slane %v2515, 1
    %v2517 = vadd.f32 %v2515, %v2516
    %v2518 = vrot.slane %v2504, 4
    %v2519 = vadd.f32 %v2504, %v2518
    %v2520 = vrot.slane %v2519, 2
    %v2521 = vadd.f32 %v2519, %v2520
    %v2522 = vrot.slane %v2521, 1
    %v2523 = vadd.f32 %v2521, %v2522
    %v2524 = vrot.slane %v2505, 4
    %v2525 = vadd.f32 %v2505, %v2524
    %v2526 = vrot.slane %v2525, 2
    %v2527 = vadd.f32 %v2525, %v2526
    %v2528 = vrot.slane %v2527, 1
    %v2529 = vadd.f32 %v2527, %v2528
    %v2530 = vmul.f32 %v2511, %v271
    %v2531 = vmul.f32 %v2517, %v271
    %v2532 = vmul.f32 %v2523, %v271
    %v2533 = vmul.f32 %v2529, %v271
    %s2534 = scalar_lea.vmem [#allocation12], 2
    %v2535 = vld [vmem:[%s2534] ss:$8 sm:$0xf]
    %v2536 = vadd.f32 %v2530, 1e-05
    %v2537 = vadd.f32 %v2531, 1e-05
    %v2538 = vadd.f32 %v2532, 1e-05
    %v2539 = vadd.f32 %v2533, 1e-05
    %v2540 = vrsqrt.pop %v2536
    %v2541 = vrsqrt.pop %v2537
    %v2542 = vrsqrt.pop %v2538
    %v2543 = vrsqrt.pop %v2539
    %v2548 = vcombine.low %v2540, %v2541
    %v2549 = vcombine.low %v2542, %v2543
    %v2551 = vunpack.c.l.s4 1966171168
    %v2552 = vunpack.c.0.s8 %v2551
    %v2553 = vlaneseq
    %v2554 = vshrl.u32 %v2553, 7
    %v2555 = vsub.s32 %v2552, %v2554
    %v2556 = vrot.slane %v2548, %v2555
    %v2558 = vunpack.c.l.s4 1966171168
    %v2559 = vunpack.c.0.s8 %v2558
    %v2560 = vlaneseq
    %v2561 = vshrl.u32 %v2560, 7
    %v2562 = vsub.s32 %v2559, %v2561
    %v2563 = vrot.slane %v2549, %v2562
    %v2564 = vcombine.low %v2556, %v2563
    %v2566 = vunpack.c.l.s4 1966171168
    %v2567 = vunpack.c.0.s8 %v2566
    %v2568 = vlaneseq
    %v2569 = vshrl.u32 %v2568, 7
    %v2570 = vsub.s32 %v2567, %v2569
    %v2571 = vrot.slane %v2564, %v2570
    %v2573 = vmul.f32 %v2535, %v2571
    %v2575 = vlaneseq
    %v2576 = vshrl.u32 %v2575, 7
    %v2577 = vsub.s32 0, %v2576
    %v2578 = vrot.slane %v2573, %v2577
    %v2579 = vlaneseq
    %v2580 = vshrl.u32 %v2579, 7
    %v2581 = vsub.s32 1, %v2580
    %v2582 = vrot.slane %v2573, %v2581
    %v2583 = vlaneseq
    %v2584 = vshrl.u32 %v2583, 7
    %v2585 = vsub.s32 2, %v2584
    %v2586 = vrot.slane %v2573, %v2585
    %v2587 = vlaneseq
    %v2588 = vshrl.u32 %v2587, 7
    %v2589 = vsub.s32 3, %v2588
    %v2590 = vrot.slane %v2573, %v2589
    %v2595 = vmul.f32 %v2498, %v2578
    %v2596 = vmul.f32 %v2499, %v2582
    %v2597 = vmul.f32 %v2500, %v2586
    %v2598 = vmul.f32 %v2501, %v2590
    %s2599 = scalar_lea.vmem [#allocation13], 2
    %v2600 = vld [vmem:[%s2599] ss:$8 sm:$0xf]
    %v2602 = vlaneseq
    %v2603 = vshrl.u32 %v2602, 7
    %v2604 = vsub.s32 0, %v2603
    %v2605 = vrot.slane %v2600, %v2604
    %v2606 = vlaneseq
    %v2607 = vshrl.u32 %v2606, 7
    %v2608 = vsub.s32 1, %v2607
    %v2609 = vrot.slane %v2600, %v2608
    %v2610 = vlaneseq
    %v2611 = vshrl.u32 %v2610, 7
    %v2612 = vsub.s32 2, %v2611
    %v2613 = vrot.slane %v2600, %v2612
    %v2614 = vlaneseq
    %v2615 = vshrl.u32 %v2614, 7
    %v2616 = vsub.s32 3, %v2615
    %v2617 = vrot.slane %v2600, %v2616
    %v2622 = vadd.f32 %v2595, %v2605
    %v2623 = vadd.f32 %v2596, %v2609
    %v2624 = vadd.f32 %v2597, %v2613
    %v2625 = vadd.f32 %v2598, %v2617
    %v2626 = vmax.f32 %v2622, 0.0
    %v2627 = vmax.f32 %v2623, 0.0
    %v2628 = vmax.f32 %v2624, 0.0
    %v2629 = vmax.f32 %v2625, 0.0
    %s2630 = sshll.u32 %s407, 4
    %2631 = dma.done [#allocation3], %s2630
    %s2632 = scalar_lea.hbm %s2, 49152
    // Predicated region
    $region62: #{tpu_custom_call.1} parent=1 // pred_check
      _
    $region63: #{tpu_custom_call.1} parent=1 // pred_check_branch
      %2634 = sbr.rel target = $region65
    $region64: #{tpu_custom_call.1} parent=1 // pred_region
      %2635 = sst [smem:[#allocation18]] [#allocation25]
      %2636 = sst [smem:[#allocation19]] [#allocation24]
    $region65: #{tpu_custom_call.1} parent=1 // pred_fallthru
      _
    %2638 = shalt.err (0)
    %s2640 = sshll.u32 %s411, 4
    %s2641 = int_to_ptr.vmem [resolvable:$true] %s2640
    %2643 = dma.hbm_to_vmem [thread:$0]  %s2632, 16384, %s2641, %s412
    %v2644 = vpack.c.bf16 %v2626, %v2626
    %v2645 = vpack.c.bf16 %v2627, %v2627
    %v2646 = vpack.c.bf16 %v2628, %v2628
    %v2647 = vpack.c.bf16 %v2629, %v2629
    %v2648 = vld [vmem:[#allocation2] sm:$0xff]
    %v2649 = vld [vmem:[#allocation2 + $0x8] sm:$0xff]
    %v2650 = vld [vmem:[#allocation2 + $0x10] sm:$0xff]
    %v2651 = vld [vmem:[#allocation2 + $0x18] sm:$0xff]
    %v2652 = vld [vmem:[#allocation2 + $0x20] sm:$0xff]
    %v2653 = vld [vmem:[#allocation2 + $0x28] sm:$0xff]
    %v2654 = vld [vmem:[#allocation2 + $0x30] sm:$0xff]
    %v2655 = vld [vmem:[#allocation2 + $0x38] sm:$0xff]
    %v2656 = vld [vmem:[#allocation2 + $0x40] sm:$0xff]
    %v2657 = vld [vmem:[#allocation2 + $0x48] sm:$0xff]
    %v2658 = vld [vmem:[#allocation2 + $0x50] sm:$0xff]
    %v2659 = vld [vmem:[#allocation2 + $0x58] sm:$0xff]
    %v2660 = vld [vmem:[#allocation2 + $0x60] sm:$0xff]
    %v2661 = vld [vmem:[#allocation2 + $0x68] sm:$0xff]
    %v2662 = vld [vmem:[#allocation2 + $0x70] sm:$0xff]
    %v2663 = vld [vmem:[#allocation2 + $0x78] sm:$0xff]
    %v2664 = vld [vmem:[#allocation2 + $0x80] sm:$0xff]
    %v2665 = vld [vmem:[#allocation2 + $0x88] sm:$0xff]
    %v2666 = vld [vmem:[#allocation2 + $0x90] sm:$0xff]
    %v2667 = vld [vmem:[#allocation2 + $0x98] sm:$0xff]
    %v2668 = vld [vmem:[#allocation2 + $0xa0] sm:$0xff]
    %v2669 = vld [vmem:[#allocation2 + $0xa8] sm:$0xff]
    %v2670 = vld [vmem:[#allocation2 + $0xb0] sm:$0xff]
    %v2671 = vld [vmem:[#allocation2 + $0xb8] sm:$0xff]
    %v2672 = vld [vmem:[#allocation2 + $0xc0] sm:$0xff]
    %v2673 = vld [vmem:[#allocation2 + $0xc8] sm:$0xff]
    %v2674 = vld [vmem:[#allocation2 + $0xd0] sm:$0xff]
    %v2675 = vld [vmem:[#allocation2 + $0xd8] sm:$0xff]
    %v2676 = vld [vmem:[#allocation2 + $0xe0] sm:$0xff]
    %v2677 = vld [vmem:[#allocation2 + $0xe8] sm:$0xff]
    %v2678 = vld [vmem:[#allocation2 + $0xf0] sm:$0xff]
    %v2679 = vld [vmem:[#allocation2 + $0xf8] sm:$0xff]
    %v2680 = vld [vmem:[#allocation2 + $0x100] sm:$0xff]
    %v2681 = vld [vmem:[#allocation2 + $0x108] sm:$0xff]
    %v2682 = vld [vmem:[#allocation2 + $0x110] sm:$0xff]
    %v2683 = vld [vmem:[#allocation2 + $0x118] sm:$0xff]
    %v2684 = vld [vmem:[#allocation2 + $0x120] sm:$0xff]
    %v2685 = vld [vmem:[#allocation2 + $0x128] sm:$0xff]
    %v2686 = vld [vmem:[#allocation2 + $0x130] sm:$0xff]
    %v2687 = vld [vmem:[#allocation2 + $0x138] sm:$0xff]
    %v2688 = vld [vmem:[#allocation2 + $0x140] sm:$0xff]
    %v2689 = vld [vmem:[#allocation2 + $0x148] sm:$0xff]
    %v2690 = vld [vmem:[#allocation2 + $0x150] sm:$0xff]
    %v2691 = vld [vmem:[#allocation2 + $0x158] sm:$0xff]
    %v2692 = vld [vmem:[#allocation2 + $0x160] sm:$0xff]
    %v2693 = vld [vmem:[#allocation2 + $0x168] sm:$0xff]
    %v2694 = vld [vmem:[#allocation2 + $0x170] sm:$0xff]
    %v2695 = vld [vmem:[#allocation2 + $0x178] sm:$0xff]
    %v2696 = vld [vmem:[#allocation2 + $0x180] sm:$0xff]
    %v2697 = vld [vmem:[#allocation2 + $0x188] sm:$0xff]
    %v2698 = vld [vmem:[#allocation2 + $0x190] sm:$0xff]
    %v2699 = vld [vmem:[#allocation2 + $0x198] sm:$0xff]
    %v2700 = vld [vmem:[#allocation2 + $0x1a0] sm:$0xff]
    %v2701 = vld [vmem:[#allocation2 + $0x1a8] sm:$0xff]
    %v2702 = vld [vmem:[#allocation2 + $0x1b0] sm:$0xff]
    %v2703 = vld [vmem:[#allocation2 + $0x1b8] sm:$0xff]
    %v2704 = vld [vmem:[#allocation2 + $0x1c0] sm:$0xff]
    %v2705 = vld [vmem:[#allocation2 + $0x1c8] sm:$0xff]
    %v2706 = vld [vmem:[#allocation2 + $0x1d0] sm:$0xff]
    %v2707 = vld [vmem:[#allocation2 + $0x1d8] sm:$0xff]
    %v2708 = vld [vmem:[#allocation2 + $0x1e0] sm:$0xff]
    %v2709 = vld [vmem:[#allocation2 + $0x1e8] sm:$0xff]
    %v2710 = vld [vmem:[#allocation2 + $0x1f0] sm:$0xff]
    %v2711 = vld [vmem:[#allocation2 + $0x1f8] sm:$0xff]
    %v2712 = vld [vmem:[#allocation2 + $0x200] sm:$0xff]
    %v2713 = vld [vmem:[#allocation2 + $0x208] sm:$0xff]
    %v2714 = vld [vmem:[#allocation2 + $0x210] sm:$0xff]
    %v2715 = vld [vmem:[#allocation2 + $0x218] sm:$0xff]
    %v2716 = vld [vmem:[#allocation2 + $0x220] sm:$0xff]
    %v2717 = vld [vmem:[#allocation2 + $0x228] sm:$0xff]
    %v2718 = vld [vmem:[#allocation2 + $0x230] sm:$0xff]
    %v2719 = vld [vmem:[#allocation2 + $0x238] sm:$0xff]
    %v2720 = vld [vmem:[#allocation2 + $0x240] sm:$0xff]
    %v2721 = vld [vmem:[#allocation2 + $0x248] sm:$0xff]
    %v2722 = vld [vmem:[#allocation2 + $0x250] sm:$0xff]
    %v2723 = vld [vmem:[#allocation2 + $0x258] sm:$0xff]
    %v2724 = vld [vmem:[#allocation2 + $0x260] sm:$0xff]
    %v2725 = vld [vmem:[#allocation2 + $0x268] sm:$0xff]
    %v2726 = vld [vmem:[#allocation2 + $0x270] sm:$0xff]
    %v2727 = vld [vmem:[#allocation2 + $0x278] sm:$0xff]
    %v2728 = vld [vmem:[#allocation2 + $0x280] sm:$0xff]
    %v2729 = vld [vmem:[#allocation2 + $0x288] sm:$0xff]
    %v2730 = vld [vmem:[#allocation2 + $0x290] sm:$0xff]
    %v2731 = vld [vmem:[#allocation2 + $0x298] sm:$0xff]
    %v2732 = vld [vmem:[#allocation2 + $0x2a0] sm:$0xff]
    %v2733 = vld [vmem:[#allocation2 + $0x2a8] sm:$0xff]
    %v2734 = vld [vmem:[#allocation2 + $0x2b0] sm:$0xff]
    %v2735 = vld [vmem:[#allocation2 + $0x2b8] sm:$0xff]
    %v2736 = vld [vmem:[#allocation2 + $0x2c0] sm:$0xff]
    %v2737 = vld [vmem:[#allocation2 + $0x2c8] sm:$0xff]
    %v2738 = vld [vmem:[#allocation2 + $0x2d0] sm:$0xff]
    %v2739 = vld [vmem:[#allocation2 + $0x2d8] sm:$0xff]
    %v2740 = vld [vmem:[#allocation2 + $0x2e0] sm:$0xff]
    %v2741 = vld [vmem:[#allocation2 + $0x2e8] sm:$0xff]
    %v2742 = vld [vmem:[#allocation2 + $0x2f0] sm:$0xff]
    %v2743 = vld [vmem:[#allocation2 + $0x2f8] sm:$0xff]
    %v2744 = vld [vmem:[#allocation2 + $0x300] sm:$0xff]
    %v2745 = vld [vmem:[#allocation2 + $0x308] sm:$0xff]
    %v2746 = vld [vmem:[#allocation2 + $0x310] sm:$0xff]
    %v2747 = vld [vmem:[#allocation2 + $0x318] sm:$0xff]
    %v2748 = vld [vmem:[#allocation2 + $0x320] sm:$0xff]
    %v2749 = vld [vmem:[#allocation2 + $0x328] sm:$0xff]
    %v2750 = vld [vmem:[#allocation2 + $0x330] sm:$0xff]
    %v2751 = vld [vmem:[#allocation2 + $0x338] sm:$0xff]
    %v2752 = vld [vmem:[#allocation2 + $0x340] sm:$0xff]
    %v2753 = vld [vmem:[#allocation2 + $0x348] sm:$0xff]
    %v2754 = vld [vmem:[#allocation2 + $0x350] sm:$0xff]
    %v2755 = vld [vmem:[#allocation2 + $0x358] sm:$0xff]
    %v2756 = vld [vmem:[#allocation2 + $0x360] sm:$0xff]
    %v2757 = vld [vmem:[#allocation2 + $0x368] sm:$0xff]
    %v2758 = vld [vmem:[#allocation2 + $0x370] sm:$0xff]
    %v2759 = vld [vmem:[#allocation2 + $0x378] sm:$0xff]
    %v2760 = vld [vmem:[#allocation2 + $0x380] sm:$0xff]
    %v2761 = vld [vmem:[#allocation2 + $0x388] sm:$0xff]
    %v2762 = vld [vmem:[#allocation2 + $0x390] sm:$0xff]
    %v2763 = vld [vmem:[#allocation2 + $0x398] sm:$0xff]
    %v2764 = vld [vmem:[#allocation2 + $0x3a0] sm:$0xff]
    %v2765 = vld [vmem:[#allocation2 + $0x3a8] sm:$0xff]
    %v2766 = vld [vmem:[#allocation2 + $0x3b0] sm:$0xff]
    %v2767 = vld [vmem:[#allocation2 + $0x3b8] sm:$0xff]
    %v2768 = vld [vmem:[#allocation2 + $0x3c0] sm:$0xff]
    %v2769 = vld [vmem:[#allocation2 + $0x3c8] sm:$0xff]
    %v2770 = vld [vmem:[#allocation2 + $0x3d0] sm:$0xff]
    %v2771 = vld [vmem:[#allocation2 + $0x3d8] sm:$0xff]
    %v2772 = vld [vmem:[#allocation2 + $0x3e0] sm:$0xff]
    %v2773 = vld [vmem:[#allocation2 + $0x3e8] sm:$0xff]
    %v2774 = vld [vmem:[#allocation2 + $0x3f0] sm:$0xff]
    %v2775 = vld [vmem:[#allocation2 + $0x3f8] sm:$0xff]
    %v2904 = vunpack.c.l.b16 %v2648
    %v2905 = vunpack.c.h.b16 %v2648
    %v2906 = vunpack.c.l.b16 %v2649
    %v2907 = vunpack.c.h.b16 %v2649
    %v2908 = vunpack.c.l.b16 %v2650
    %v2909 = vunpack.c.h.b16 %v2650
    %v2910 = vunpack.c.l.b16 %v2651
    %v2911 = vunpack.c.h.b16 %v2651
    %v2912 = vunpack.c.l.b16 %v2652
    %v2913 = vunpack.c.h.b16 %v2652
    %v2914 = vunpack.c.l.b16 %v2653
    %v2915 = vunpack.c.h.b16 %v2653
    %v2916 = vunpack.c.l.b16 %v2654
    %v2917 = vunpack.c.h.b16 %v2654
    %v2918 = vunpack.c.l.b16 %v2655
    %v2919 = vunpack.c.h.b16 %v2655
    %v2920 = vunpack.c.l.b16 %v2656
    %v2921 = vunpack.c.h.b16 %v2656
    %v2922 = vunpack.c.l.b16 %v2657
    %v2923 = vunpack.c.h.b16 %v2657
    %v2924 = vunpack.c.l.b16 %v2658
    %v2925 = vunpack.c.h.b16 %v2658
    %v2926 = vunpack.c.l.b16 %v2659
    %v2927 = vunpack.c.h.b16 %v2659
    %v2928 = vunpack.c.l.b16 %v2660
    %v2929 = vunpack.c.h.b16 %v2660
    %v2930 = vunpack.c.l.b16 %v2661
    %v2931 = vunpack.c.h.b16 %v2661
    %v2932 = vunpack.c.l.b16 %v2662
    %v2933 = vunpack.c.h.b16 %v2662
    %v2934 = vunpack.c.l.b16 %v2663
    %v2935 = vunpack.c.h.b16 %v2663
    %v2936 = vunpack.c.l.b16 %v2664
    %v2937 = vunpack.c.h.b16 %v2664
    %v2938 = vunpack.c.l.b16 %v2665
    %v2939 = vunpack.c.h.b16 %v2665
    %v2940 = vunpack.c.l.b16 %v2666
    %v2941 = vunpack.c.h.b16 %v2666
    %v2942 = vunpack.c.l.b16 %v2667
    %v2943 = vunpack.c.h.b16 %v2667
    %v2944 = vunpack.c.l.b16 %v2668
    %v2945 = vunpack.c.h.b16 %v2668
    %v2946 = vunpack.c.l.b16 %v2669
    %v2947 = vunpack.c.h.b16 %v2669
    %v2948 = vunpack.c.l.b16 %v2670
    %v2949 = vunpack.c.h.b16 %v2670
    %v2950 = vunpack.c.l.b16 %v2671
    %v2951 = vunpack.c.h.b16 %v2671
    %v2952 = vunpack.c.l.b16 %v2672
    %v2953 = vunpack.c.h.b16 %v2672
    %v2954 = vunpack.c.l.b16 %v2673
    %v2955 = vunpack.c.h.b16 %v2673
    %v2956 = vunpack.c.l.b16 %v2674
    %v2957 = vunpack.c.h.b16 %v2674
    %v2958 = vunpack.c.l.b16 %v2675
    %v2959 = vunpack.c.h.b16 %v2675
    %v2960 = vunpack.c.l.b16 %v2676
    %v2961 = vunpack.c.h.b16 %v2676
    %v2962 = vunpack.c.l.b16 %v2677
    %v2963 = vunpack.c.h.b16 %v2677
    %v2964 = vunpack.c.l.b16 %v2678
    %v2965 = vunpack.c.h.b16 %v2678
    %v2966 = vunpack.c.l.b16 %v2679
    %v2967 = vunpack.c.h.b16 %v2679
    %v2968 = vunpack.c.l.b16 %v2680
    %v2969 = vunpack.c.h.b16 %v2680
    %v2970 = vunpack.c.l.b16 %v2681
    %v2971 = vunpack.c.h.b16 %v2681
    %v2972 = vunpack.c.l.b16 %v2682
    %v2973 = vunpack.c.h.b16 %v2682
    %v2974 = vunpack.c.l.b16 %v2683
    %v2975 = vunpack.c.h.b16 %v2683
    %v2976 = vunpack.c.l.b16 %v2684
    %v2977 = vunpack.c.h.b16 %v2684
    %v2978 = vunpack.c.l.b16 %v2685
    %v2979 = vunpack.c.h.b16 %v2685
    %v2980 = vunpack.c.l.b16 %v2686
    %v2981 = vunpack.c.h.b16 %v2686
    %v2982 = vunpack.c.l.b16 %v2687
    %v2983 = vunpack.c.h.b16 %v2687
    %v2984 = vunpack.c.l.b16 %v2688
    %v2985 = vunpack.c.h.b16 %v2688
    %v2986 = vunpack.c.l.b16 %v2689
    %v2987 = vunpack.c.h.b16 %v2689
    %v2988 = vunpack.c.l.b16 %v2690
    %v2989 = vunpack.c.h.b16 %v2690
    %v2990 = vunpack.c.l.b16 %v2691
    %v2991 = vunpack.c.h.b16 %v2691
    %v2992 = vunpack.c.l.b16 %v2692
    %v2993 = vunpack.c.h.b16 %v2692
    %v2994 = vunpack.c.l.b16 %v2693
    %v2995 = vunpack.c.h.b16 %v2693
    %v2996 = vunpack.c.l.b16 %v2694
    %v2997 = vunpack.c.h.b16 %v2694
    %v2998 = vunpack.c.l.b16 %v2695
    %v2999 = vunpack.c.h.b16 %v2695
    %v3000 = vunpack.c.l.b16 %v2696
    %v3001 = vunpack.c.h.b16 %v2696
    %v3002 = vunpack.c.l.b16 %v2697
    %v3003 = vunpack.c.h.b16 %v2697
    %v3004 = vunpack.c.l.b16 %v2698
    %v3005 = vunpack.c.h.b16 %v2698
    %v3006 = vunpack.c.l.b16 %v2699
    %v3007 = vunpack.c.h.b16 %v2699
    %v3008 = vunpack.c.l.b16 %v2700
    %v3009 = vunpack.c.h.b16 %v2700
    %v3010 = vunpack.c.l.b16 %v2701
    %v3011 = vunpack.c.h.b16 %v2701
    %v3012 = vunpack.c.l.b16 %v2702
    %v3013 = vunpack.c.h.b16 %v2702
    %v3014 = vunpack.c.l.b16 %v2703
    %v3015 = vunpack.c.h.b16 %v2703
    %v3016 = vunpack.c.l.b16 %v2704
    %v3017 = vunpack.c.h.b16 %v2704
    %v3018 = vunpack.c.l.b16 %v2705
    %v3019 = vunpack.c.h.b16 %v2705
    %v3020 = vunpack.c.l.b16 %v2706
    %v3021 = vunpack.c.h.b16 %v2706
    %v3022 = vunpack.c.l.b16 %v2707
    %v3023 = vunpack.c.h.b16 %v2707
    %v3024 = vunpack.c.l.b16 %v2708
    %v3025 = vunpack.c.h.b16 %v2708
    %v3026 = vunpack.c.l.b16 %v2709
    %v3027 = vunpack.c.h.b16 %v2709
    %v3028 = vunpack.c.l.b16 %v2710
    %v3029 = vunpack.c.h.b16 %v2710
    %v3030 = vunpack.c.l.b16 %v2711
    %v3031 = vunpack.c.h.b16 %v2711
    %v3032 = vunpack.c.l.b16 %v2712
    %v3033 = vunpack.c.h.b16 %v2712
    %v3034 = vunpack.c.l.b16 %v2713
    %v3035 = vunpack.c.h.b16 %v2713
    %v3036 = vunpack.c.l.b16 %v2714
    %v3037 = vunpack.c.h.b16 %v2714
    %v3038 = vunpack.c.l.b16 %v2715
    %v3039 = vunpack.c.h.b16 %v2715
    %v3040 = vunpack.c.l.b16 %v2716
    %v3041 = vunpack.c.h.b16 %v2716
    %v3042 = vunpack.c.l.b16 %v2717
    %v3043 = vunpack.c.h.b16 %v2717
    %v3044 = vunpack.c.l.b16 %v2718
    %v3045 = vunpack.c.h.b16 %v2718
    %v3046 = vunpack.c.l.b16 %v2719
    %v3047 = vunpack.c.h.b16 %v2719
    %v3048 = vunpack.c.l.b16 %v2720
    %v3049 = vunpack.c.h.b16 %v2720
    %v3050 = vunpack.c.l.b16 %v2721
    %v3051 = vunpack.c.h.b16 %v2721
    %v3052 = vunpack.c.l.b16 %v2722
    %v3053 = vunpack.c.h.b16 %v2722
    %v3054 = vunpack.c.l.b16 %v2723
    %v3055 = vunpack.c.h.b16 %v2723
    %v3056 = vunpack.c.l.b16 %v2724
    %v3057 = vunpack.c.h.b16 %v2724
    %v3058 = vunpack.c.l.b16 %v2725
    %v3059 = vunpack.c.h.b16 %v2725
    %v3060 = vunpack.c.l.b16 %v2726
    %v3061 = vunpack.c.h.b16 %v2726
    %v3062 = vunpack.c.l.b16 %v2727
    %v3063 = vunpack.c.h.b16 %v2727
    %v3064 = vunpack.c.l.b16 %v2728
    %v3065 = vunpack.c.h.b16 %v2728
    %v3066 = vunpack.c.l.b16 %v2729
    %v3067 = vunpack.c.h.b16 %v2729
    %v3068 = vunpack.c.l.b16 %v2730
    %v3069 = vunpack.c.h.b16 %v2730
    %v3070 = vunpack.c.l.b16 %v2731
    %v3071 = vunpack.c.h.b16 %v2731
    %v3072 = vunpack.c.l.b16 %v2732
    %v3073 = vunpack.c.h.b16 %v2732
    %v3074 = vunpack.c.l.b16 %v2733
    %v3075 = vunpack.c.h.b16 %v2733
    %v3076 = vunpack.c.l.b16 %v2734
    %v3077 = vunpack.c.h.b16 %v2734
    %v3078 = vunpack.c.l.b16 %v2735
    %v3079 = vunpack.c.h.b16 %v2735
    %v3080 = vunpack.c.l.b16 %v2736
    %v3081 = vunpack.c.h.b16 %v2736
    %v3082 = vunpack.c.l.b16 %v2737
    %v3083 = vunpack.c.h.b16 %v2737
    %v3084 = vunpack.c.l.b16 %v2738
    %v3085 = vunpack.c.h.b16 %v2738
    %v3086 = vunpack.c.l.b16 %v2739
    %v3087 = vunpack.c.h.b16 %v2739
    %v3088 = vunpack.c.l.b16 %v2740
    %v3089 = vunpack.c.h.b16 %v2740
    %v3090 = vunpack.c.l.b16 %v2741
    %v3091 = vunpack.c.h.b16 %v2741
    %v3092 = vunpack.c.l.b16 %v2742
    %v3093 = vunpack.c.h.b16 %v2742
    %v3094 = vunpack.c.l.b16 %v2743
    %v3095 = vunpack.c.h.b16 %v2743
    %v3096 = vunpack.c.l.b16 %v2744
    %v3097 = vunpack.c.h.b16 %v2744
    %v3098 = vunpack.c.l.b16 %v2745
    %v3099 = vunpack.c.h.b16 %v2745
    %v3100 = vunpack.c.l.b16 %v2746
    %v3101 = vunpack.c.h.b16 %v2746
    %v3102 = vunpack.c.l.b16 %v2747
    %v3103 = vunpack.c.h.b16 %v2747
    %v3104 = vunpack.c.l.b16 %v2748
    %v3105 = vunpack.c.h.b16 %v2748
    %v3106 = vunpack.c.l.b16 %v2749
    %v3107 = vunpack.c.h.b16 %v2749
    %v3108 = vunpack.c.l.b16 %v2750
    %v3109 = vunpack.c.h.b16 %v2750
    %v3110 = vunpack.c.l.b16 %v2751
    %v3111 = vunpack.c.h.b16 %v2751
    %v3112 = vunpack.c.l.b16 %v2752
    %v3113 = vunpack.c.h.b16 %v2752
    %v3114 = vunpack.c.l.b16 %v2753
    %v3115 = vunpack.c.h.b16 %v2753
    %v3116 = vunpack.c.l.b16 %v2754
    %v3117 = vunpack.c.h.b16 %v2754
    %v3118 = vunpack.c.l.b16 %v2755
    %v3119 = vunpack.c.h.b16 %v2755
    %v3120 = vunpack.c.l.b16 %v2756
    %v3121 = vunpack.c.h.b16 %v2756
    %v3122 = vunpack.c.l.b16 %v2757
    %v3123 = vunpack.c.h.b16 %v2757
    %v3124 = vunpack.c.l.b16 %v2758
    %v3125 = vunpack.c.h.b16 %v2758
    %v3126 = vunpack.c.l.b16 %v2759
    %v3127 = vunpack.c.h.b16 %v2759
    %v3128 = vunpack.c.l.b16 %v2760
    %v3129 = vunpack.c.h.b16 %v2760
    %v3130 = vunpack.c.l.b16 %v2761
    %v3131 = vunpack.c.h.b16 %v2761
    %v3132 = vunpack.c.l.b16 %v2762
    %v3133 = vunpack.c.h.b16 %v2762
    %v3134 = vunpack.c.l.b16 %v2763
    %v3135 = vunpack.c.h.b16 %v2763
    %v3136 = vunpack.c.l.b16 %v2764
    %v3137 = vunpack.c.h.b16 %v2764
    %v3138 = vunpack.c.l.b16 %v2765
    %v3139 = vunpack.c.h.b16 %v2765
    %v3140 = vunpack.c.l.b16 %v2766
    %v3141 = vunpack.c.h.b16 %v2766
    %v3142 = vunpack.c.l.b16 %v2767
    %v3143 = vunpack.c.h.b16 %v2767
    %v3144 = vunpack.c.l.b16 %v2768
    %v3145 = vunpack.c.h.b16 %v2768
    %v3146 = vunpack.c.l.b16 %v2769
    %v3147 = vunpack.c.h.b16 %v2769
    %v3148 = vunpack.c.l.b16 %v2770
    %v3149 = vunpack.c.h.b16 %v2770
    %v3150 = vunpack.c.l.b16 %v2771
    %v3151 = vunpack.c.h.b16 %v2771
    %v3152 = vunpack.c.l.b16 %v2772
    %v3153 = vunpack.c.h.b16 %v2772
    %v3154 = vunpack.c.l.b16 %v2773
    %v3155 = vunpack.c.h.b16 %v2773
    %v3156 = vunpack.c.l.b16 %v2774
    %v3157 = vunpack.c.h.b16 %v2774
    %v3158 = vunpack.c.l.b16 %v2775
    %v3159 = vunpack.c.h.b16 %v2775
    %v3160 = vpack.c.b16 %v2908, %v2904
    %v3161 = vpack.c.b16 %v2909, %v2905
    %v3162 = vpack.c.b16 %v2910, %v2906
    %v3163 = vpack.c.b16 %v2911, %v2907
    %v3164 = vpack.c.b16 %v2916, %v2912
    %v3165 = vpack.c.b16 %v2917, %v2913
    %v3166 = vpack.c.b16 %v2918, %v2914
    %v3167 = vpack.c.b16 %v2919, %v2915
    %v3168 = vpack.c.b16 %v2924, %v2920
    %v3169 = vpack.c.b16 %v2925, %v2921
    %v3170 = vpack.c.b16 %v2926, %v2922
    %v3171 = vpack.c.b16 %v2927, %v2923
    %v3172 = vpack.c.b16 %v2932, %v2928
    %v3173 = vpack.c.b16 %v2933, %v2929
    %v3174 = vpack.c.b16 %v2934, %v2930
    %v3175 = vpack.c.b16 %v2935, %v2931
    %v3176 = vpack.c.b16 %v2940, %v2936
    %v3177 = vpack.c.b16 %v2941, %v2937
    %v3178 = vpack.c.b16 %v2942, %v2938
    %v3179 = vpack.c.b16 %v2943, %v2939
    %v3180 = vpack.c.b16 %v2948, %v2944
    %v3181 = vpack.c.b16 %v2949, %v2945
    %v3182 = vpack.c.b16 %v2950, %v2946
    %v3183 = vpack.c.b16 %v2951, %v2947
    %v3184 = vpack.c.b16 %v2956, %v2952
    %v3185 = vpack.c.b16 %v2957, %v2953
    %v3186 = vpack.c.b16 %v2958, %v2954
    %v3187 = vpack.c.b16 %v2959, %v2955
    %v3188 = vpack.c.b16 %v2964, %v2960
    %v3189 = vpack.c.b16 %v2965, %v2961
    %v3190 = vpack.c.b16 %v2966, %v2962
    %v3191 = vpack.c.b16 %v2967, %v2963
    %v3192 = vpack.c.b16 %v2972, %v2968
    %v3193 = vpack.c.b16 %v2973, %v2969
    %v3194 = vpack.c.b16 %v2974, %v2970
    %v3195 = vpack.c.b16 %v2975, %v2971
    %v3196 = vpack.c.b16 %v2980, %v2976
    %v3197 = vpack.c.b16 %v2981, %v2977
    %v3198 = vpack.c.b16 %v2982, %v2978
    %v3199 = vpack.c.b16 %v2983, %v2979
    %v3200 = vpack.c.b16 %v2988, %v2984
    %v3201 = vpack.c.b16 %v2989, %v2985
    %v3202 = vpack.c.b16 %v2990, %v2986
    %v3203 = vpack.c.b16 %v2991, %v2987
    %v3204 = vpack.c.b16 %v2996, %v2992
    %v3205 = vpack.c.b16 %v2997, %v2993
    %v3206 = vpack.c.b16 %v2998, %v2994
    %v3207 = vpack.c.b16 %v2999, %v2995
    %v3208 = vpack.c.b16 %v3004, %v3000
    %v3209 = vpack.c.b16 %v3005, %v3001
    %v3210 = vpack.c.b16 %v3006, %v3002
    %v3211 = vpack.c.b16 %v3007, %v3003
    %v3212 = vpack.c.b16 %v3012, %v3008
    %v3213 = vpack.c.b16 %v3013, %v3009
    %v3214 = vpack.c.b16 %v3014, %v3010
    %v3215 = vpack.c.b16 %v3015, %v3011
    %v3216 = vpack.c.b16 %v3020, %v3016
    %v3217 = vpack.c.b16 %v3021, %v3017
    %v3218 = vpack.c.b16 %v3022, %v3018
    %v3219 = vpack.c.b16 %v3023, %v3019
    %v3220 = vpack.c.b16 %v3028, %v3024
    %v3221 = vpack.c.b16 %v3029, %v3025
    %v3222 = vpack.c.b16 %v3030, %v3026
    %v3223 = vpack.c.b16 %v3031, %v3027
    %v3224 = vpack.c.b16 %v3036, %v3032
    %v3225 = vpack.c.b16 %v3037, %v3033
    %v3226 = vpack.c.b16 %v3038, %v3034
    %v3227 = vpack.c.b16 %v3039, %v3035
    %v3228 = vpack.c.b16 %v3044, %v3040
    %v3229 = vpack.c.b16 %v3045, %v3041
    %v3230 = vpack.c.b16 %v3046, %v3042
    %v3231 = vpack.c.b16 %v3047, %v3043
    %v3232 = vpack.c.b16 %v3052, %v3048
    %v3233 = vpack.c.b16 %v3053, %v3049
    %v3234 = vpack.c.b16 %v3054, %v3050
    %v3235 = vpack.c.b16 %v3055, %v3051
    %v3236 = vpack.c.b16 %v3060, %v3056
    %v3237 = vpack.c.b16 %v3061, %v3057
    %v3238 = vpack.c.b16 %v3062, %v3058
    %v3239 = vpack.c.b16 %v3063, %v3059
    %v3240 = vpack.c.b16 %v3068, %v3064
    %v3241 = vpack.c.b16 %v3069, %v3065
    %v3242 = vpack.c.b16 %v3070, %v3066
    %v3243 = vpack.c.b16 %v3071, %v3067
    %v3244 = vpack.c.b16 %v3076, %v3072
    %v3245 = vpack.c.b16 %v3077, %v3073
    %v3246 = vpack.c.b16 %v3078, %v3074
    %v3247 = vpack.c.b16 %v3079, %v3075
    %v3248 = vpack.c.b16 %v3084, %v3080
    %v3249 = vpack.c.b16 %v3085, %v3081
    %v3250 = vpack.c.b16 %v3086, %v3082
    %v3251 = vpack.c.b16 %v3087, %v3083
    %v3252 = vpack.c.b16 %v3092, %v3088
    %v3253 = vpack.c.b16 %v3093, %v3089
    %v3254 = vpack.c.b16 %v3094, %v3090
    %v3255 = vpack.c.b16 %v3095, %v3091
    %v3256 = vpack.c.b16 %v3100, %v3096
    %v3257 = vpack.c.b16 %v3101, %v3097
    %v3258 = vpack.c.b16 %v3102, %v3098
    %v3259 = vpack.c.b16 %v3103, %v3099
    %v3260 = vpack.c.b16 %v3108, %v3104
    %v3261 = vpack.c.b16 %v3109, %v3105
    %v3262 = vpack.c.b16 %v3110, %v3106
    %v3263 = vpack.c.b16 %v3111, %v3107
    %v3264 = vpack.c.b16 %v3116, %v3112
    %v3265 = vpack.c.b16 %v3117, %v3113
    %v3266 = vpack.c.b16 %v3118, %v3114
    %v3267 = vpack.c.b16 %v3119, %v3115
    %v3268 = vpack.c.b16 %v3124, %v3120
    %v3269 = vpack.c.b16 %v3125, %v3121
    %v3270 = vpack.c.b16 %v3126, %v3122
    %v3271 = vpack.c.b16 %v3127, %v3123
    %v3272 = vpack.c.b16 %v3132, %v3128
    %v3273 = vpack.c.b16 %v3133, %v3129
    %v3274 = vpack.c.b16 %v3134, %v3130
    %v3275 = vpack.c.b16 %v3135, %v3131
    %v3276 = vpack.c.b16 %v3140, %v3136
    %v3277 = vpack.c.b16 %v3141, %v3137
    %v3278 = vpack.c.b16 %v3142, %v3138
    %v3279 = vpack.c.b16 %v3143, %v3139
    %v3280 = vpack.c.b16 %v3148, %v3144
    %v3281 = vpack.c.b16 %v3149, %v3145
    %v3282 = vpack.c.b16 %v3150, %v3146
    %v3283 = vpack.c.b16 %v3151, %v3147
    %v3284 = vpack.c.b16 %v3156, %v3152
    %v3285 = vpack.c.b16 %v3157, %v3153
    %v3286 = vpack.c.b16 %v3158, %v3154
    %v3287 = vpack.c.b16 %v3159, %v3155
    %3416 = vmatprep.subr.bf16.mxu0 %v3189
    %3417 = vmatpush1.bf16.msra.mxu0 %v3188
    %3418 = vmatprep.subr.bf16.mxu0 %v3185
    %3419 = vmatpush1.bf16.msra.mxu0 %v3184
    %3420 = vmatprep.subr.bf16.mxu0 %v3181
    %3421 = vmatpush1.bf16.msra.mxu0 %v3180
    %3422 = vmatprep.subr.bf16.mxu0 %v3177
    %3423 = vmatpush1.bf16.msra.mxu0 %v3176
    %3424 = vmatprep.subr.bf16.mxu0 %v3173
    %3425 = vmatpush1.bf16.msra.mxu0 %v3172
    %3426 = vmatprep.subr.bf16.mxu0 %v3169
    %3427 = vmatpush1.bf16.msra.mxu0 %v3168
    %3428 = vmatprep.subr.bf16.mxu0 %v3165
    %3429 = vmatpush1.bf16.msra.mxu0 %v3164
    %3430 = vmatprep.subr.bf16.mxu0 %v3161
    %3431 = vmatpush1.bf16.msra.mxu0 %v3160
    %3432 = vmatprep.subr.bf16.mxu0 %v3221
    %3433 = vmatpush2.bf16.msra.mxu0 %v3220
    %3434 = vmatprep.subr.bf16.mxu0 %v3217
    %3435 = vmatpush2.bf16.msra.mxu0 %v3216
    %3436 = vmatprep.subr.bf16.mxu0 %v3213
    %3437 = vmatpush2.bf16.msra.mxu0 %v3212
    %3438 = vmatprep.subr.bf16.mxu0 %v3209
    %3439 = vmatpush2.bf16.msra.mxu0 %v3208
    %3440 = vmatprep.subr.bf16.mxu0 %v3205
    %3441 = vmatpush2.bf16.msra.mxu0 %v3204
    %3442 = vmatprep.subr.bf16.mxu0 %v3201
    %3443 = vmatpush2.bf16.msra.mxu0 %v3200
    %3444 = vmatprep.subr.bf16.mxu0 %v3197
    %3445 = vmatpush2.bf16.msra.mxu0 %v3196
    %3446 = vmatprep.subr.bf16.mxu0 %v3193
    %3447 = vmatpush2.bf16.msra.mxu0 %v3192
    %3448 = vmatprep.mubr.bf16.mxu0 %v2645
    %3449 = vmatmul.mubr.bf16.gmra.mxu0 %v2644
    %v3450 = vpop.f32.mrf.mxu0
    %v3451 = vadd.f32 0.0, %v3450
    %v3452 = vpop.f32.mrf.mxu0
    %v3453 = vadd.f32 0.0, %v3452
    %v3454 = vpop.f32.mrf.mxu0
    %v3455 = vpop.f32.mrf.mxu0
    %3456 = vdwg.mxu0
    %3457 = vmatprep.subr.bf16.mxu0 %v3253
    %3458 = vmatpush1.bf16.msra.mxu0 %v3252
    %3459 = vmatprep.subr.bf16.mxu0 %v3249
    %3460 = vmatpush1.bf16.msra.mxu0 %v3248
    %3461 = vmatprep.subr.bf16.mxu0 %v3245
    %3462 = vmatpush1.bf16.msra.mxu0 %v3244
    %3463 = vmatprep.subr.bf16.mxu0 %v3241
    %3464 = vmatpush1.bf16.msra.mxu0 %v3240
    %3465 = vmatprep.subr.bf16.mxu0 %v3237
    %3466 = vmatpush1.bf16.msra.mxu0 %v3236
    %3467 = vmatprep.subr.bf16.mxu0 %v3233
    %3468 = vmatpush1.bf16.msra.mxu0 %v3232
    %3469 = vmatprep.subr.bf16.mxu0 %v3229
    %3470 = vmatpush1.bf16.msra.mxu0 %v3228
    %3471 = vmatprep.subr.bf16.mxu0 %v3225
    %3472 = vmatpush1.bf16.msra.mxu0 %v3224
    %3473 = vmatprep.subr.bf16.mxu0 %v3285
    %3474 = vmatpush2.bf16.msra.mxu0 %v3284
    %3475 = vmatprep.subr.bf16.mxu0 %v3281
    %3476 = vmatpush2.bf16.msra.mxu0 %v3280
    %3477 = vmatprep.subr.bf16.mxu0 %v3277
    %3478 = vmatpush2.bf16.msra.mxu0 %v3276
    %3479 = vmatprep.subr.bf16.mxu0 %v3273
    %3480 = vmatpush2.bf16.msra.mxu0 %v3272
    %3481 = vmatprep.subr.bf16.mxu0 %v3269
    %3482 = vmatpush2.bf16.msra.mxu0 %v3268
    %3483 = vmatprep.subr.bf16.mxu0 %v3265
    %3484 = vmatpush2.bf16.msra.mxu0 %v3264
    %3485 = vmatprep.subr.bf16.mxu0 %v3261
    %3486 = vmatpush2.bf16.msra.mxu0 %v3260
    %3487 = vmatprep.subr.bf16.mxu0 %v3257
    %3488 = vmatpush2.bf16.msra.mxu0 %v3256
    %3489 = vmatprep.mubr.bf16.mxu0 %v2647
    %3490 = vmatmul.mubr.bf16.gmra.mxu0 %v2646
    %v3491 = vpop.f32.mrf.mxu0
    %v3492 = vadd.f32 %v3451, %v3491
    %v3493 = vpop.f32.mrf.mxu0
    %v3494 = vadd.f32 %v3453, %v3493
    %v3495 = vpop.f32.mrf.mxu0
    %v3496 = vpop.f32.mrf.mxu0
    %3497 = vdwg.mxu0
    %3498 = vmatprep.subr.bf16.mxu0 %v3191
    %3499 = vmatpush1.bf16.msra.mxu0 %v3190
    %3500 = vmatprep.subr.bf16.mxu0 %v3187
    %3501 = vmatpush1.bf16.msra.mxu0 %v3186
    %3502 = vmatprep.subr.bf16.mxu0 %v3183
    %3503 = vmatpush1.bf16.msra.mxu0 %v3182
    %3504 = vmatprep.subr.bf16.mxu0 %v3179
    %3505 = vmatpush1.bf16.msra.mxu0 %v3178
    %3506 = vmatprep.subr.bf16.mxu0 %v3175
    %3507 = vmatpush1.bf16.msra.mxu0 %v3174
    %3508 = vmatprep.subr.bf16.mxu0 %v3171
    %3509 = vmatpush1.bf16.msra.mxu0 %v3170
    %3510 = vmatprep.subr.bf16.mxu0 %v3167
    %3511 = vmatpush1.bf16.msra.mxu0 %v3166
    %3512 = vmatprep.subr.bf16.mxu0 %v3163
    %3513 = vmatpush1.bf16.msra.mxu0 %v3162
    %3514 = vmatprep.subr.bf16.mxu0 %v3223
    %3515 = vmatpush2.bf16.msra.mxu0 %v3222
    %3516 = vmatprep.subr.bf16.mxu0 %v3219
    %3517 = vmatpush2.bf16.msra.mxu0 %v3218
    %3518 = vmatprep.subr.bf16.mxu0 %v3215
    %3519 = vmatpush2.bf16.msra.mxu0 %v3214
    %3520 = vmatprep.subr.bf16.mxu0 %v3211
    %3521 = vmatpush2.bf16.msra.mxu0 %v3210
    %3522 = vmatprep.subr.bf16.mxu0 %v3207
    %3523 = vmatpush2.bf16.msra.mxu0 %v3206
    %3524 = vmatprep.subr.bf16.mxu0 %v3203
    %3525 = vmatpush2.bf16.msra.mxu0 %v3202
    %3526 = vmatprep.subr.bf16.mxu0 %v3199
    %3527 = vmatpush2.bf16.msra.mxu0 %v3198
    %3528 = vmatprep.subr.bf16.mxu0 %v3195
    %3529 = vmatpush2.bf16.msra.mxu0 %v3194
    %3530 = vmatprep.mubr.bf16.mxu0 %v2645
    %3531 = vmatmul.mubr.bf16.gmra.mxu0 %v2644
    %v3532 = vpop.f32.mrf.mxu0
    %v3533 = vadd.f32 0.0, %v3532
    %v3534 = vpop.f32.mrf.mxu0
    %v3535 = vadd.f32 0.0, %v3534
    %v3536 = vpop.f32.mrf.mxu0
    %v3537 = vpop.f32.mrf.mxu0
    %3538 = vdwg.mxu0
    %3539 = vmatprep.subr.bf16.mxu0 %v3255
    %3540 = vmatpush1.bf16.msra.mxu0 %v3254
    %3541 = vmatprep.subr.bf16.mxu0 %v3251
    %3542 = vmatpush1.bf16.msra.mxu0 %v3250
    %3543 = vmatprep.subr.bf16.mxu0 %v3247
    %3544 = vmatpush1.bf16.msra.mxu0 %v3246
    %3545 = vmatprep.subr.bf16.mxu0 %v3243
    %3546 = vmatpush1.bf16.msra.mxu0 %v3242
    %3547 = vmatprep.subr.bf16.mxu0 %v3239
    %3548 = vmatpush1.bf16.msra.mxu0 %v3238
    %3549 = vmatprep.subr.bf16.mxu0 %v3235
    %3550 = vmatpush1.bf16.msra.mxu0 %v3234
    %3551 = vmatprep.subr.bf16.mxu0 %v3231
    %3552 = vmatpush1.bf16.msra.mxu0 %v3230
    %3553 = vmatprep.subr.bf16.mxu0 %v3227
    %3554 = vmatpush1.bf16.msra.mxu0 %v3226
    %3555 = vmatprep.subr.bf16.mxu0 %v3287
    %3556 = vmatpush2.bf16.msra.mxu0 %v3286
    %3557 = vmatprep.subr.bf16.mxu0 %v3283
    %3558 = vmatpush2.bf16.msra.mxu0 %v3282
    %3559 = vmatprep.subr.bf16.mxu0 %v3279
    %3560 = vmatpush2.bf16.msra.mxu0 %v3278
    %3561 = vmatprep.subr.bf16.mxu0 %v3275
    %3562 = vmatpush2.bf16.msra.mxu0 %v3274
    %3563 = vmatprep.subr.bf16.mxu0 %v3271
    %3564 = vmatpush2.bf16.msra.mxu0 %v3270
    %3565 = vmatprep.subr.bf16.mxu0 %v3267
    %3566 = vmatpush2.bf16.msra.mxu0 %v3266
    %3567 = vmatprep.subr.bf16.mxu0 %v3263
    %3568 = vmatpush2.bf16.msra.mxu0 %v3262
    %3569 = vmatprep.subr.bf16.mxu0 %v3259
    %3570 = vmatpush2.bf16.msra.mxu0 %v3258
    %3571 = vmatprep.mubr.bf16.mxu0 %v2647
    %3572 = vmatmul.mubr.bf16.gmra.mxu0 %v2646
    %v3573 = vpop.f32.mrf.mxu0
    %v3574 = vadd.f32 %v3533, %v3573
    %v3575 = vpop.f32.mrf.mxu0
    %v3576 = vadd.f32 %v3535, %v3575
    %v3577 = vpop.f32.mrf.mxu0
    %v3578 = vpop.f32.mrf.mxu0
    %3579 = vdwg.mxu0
    %v3580 = vrot.slane %v3492, 4
    %v3581 = vadd.f32 %v3492, %v3580
    %v3582 = vrot.slane %v3581, 2
    %v3583 = vadd.f32 %v3581, %v3582
    %v3584 = vrot.slane %v3583, 1
    %v3585 = vadd.f32 %v3583, %v3584
    %v3586 = vrot.slane %v3494, 4
    %v3587 = vadd.f32 %v3494, %v3586
    %v3588 = vrot.slane %v3587, 2
    %v3589 = vadd.f32 %v3587, %v3588
    %v3590 = vrot.slane %v3589, 1
    %v3591 = vadd.f32 %v3589, %v3590
    %v3592 = vrot.slane %v3574, 4
    %v3593 = vadd.f32 %v3574, %v3592
    %v3594 = vrot.slane %v3593, 2
    %v3595 = vadd.f32 %v3593, %v3594
    %v3596 = vrot.slane %v3595, 1
    %v3597 = vadd.f32 %v3595, %v3596
    %v3598 = vrot.slane %v3576, 4
    %v3599 = vadd.f32 %v3576, %v3598
    %v3600 = vrot.slane %v3599, 2
    %v3601 = vadd.f32 %v3599, %v3600
    %v3602 = vrot.slane %v3601, 1
    %v3603 = vadd.f32 %v3601, %v3602
    %v3604 = vmul.f32 %v3585, %v271
    %v3605 = vmul.f32 %v3591, %v271
    %v3606 = vmul.f32 %v3597, %v271
    %v3607 = vmul.f32 %v3603, %v271
    %v3608 = vsub.f32 %v3492, %v3604
    %v3609 = vsub.f32 %v3494, %v3605
    %v3610 = vsub.f32 %v3574, %v3606
    %v3611 = vsub.f32 %v3576, %v3607
    %v3612 = vmul.f32 %v3608, %v3608
    %v3613 = vmul.f32 %v3609, %v3609
    %v3614 = vmul.f32 %v3610, %v3610
    %v3615 = vmul.f32 %v3611, %v3611
    %v3616 = vrot.slane %v3612, 4
    %v3617 = vadd.f32 %v3612, %v3616
    %v3618 = vrot.slane %v3617, 2
    %v3619 = vadd.f32 %v3617, %v3618
    %v3620 = vrot.slane %v3619, 1
    %v3621 = vadd.f32 %v3619, %v3620
    %v3622 = vrot.slane %v3613, 4
    %v3623 = vadd.f32 %v3613, %v3622
    %v3624 = vrot.slane %v3623, 2
    %v3625 = vadd.f32 %v3623, %v3624
    %v3626 = vrot.slane %v3625, 1
    %v3627 = vadd.f32 %v3625, %v3626
    %v3628 = vrot.slane %v3614, 4
    %v3629 = vadd.f32 %v3614, %v3628
    %v3630 = vrot.slane %v3629, 2
    %v3631 = vadd.f32 %v3629, %v3630
    %v3632 = vrot.slane %v3631, 1
    %v3633 = vadd.f32 %v3631, %v3632
    %v3634 = vrot.slane %v3615, 4
    %v3635 = vadd.f32 %v3615, %v3634
    %v3636 = vrot.slane %v3635, 2
    %v3637 = vadd.f32 %v3635, %v3636
    %v3638 = vrot.slane %v3637, 1
    %v3639 = vadd.f32 %v3637, %v3638
    %v3640 = vmul.f32 %v3621, %v271
    %v3641 = vmul.f32 %v3627, %v271
    %v3642 = vmul.f32 %v3633, %v271
    %v3643 = vmul.f32 %v3639, %v271
    %s3644 = scalar_lea.vmem [#allocation12], 3
    %v3645 = vld [vmem:[%s3644] ss:$8 sm:$0xf]
    %v3646 = vadd.f32 %v3640, 1e-05
    %v3647 = vadd.f32 %v3641, 1e-05
    %v3648 = vadd.f32 %v3642, 1e-05
    %v3649 = vadd.f32 %v3643, 1e-05
    %v3650 = vrsqrt.pop %v3646
    %v3651 = vrsqrt.pop %v3647
    %v3652 = vrsqrt.pop %v3648
    %v3653 = vrsqrt.pop %v3649
    %v3658 = vcombine.low %v3650, %v3651
    %v3659 = vcombine.low %v3652, %v3653
    %v3661 = vunpack.c.l.s4 1966171168
    %v3662 = vunpack.c.0.s8 %v3661
    %v3663 = vlaneseq
    %v3664 = vshrl.u32 %v3663, 7
    %v3665 = vsub.s32 %v3662, %v3664
    %v3666 = vrot.slane %v3658, %v3665
    %v3668 = vunpack.c.l.s4 1966171168
    %v3669 = vunpack.c.0.s8 %v3668
    %v3670 = vlaneseq
    %v3671 = vshrl.u32 %v3670, 7
    %v3672 = vsub.s32 %v3669, %v3671
    %v3673 = vrot.slane %v3659, %v3672
    %v3674 = vcombine.low %v3666, %v3673
    %v3676 = vunpack.c.l.s4 1966171168
    %v3677 = vunpack.c.0.s8 %v3676
    %v3678 = vlaneseq
    %v3679 = vshrl.u32 %v3678, 7
    %v3680 = vsub.s32 %v3677, %v3679
    %v3681 = vrot.slane %v3674, %v3680
    %v3683 = vmul.f32 %v3645, %v3681
    %v3685 = vlaneseq
    %v3686 = vshrl.u32 %v3685, 7
    %v3687 = vsub.s32 0, %v3686
    %v3688 = vrot.slane %v3683, %v3687
    %v3689 = vlaneseq
    %v3690 = vshrl.u32 %v3689, 7
    %v3691 = vsub.s32 1, %v3690
    %v3692 = vrot.slane %v3683, %v3691
    %v3693 = vlaneseq
    %v3694 = vshrl.u32 %v3693, 7
    %v3695 = vsub.s32 2, %v3694
    %v3696 = vrot.slane %v3683, %v3695
    %v3697 = vlaneseq
    %v3698 = vshrl.u32 %v3697, 7
    %v3699 = vsub.s32 3, %v3698
    %v3700 = vrot.slane %v3683, %v3699
    %v3705 = vmul.f32 %v3608, %v3688
    %v3706 = vmul.f32 %v3609, %v3692
    %v3707 = vmul.f32 %v3610, %v3696
    %v3708 = vmul.f32 %v3611, %v3700
    %s3709 = scalar_lea.vmem [#allocation13], 3
    %v3710 = vld [vmem:[%s3709] ss:$8 sm:$0xf]
    %v3712 = vlaneseq
    %v3713 = vshrl.u32 %v3712, 7
    %v3714 = vsub.s32 0, %v3713
    %v3715 = vrot.slane %v3710, %v3714
    %v3716 = vlaneseq
    %v3717 = vshrl.u32 %v3716, 7
    %v3718 = vsub.s32 1, %v3717
    %v3719 = vrot.slane %v3710, %v3718
    %v3720 = vlaneseq
    %v3721 = vshrl.u32 %v3720, 7
    %v3722 = vsub.s32 2, %v3721
    %v3723 = vrot.slane %v3710, %v3722
    %v3724 = vlaneseq
    %v3725 = vshrl.u32 %v3724, 7
    %v3726 = vsub.s32 3, %v3725
    %v3727 = vrot.slane %v3710, %v3726
    %v3732 = vadd.f32 %v3705, %v3715
    %v3733 = vadd.f32 %v3706, %v3719
    %v3734 = vadd.f32 %v3707, %v3723
    %v3735 = vadd.f32 %v3708, %v3727
    %v3736 = vmax.f32 %v3732, 0.0
    %v3737 = vmax.f32 %v3733, 0.0
    %v3738 = vmax.f32 %v3734, 0.0
    %v3739 = vmax.f32 %v3735, 0.0
    %s3740 = sshll.u32 %s407, 4
    %3741 = dma.done %s412, %s3740
    %s3742 = scalar_lea.hbm %s2, 65536
    // Predicated region
    $region66: #{tpu_custom_call.1} parent=1 // pred_check
      _
    $region67: #{tpu_custom_call.1} parent=1 // pred_check_branch
      %3744 = sbr.rel target = $region69
    $region68: #{tpu_custom_call.1} parent=1 // pred_region
      %3745 = sst [smem:[#allocation18]] [#allocation27]
      %3746 = sst [smem:[#allocation19]] [#allocation26]
    $region69: #{tpu_custom_call.1} parent=1 // pred_fallthru
      _
    %3748 = shalt.err (0)
    %s3750 = sshll.u32 [#allocation2], 4
    %s3751 = int_to_ptr.vmem [resolvable:$true] %s3750
    %3753 = dma.hbm_to_vmem [thread:$0]  %s3742, 16384, %s3751, [#allocation3]
    %v3754 = vpack.c.bf16 %v3736, %v3736
    %v3755 = vpack.c.bf16 %v3737, %v3737
    %v3756 = vpack.c.bf16 %v3738, %v3738
    %v3757 = vpack.c.bf16 %v3739, %v3739
    %v3758 = vld [vmem:[%s411] sm:$0xff]
    %v3759 = vld [vmem:[%s411 + $0x8] sm:$0xff]
    %v3760 = vld [vmem:[%s411 + $0x10] sm:$0xff]
    %v3761 = vld [vmem:[%s411 + $0x18] sm:$0xff]
    %v3762 = vld [vmem:[%s411 + $0x20] sm:$0xff]
    %v3763 = vld [vmem:[%s411 + $0x28] sm:$0xff]
    %v3764 = vld [vmem:[%s411 + $0x30] sm:$0xff]
    %v3765 = vld [vmem:[%s411 + $0x38] sm:$0xff]
    %v3766 = vld [vmem:[%s411 + $0x40] sm:$0xff]
    %v3767 = vld [vmem:[%s411 + $0x48] sm:$0xff]
    %v3768 = vld [vmem:[%s411 + $0x50] sm:$0xff]
    %v3769 = vld [vmem:[%s411 + $0x58] sm:$0xff]
    %v3770 = vld [vmem:[%s411 + $0x60] sm:$0xff]
    %v3771 = vld [vmem:[%s411 + $0x68] sm:$0xff]
    %v3772 = vld [vmem:[%s411 + $0x70] sm:$0xff]
    %v3773 = vld [vmem:[%s411 + $0x78] sm:$0xff]
    %v3774 = vld [vmem:[%s411 + $0x80] sm:$0xff]
    %v3775 = vld [vmem:[%s411 + $0x88] sm:$0xff]
    %v3776 = vld [vmem:[%s411 + $0x90] sm:$0xff]
    %v3777 = vld [vmem:[%s411 + $0x98] sm:$0xff]
    %v3778 = vld [vmem:[%s411 + $0xa0] sm:$0xff]
    %v3779 = vld [vmem:[%s411 + $0xa8] sm:$0xff]
    %v3780 = vld [vmem:[%s411 + $0xb0] sm:$0xff]
    %v3781 = vld [vmem:[%s411 + $0xb8] sm:$0xff]
    %v3782 = vld [vmem:[%s411 + $0xc0] sm:$0xff]
    %v3783 = vld [vmem:[%s411 + $0xc8] sm:$0xff]
    %v3784 = vld [vmem:[%s411 + $0xd0] sm:$0xff]
    %v3785 = vld [vmem:[%s411 + $0xd8] sm:$0xff]
    %v3786 = vld [vmem:[%s411 + $0xe0] sm:$0xff]
    %v3787 = vld [vmem:[%s411 + $0xe8] sm:$0xff]
    %v3788 = vld [vmem:[%s411 + $0xf0] sm:$0xff]
    %v3789 = vld [vmem:[%s411 + $0xf8] sm:$0xff]
    %v3790 = vld [vmem:[%s411 + $0x100] sm:$0xff]
    %v3791 = vld [vmem:[%s411 + $0x108] sm:$0xff]
    %v3792 = vld [vmem:[%s411 + $0x110] sm:$0xff]
    %v3793 = vld [vmem:[%s411 + $0x118] sm:$0xff]
    %v3794 = vld [vmem:[%s411 + $0x120] sm:$0xff]
    %v3795 = vld [vmem:[%s411 + $0x128] sm:$0xff]
    %v3796 = vld [vmem:[%s411 + $0x130] sm:$0xff]
    %v3797 = vld [vmem:[%s411 + $0x138] sm:$0xff]
    %v3798 = vld [vmem:[%s411 + $0x140] sm:$0xff]
    %v3799 = vld [vmem:[%s411 + $0x148] sm:$0xff]
    %v3800 = vld [vmem:[%s411 + $0x150] sm:$0xff]
    %v3801 = vld [vmem:[%s411 + $0x158] sm:$0xff]
    %v3802 = vld [vmem:[%s411 + $0x160] sm:$0xff]
    %v3803 = vld [vmem:[%s411 + $0x168] sm:$0xff]
    %v3804 = vld [vmem:[%s411 + $0x170] sm:$0xff]
    %v3805 = vld [vmem:[%s411 + $0x178] sm:$0xff]
    %v3806 = vld [vmem:[%s411 + $0x180] sm:$0xff]
    %v3807 = vld [vmem:[%s411 + $0x188] sm:$0xff]
    %v3808 = vld [vmem:[%s411 + $0x190] sm:$0xff]
    %v3809 = vld [vmem:[%s411 + $0x198] sm:$0xff]
    %v3810 = vld [vmem:[%s411 + $0x1a0] sm:$0xff]
    %v3811 = vld [vmem:[%s411 + $0x1a8] sm:$0xff]
    %v3812 = vld [vmem:[%s411 + $0x1b0] sm:$0xff]
    %v3813 = vld [vmem:[%s411 + $0x1b8] sm:$0xff]
    %v3814 = vld [vmem:[%s411 + $0x1c0] sm:$0xff]
    %v3815 = vld [vmem:[%s411 + $0x1c8] sm:$0xff]
    %v3816 = vld [vmem:[%s411 + $0x1d0] sm:$0xff]
    %v3817 = vld [vmem:[%s411 + $0x1d8] sm:$0xff]
    %v3818 = vld [vmem:[%s411 + $0x1e0] sm:$0xff]
    %v3819 = vld [vmem:[%s411 + $0x1e8] sm:$0xff]
    %v3820 = vld [vmem:[%s411 + $0x1f0] sm:$0xff]
    %v3821 = vld [vmem:[%s411 + $0x1f8] sm:$0xff]
    %v3822 = vld [vmem:[%s411 + $0x200] sm:$0xff]
    %v3823 = vld [vmem:[%s411 + $0x208] sm:$0xff]
    %v3824 = vld [vmem:[%s411 + $0x210] sm:$0xff]
    %v3825 = vld [vmem:[%s411 + $0x218] sm:$0xff]
    %v3826 = vld [vmem:[%s411 + $0x220] sm:$0xff]
    %v3827 = vld [vmem:[%s411 + $0x228] sm:$0xff]
    %v3828 = vld [vmem:[%s411 + $0x230] sm:$0xff]
    %v3829 = vld [vmem:[%s411 + $0x238] sm:$0xff]
    %v3830 = vld [vmem:[%s411 + $0x240] sm:$0xff]
    %v3831 = vld [vmem:[%s411 + $0x248] sm:$0xff]
    %v3832 = vld [vmem:[%s411 + $0x250] sm:$0xff]
    %v3833 = vld [vmem:[%s411 + $0x258] sm:$0xff]
    %v3834 = vld [vmem:[%s411 + $0x260] sm:$0xff]
    %v3835 = vld [vmem:[%s411 + $0x268] sm:$0xff]
    %v3836 = vld [vmem:[%s411 + $0x270] sm:$0xff]
    %v3837 = vld [vmem:[%s411 + $0x278] sm:$0xff]
    %v3838 = vld [vmem:[%s411 + $0x280] sm:$0xff]
    %v3839 = vld [vmem:[%s411 + $0x288] sm:$0xff]
    %v3840 = vld [vmem:[%s411 + $0x290] sm:$0xff]
    %v3841 = vld [vmem:[%s411 + $0x298] sm:$0xff]
    %v3842 = vld [vmem:[%s411 + $0x2a0] sm:$0xff]
    %v3843 = vld [vmem:[%s411 + $0x2a8] sm:$0xff]
    %v3844 = vld [vmem:[%s411 + $0x2b0] sm:$0xff]
    %v3845 = vld [vmem:[%s411 + $0x2b8] sm:$0xff]
    %v3846 = vld [vmem:[%s411 + $0x2c0] sm:$0xff]
    %v3847 = vld [vmem:[%s411 + $0x2c8] sm:$0xff]
    %v3848 = vld [vmem:[%s411 + $0x2d0] sm:$0xff]
    %v3849 = vld [vmem:[%s411 + $0x2d8] sm:$0xff]
    %v3850 = vld [vmem:[%s411 + $0x2e0] sm:$0xff]
    %v3851 = vld [vmem:[%s411 + $0x2e8] sm:$0xff]
    %v3852 = vld [vmem:[%s411 + $0x2f0] sm:$0xff]
    %v3853 = vld [vmem:[%s411 + $0x2f8] sm:$0xff]
    %v3854 = vld [vmem:[%s411 + $0x300] sm:$0xff]
    %v3855 = vld [vmem:[%s411 + $0x308] sm:$0xff]
    %v3856 = vld [vmem:[%s411 + $0x310] sm:$0xff]
    %v3857 = vld [vmem:[%s411 + $0x318] sm:$0xff]
    %v3858 = vld [vmem:[%s411 + $0x320] sm:$0xff]
    %v3859 = vld [vmem:[%s411 + $0x328] sm:$0xff]
    %v3860 = vld [vmem:[%s411 + $0x330] sm:$0xff]
    %v3861 = vld [vmem:[%s411 + $0x338] sm:$0xff]
    %v3862 = vld [vmem:[%s411 + $0x340] sm:$0xff]
    %v3863 = vld [vmem:[%s411 + $0x348] sm:$0xff]
    %v3864 = vld [vmem:[%s411 + $0x350] sm:$0xff]
    %v3865 = vld [vmem:[%s411 + $0x358] sm:$0xff]
    %v3866 = vld [vmem:[%s411 + $0x360] sm:$0xff]
    %v3867 = vld [vmem:[%s411 + $0x368] sm:$0xff]
    %v3868 = vld [vmem:[%s411 + $0x370] sm:$0xff]
    %v3869 = vld [vmem:[%s411 + $0x378] sm:$0xff]
    %v3870 = vld [vmem:[%s411 + $0x380] sm:$0xff]
    %v3871 = vld [vmem:[%s411 + $0x388] sm:$0xff]
    %v3872 = vld [vmem:[%s411 + $0x390] sm:$0xff]
    %v3873 = vld [vmem:[%s411 + $0x398] sm:$0xff]
    %v3874 = vld [vmem:[%s411 + $0x3a0] sm:$0xff]
    %v3875 = vld [vmem:[%s411 + $0x3a8] sm:$0xff]
    %v3876 = vld [vmem:[%s411 + $0x3b0] sm:$0xff]
    %v3877 = vld [vmem:[%s411 + $0x3b8] sm:$0xff]
    %v3878 = vld [vmem:[%s411 + $0x3c0] sm:$0xff]
    %v3879 = vld [vmem:[%s411 + $0x3c8] sm:$0xff]
    %v3880 = vld [vmem:[%s411 + $0x3d0] sm:$0xff]
    %v3881 = vld [vmem:[%s411 + $0x3d8] sm:$0xff]
    %v3882 = vld [vmem:[%s411 + $0x3e0] sm:$0xff]
    %v3883 = vld [vmem:[%s411 + $0x3e8] sm:$0xff]
    %v3884 = vld [vmem:[%s411 + $0x3f0] sm:$0xff]
    %v3885 = vld [vmem:[%s411 + $0x3f8] sm:$0xff]
    %v4014 = vunpack.c.l.b16 %v3758
    %v4015 = vunpack.c.h.b16 %v3758
    %v4016 = vunpack.c.l.b16 %v3759
    %v4017 = vunpack.c.h.b16 %v3759
    %v4018 = vunpack.c.l.b16 %v3760
    %v4019 = vunpack.c.h.b16 %v3760
    %v4020 = vunpack.c.l.b16 %v3761
    %v4021 = vunpack.c.h.b16 %v3761
    %v4022 = vunpack.c.l.b16 %v3762
    %v4023 = vunpack.c.h.b16 %v3762
    %v4024 = vunpack.c.l.b16 %v3763
    %v4025 = vunpack.c.h.b16 %v3763
    %v4026 = vunpack.c.l.b16 %v3764
    %v4027 = vunpack.c.h.b16 %v3764
    %v4028 = vunpack.c.l.b16 %v3765
    %v4029 = vunpack.c.h.b16 %v3765
    %v4030 = vunpack.c.l.b16 %v3766
    %v4031 = vunpack.c.h.b16 %v3766
    %v4032 = vunpack.c.l.b16 %v3767
    %v4033 = vunpack.c.h.b16 %v3767
    %v4034 = vunpack.c.l.b16 %v3768
    %v4035 = vunpack.c.h.b16 %v3768
    %v4036 = vunpack.c.l.b16 %v3769
    %v4037 = vunpack.c.h.b16 %v3769
    %v4038 = vunpack.c.l.b16 %v3770
    %v4039 = vunpack.c.h.b16 %v3770
    %v4040 = vunpack.c.l.b16 %v3771
    %v4041 = vunpack.c.h.b16 %v3771
    %v4042 = vunpack.c.l.b16 %v3772
    %v4043 = vunpack.c.h.b16 %v3772
    %v4044 = vunpack.c.l.b16 %v3773
    %v4045 = vunpack.c.h.b16 %v3773
    %v4046 = vunpack.c.l.b16 %v3774
    %v4047 = vunpack.c.h.b16 %v3774
    %v4048 = vunpack.c.l.b16 %v3775
    %v4049 = vunpack.c.h.b16 %v3775
    %v4050 = vunpack.c.l.b16 %v3776
    %v4051 = vunpack.c.h.b16 %v3776
    %v4052 = vunpack.c.l.b16 %v3777
    %v4053 = vunpack.c.h.b16 %v3777
    %v4054 = vunpack.c.l.b16 %v3778
    %v4055 = vunpack.c.h.b16 %v3778
    %v4056 = vunpack.c.l.b16 %v3779
    %v4057 = vunpack.c.h.b16 %v3779
    %v4058 = vunpack.c.l.b16 %v3780
    %v4059 = vunpack.c.h.b16 %v3780
    %v4060 = vunpack.c.l.b16 %v3781
    %v4061 = vunpack.c.h.b16 %v3781
    %v4062 = vunpack.c.l.b16 %v3782
    %v4063 = vunpack.c.h.b16 %v3782
    %v4064 = vunpack.c.l.b16 %v3783
    %v4065 = vunpack.c.h.b16 %v3783
    %v4066 = vunpack.c.l.b16 %v3784
    %v4067 = vunpack.c.h.b16 %v3784
    %v4068 = vunpack.c.l.b16 %v3785
    %v4069 = vunpack.c.h.b16 %v3785
    %v4070 = vunpack.c.l.b16 %v3786
    %v4071 = vunpack.c.h.b16 %v3786
    %v4072 = vunpack.c.l.b16 %v3787
    %v4073 = vunpack.c.h.b16 %v3787
    %v4074 = vunpack.c.l.b16 %v3788
    %v4075 = vunpack.c.h.b16 %v3788
    %v4076 = vunpack.c.l.b16 %v3789
    %v4077 = vunpack.c.h.b16 %v3789
    %v4078 = vunpack.c.l.b16 %v3790
    %v4079 = vunpack.c.h.b16 %v3790
    %v4080 = vunpack.c.l.b16 %v3791
    %v4081 = vunpack.c.h.b16 %v3791
    %v4082 = vunpack.c.l.b16 %v3792
    %v4083 = vunpack.c.h.b16 %v3792
    %v4084 = vunpack.c.l.b16 %v3793
    %v4085 = vunpack.c.h.b16 %v3793
    %v4086 = vunpack.c.l.b16 %v3794
    %v4087 = vunpack.c.h.b16 %v3794
    %v4088 = vunpack.c.l.b16 %v3795
    %v4089 = vunpack.c.h.b16 %v3795
    %v4090 = vunpack.c.l.b16 %v3796
    %v4091 = vunpack.c.h.b16 %v3796
    %v4092 = vunpack.c.l.b16 %v3797
    %v4093 = vunpack.c.h.b16 %v3797
    %v4094 = vunpack.c.l.b16 %v3798
    %v4095 = vunpack.c.h.b16 %v3798
    %v4096 = vunpack.c.l.b16 %v3799
    %v4097 = vunpack.c.h.b16 %v3799
    %v4098 = vunpack.c.l.b16 %v3800
    %v4099 = vunpack.c.h.b16 %v3800
    %v4100 = vunpack.c.l.b16 %v3801
    %v4101 = vunpack.c.h.b16 %v3801
    %v4102 = vunpack.c.l.b16 %v3802
    %v4103 = vunpack.c.h.b16 %v3802
    %v4104 = vunpack.c.l.b16 %v3803
    %v4105 = vunpack.c.h.b16 %v3803
    %v4106 = vunpack.c.l.b16 %v3804
    %v4107 = vunpack.c.h.b16 %v3804
    %v4108 = vunpack.c.l.b16 %v3805
    %v4109 = vunpack.c.h.b16 %v3805
    %v4110 = vunpack.c.l.b16 %v3806
    %v4111 = vunpack.c.h.b16 %v3806
    %v4112 = vunpack.c.l.b16 %v3807
    %v4113 = vunpack.c.h.b16 %v3807
    %v4114 = vunpack.c.l.b16 %v3808
    %v4115 = vunpack.c.h.b16 %v3808
    %v4116 = vunpack.c.l.b16 %v3809
    %v4117 = vunpack.c.h.b16 %v3809
    %v4118 = vunpack.c.l.b16 %v3810
    %v4119 = vunpack.c.h.b16 %v3810
    %v4120 = vunpack.c.l.b16 %v3811
    %v4121 = vunpack.c.h.b16 %v3811
    %v4122 = vunpack.c.l.b16 %v3812
    %v4123 = vunpack.c.h.b16 %v3812
    %v4124 = vunpack.c.l.b16 %v3813
    %v4125 = vunpack.c.h.b16 %v3813
    %v4126 = vunpack.c.l.b16 %v3814
    %v4127 = vunpack.c.h.b16 %v3814
    %v4128 = vunpack.c.l.b16 %v3815
    %v4129 = vunpack.c.h.b16 %v3815
    %v4130 = vunpack.c.l.b16 %v3816
    %v4131 = vunpack.c.h.b16 %v3816
    %v4132 = vunpack.c.l.b16 %v3817
    %v4133 = vunpack.c.h.b16 %v3817
    %v4134 = vunpack.c.l.b16 %v3818
    %v4135 = vunpack.c.h.b16 %v3818
    %v4136 = vunpack.c.l.b16 %v3819
    %v4137 = vunpack.c.h.b16 %v3819
    %v4138 = vunpack.c.l.b16 %v3820
    %v4139 = vunpack.c.h.b16 %v3820
    %v4140 = vunpack.c.l.b16 %v3821
    %v4141 = vunpack.c.h.b16 %v3821
    %v4142 = vunpack.c.l.b16 %v3822
    %v4143 = vunpack.c.h.b16 %v3822
    %v4144 = vunpack.c.l.b16 %v3823
    %v4145 = vunpack.c.h.b16 %v3823
    %v4146 = vunpack.c.l.b16 %v3824
    %v4147 = vunpack.c.h.b16 %v3824
    %v4148 = vunpack.c.l.b16 %v3825
    %v4149 = vunpack.c.h.b16 %v3825
    %v4150 = vunpack.c.l.b16 %v3826
    %v4151 = vunpack.c.h.b16 %v3826
    %v4152 = vunpack.c.l.b16 %v3827
    %v4153 = vunpack.c.h.b16 %v3827
    %v4154 = vunpack.c.l.b16 %v3828
    %v4155 = vunpack.c.h.b16 %v3828
    %v4156 = vunpack.c.l.b16 %v3829
    %v4157 = vunpack.c.h.b16 %v3829
    %v4158 = vunpack.c.l.b16 %v3830
    %v4159 = vunpack.c.h.b16 %v3830
    %v4160 = vunpack.c.l.b16 %v3831
    %v4161 = vunpack.c.h.b16 %v3831
    %v4162 = vunpack.c.l.b16 %v3832
    %v4163 = vunpack.c.h.b16 %v3832
    %v4164 = vunpack.c.l.b16 %v3833
    %v4165 = vunpack.c.h.b16 %v3833
    %v4166 = vunpack.c.l.b16 %v3834
    %v4167 = vunpack.c.h.b16 %v3834
    %v4168 = vunpack.c.l.b16 %v3835
    %v4169 = vunpack.c.h.b16 %v3835
    %v4170 = vunpack.c.l.b16 %v3836
    %v4171 = vunpack.c.h.b16 %v3836
    %v4172 = vunpack.c.l.b16 %v3837
    %v4173 = vunpack.c.h.b16 %v3837
    %v4174 = vunpack.c.l.b16 %v3838
    %v4175 = vunpack.c.h.b16 %v3838
    %v4176 = vunpack.c.l.b16 %v3839
    %v4177 = vunpack.c.h.b16 %v3839
    %v4178 = vunpack.c.l.b16 %v3840
    %v4179 = vunpack.c.h.b16 %v3840
    %v4180 = vunpack.c.l.b16 %v3841
    %v4181 = vunpack.c.h.b16 %v3841
    %v4182 = vunpack.c.l.b16 %v3842
    %v4183 = vunpack.c.h.b16 %v3842
    %v4184 = vunpack.c.l.b16 %v3843
    %v4185 = vunpack.c.h.b16 %v3843
    %v4186 = vunpack.c.l.b16 %v3844
    %v4187 = vunpack.c.h.b16 %v3844
    %v4188 = vunpack.c.l.b16 %v3845
    %v4189 = vunpack.c.h.b16 %v3845
    %v4190 = vunpack.c.l.b16 %v3846
    %v4191 = vunpack.c.h.b16 %v3846
    %v4192 = vunpack.c.l.b16 %v3847
    %v4193 = vunpack.c.h.b16 %v3847
    %v4194 = vunpack.c.l.b16 %v3848
    %v4195 = vunpack.c.h.b16 %v3848
    %v4196 = vunpack.c.l.b16 %v3849
    %v4197 = vunpack.c.h.b16 %v3849
    %v4198 = vunpack.c.l.b16 %v3850
    %v4199 = vunpack.c.h.b16 %v3850
    %v4200 = vunpack.c.l.b16 %v3851
    %v4201 = vunpack.c.h.b16 %v3851
    %v4202 = vunpack.c.l.b16 %v3852
    %v4203 = vunpack.c.h.b16 %v3852
    %v4204 = vunpack.c.l.b16 %v3853
    %v4205 = vunpack.c.h.b16 %v3853
    %v4206 = vunpack.c.l.b16 %v3854
    %v4207 = vunpack.c.h.b16 %v3854
    %v4208 = vunpack.c.l.b16 %v3855
    %v4209 = vunpack.c.h.b16 %v3855
    %v4210 = vunpack.c.l.b16 %v3856
    %v4211 = vunpack.c.h.b16 %v3856
    %v4212 = vunpack.c.l.b16 %v3857
    %v4213 = vunpack.c.h.b16 %v3857
    %v4214 = vunpack.c.l.b16 %v3858
    %v4215 = vunpack.c.h.b16 %v3858
    %v4216 = vunpack.c.l.b16 %v3859
    %v4217 = vunpack.c.h.b16 %v3859
    %v4218 = vunpack.c.l.b16 %v3860
    %v4219 = vunpack.c.h.b16 %v3860
    %v4220 = vunpack.c.l.b16 %v3861
    %v4221 = vunpack.c.h.b16 %v3861
    %v4222 = vunpack.c.l.b16 %v3862
    %v4223 = vunpack.c.h.b16 %v3862
    %v4224 = vunpack.c.l.b16 %v3863
    %v4225 = vunpack.c.h.b16 %v3863
    %v4226 = vunpack.c.l.b16 %v3864
    %v4227 = vunpack.c.h.b16 %v3864
    %v4228 = vunpack.c.l.b16 %v3865
    %v4229 = vunpack.c.h.b16 %v3865
    %v4230 = vunpack.c.l.b16 %v3866
    %v4231 = vunpack.c.h.b16 %v3866
    %v4232 = vunpack.c.l.b16 %v3867
    %v4233 = vunpack.c.h.b16 %v3867
    %v4234 = vunpack.c.l.b16 %v3868
    %v4235 = vunpack.c.h.b16 %v3868
    %v4236 = vunpack.c.l.b16 %v3869
    %v4237 = vunpack.c.h.b16 %v3869
    %v4238 = vunpack.c.l.b16 %v3870
    %v4239 = vunpack.c.h.b16 %v3870
    %v4240 = vunpack.c.l.b16 %v3871
    %v4241 = vunpack.c.h.b16 %v3871
    %v4242 = vunpack.c.l.b16 %v3872
    %v4243 = vunpack.c.h.b16 %v3872
    %v4244 = vunpack.c.l.b16 %v3873
    %v4245 = vunpack.c.h.b16 %v3873
    %v4246 = vunpack.c.l.b16 %v3874
    %v4247 = vunpack.c.h.b16 %v3874
    %v4248 = vunpack.c.l.b16 %v3875
    %v4249 = vunpack.c.h.b16 %v3875
    %v4250 = vunpack.c.l.b16 %v3876
    %v4251 = vunpack.c.h.b16 %v3876
    %v4252 = vunpack.c.l.b16 %v3877
    %v4253 = vunpack.c.h.b16 %v3877
    %v4254 = vunpack.c.l.b16 %v3878
    %v4255 = vunpack.c.h.b16 %v3878
    %v4256 = vunpack.c.l.b16 %v3879
    %v4257 = vunpack.c.h.b16 %v3879
    %v4258 = vunpack.c.l.b16 %v3880
    %v4259 = vunpack.c.h.b16 %v3880
    %v4260 = vunpack.c.l.b16 %v3881
    %v4261 = vunpack.c.h.b16 %v3881
    %v4262 = vunpack.c.l.b16 %v3882
    %v4263 = vunpack.c.h.b16 %v3882
    %v4264 = vunpack.c.l.b16 %v3883
    %v4265 = vunpack.c.h.b16 %v3883
    %v4266 = vunpack.c.l.b16 %v3884
    %v4267 = vunpack.c.h.b16 %v3884
    %v4268 = vunpack.c.l.b16 %v3885
    %v4269 = vunpack.c.h.b16 %v3885
    %v4270 = vpack.c.b16 %v4018, %v4014
    %v4271 = vpack.c.b16 %v4019, %v4015
    %v4272 = vpack.c.b16 %v4020, %v4016
    %v4273 = vpack.c.b16 %v4021, %v4017
    %v4274 = vpack.c.b16 %v4026, %v4022
    %v4275 = vpack.c.b16 %v4027, %v4023
    %v4276 = vpack.c.b16 %v4028, %v4024
    %v4277 = vpack.c.b16 %v4029, %v4025
    %v4278 = vpack.c.b16 %v4034, %v4030
    %v4279 = vpack.c.b16 %v4035, %v4031
    %v4280 = vpack.c.b16 %v4036, %v4032
    %v4281 = vpack.c.b16 %v4037, %v4033
    %v4282 = vpack.c.b16 %v4042, %v4038
    %v4283 = vpack.c.b16 %v4043, %v4039
    %v4284 = vpack.c.b16 %v4044, %v4040
    %v4285 = vpack.c.b16 %v4045, %v4041
    %v4286 = vpack.c.b16 %v4050, %v4046
    %v4287 = vpack.c.b16 %v4051, %v4047
    %v4288 = vpack.c.b16 %v4052, %v4048
    %v4289 = vpack.c.b16 %v4053, %v4049
    %v4290 = vpack.c.b16 %v4058, %v4054
    %v4291 = vpack.c.b16 %v4059, %v4055
    %v4292 = vpack.c.b16 %v4060, %v4056
    %v4293 = vpack.c.b16 %v4061, %v4057
    %v4294 = vpack.c.b16 %v4066, %v4062
    %v4295 = vpack.c.b16 %v4067, %v4063
    %v4296 = vpack.c.b16 %v4068, %v4064
    %v4297 = vpack.c.b16 %v4069, %v4065
    %v4298 = vpack.c.b16 %v4074, %v4070
    %v4299 = vpack.c.b16 %v4075, %v4071
    %v4300 = vpack.c.b16 %v4076, %v4072
    %v4301 = vpack.c.b16 %v4077, %v4073
    %v4302 = vpack.c.b16 %v4082, %v4078
    %v4303 = vpack.c.b16 %v4083, %v4079
    %v4304 = vpack.c.b16 %v4084, %v4080
    %v4305 = vpack.c.b16 %v4085, %v4081
    %v4306 = vpack.c.b16 %v4090, %v4086
    %v4307 = vpack.c.b16 %v4091, %v4087
    %v4308 = vpack.c.b16 %v4092, %v4088
    %v4309 = vpack.c.b16 %v4093, %v4089
    %v4310 = vpack.c.b16 %v4098, %v4094
    %v4311 = vpack.c.b16 %v4099, %v4095
    %v4312 = vpack.c.b16 %v4100, %v4096
    %v4313 = vpack.c.b16 %v4101, %v4097
    %v4314 = vpack.c.b16 %v4106, %v4102
    %v4315 = vpack.c.b16 %v4107, %v4103
    %v4316 = vpack.c.b16 %v4108, %v4104
    %v4317 = vpack.c.b16 %v4109, %v4105
    %v4318 = vpack.c.b16 %v4114, %v4110
    %v4319 = vpack.c.b16 %v4115, %v4111
    %v4320 = vpack.c.b16 %v4116, %v4112
    %v4321 = vpack.c.b16 %v4117, %v4113
    %v4322 = vpack.c.b16 %v4122, %v4118
    %v4323 = vpack.c.b16 %v4123, %v4119
    %v4324 = vpack.c.b16 %v4124, %v4120
    %v4325 = vpack.c.b16 %v4125, %v4121
    %v4326 = vpack.c.b16 %v4130, %v4126
    %v4327 = vpack.c.b16 %v4131, %v4127
    %v4328 = vpack.c.b16 %v4132, %v4128
    %v4329 = vpack.c.b16 %v4133, %v4129
    %v4330 = vpack.c.b16 %v4138, %v4134
    %v4331 = vpack.c.b16 %v4139, %v4135
    %v4332 = vpack.c.b16 %v4140, %v4136
    %v4333 = vpack.c.b16 %v4141, %v4137
    %v4334 = vpack.c.b16 %v4146, %v4142
    %v4335 = vpack.c.b16 %v4147, %v4143
    %v4336 = vpack.c.b16 %v4148, %v4144
    %v4337 = vpack.c.b16 %v4149, %v4145
    %v4338 = vpack.c.b16 %v4154, %v4150
    %v4339 = vpack.c.b16 %v4155, %v4151
    %v4340 = vpack.c.b16 %v4156, %v4152
    %v4341 = vpack.c.b16 %v4157, %v4153
    %v4342 = vpack.c.b16 %v4162, %v4158
    %v4343 = vpack.c.b16 %v4163, %v4159
    %v4344 = vpack.c.b16 %v4164, %v4160
    %v4345 = vpack.c.b16 %v4165, %v4161
    %v4346 = vpack.c.b16 %v4170, %v4166
    %v4347 = vpack.c.b16 %v4171, %v4167
    %v4348 = vpack.c.b16 %v4172, %v4168
    %v4349 = vpack.c.b16 %v4173, %v4169
    %v4350 = vpack.c.b16 %v4178, %v4174
    %v4351 = vpack.c.b16 %v4179, %v4175
    %v4352 = vpack.c.b16 %v4180, %v4176
    %v4353 = vpack.c.b16 %v4181, %v4177
    %v4354 = vpack.c.b16 %v4186, %v4182
    %v4355 = vpack.c.b16 %v4187, %v4183
    %v4356 = vpack.c.b16 %v4188, %v4184
    %v4357 = vpack.c.b16 %v4189, %v4185
    %v4358 = vpack.c.b16 %v4194, %v4190
    %v4359 = vpack.c.b16 %v4195, %v4191
    %v4360 = vpack.c.b16 %v4196, %v4192
    %v4361 = vpack.c.b16 %v4197, %v4193
    %v4362 = vpack.c.b16 %v4202, %v4198
    %v4363 = vpack.c.b16 %v4203, %v4199
    %v4364 = vpack.c.b16 %v4204, %v4200
    %v4365 = vpack.c.b16 %v4205, %v4201
    %v4366 = vpack.c.b16 %v4210, %v4206
    %v4367 = vpack.c.b16 %v4211, %v4207
    %v4368 = vpack.c.b16 %v4212, %v4208
    %v4369 = vpack.c.b16 %v4213, %v4209
    %v4370 = vpack.c.b16 %v4218, %v4214
    %v4371 = vpack.c.b16 %v4219, %v4215
    %v4372 = vpack.c.b16 %v4220, %v4216
    %v4373 = vpack.c.b16 %v4221, %v4217
    %v4374 = vpack.c.b16 %v4226, %v4222
    %v4375 = vpack.c.b16 %v4227, %v4223
    %v4376 = vpack.c.b16 %v4228, %v4224
    %v4377 = vpack.c.b16 %v4229, %v4225
    %v4378 = vpack.c.b16 %v4234, %v4230
    %v4379 = vpack.c.b16 %v4235, %v4231
    %v4380 = vpack.c.b16 %v4236, %v4232
    %v4381 = vpack.c.b16 %v4237, %v4233
    %v4382 = vpack.c.b16 %v4242, %v4238
    %v4383 = vpack.c.b16 %v4243, %v4239
    %v4384 = vpack.c.b16 %v4244, %v4240
    %v4385 = vpack.c.b16 %v4245, %v4241
    %v4386 = vpack.c.b16 %v4250, %v4246
    %v4387 = vpack.c.b16 %v4251, %v4247
    %v4388 = vpack.c.b16 %v4252, %v4248
    %v4389 = vpack.c.b16 %v4253, %v4249
    %v4390 = vpack.c.b16 %v4258, %v4254
    %v4391 = vpack.c.b16 %v4259, %v4255
    %v4392 = vpack.c.b16 %v4260, %v4256
    %v4393 = vpack.c.b16 %v4261, %v4257
    %v4394 = vpack.c.b16 %v4266, %v4262
    %v4395 = vpack.c.b16 %v4267, %v4263
    %v4396 = vpack.c.b16 %v4268, %v4264
    %v4397 = vpack.c.b16 %v4269, %v4265
    %4526 = vmatprep.subr.bf16.mxu0 %v4299
    %4527 = vmatpush1.bf16.msra.mxu0 %v4298
    %4528 = vmatprep.subr.bf16.mxu0 %v4295
    %4529 = vmatpush1.bf16.msra.mxu0 %v4294
    %4530 = vmatprep.subr.bf16.mxu0 %v4291
    %4531 = vmatpush1.bf16.msra.mxu0 %v4290
    %4532 = vmatprep.subr.bf16.mxu0 %v4287
    %4533 = vmatpush1.bf16.msra.mxu0 %v4286
    %4534 = vmatprep.subr.bf16.mxu0 %v4283
    %4535 = vmatpush1.bf16.msra.mxu0 %v4282
    %4536 = vmatprep.subr.bf16.mxu0 %v4279
    %4537 = vmatpush1.bf16.msra.mxu0 %v4278
    %4538 = vmatprep.subr.bf16.mxu0 %v4275
    %4539 = vmatpush1.bf16.msra.mxu0 %v4274
    %4540 = vmatprep.subr.bf16.mxu0 %v4271
    %4541 = vmatpush1.bf16.msra.mxu0 %v4270
    %4542 = vmatprep.subr.bf16.mxu0 %v4331
    %4543 = vmatpush2.bf16.msra.mxu0 %v4330
    %4544 = vmatprep.subr.bf16.mxu0 %v4327
    %4545 = vmatpush2.bf16.msra.mxu0 %v4326
    %4546 = vmatprep.subr.bf16.mxu0 %v4323
    %4547 = vmatpush2.bf16.msra.mxu0 %v4322
    %4548 = vmatprep.subr.bf16.mxu0 %v4319
    %4549 = vmatpush2.bf16.msra.mxu0 %v4318
    %4550 = vmatprep.subr.bf16.mxu0 %v4315
    %4551 = vmatpush2.bf16.msra.mxu0 %v4314
    %4552 = vmatprep.subr.bf16.mxu0 %v4311
    %4553 = vmatpush2.bf16.msra.mxu0 %v4310
    %4554 = vmatprep.subr.bf16.mxu0 %v4307
    %4555 = vmatpush2.bf16.msra.mxu0 %v4306
    %4556 = vmatprep.subr.bf16.mxu0 %v4303
    %4557 = vmatpush2.bf16.msra.mxu0 %v4302
    %4558 = vmatprep.mubr.bf16.mxu0 %v3755
    %4559 = vmatmul.mubr.bf16.gmra.mxu0 %v3754
    %v4560 = vpop.f32.mrf.mxu0
    %v4561 = vadd.f32 0.0, %v4560
    %v4562 = vpop.f32.mrf.mxu0
    %v4563 = vadd.f32 0.0, %v4562
    %v4564 = vpop.f32.mrf.mxu0
    %v4565 = vpop.f32.mrf.mxu0
    %4566 = vdwg.mxu0
    %4567 = vmatprep.subr.bf16.mxu0 %v4363
    %4568 = vmatpush1.bf16.msra.mxu0 %v4362
    %4569 = vmatprep.subr.bf16.mxu0 %v4359
    %4570 = vmatpush1.bf16.msra.mxu0 %v4358
    %4571 = vmatprep.subr.bf16.mxu0 %v4355
    %4572 = vmatpush1.bf16.msra.mxu0 %v4354
    %4573 = vmatprep.subr.bf16.mxu0 %v4351
    %4574 = vmatpush1.bf16.msra.mxu0 %v4350
    %4575 = vmatprep.subr.bf16.mxu0 %v4347
    %4576 = vmatpush1.bf16.msra.mxu0 %v4346
    %4577 = vmatprep.subr.bf16.mxu0 %v4343
    %4578 = vmatpush1.bf16.msra.mxu0 %v4342
    %4579 = vmatprep.subr.bf16.mxu0 %v4339
    %4580 = vmatpush1.bf16.msra.mxu0 %v4338
    %4581 = vmatprep.subr.bf16.mxu0 %v4335
    %4582 = vmatpush1.bf16.msra.mxu0 %v4334
    %4583 = vmatprep.subr.bf16.mxu0 %v4395
    %4584 = vmatpush2.bf16.msra.mxu0 %v4394
    %4585 = vmatprep.subr.bf16.mxu0 %v4391
    %4586 = vmatpush2.bf16.msra.mxu0 %v4390
    %4587 = vmatprep.subr.bf16.mxu0 %v4387
    %4588 = vmatpush2.bf16.msra.mxu0 %v4386
    %4589 = vmatprep.subr.bf16.mxu0 %v4383
    %4590 = vmatpush2.bf16.msra.mxu0 %v4382
    %4591 = vmatprep.subr.bf16.mxu0 %v4379
    %4592 = vmatpush2.bf16.msra.mxu0 %v4378
    %4593 = vmatprep.subr.bf16.mxu0 %v4375
    %4594 = vmatpush2.bf16.msra.mxu0 %v4374
    %4595 = vmatprep.subr.bf16.mxu0 %v4371
    %4596 = vmatpush2.bf16.msra.mxu0 %v4370
    %4597 = vmatprep.subr.bf16.mxu0 %v4367
    %4598 = vmatpush2.bf16.msra.mxu0 %v4366
    %4599 = vmatprep.mubr.bf16.mxu0 %v3757
    %4600 = vmatmul.mubr.bf16.gmra.mxu0 %v3756
    %v4601 = vpop.f32.mrf.mxu0
    %v4602 = vadd.f32 %v4561, %v4601
    %v4603 = vpop.f32.mrf.mxu0
    %v4604 = vadd.f32 %v4563, %v4603
    %v4605 = vpop.f32.mrf.mxu0
    %v4606 = vpop.f32.mrf.mxu0
    %4607 = vdwg.mxu0
    %4608 = vmatprep.subr.bf16.mxu0 %v4301
    %4609 = vmatpush1.bf16.msra.mxu0 %v4300
    %4610 = vmatprep.subr.bf16.mxu0 %v4297
    %4611 = vmatpush1.bf16.msra.mxu0 %v4296
    %4612 = vmatprep.subr.bf16.mxu0 %v4293
    %4613 = vmatpush1.bf16.msra.mxu0 %v4292
    %4614 = vmatprep.subr.bf16.mxu0 %v4289
    %4615 = vmatpush1.bf16.msra.mxu0 %v4288
    %4616 = vmatprep.subr.bf16.mxu0 %v4285
    %4617 = vmatpush1.bf16.msra.mxu0 %v4284
    %4618 = vmatprep.subr.bf16.mxu0 %v4281
    %4619 = vmatpush1.bf16.msra.mxu0 %v4280
    %4620 = vmatprep.subr.bf16.mxu0 %v4277
    %4621 = vmatpush1.bf16.msra.mxu0 %v4276
    %4622 = vmatprep.subr.bf16.mxu0 %v4273
    %4623 = vmatpush1.bf16.msra.mxu0 %v4272
    %4624 = vmatprep.subr.bf16.mxu0 %v4333
    %4625 = vmatpush2.bf16.msra.mxu0 %v4332
    %4626 = vmatprep.subr.bf16.mxu0 %v4329
    %4627 = vmatpush2.bf16.msra.mxu0 %v4328
    %4628 = vmatprep.subr.bf16.mxu0 %v4325
    %4629 = vmatpush2.bf16.msra.mxu0 %v4324
    %4630 = vmatprep.subr.bf16.mxu0 %v4321
    %4631 = vmatpush2.bf16.msra.mxu0 %v4320
    %4632 = vmatprep.subr.bf16.mxu0 %v4317
    %4633 = vmatpush2.bf16.msra.mxu0 %v4316
    %4634 = vmatprep.subr.bf16.mxu0 %v4313
    %4635 = vmatpush2.bf16.msra.mxu0 %v4312
    %4636 = vmatprep.subr.bf16.mxu0 %v4309
    %4637 = vmatpush2.bf16.msra.mxu0 %v4308
    %4638 = vmatprep.subr.bf16.mxu0 %v4305
    %4639 = vmatpush2.bf16.msra.mxu0 %v4304
    %4640 = vmatprep.mubr.bf16.mxu0 %v3755
    %4641 = vmatmul.mubr.bf16.gmra.mxu0 %v3754
    %v4642 = vpop.f32.mrf.mxu0
    %v4643 = vadd.f32 0.0, %v4642
    %v4644 = vpop.f32.mrf.mxu0
    %v4645 = vadd.f32 0.0, %v4644
    %v4646 = vpop.f32.mrf.mxu0
    %v4647 = vpop.f32.mrf.mxu0
    %4648 = vdwg.mxu0
    %4649 = vmatprep.subr.bf16.mxu0 %v4365
    %4650 = vmatpush1.bf16.msra.mxu0 %v4364
    %4651 = vmatprep.subr.bf16.mxu0 %v4361
    %4652 = vmatpush1.bf16.msra.mxu0 %v4360
    %4653 = vmatprep.subr.bf16.mxu0 %v4357
    %4654 = vmatpush1.bf16.msra.mxu0 %v4356
    %4655 = vmatprep.subr.bf16.mxu0 %v4353
    %4656 = vmatpush1.bf16.msra.mxu0 %v4352
    %4657 = vmatprep.subr.bf16.mxu0 %v4349
    %4658 = vmatpush1.bf16.msra.mxu0 %v4348
    %4659 = vmatprep.subr.bf16.mxu0 %v4345
    %4660 = vmatpush1.bf16.msra.mxu0 %v4344
    %4661 = vmatprep.subr.bf16.mxu0 %v4341
    %4662 = vmatpush1.bf16.msra.mxu0 %v4340
    %4663 = vmatprep.subr.bf16.mxu0 %v4337
    %4664 = vmatpush1.bf16.msra.mxu0 %v4336
    %4665 = vmatprep.subr.bf16.mxu0 %v4397
    %4666 = vmatpush2.bf16.msra.mxu0 %v4396
    %4667 = vmatprep.subr.bf16.mxu0 %v4393
    %4668 = vmatpush2.bf16.msra.mxu0 %v4392
    %4669 = vmatprep.subr.bf16.mxu0 %v4389
    %4670 = vmatpush2.bf16.msra.mxu0 %v4388
    %4671 = vmatprep.subr.bf16.mxu0 %v4385
    %4672 = vmatpush2.bf16.msra.mxu0 %v4384
    %4673 = vmatprep.subr.bf16.mxu0 %v4381
    %4674 = vmatpush2.bf16.msra.mxu0 %v4380
    %4675 = vmatprep.subr.bf16.mxu0 %v4377
    %4676 = vmatpush2.bf16.msra.mxu0 %v4376
    %4677 = vmatprep.subr.bf16.mxu0 %v4373
    %4678 = vmatpush2.bf16.msra.mxu0 %v4372
    %4679 = vmatprep.subr.bf16.mxu0 %v4369
    %4680 = vmatpush2.bf16.msra.mxu0 %v4368
    %4681 = vmatprep.mubr.bf16.mxu0 %v3757
    %4682 = vmatmul.mubr.bf16.gmra.mxu0 %v3756
    %v4683 = vpop.f32.mrf.mxu0
    %v4684 = vadd.f32 %v4643, %v4683
    %v4685 = vpop.f32.mrf.mxu0
    %v4686 = vadd.f32 %v4645, %v4685
    %v4687 = vpop.f32.mrf.mxu0
    %v4688 = vpop.f32.mrf.mxu0
    %4689 = vdwg.mxu0
    %v4690 = vrot.slane %v4602, 4
    %v4691 = vadd.f32 %v4602, %v4690
    %v4692 = vrot.slane %v4691, 2
    %v4693 = vadd.f32 %v4691, %v4692
    %v4694 = vrot.slane %v4693, 1
    %v4695 = vadd.f32 %v4693, %v4694
    %v4696 = vrot.slane %v4604, 4
    %v4697 = vadd.f32 %v4604, %v4696
    %v4698 = vrot.slane %v4697, 2
    %v4699 = vadd.f32 %v4697, %v4698
    %v4700 = vrot.slane %v4699, 1
    %v4701 = vadd.f32 %v4699, %v4700
    %v4702 = vrot.slane %v4684, 4
    %v4703 = vadd.f32 %v4684, %v4702
    %v4704 = vrot.slane %v4703, 2
    %v4705 = vadd.f32 %v4703, %v4704
    %v4706 = vrot.slane %v4705, 1
    %v4707 = vadd.f32 %v4705, %v4706
    %v4708 = vrot.slane %v4686, 4
    %v4709 = vadd.f32 %v4686, %v4708
    %v4710 = vrot.slane %v4709, 2
    %v4711 = vadd.f32 %v4709, %v4710
    %v4712 = vrot.slane %v4711, 1
    %v4713 = vadd.f32 %v4711, %v4712
    %v4714 = vmul.f32 %v4695, %v271
    %v4715 = vmul.f32 %v4701, %v271
    %v4716 = vmul.f32 %v4707, %v271
    %v4717 = vmul.f32 %v4713, %v271
    %v4718 = vsub.f32 %v4602, %v4714
    %v4719 = vsub.f32 %v4604, %v4715
    %v4720 = vsub.f32 %v4684, %v4716
    %v4721 = vsub.f32 %v4686, %v4717
    %v4722 = vmul.f32 %v4718, %v4718
    %v4723 = vmul.f32 %v4719, %v4719
    %v4724 = vmul.f32 %v4720, %v4720
    %v4725 = vmul.f32 %v4721, %v4721
    %v4726 = vrot.slane %v4722, 4
    %v4727 = vadd.f32 %v4722, %v4726
    %v4728 = vrot.slane %v4727, 2
    %v4729 = vadd.f32 %v4727, %v4728
    %v4730 = vrot.slane %v4729, 1
    %v4731 = vadd.f32 %v4729, %v4730
    %v4732 = vrot.slane %v4723, 4
    %v4733 = vadd.f32 %v4723, %v4732
    %v4734 = vrot.slane %v4733, 2
    %v4735 = vadd.f32 %v4733, %v4734
    %v4736 = vrot.slane %v4735, 1
    %v4737 = vadd.f32 %v4735, %v4736
    %v4738 = vrot.slane %v4724, 4
    %v4739 = vadd.f32 %v4724, %v4738
    %v4740 = vrot.slane %v4739, 2
    %v4741 = vadd.f32 %v4739, %v4740
    %v4742 = vrot.slane %v4741, 1
    %v4743 = vadd.f32 %v4741, %v4742
    %v4744 = vrot.slane %v4725, 4
    %v4745 = vadd.f32 %v4725, %v4744
    %v4746 = vrot.slane %v4745, 2
    %v4747 = vadd.f32 %v4745, %v4746
    %v4748 = vrot.slane %v4747, 1
    %v4749 = vadd.f32 %v4747, %v4748
    %v4750 = vmul.f32 %v4731, %v271
    %v4751 = vmul.f32 %v4737, %v271
    %v4752 = vmul.f32 %v4743, %v271
    %v4753 = vmul.f32 %v4749, %v271
    %s4754 = scalar_lea.vmem [#allocation12], 4
    %v4755 = vld [vmem:[%s4754] ss:$8 sm:$0xf]
    %v4756 = vadd.f32 %v4750, 1e-05
    %v4757 = vadd.f32 %v4751, 1e-05
    %v4758 = vadd.f32 %v4752, 1e-05
    %v4759 = vadd.f32 %v4753, 1e-05
    %v4760 = vrsqrt.pop %v4756
    %v4761 = vrsqrt.pop %v4757
    %v4762 = vrsqrt.pop %v4758
    %v4763 = vrsqrt.pop %v4759
    %v4768 = vcombine.low %v4760, %v4761
    %v4769 = vcombine.low %v4762, %v4763
    %v4771 = vunpack.c.l.s4 1966171168
    %v4772 = vunpack.c.0.s8 %v4771
    %v4773 = vlaneseq
    %v4774 = vshrl.u32 %v4773, 7
    %v4775 = vsub.s32 %v4772, %v4774
    %v4776 = vrot.slane %v4768, %v4775
    %v4778 = vunpack.c.l.s4 1966171168
    %v4779 = vunpack.c.0.s8 %v4778
    %v4780 = vlaneseq
    %v4781 = vshrl.u32 %v4780, 7
    %v4782 = vsub.s32 %v4779, %v4781
    %v4783 = vrot.slane %v4769, %v4782
    %v4784 = vcombine.low %v4776, %v4783
    %v4786 = vunpack.c.l.s4 1966171168
    %v4787 = vunpack.c.0.s8 %v4786
    %v4788 = vlaneseq
    %v4789 = vshrl.u32 %v4788, 7
    %v4790 = vsub.s32 %v4787, %v4789
    %v4791 = vrot.slane %v4784, %v4790
    %v4793 = vmul.f32 %v4755, %v4791
    %v4795 = vlaneseq
    %v4796 = vshrl.u32 %v4795, 7
    %v4797 = vsub.s32 0, %v4796
    %v4798 = vrot.slane %v4793, %v4797
    %v4799 = vlaneseq
    %v4800 = vshrl.u32 %v4799, 7
    %v4801 = vsub.s32 1, %v4800
    %v4802 = vrot.slane %v4793, %v4801
    %v4803 = vlaneseq
    %v4804 = vshrl.u32 %v4803, 7
    %v4805 = vsub.s32 2, %v4804
    %v4806 = vrot.slane %v4793, %v4805
    %v4807 = vlaneseq
    %v4808 = vshrl.u32 %v4807, 7
    %v4809 = vsub.s32 3, %v4808
    %v4810 = vrot.slane %v4793, %v4809
    %v4815 = vmul.f32 %v4718, %v4798
    %v4816 = vmul.f32 %v4719, %v4802
    %v4817 = vmul.f32 %v4720, %v4806
    %v4818 = vmul.f32 %v4721, %v4810
    %s4819 = scalar_lea.vmem [#allocation13], 4
    %v4820 = vld [vmem:[%s4819] ss:$8 sm:$0xf]
    %v4822 = vlaneseq
    %v4823 = vshrl.u32 %v4822, 7
    %v4824 = vsub.s32 0, %v4823
    %v4825 = vrot.slane %v4820, %v4824
    %v4826 = vlaneseq
    %v4827 = vshrl.u32 %v4826, 7
    %v4828 = vsub.s32 1, %v4827
    %v4829 = vrot.slane %v4820, %v4828
    %v4830 = vlaneseq
    %v4831 = vshrl.u32 %v4830, 7
    %v4832 = vsub.s32 2, %v4831
    %v4833 = vrot.slane %v4820, %v4832
    %v4834 = vlaneseq
    %v4835 = vshrl.u32 %v4834, 7
    %v4836 = vsub.s32 3, %v4835
    %v4837 = vrot.slane %v4820, %v4836
    %v4842 = vadd.f32 %v4815, %v4825
    %v4843 = vadd.f32 %v4816, %v4829
    %v4844 = vadd.f32 %v4817, %v4833
    %v4845 = vadd.f32 %v4818, %v4837
    %v4846 = vmax.f32 %v4842, 0.0
    %v4847 = vmax.f32 %v4843, 0.0
    %v4848 = vmax.f32 %v4844, 0.0
    %v4849 = vmax.f32 %v4845, 0.0
    %s4850 = sshll.u32 %s407, 4
    %4851 = dma.done [#allocation3], %s4850
    %s4852 = scalar_lea.hbm %s2, 81920
    // Predicated region
    $region70: #{tpu_custom_call.1} parent=1 // pred_check
      _
    $region71: #{tpu_custom_call.1} parent=1 // pred_check_branch
      %4854 = sbr.rel target = $region73
    $region72: #{tpu_custom_call.1} parent=1 // pred_region
      %4855 = sst [smem:[#allocation18]] [#allocation29]
      %4856 = sst [smem:[#allocation19]] [#allocation28]
    $region73: #{tpu_custom_call.1} parent=1 // pred_fallthru
      _
    %4858 = shalt.err (0)
    %s4860 = sshll.u32 %s411, 4
    %s4861 = int_to_ptr.vmem [resolvable:$true] %s4860
    %4863 = dma.hbm_to_vmem [thread:$0]  %s4852, 16384, %s4861, %s412
    %v4864 = vpack.c.bf16 %v4846, %v4846
    %v4865 = vpack.c.bf16 %v4847, %v4847
    %v4866 = vpack.c.bf16 %v4848, %v4848
    %v4867 = vpack.c.bf16 %v4849, %v4849
    %v4868 = vld [vmem:[#allocation2] sm:$0xff]
    %v4869 = vld [vmem:[#allocation2 + $0x8] sm:$0xff]
    %v4870 = vld [vmem:[#allocation2 + $0x10] sm:$0xff]
    %v4871 = vld [vmem:[#allocation2 + $0x18] sm:$0xff]
    %v4872 = vld [vmem:[#allocation2 + $0x20] sm:$0xff]
    %v4873 = vld [vmem:[#allocation2 + $0x28] sm:$0xff]
    %v4874 = vld [vmem:[#allocation2 + $0x30] sm:$0xff]
    %v4875 = vld [vmem:[#allocation2 + $0x38] sm:$0xff]
    %v4876 = vld [vmem:[#allocation2 + $0x40] sm:$0xff]
    %v4877 = vld [vmem:[#allocation2 + $0x48] sm:$0xff]
    %v4878 = vld [vmem:[#allocation2 + $0x50] sm:$0xff]
    %v4879 = vld [vmem:[#allocation2 + $0x58] sm:$0xff]
    %v4880 = vld [vmem:[#allocation2 + $0x60] sm:$0xff]
    %v4881 = vld [vmem:[#allocation2 + $0x68] sm:$0xff]
    %v4882 = vld [vmem:[#allocation2 + $0x70] sm:$0xff]
    %v4883 = vld [vmem:[#allocation2 + $0x78] sm:$0xff]
    %v4884 = vld [vmem:[#allocation2 + $0x80] sm:$0xff]
    %v4885 = vld [vmem:[#allocation2 + $0x88] sm:$0xff]
    %v4886 = vld [vmem:[#allocation2 + $0x90] sm:$0xff]
    %v4887 = vld [vmem:[#allocation2 + $0x98] sm:$0xff]
    %v4888 = vld [vmem:[#allocation2 + $0xa0] sm:$0xff]
    %v4889 = vld [vmem:[#allocation2 + $0xa8] sm:$0xff]
    %v4890 = vld [vmem:[#allocation2 + $0xb0] sm:$0xff]
    %v4891 = vld [vmem:[#allocation2 + $0xb8] sm:$0xff]
    %v4892 = vld [vmem:[#allocation2 + $0xc0] sm:$0xff]
    %v4893 = vld [vmem:[#allocation2 + $0xc8] sm:$0xff]
    %v4894 = vld [vmem:[#allocation2 + $0xd0] sm:$0xff]
    %v4895 = vld [vmem:[#allocation2 + $0xd8] sm:$0xff]
    %v4896 = vld [vmem:[#allocation2 + $0xe0] sm:$0xff]
    %v4897 = vld [vmem:[#allocation2 + $0xe8] sm:$0xff]
    %v4898 = vld [vmem:[#allocation2 + $0xf0] sm:$0xff]
    %v4899 = vld [vmem:[#allocation2 + $0xf8] sm:$0xff]
    %v4900 = vld [vmem:[#allocation2 + $0x100] sm:$0xff]
    %v4901 = vld [vmem:[#allocation2 + $0x108] sm:$0xff]
    %v4902 = vld [vmem:[#allocation2 + $0x110] sm:$0xff]
    %v4903 = vld [vmem:[#allocation2 + $0x118] sm:$0xff]
    %v4904 = vld [vmem:[#allocation2 + $0x120] sm:$0xff]
    %v4905 = vld [vmem:[#allocation2 + $0x128] sm:$0xff]
    %v4906 = vld [vmem:[#allocation2 + $0x130] sm:$0xff]
    %v4907 = vld [vmem:[#allocation2 + $0x138] sm:$0xff]
    %v4908 = vld [vmem:[#allocation2 + $0x140] sm:$0xff]
    %v4909 = vld [vmem:[#allocation2 + $0x148] sm:$0xff]
    %v4910 = vld [vmem:[#allocation2 + $0x150] sm:$0xff]
    %v4911 = vld [vmem:[#allocation2 + $0x158] sm:$0xff]
    %v4912 = vld [vmem:[#allocation2 + $0x160] sm:$0xff]
    %v4913 = vld [vmem:[#allocation2 + $0x168] sm:$0xff]
    %v4914 = vld [vmem:[#allocation2 + $0x170] sm:$0xff]
    %v4915 = vld [vmem:[#allocation2 + $0x178] sm:$0xff]
    %v4916 = vld [vmem:[#allocation2 + $0x180] sm:$0xff]
    %v4917 = vld [vmem:[#allocation2 + $0x188] sm:$0xff]
    %v4918 = vld [vmem:[#allocation2 + $0x190] sm:$0xff]
    %v4919 = vld [vmem:[#allocation2 + $0x198] sm:$0xff]
    %v4920 = vld [vmem:[#allocation2 + $0x1a0] sm:$0xff]
    %v4921 = vld [vmem:[#allocation2 + $0x1a8] sm:$0xff]
    %v4922 = vld [vmem:[#allocation2 + $0x1b0] sm:$0xff]
    %v4923 = vld [vmem:[#allocation2 + $0x1b8] sm:$0xff]
    %v4924 = vld [vmem:[#allocation2 + $0x1c0] sm:$0xff]
    %v4925 = vld [vmem:[#allocation2 + $0x1c8] sm:$0xff]
    %v4926 = vld [vmem:[#allocation2 + $0x1d0] sm:$0xff]
    %v4927 = vld [vmem:[#allocation2 + $0x1d8] sm:$0xff]
    %v4928 = vld [vmem:[#allocation2 + $0x1e0] sm:$0xff]
    %v4929 = vld [vmem:[#allocation2 + $0x1e8] sm:$0xff]
    %v4930 = vld [vmem:[#allocation2 + $0x1f0] sm:$0xff]
    %v4931 = vld [vmem:[#allocation2 + $0x1f8] sm:$0xff]
    %v4932 = vld [vmem:[#allocation2 + $0x200] sm:$0xff]
    %v4933 = vld [vmem:[#allocation2 + $0x208] sm:$0xff]
    %v4934 = vld [vmem:[#allocation2 + $0x210] sm:$0xff]
    %v4935 = vld [vmem:[#allocation2 + $0x218] sm:$0xff]
    %v4936 = vld [vmem:[#allocation2 + $0x220] sm:$0xff]
    %v4937 = vld [vmem:[#allocation2 + $0x228] sm:$0xff]
    %v4938 = vld [vmem:[#allocation2 + $0x230] sm:$0xff]
    %v4939 = vld [vmem:[#allocation2 + $0x238] sm:$0xff]
    %v4940 = vld [vmem:[#allocation2 + $0x240] sm:$0xff]
    %v4941 = vld [vmem:[#allocation2 + $0x248] sm:$0xff]
    %v4942 = vld [vmem:[#allocation2 + $0x250] sm:$0xff]
    %v4943 = vld [vmem:[#allocation2 + $0x258] sm:$0xff]
    %v4944 = vld [vmem:[#allocation2 + $0x260] sm:$0xff]
    %v4945 = vld [vmem:[#allocation2 + $0x268] sm:$0xff]
    %v4946 = vld [vmem:[#allocation2 + $0x270] sm:$0xff]
    %v4947 = vld [vmem:[#allocation2 + $0x278] sm:$0xff]
    %v4948 = vld [vmem:[#allocation2 + $0x280] sm:$0xff]
    %v4949 = vld [vmem:[#allocation2 + $0x288] sm:$0xff]
    %v4950 = vld [vmem:[#allocation2 + $0x290] sm:$0xff]
    %v4951 = vld [vmem:[#allocation2 + $0x298] sm:$0xff]
    %v4952 = vld [vmem:[#allocation2 + $0x2a0] sm:$0xff]
    %v4953 = vld [vmem:[#allocation2 + $0x2a8] sm:$0xff]
    %v4954 = vld [vmem:[#allocation2 + $0x2b0] sm:$0xff]
    %v4955 = vld [vmem:[#allocation2 + $0x2b8] sm:$0xff]
    %v4956 = vld [vmem:[#allocation2 + $0x2c0] sm:$0xff]
    %v4957 = vld [vmem:[#allocation2 + $0x2c8] sm:$0xff]
    %v4958 = vld [vmem:[#allocation2 + $0x2d0] sm:$0xff]
    %v4959 = vld [vmem:[#allocation2 + $0x2d8] sm:$0xff]
    %v4960 = vld [vmem:[#allocation2 + $0x2e0] sm:$0xff]
    %v4961 = vld [vmem:[#allocation2 + $0x2e8] sm:$0xff]
    %v4962 = vld [vmem:[#allocation2 + $0x2f0] sm:$0xff]
    %v4963 = vld [vmem:[#allocation2 + $0x2f8] sm:$0xff]
    %v4964 = vld [vmem:[#allocation2 + $0x300] sm:$0xff]
    %v4965 = vld [vmem:[#allocation2 + $0x308] sm:$0xff]
    %v4966 = vld [vmem:[#allocation2 + $0x310] sm:$0xff]
    %v4967 = vld [vmem:[#allocation2 + $0x318] sm:$0xff]
    %v4968 = vld [vmem:[#allocation2 + $0x320] sm:$0xff]
    %v4969 = vld [vmem:[#allocation2 + $0x328] sm:$0xff]
    %v4970 = vld [vmem:[#allocation2 + $0x330] sm:$0xff]
    %v4971 = vld [vmem:[#allocation2 + $0x338] sm:$0xff]
    %v4972 = vld [vmem:[#allocation2 + $0x340] sm:$0xff]
    %v4973 = vld [vmem:[#allocation2 + $0x348] sm:$0xff]
    %v4974 = vld [vmem:[#allocation2 + $0x350] sm:$0xff]
    %v4975 = vld [vmem:[#allocation2 + $0x358] sm:$0xff]
    %v4976 = vld [vmem:[#allocation2 + $0x360] sm:$0xff]
    %v4977 = vld [vmem:[#allocation2 + $0x368] sm:$0xff]
    %v4978 = vld [vmem:[#allocation2 + $0x370] sm:$0xff]
    %v4979 = vld [vmem:[#allocation2 + $0x378] sm:$0xff]
    %v4980 = vld [vmem:[#allocation2 + $0x380] sm:$0xff]
    %v4981 = vld [vmem:[#allocation2 + $0x388] sm:$0xff]
    %v4982 = vld [vmem:[#allocation2 + $0x390] sm:$0xff]
    %v4983 = vld [vmem:[#allocation2 + $0x398] sm:$0xff]
    %v4984 = vld [vmem:[#allocation2 + $0x3a0] sm:$0xff]
    %v4985 = vld [vmem:[#allocation2 + $0x3a8] sm:$0xff]
    %v4986 = vld [vmem:[#allocation2 + $0x3b0] sm:$0xff]
    %v4987 = vld [vmem:[#allocation2 + $0x3b8] sm:$0xff]
    %v4988 = vld [vmem:[#allocation2 + $0x3c0] sm:$0xff]
    %v4989 = vld [vmem:[#allocation2 + $0x3c8] sm:$0xff]
    %v4990 = vld [vmem:[#allocation2 + $0x3d0] sm:$0xff]
    %v4991 = vld [vmem:[#allocation2 + $0x3d8] sm:$0xff]
    %v4992 = vld [vmem:[#allocation2 + $0x3e0] sm:$0xff]
    %v4993 = vld [vmem:[#allocation2 + $0x3e8] sm:$0xff]
    %v4994 = vld [vmem:[#allocation2 + $0x3f0] sm:$0xff]
    %v4995 = vld [vmem:[#allocation2 + $0x3f8] sm:$0xff]
    %v5124 = vunpack.c.l.b16 %v4868
    %v5125 = vunpack.c.h.b16 %v4868
    %v5126 = vunpack.c.l.b16 %v4869
    %v5127 = vunpack.c.h.b16 %v4869
    %v5128 = vunpack.c.l.b16 %v4870
    %v5129 = vunpack.c.h.b16 %v4870
    %v5130 = vunpack.c.l.b16 %v4871
    %v5131 = vunpack.c.h.b16 %v4871
    %v5132 = vunpack.c.l.b16 %v4872
    %v5133 = vunpack.c.h.b16 %v4872
    %v5134 = vunpack.c.l.b16 %v4873
    %v5135 = vunpack.c.h.b16 %v4873
    %v5136 = vunpack.c.l.b16 %v4874
    %v5137 = vunpack.c.h.b16 %v4874
    %v5138 = vunpack.c.l.b16 %v4875
    %v5139 = vunpack.c.h.b16 %v4875
    %v5140 = vunpack.c.l.b16 %v4876
    %v5141 = vunpack.c.h.b16 %v4876
    %v5142 = vunpack.c.l.b16 %v4877
    %v5143 = vunpack.c.h.b16 %v4877
    %v5144 = vunpack.c.l.b16 %v4878
    %v5145 = vunpack.c.h.b16 %v4878
    %v5146 = vunpack.c.l.b16 %v4879
    %v5147 = vunpack.c.h.b16 %v4879
    %v5148 = vunpack.c.l.b16 %v4880
    %v5149 = vunpack.c.h.b16 %v4880
    %v5150 = vunpack.c.l.b16 %v4881
    %v5151 = vunpack.c.h.b16 %v4881
    %v5152 = vunpack.c.l.b16 %v4882
    %v5153 = vunpack.c.h.b16 %v4882
    %v5154 = vunpack.c.l.b16 %v4883
    %v5155 = vunpack.c.h.b16 %v4883
    %v5156 = vunpack.c.l.b16 %v4884
    %v5157 = vunpack.c.h.b16 %v4884
    %v5158 = vunpack.c.l.b16 %v4885
    %v5159 = vunpack.c.h.b16 %v4885
    %v5160 = vunpack.c.l.b16 %v4886
    %v5161 = vunpack.c.h.b16 %v4886
    %v5162 = vunpack.c.l.b16 %v4887
    %v5163 = vunpack.c.h.b16 %v4887
    %v5164 = vunpack.c.l.b16 %v4888
    %v5165 = vunpack.c.h.b16 %v4888
    %v5166 = vunpack.c.l.b16 %v4889
    %v5167 = vunpack.c.h.b16 %v4889
    %v5168 = vunpack.c.l.b16 %v4890
    %v5169 = vunpack.c.h.b16 %v4890
    %v5170 = vunpack.c.l.b16 %v4891
    %v5171 = vunpack.c.h.b16 %v4891
    %v5172 = vunpack.c.l.b16 %v4892
    %v5173 = vunpack.c.h.b16 %v4892
    %v5174 = vunpack.c.l.b16 %v4893
    %v5175 = vunpack.c.h.b16 %v4893
    %v5176 = vunpack.c.l.b16 %v4894
    %v5177 = vunpack.c.h.b16 %v4894
    %v5178 = vunpack.c.l.b16 %v4895
    %v5179 = vunpack.c.h.b16 %v4895
    %v5180 = vunpack.c.l.b16 %v4896
    %v5181 = vunpack.c.h.b16 %v4896
    %v5182 = vunpack.c.l.b16 %v4897
    %v5183 = vunpack.c.h.b16 %v4897
    %v5184 = vunpack.c.l.b16 %v4898
    %v5185 = vunpack.c.h.b16 %v4898
    %v5186 = vunpack.c.l.b16 %v4899
    %v5187 = vunpack.c.h.b16 %v4899
    %v5188 = vunpack.c.l.b16 %v4900
    %v5189 = vunpack.c.h.b16 %v4900
    %v5190 = vunpack.c.l.b16 %v4901
    %v5191 = vunpack.c.h.b16 %v4901
    %v5192 = vunpack.c.l.b16 %v4902
    %v5193 = vunpack.c.h.b16 %v4902
    %v5194 = vunpack.c.l.b16 %v4903
    %v5195 = vunpack.c.h.b16 %v4903
    %v5196 = vunpack.c.l.b16 %v4904
    %v5197 = vunpack.c.h.b16 %v4904
    %v5198 = vunpack.c.l.b16 %v4905
    %v5199 = vunpack.c.h.b16 %v4905
    %v5200 = vunpack.c.l.b16 %v4906
    %v5201 = vunpack.c.h.b16 %v4906
    %v5202 = vunpack.c.l.b16 %v4907
    %v5203 = vunpack.c.h.b16 %v4907
    %v5204 = vunpack.c.l.b16 %v4908
    %v5205 = vunpack.c.h.b16 %v4908
    %v5206 = vunpack.c.l.b16 %v4909
    %v5207 = vunpack.c.h.b16 %v4909
    %v5208 = vunpack.c.l.b16 %v4910
    %v5209 = vunpack.c.h.b16 %v4910
    %v5210 = vunpack.c.l.b16 %v4911
    %v5211 = vunpack.c.h.b16 %v4911
    %v5212 = vunpack.c.l.b16 %v4912
    %v5213 = vunpack.c.h.b16 %v4912
    %v5214 = vunpack.c.l.b16 %v4913
    %v5215 = vunpack.c.h.b16 %v4913
    %v5216 = vunpack.c.l.b16 %v4914
    %v5217 = vunpack.c.h.b16 %v4914
    %v5218 = vunpack.c.l.b16 %v4915
    %v5219 = vunpack.c.h.b16 %v4915
    %v5220 = vunpack.c.l.b16 %v4916
    %v5221 = vunpack.c.h.b16 %v4916
    %v5222 = vunpack.c.l.b16 %v4917
    %v5223 = vunpack.c.h.b16 %v4917
    %v5224 = vunpack.c.l.b16 %v4918
    %v5225 = vunpack.c.h.b16 %v4918
    %v5226 = vunpack.c.l.b16 %v4919
    %v5227 = vunpack.c.h.b16 %v4919
    %v5228 = vunpack.c.l.b16 %v4920
    %v5229 = vunpack.c.h.b16 %v4920
    %v5230 = vunpack.c.l.b16 %v4921
    %v5231 = vunpack.c.h.b16 %v4921
    %v5232 = vunpack.c.l.b16 %v4922
    %v5233 = vunpack.c.h.b16 %v4922
    %v5234 = vunpack.c.l.b16 %v4923
    %v5235 = vunpack.c.h.b16 %v4923
    %v5236 = vunpack.c.l.b16 %v4924
    %v5237 = vunpack.c.h.b16 %v4924
    %v5238 = vunpack.c.l.b16 %v4925
    %v5239 = vunpack.c.h.b16 %v4925
    %v5240 = vunpack.c.l.b16 %v4926
    %v5241 = vunpack.c.h.b16 %v4926
    %v5242 = vunpack.c.l.b16 %v4927
    %v5243 = vunpack.c.h.b16 %v4927
    %v5244 = vunpack.c.l.b16 %v4928
    %v5245 = vunpack.c.h.b16 %v4928
    %v5246 = vunpack.c.l.b16 %v4929
    %v5247 = vunpack.c.h.b16 %v4929
    %v5248 = vunpack.c.l.b16 %v4930
    %v5249 = vunpack.c.h.b16 %v4930
    %v5250 = vunpack.c.l.b16 %v4931
    %v5251 = vunpack.c.h.b16 %v4931
    %v5252 = vunpack.c.l.b16 %v4932
    %v5253 = vunpack.c.h.b16 %v4932
    %v5254 = vunpack.c.l.b16 %v4933
    %v5255 = vunpack.c.h.b16 %v4933
    %v5256 = vunpack.c.l.b16 %v4934
    %v5257 = vunpack.c.h.b16 %v4934
    %v5258 = vunpack.c.l.b16 %v4935
    %v5259 = vunpack.c.h.b16 %v4935
    %v5260 = vunpack.c.l.b16 %v4936
    %v5261 = vunpack.c.h.b16 %v4936
    %v5262 = vunpack.c.l.b16 %v4937
    %v5263 = vunpack.c.h.b16 %v4937
    %v5264 = vunpack.c.l.b16 %v4938
    %v5265 = vunpack.c.h.b16 %v4938
    %v5266 = vunpack.c.l.b16 %v4939
    %v5267 = vunpack.c.h.b16 %v4939
    %v5268 = vunpack.c.l.b16 %v4940
    %v5269 = vunpack.c.h.b16 %v4940
    %v5270 = vunpack.c.l.b16 %v4941
    %v5271 = vunpack.c.h.b16 %v4941
    %v5272 = vunpack.c.l.b16 %v4942
    %v5273 = vunpack.c.h.b16 %v4942
    %v5274 = vunpack.c.l.b16 %v4943
    %v5275 = vunpack.c.h.b16 %v4943
    %v5276 = vunpack.c.l.b16 %v4944
    %v5277 = vunpack.c.h.b16 %v4944
    %v5278 = vunpack.c.l.b16 %v4945
    %v5279 = vunpack.c.h.b16 %v4945
    %v5280 = vunpack.c.l.b16 %v4946
    %v5281 = vunpack.c.h.b16 %v4946
    %v5282 = vunpack.c.l.b16 %v4947
    %v5283 = vunpack.c.h.b16 %v4947
    %v5284 = vunpack.c.l.b16 %v4948
    %v5285 = vunpack.c.h.b16 %v4948
    %v5286 = vunpack.c.l.b16 %v4949
    %v5287 = vunpack.c.h.b16 %v4949
    %v5288 = vunpack.c.l.b16 %v4950
    %v5289 = vunpack.c.h.b16 %v4950
    %v5290 = vunpack.c.l.b16 %v4951
    %v5291 = vunpack.c.h.b16 %v4951
    %v5292 = vunpack.c.l.b16 %v4952
    %v5293 = vunpack.c.h.b16 %v4952
    %v5294 = vunpack.c.l.b16 %v4953
    %v5295 = vunpack.c.h.b16 %v4953
    %v5296 = vunpack.c.l.b16 %v4954
    %v5297 = vunpack.c.h.b16 %v4954
    %v5298 = vunpack.c.l.b16 %v4955
    %v5299 = vunpack.c.h.b16 %v4955
    %v5300 = vunpack.c.l.b16 %v4956
    %v5301 = vunpack.c.h.b16 %v4956
    %v5302 = vunpack.c.l.b16 %v4957
    %v5303 = vunpack.c.h.b16 %v4957
    %v5304 = vunpack.c.l.b16 %v4958
    %v5305 = vunpack.c.h.b16 %v4958
    %v5306 = vunpack.c.l.b16 %v4959
    %v5307 = vunpack.c.h.b16 %v4959
    %v5308 = vunpack.c.l.b16 %v4960
    %v5309 = vunpack.c.h.b16 %v4960
    %v5310 = vunpack.c.l.b16 %v4961
    %v5311 = vunpack.c.h.b16 %v4961
    %v5312 = vunpack.c.l.b16 %v4962
    %v5313 = vunpack.c.h.b16 %v4962
    %v5314 = vunpack.c.l.b16 %v4963
    %v5315 = vunpack.c.h.b16 %v4963
    %v5316 = vunpack.c.l.b16 %v4964
    %v5317 = vunpack.c.h.b16 %v4964
    %v5318 = vunpack.c.l.b16 %v4965
    %v5319 = vunpack.c.h.b16 %v4965
    %v5320 = vunpack.c.l.b16 %v4966
    %v5321 = vunpack.c.h.b16 %v4966
    %v5322 = vunpack.c.l.b16 %v4967
    %v5323 = vunpack.c.h.b16 %v4967
    %v5324 = vunpack.c.l.b16 %v4968
    %v5325 = vunpack.c.h.b16 %v4968
    %v5326 = vunpack.c.l.b16 %v4969
    %v5327 = vunpack.c.h.b16 %v4969
    %v5328 = vunpack.c.l.b16 %v4970
    %v5329 = vunpack.c.h.b16 %v4970
    %v5330 = vunpack.c.l.b16 %v4971
    %v5331 = vunpack.c.h.b16 %v4971
    %v5332 = vunpack.c.l.b16 %v4972
    %v5333 = vunpack.c.h.b16 %v4972
    %v5334 = vunpack.c.l.b16 %v4973
    %v5335 = vunpack.c.h.b16 %v4973
    %v5336 = vunpack.c.l.b16 %v4974
    %v5337 = vunpack.c.h.b16 %v4974
    %v5338 = vunpack.c.l.b16 %v4975
    %v5339 = vunpack.c.h.b16 %v4975
    %v5340 = vunpack.c.l.b16 %v4976
    %v5341 = vunpack.c.h.b16 %v4976
    %v5342 = vunpack.c.l.b16 %v4977
    %v5343 = vunpack.c.h.b16 %v4977
    %v5344 = vunpack.c.l.b16 %v4978
    %v5345 = vunpack.c.h.b16 %v4978
    %v5346 = vunpack.c.l.b16 %v4979
    %v5347 = vunpack.c.h.b16 %v4979
    %v5348 = vunpack.c.l.b16 %v4980
    %v5349 = vunpack.c.h.b16 %v4980
    %v5350 = vunpack.c.l.b16 %v4981
    %v5351 = vunpack.c.h.b16 %v4981
    %v5352 = vunpack.c.l.b16 %v4982
    %v5353 = vunpack.c.h.b16 %v4982
    %v5354 = vunpack.c.l.b16 %v4983
    %v5355 = vunpack.c.h.b16 %v4983
    %v5356 = vunpack.c.l.b16 %v4984
    %v5357 = vunpack.c.h.b16 %v4984
    %v5358 = vunpack.c.l.b16 %v4985
    %v5359 = vunpack.c.h.b16 %v4985
    %v5360 = vunpack.c.l.b16 %v4986
    %v5361 = vunpack.c.h.b16 %v4986
    %v5362 = vunpack.c.l.b16 %v4987
    %v5363 = vunpack.c.h.b16 %v4987
    %v5364 = vunpack.c.l.b16 %v4988
    %v5365 = vunpack.c.h.b16 %v4988
    %v5366 = vunpack.c.l.b16 %v4989
    %v5367 = vunpack.c.h.b16 %v4989
    %v5368 = vunpack.c.l.b16 %v4990
    %v5369 = vunpack.c.h.b16 %v4990
    %v5370 = vunpack.c.l.b16 %v4991
    %v5371 = vunpack.c.h.b16 %v4991
    %v5372 = vunpack.c.l.b16 %v4992
    %v5373 = vunpack.c.h.b16 %v4992
    %v5374 = vunpack.c.l.b16 %v4993
    %v5375 = vunpack.c.h.b16 %v4993
    %v5376 = vunpack.c.l.b16 %v4994
    %v5377 = vunpack.c.h.b16 %v4994
    %v5378 = vunpack.c.l.b16 %v4995
    %v5379 = vunpack.c.h.b16 %v4995
    %v5380 = vpack.c.b16 %v5128, %v5124
    %v5381 = vpack.c.b16 %v5129, %v5125
    %v5382 = vpack.c.b16 %v5130, %v5126
    %v5383 = vpack.c.b16 %v5131, %v5127
    %v5384 = vpack.c.b16 %v5136, %v5132
    %v5385 = vpack.c.b16 %v5137, %v5133
    %v5386 = vpack.c.b16 %v5138, %v5134
    %v5387 = vpack.c.b16 %v5139, %v5135
    %v5388 = vpack.c.b16 %v5144, %v5140
    %v5389 = vpack.c.b16 %v5145, %v5141
    %v5390 = vpack.c.b16 %v5146, %v5142
    %v5391 = vpack.c.b16 %v5147, %v5143
    %v5392 = vpack.c.b16 %v5152, %v5148
    %v5393 = vpack.c.b16 %v5153, %v5149
    %v5394 = vpack.c.b16 %v5154, %v5150
    %v5395 = vpack.c.b16 %v5155, %v5151
    %v5396 = vpack.c.b16 %v5160, %v5156
    %v5397 = vpack.c.b16 %v5161, %v5157
    %v5398 = vpack.c.b16 %v5162, %v5158
    %v5399 = vpack.c.b16 %v5163, %v5159
    %v5400 = vpack.c.b16 %v5168, %v5164
    %v5401 = vpack.c.b16 %v5169, %v5165
    %v5402 = vpack.c.b16 %v5170, %v5166
    %v5403 = vpack.c.b16 %v5171, %v5167
    %v5404 = vpack.c.b16 %v5176, %v5172
    %v5405 = vpack.c.b16 %v5177, %v5173
    %v5406 = vpack.c.b16 %v5178, %v5174
    %v5407 = vpack.c.b16 %v5179, %v5175
    %v5408 = vpack.c.b16 %v5184, %v5180
    %v5409 = vpack.c.b16 %v5185, %v5181
    %v5410 = vpack.c.b16 %v5186, %v5182
    %v5411 = vpack.c.b16 %v5187, %v5183
    %v5412 = vpack.c.b16 %v5192, %v5188
    %v5413 = vpack.c.b16 %v5193, %v5189
    %v5414 = vpack.c.b16 %v5194, %v5190
    %v5415 = vpack.c.b16 %v5195, %v5191
    %v5416 = vpack.c.b16 %v5200, %v5196
    %v5417 = vpack.c.b16 %v5201, %v5197
    %v5418 = vpack.c.b16 %v5202, %v5198
    %v5419 = vpack.c.b16 %v5203, %v5199
    %v5420 = vpack.c.b16 %v5208, %v5204
    %v5421 = vpack.c.b16 %v5209, %v5205
    %v5422 = vpack.c.b16 %v5210, %v5206
    %v5423 = vpack.c.b16 %v5211, %v5207
    %v5424 = vpack.c.b16 %v5216, %v5212
    %v5425 = vpack.c.b16 %v5217, %v5213
    %v5426 = vpack.c.b16 %v5218, %v5214
    %v5427 = vpack.c.b16 %v5219, %v5215
    %v5428 = vpack.c.b16 %v5224, %v5220
    %v5429 = vpack.c.b16 %v5225, %v5221
    %v5430 = vpack.c.b16 %v5226, %v5222
    %v5431 = vpack.c.b16 %v5227, %v5223
    %v5432 = vpack.c.b16 %v5232, %v5228
    %v5433 = vpack.c.b16 %v5233, %v5229
    %v5434 = vpack.c.b16 %v5234, %v5230
    %v5435 = vpack.c.b16 %v5235, %v5231
    %v5436 = vpack.c.b16 %v5240, %v5236
    %v5437 = vpack.c.b16 %v5241, %v5237
    %v5438 = vpack.c.b16 %v5242, %v5238
    %v5439 = vpack.c.b16 %v5243, %v5239
    %v5440 = vpack.c.b16 %v5248, %v5244
    %v5441 = vpack.c.b16 %v5249, %v5245
    %v5442 = vpack.c.b16 %v5250, %v5246
    %v5443 = vpack.c.b16 %v5251, %v5247
    %v5444 = vpack.c.b16 %v5256, %v5252
    %v5445 = vpack.c.b16 %v5257, %v5253
    %v5446 = vpack.c.b16 %v5258, %v5254
    %v5447 = vpack.c.b16 %v5259, %v5255
    %v5448 = vpack.c.b16 %v5264, %v5260
    %v5449 = vpack.c.b16 %v5265, %v5261
    %v5450 = vpack.c.b16 %v5266, %v5262
    %v5451 = vpack.c.b16 %v5267, %v5263
    %v5452 = vpack.c.b16 %v5272, %v5268
    %v5453 = vpack.c.b16 %v5273, %v5269
    %v5454 = vpack.c.b16 %v5274, %v5270
    %v5455 = vpack.c.b16 %v5275, %v5271
    %v5456 = vpack.c.b16 %v5280, %v5276
    %v5457 = vpack.c.b16 %v5281, %v5277
    %v5458 = vpack.c.b16 %v5282, %v5278
    %v5459 = vpack.c.b16 %v5283, %v5279
    %v5460 = vpack.c.b16 %v5288, %v5284
    %v5461 = vpack.c.b16 %v5289, %v5285
    %v5462 = vpack.c.b16 %v5290, %v5286
    %v5463 = vpack.c.b16 %v5291, %v5287
    %v5464 = vpack.c.b16 %v5296, %v5292
    %v5465 = vpack.c.b16 %v5297, %v5293
    %v5466 = vpack.c.b16 %v5298, %v5294
    %v5467 = vpack.c.b16 %v5299, %v5295
    %v5468 = vpack.c.b16 %v5304, %v5300
    %v5469 = vpack.c.b16 %v5305, %v5301
    %v5470 = vpack.c.b16 %v5306, %v5302
    %v5471 = vpack.c.b16 %v5307, %v5303
    %v5472 = vpack.c.b16 %v5312, %v5308
    %v5473 = vpack.c.b16 %v5313, %v5309
    %v5474 = vpack.c.b16 %v5314, %v5310
    %v5475 = vpack.c.b16 %v5315, %v5311
    %v5476 = vpack.c.b16 %v5320, %v5316
    %v5477 = vpack.c.b16 %v5321, %v5317
    %v5478 = vpack.c.b16 %v5322, %v5318
    %v5479 = vpack.c.b16 %v5323, %v5319
    %v5480 = vpack.c.b16 %v5328, %v5324
    %v5481 = vpack.c.b16 %v5329, %v5325
    %v5482 = vpack.c.b16 %v5330, %v5326
    %v5483 = vpack.c.b16 %v5331, %v5327
    %v5484 = vpack.c.b16 %v5336, %v5332
    %v5485 = vpack.c.b16 %v5337, %v5333
    %v5486 = vpack.c.b16 %v5338, %v5334
    %v5487 = vpack.c.b16 %v5339, %v5335
    %v5488 = vpack.c.b16 %v5344, %v5340
    %v5489 = vpack.c.b16 %v5345, %v5341
    %v5490 = vpack.c.b16 %v5346, %v5342
    %v5491 = vpack.c.b16 %v5347, %v5343
    %v5492 = vpack.c.b16 %v5352, %v5348
    %v5493 = vpack.c.b16 %v5353, %v5349
    %v5494 = vpack.c.b16 %v5354, %v5350
    %v5495 = vpack.c.b16 %v5355, %v5351
    %v5496 = vpack.c.b16 %v5360, %v5356
    %v5497 = vpack.c.b16 %v5361, %v5357
    %v5498 = vpack.c.b16 %v5362, %v5358
    %v5499 = vpack.c.b16 %v5363, %v5359
    %v5500 = vpack.c.b16 %v5368, %v5364
    %v5501 = vpack.c.b16 %v5369, %v5365
    %v5502 = vpack.c.b16 %v5370, %v5366
    %v5503 = vpack.c.b16 %v5371, %v5367
    %v5504 = vpack.c.b16 %v5376, %v5372
    %v5505 = vpack.c.b16 %v5377, %v5373
    %v5506 = vpack.c.b16 %v5378, %v5374
    %v5507 = vpack.c.b16 %v5379, %v5375
    %5636 = vmatprep.subr.bf16.mxu0 %v5409
    %5637 = vmatpush1.bf16.msra.mxu0 %v5408
    %5638 = vmatprep.subr.bf16.mxu0 %v5405
    %5639 = vmatpush1.bf16.msra.mxu0 %v5404
    %5640 = vmatprep.subr.bf16.mxu0 %v5401
    %5641 = vmatpush1.bf16.msra.mxu0 %v5400
    %5642 = vmatprep.subr.bf16.mxu0 %v5397
    %5643 = vmatpush1.bf16.msra.mxu0 %v5396
    %5644 = vmatprep.subr.bf16.mxu0 %v5393
    %5645 = vmatpush1.bf16.msra.mxu0 %v5392
    %5646 = vmatprep.subr.bf16.mxu0 %v5389
    %5647 = vmatpush1.bf16.msra.mxu0 %v5388
    %5648 = vmatprep.subr.bf16.mxu0 %v5385
    %5649 = vmatpush1.bf16.msra.mxu0 %v5384
    %5650 = vmatprep.subr.bf16.mxu0 %v5381
    %5651 = vmatpush1.bf16.msra.mxu0 %v5380
    %5652 = vmatprep.subr.bf16.mxu0 %v5441
    %5653 = vmatpush2.bf16.msra.mxu0 %v5440
    %5654 = vmatprep.subr.bf16.mxu0 %v5437
    %5655 = vmatpush2.bf16.msra.mxu0 %v5436
    %5656 = vmatprep.subr.bf16.mxu0 %v5433
    %5657 = vmatpush2.bf16.msra.mxu0 %v5432
    %5658 = vmatprep.subr.bf16.mxu0 %v5429
    %5659 = vmatpush2.bf16.msra.mxu0 %v5428
    %5660 = vmatprep.subr.bf16.mxu0 %v5425
    %5661 = vmatpush2.bf16.msra.mxu0 %v5424
    %5662 = vmatprep.subr.bf16.mxu0 %v5421
    %5663 = vmatpush2.bf16.msra.mxu0 %v5420
    %5664 = vmatprep.subr.bf16.mxu0 %v5417
    %5665 = vmatpush2.bf16.msra.mxu0 %v5416
    %5666 = vmatprep.subr.bf16.mxu0 %v5413
    %5667 = vmatpush2.bf16.msra.mxu0 %v5412
    %5668 = vmatprep.mubr.bf16.mxu0 %v4865
    %5669 = vmatmul.mubr.bf16.gmra.mxu0 %v4864
    %v5670 = vpop.f32.mrf.mxu0
    %v5671 = vadd.f32 0.0, %v5670
    %v5672 = vpop.f32.mrf.mxu0
    %v5673 = vadd.f32 0.0, %v5672
    %v5674 = vpop.f32.mrf.mxu0
    %v5675 = vpop.f32.mrf.mxu0
    %5676 = vdwg.mxu0
    %5677 = vmatprep.subr.bf16.mxu0 %v5473
    %5678 = vmatpush1.bf16.msra.mxu0 %v5472
    %5679 = vmatprep.subr.bf16.mxu0 %v5469
    %5680 = vmatpush1.bf16.msra.mxu0 %v5468
    %5681 = vmatprep.subr.bf16.mxu0 %v5465
    %5682 = vmatpush1.bf16.msra.mxu0 %v5464
    %5683 = vmatprep.subr.bf16.mxu0 %v5461
    %5684 = vmatpush1.bf16.msra.mxu0 %v5460
    %5685 = vmatprep.subr.bf16.mxu0 %v5457
    %5686 = vmatpush1.bf16.msra.mxu0 %v5456
    %5687 = vmatprep.subr.bf16.mxu0 %v5453
    %5688 = vmatpush1.bf16.msra.mxu0 %v5452
    %5689 = vmatprep.subr.bf16.mxu0 %v5449
    %5690 = vmatpush1.bf16.msra.mxu0 %v5448
    %5691 = vmatprep.subr.bf16.mxu0 %v5445
    %5692 = vmatpush1.bf16.msra.mxu0 %v5444
    %5693 = vmatprep.subr.bf16.mxu0 %v5505
    %5694 = vmatpush2.bf16.msra.mxu0 %v5504
    %5695 = vmatprep.subr.bf16.mxu0 %v5501
    %5696 = vmatpush2.bf16.msra.mxu0 %v5500
    %5697 = vmatprep.subr.bf16.mxu0 %v5497
    %5698 = vmatpush2.bf16.msra.mxu0 %v5496
    %5699 = vmatprep.subr.bf16.mxu0 %v5493
    %5700 = vmatpush2.bf16.msra.mxu0 %v5492
    %5701 = vmatprep.subr.bf16.mxu0 %v5489
    %5702 = vmatpush2.bf16.msra.mxu0 %v5488
    %5703 = vmatprep.subr.bf16.mxu0 %v5485
    %5704 = vmatpush2.bf16.msra.mxu0 %v5484
    %5705 = vmatprep.subr.bf16.mxu0 %v5481
    %5706 = vmatpush2.bf16.msra.mxu0 %v5480
    %5707 = vmatprep.subr.bf16.mxu0 %v5477
    %5708 = vmatpush2.bf16.msra.mxu0 %v5476
    %5709 = vmatprep.mubr.bf16.mxu0 %v4867
    %5710 = vmatmul.mubr.bf16.gmra.mxu0 %v4866
    %v5711 = vpop.f32.mrf.mxu0
    %v5712 = vadd.f32 %v5671, %v5711
    %v5713 = vpop.f32.mrf.mxu0
    %v5714 = vadd.f32 %v5673, %v5713
    %v5715 = vpop.f32.mrf.mxu0
    %v5716 = vpop.f32.mrf.mxu0
    %5717 = vdwg.mxu0
    %5718 = vmatprep.subr.bf16.mxu0 %v5411
    %5719 = vmatpush1.bf16.msra.mxu0 %v5410
    %5720 = vmatprep.subr.bf16.mxu0 %v5407
    %5721 = vmatpush1.bf16.msra.mxu0 %v5406
    %5722 = vmatprep.subr.bf16.mxu0 %v5403
    %5723 = vmatpush1.bf16.msra.mxu0 %v5402
    %5724 = vmatprep.subr.bf16.mxu0 %v5399
    %5725 = vmatpush1.bf16.msra.mxu0 %v5398
    %5726 = vmatprep.subr.bf16.mxu0 %v5395
    %5727 = vmatpush1.bf16.msra.mxu0 %v5394
    %5728 = vmatprep.subr.bf16.mxu0 %v5391
    %5729 = vmatpush1.bf16.msra.mxu0 %v5390
    %5730 = vmatprep.subr.bf16.mxu0 %v5387
    %5731 = vmatpush1.bf16.msra.mxu0 %v5386
    %5732 = vmatprep.subr.bf16.mxu0 %v5383
    %5733 = vmatpush1.bf16.msra.mxu0 %v5382
    %5734 = vmatprep.subr.bf16.mxu0 %v5443
    %5735 = vmatpush2.bf16.msra.mxu0 %v5442
    %5736 = vmatprep.subr.bf16.mxu0 %v5439
    %5737 = vmatpush2.bf16.msra.mxu0 %v5438
    %5738 = vmatprep.subr.bf16.mxu0 %v5435
    %5739 = vmatpush2.bf16.msra.mxu0 %v5434
    %5740 = vmatprep.subr.bf16.mxu0 %v5431
    %5741 = vmatpush2.bf16.msra.mxu0 %v5430
    %5742 = vmatprep.subr.bf16.mxu0 %v5427
    %5743 = vmatpush2.bf16.msra.mxu0 %v5426
    %5744 = vmatprep.subr.bf16.mxu0 %v5423
    %5745 = vmatpush2.bf16.msra.mxu0 %v5422
    %5746 = vmatprep.subr.bf16.mxu0 %v5419
    %5747 = vmatpush2.bf16.msra.mxu0 %v5418
    %5748 = vmatprep.subr.bf16.mxu0 %v5415
    %5749 = vmatpush2.bf16.msra.mxu0 %v5414
    %5750 = vmatprep.mubr.bf16.mxu0 %v4865
    %5751 = vmatmul.mubr.bf16.gmra.mxu0 %v4864
    %v5752 = vpop.f32.mrf.mxu0
    %v5753 = vadd.f32 0.0, %v5752
    %v5754 = vpop.f32.mrf.mxu0
    %v5755 = vadd.f32 0.0, %v5754
    %v5756 = vpop.f32.mrf.mxu0
    %v5757 = vpop.f32.mrf.mxu0
    %5758 = vdwg.mxu0
    %5759 = vmatprep.subr.bf16.mxu0 %v5475
    %5760 = vmatpush1.bf16.msra.mxu0 %v5474
    %5761 = vmatprep.subr.bf16.mxu0 %v5471
    %5762 = vmatpush1.bf16.msra.mxu0 %v5470
    %5763 = vmatprep.subr.bf16.mxu0 %v5467
    %5764 = vmatpush1.bf16.msra.mxu0 %v5466
    %5765 = vmatprep.subr.bf16.mxu0 %v5463
    %5766 = vmatpush1.bf16.msra.mxu0 %v5462
    %5767 = vmatprep.subr.bf16.mxu0 %v5459
    %5768 = vmatpush1.bf16.msra.mxu0 %v5458
    %5769 = vmatprep.subr.bf16.mxu0 %v5455
    %5770 = vmatpush1.bf16.msra.mxu0 %v5454
    %5771 = vmatprep.subr.bf16.mxu0 %v5451
    %5772 = vmatpush1.bf16.msra.mxu0 %v5450
    %5773 = vmatprep.subr.bf16.mxu0 %v5447
    %5774 = vmatpush1.bf16.msra.mxu0 %v5446
    %5775 = vmatprep.subr.bf16.mxu0 %v5507
    %5776 = vmatpush2.bf16.msra.mxu0 %v5506
    %5777 = vmatprep.subr.bf16.mxu0 %v5503
    %5778 = vmatpush2.bf16.msra.mxu0 %v5502
    %5779 = vmatprep.subr.bf16.mxu0 %v5499
    %5780 = vmatpush2.bf16.msra.mxu0 %v5498
    %5781 = vmatprep.subr.bf16.mxu0 %v5495
    %5782 = vmatpush2.bf16.msra.mxu0 %v5494
    %5783 = vmatprep.subr.bf16.mxu0 %v5491
    %5784 = vmatpush2.bf16.msra.mxu0 %v5490
    %5785 = vmatprep.subr.bf16.mxu0 %v5487
    %5786 = vmatpush2.bf16.msra.mxu0 %v5486
    %5787 = vmatprep.subr.bf16.mxu0 %v5483
    %5788 = vmatpush2.bf16.msra.mxu0 %v5482
    %5789 = vmatprep.subr.bf16.mxu0 %v5479
    %5790 = vmatpush2.bf16.msra.mxu0 %v5478
    %5791 = vmatprep.mubr.bf16.mxu0 %v4867
    %5792 = vmatmul.mubr.bf16.gmra.mxu0 %v4866
    %v5793 = vpop.f32.mrf.mxu0
    %v5794 = vadd.f32 %v5753, %v5793
    %v5795 = vpop.f32.mrf.mxu0
    %v5796 = vadd.f32 %v5755, %v5795
    %v5797 = vpop.f32.mrf.mxu0
    %v5798 = vpop.f32.mrf.mxu0
    %5799 = vdwg.mxu0
    %v5800 = vrot.slane %v5712, 4
    %v5801 = vadd.f32 %v5712, %v5800
    %v5802 = vrot.slane %v5801, 2
    %v5803 = vadd.f32 %v5801, %v5802
    %v5804 = vrot.slane %v5803, 1
    %v5805 = vadd.f32 %v5803, %v5804
    %v5806 = vrot.slane %v5714, 4
    %v5807 = vadd.f32 %v5714, %v5806
    %v5808 = vrot.slane %v5807, 2
    %v5809 = vadd.f32 %v5807, %v5808
    %v5810 = vrot.slane %v5809, 1
    %v5811 = vadd.f32 %v5809, %v5810
    %v5812 = vrot.slane %v5794, 4
    %v5813 = vadd.f32 %v5794, %v5812
    %v5814 = vrot.slane %v5813, 2
    %v5815 = vadd.f32 %v5813, %v5814
    %v5816 = vrot.slane %v5815, 1
    %v5817 = vadd.f32 %v5815, %v5816
    %v5818 = vrot.slane %v5796, 4
    %v5819 = vadd.f32 %v5796, %v5818
    %v5820 = vrot.slane %v5819, 2
    %v5821 = vadd.f32 %v5819, %v5820
    %v5822 = vrot.slane %v5821, 1
    %v5823 = vadd.f32 %v5821, %v5822
    %v5824 = vmul.f32 %v5805, %v271
    %v5825 = vmul.f32 %v5811, %v271
    %v5826 = vmul.f32 %v5817, %v271
    %v5827 = vmul.f32 %v5823, %v271
    %v5828 = vsub.f32 %v5712, %v5824
    %v5829 = vsub.f32 %v5714, %v5825
    %v5830 = vsub.f32 %v5794, %v5826
    %v5831 = vsub.f32 %v5796, %v5827
    %v5832 = vmul.f32 %v5828, %v5828
    %v5833 = vmul.f32 %v5829, %v5829
    %v5834 = vmul.f32 %v5830, %v5830
    %v5835 = vmul.f32 %v5831, %v5831
    %v5836 = vrot.slane %v5832, 4
    %v5837 = vadd.f32 %v5832, %v5836
    %v5838 = vrot.slane %v5837, 2
    %v5839 = vadd.f32 %v5837, %v5838
    %v5840 = vrot.slane %v5839, 1
    %v5841 = vadd.f32 %v5839, %v5840
    %v5842 = vrot.slane %v5833, 4
    %v5843 = vadd.f32 %v5833, %v5842
    %v5844 = vrot.slane %v5843, 2
    %v5845 = vadd.f32 %v5843, %v5844
    %v5846 = vrot.slane %v5845, 1
    %v5847 = vadd.f32 %v5845, %v5846
    %v5848 = vrot.slane %v5834, 4
    %v5849 = vadd.f32 %v5834, %v5848
    %v5850 = vrot.slane %v5849, 2
    %v5851 = vadd.f32 %v5849, %v5850
    %v5852 = vrot.slane %v5851, 1
    %v5853 = vadd.f32 %v5851, %v5852
    %v5854 = vrot.slane %v5835, 4
    %v5855 = vadd.f32 %v5835, %v5854
    %v5856 = vrot.slane %v5855, 2
    %v5857 = vadd.f32 %v5855, %v5856
    %v5858 = vrot.slane %v5857, 1
    %v5859 = vadd.f32 %v5857, %v5858
    %v5860 = vmul.f32 %v5841, %v271
    %v5861 = vmul.f32 %v5847, %v271
    %v5862 = vmul.f32 %v5853, %v271
    %v5863 = vmul.f32 %v5859, %v271
    %s5864 = scalar_lea.vmem [#allocation12], 5
    %v5865 = vld [vmem:[%s5864] ss:$8 sm:$0xf]
    %v5866 = vadd.f32 %v5860, 1e-05
    %v5867 = vadd.f32 %v5861, 1e-05
    %v5868 = vadd.f32 %v5862, 1e-05
    %v5869 = vadd.f32 %v5863, 1e-05
    %v5870 = vrsqrt.pop %v5866
    %v5871 = vrsqrt.pop %v5867
    %v5872 = vrsqrt.pop %v5868
    %v5873 = vrsqrt.pop %v5869
    %v5878 = vcombine.low %v5870, %v5871
    %v5879 = vcombine.low %v5872, %v5873
    %v5881 = vunpack.c.l.s4 1966171168
    %v5882 = vunpack.c.0.s8 %v5881
    %v5883 = vlaneseq
    %v5884 = vshrl.u32 %v5883, 7
    %v5885 = vsub.s32 %v5882, %v5884
    %v5886 = vrot.slane %v5878, %v5885
    %v5888 = vunpack.c.l.s4 1966171168
    %v5889 = vunpack.c.0.s8 %v5888
    %v5890 = vlaneseq
    %v5891 = vshrl.u32 %v5890, 7
    %v5892 = vsub.s32 %v5889, %v5891
    %v5893 = vrot.slane %v5879, %v5892
    %v5894 = vcombine.low %v5886, %v5893
    %v5896 = vunpack.c.l.s4 1966171168
    %v5897 = vunpack.c.0.s8 %v5896
    %v5898 = vlaneseq
    %v5899 = vshrl.u32 %v5898, 7
    %v5900 = vsub.s32 %v5897, %v5899
    %v5901 = vrot.slane %v5894, %v5900
    %v5903 = vmul.f32 %v5865, %v5901
    %v5905 = vlaneseq
    %v5906 = vshrl.u32 %v5905, 7
    %v5907 = vsub.s32 0, %v5906
    %v5908 = vrot.slane %v5903, %v5907
    %v5909 = vlaneseq
    %v5910 = vshrl.u32 %v5909, 7
    %v5911 = vsub.s32 1, %v5910
    %v5912 = vrot.slane %v5903, %v5911
    %v5913 = vlaneseq
    %v5914 = vshrl.u32 %v5913, 7
    %v5915 = vsub.s32 2, %v5914
    %v5916 = vrot.slane %v5903, %v5915
    %v5917 = vlaneseq
    %v5918 = vshrl.u32 %v5917, 7
    %v5919 = vsub.s32 3, %v5918
    %v5920 = vrot.slane %v5903, %v5919
    %v5925 = vmul.f32 %v5828, %v5908
    %v5926 = vmul.f32 %v5829, %v5912
    %v5927 = vmul.f32 %v5830, %v5916
    %v5928 = vmul.f32 %v5831, %v5920
    %s5929 = scalar_lea.vmem [#allocation13], 5
    %v5930 = vld [vmem:[%s5929] ss:$8 sm:$0xf]
    %v5932 = vlaneseq
    %v5933 = vshrl.u32 %v5932, 7
    %v5934 = vsub.s32 0, %v5933
    %v5935 = vrot.slane %v5930, %v5934
    %v5936 = vlaneseq
    %v5937 = vshrl.u32 %v5936, 7
    %v5938 = vsub.s32 1, %v5937
    %v5939 = vrot.slane %v5930, %v5938
    %v5940 = vlaneseq
    %v5941 = vshrl.u32 %v5940, 7
    %v5942 = vsub.s32 2, %v5941
    %v5943 = vrot.slane %v5930, %v5942
    %v5944 = vlaneseq
    %v5945 = vshrl.u32 %v5944, 7
    %v5946 = vsub.s32 3, %v5945
    %v5947 = vrot.slane %v5930, %v5946
    %v5952 = vadd.f32 %v5925, %v5935
    %v5953 = vadd.f32 %v5926, %v5939
    %v5954 = vadd.f32 %v5927, %v5943
    %v5955 = vadd.f32 %v5928, %v5947
    %v5956 = vmax.f32 %v5952, 0.0
    %v5957 = vmax.f32 %v5953, 0.0
    %v5958 = vmax.f32 %v5954, 0.0
    %v5959 = vmax.f32 %v5955, 0.0
    %s5960 = sshll.u32 %s407, 4
    %5961 = dma.done %s412, %s5960
    %v5962 = vpack.c.bf16 %v5956, %v5956
    %v5963 = vpack.c.bf16 %v5957, %v5957
    %v5964 = vpack.c.bf16 %v5958, %v5958
    %v5965 = vpack.c.bf16 %v5959, %v5959
    %v5966 = vld [vmem:[%s411] sm:$0xff]
    %v5967 = vld [vmem:[%s411 + $0x8] sm:$0xff]
    %v5968 = vld [vmem:[%s411 + $0x10] sm:$0xff]
    %v5969 = vld [vmem:[%s411 + $0x18] sm:$0xff]
    %v5970 = vld [vmem:[%s411 + $0x20] sm:$0xff]
    %v5971 = vld [vmem:[%s411 + $0x28] sm:$0xff]
    %v5972 = vld [vmem:[%s411 + $0x30] sm:$0xff]
    %v5973 = vld [vmem:[%s411 + $0x38] sm:$0xff]
    %v5974 = vld [vmem:[%s411 + $0x40] sm:$0xff]
    %v5975 = vld [vmem:[%s411 + $0x48] sm:$0xff]
    %v5976 = vld [vmem:[%s411 + $0x50] sm:$0xff]
    %v5977 = vld [vmem:[%s411 + $0x58] sm:$0xff]
    %v5978 = vld [vmem:[%s411 + $0x60] sm:$0xff]
    %v5979 = vld [vmem:[%s411 + $0x68] sm:$0xff]
    %v5980 = vld [vmem:[%s411 + $0x70] sm:$0xff]
    %v5981 = vld [vmem:[%s411 + $0x78] sm:$0xff]
    %v5982 = vld [vmem:[%s411 + $0x80] sm:$0xff]
    %v5983 = vld [vmem:[%s411 + $0x88] sm:$0xff]
    %v5984 = vld [vmem:[%s411 + $0x90] sm:$0xff]
    %v5985 = vld [vmem:[%s411 + $0x98] sm:$0xff]
    %v5986 = vld [vmem:[%s411 + $0xa0] sm:$0xff]
    %v5987 = vld [vmem:[%s411 + $0xa8] sm:$0xff]
    %v5988 = vld [vmem:[%s411 + $0xb0] sm:$0xff]
    %v5989 = vld [vmem:[%s411 + $0xb8] sm:$0xff]
    %v5990 = vld [vmem:[%s411 + $0xc0] sm:$0xff]
    %v5991 = vld [vmem:[%s411 + $0xc8] sm:$0xff]
    %v5992 = vld [vmem:[%s411 + $0xd0] sm:$0xff]
    %v5993 = vld [vmem:[%s411 + $0xd8] sm:$0xff]
    %v5994 = vld [vmem:[%s411 + $0xe0] sm:$0xff]
    %v5995 = vld [vmem:[%s411 + $0xe8] sm:$0xff]
    %v5996 = vld [vmem:[%s411 + $0xf0] sm:$0xff]
    %v5997 = vld [vmem:[%s411 + $0xf8] sm:$0xff]
    %v5998 = vld [vmem:[%s411 + $0x100] sm:$0xff]
    %v5999 = vld [vmem:[%s411 + $0x108] sm:$0xff]
    %v6000 = vld [vmem:[%s411 + $0x110] sm:$0xff]
    %v6001 = vld [vmem:[%s411 + $0x118] sm:$0xff]
    %v6002 = vld [vmem:[%s411 + $0x120] sm:$0xff]
    %v6003 = vld [vmem:[%s411 + $0x128] sm:$0xff]
    %v6004 = vld [vmem:[%s411 + $0x130] sm:$0xff]
    %v6005 = vld [vmem:[%s411 + $0x138] sm:$0xff]
    %v6006 = vld [vmem:[%s411 + $0x140] sm:$0xff]
    %v6007 = vld [vmem:[%s411 + $0x148] sm:$0xff]
    %v6008 = vld [vmem:[%s411 + $0x150] sm:$0xff]
    %v6009 = vld [vmem:[%s411 + $0x158] sm:$0xff]
    %v6010 = vld [vmem:[%s411 + $0x160] sm:$0xff]
    %v6011 = vld [vmem:[%s411 + $0x168] sm:$0xff]
    %v6012 = vld [vmem:[%s411 + $0x170] sm:$0xff]
    %v6013 = vld [vmem:[%s411 + $0x178] sm:$0xff]
    %v6014 = vld [vmem:[%s411 + $0x180] sm:$0xff]
    %v6015 = vld [vmem:[%s411 + $0x188] sm:$0xff]
    %v6016 = vld [vmem:[%s411 + $0x190] sm:$0xff]
    %v6017 = vld [vmem:[%s411 + $0x198] sm:$0xff]
    %v6018 = vld [vmem:[%s411 + $0x1a0] sm:$0xff]
    %v6019 = vld [vmem:[%s411 + $0x1a8] sm:$0xff]
    %v6020 = vld [vmem:[%s411 + $0x1b0] sm:$0xff]
    %v6021 = vld [vmem:[%s411 + $0x1b8] sm:$0xff]
    %v6022 = vld [vmem:[%s411 + $0x1c0] sm:$0xff]
    %v6023 = vld [vmem:[%s411 + $0x1c8] sm:$0xff]
    %v6024 = vld [vmem:[%s411 + $0x1d0] sm:$0xff]
    %v6025 = vld [vmem:[%s411 + $0x1d8] sm:$0xff]
    %v6026 = vld [vmem:[%s411 + $0x1e0] sm:$0xff]
    %v6027 = vld [vmem:[%s411 + $0x1e8] sm:$0xff]
    %v6028 = vld [vmem:[%s411 + $0x1f0] sm:$0xff]
    %v6029 = vld [vmem:[%s411 + $0x1f8] sm:$0xff]
    %v6030 = vld [vmem:[%s411 + $0x200] sm:$0xff]
    %v6031 = vld [vmem:[%s411 + $0x208] sm:$0xff]
    %v6032 = vld [vmem:[%s411 + $0x210] sm:$0xff]
    %v6033 = vld [vmem:[%s411 + $0x218] sm:$0xff]
    %v6034 = vld [vmem:[%s411 + $0x220] sm:$0xff]
    %v6035 = vld [vmem:[%s411 + $0x228] sm:$0xff]
    %v6036 = vld [vmem:[%s411 + $0x230] sm:$0xff]
    %v6037 = vld [vmem:[%s411 + $0x238] sm:$0xff]
    %v6038 = vld [vmem:[%s411 + $0x240] sm:$0xff]
    %v6039 = vld [vmem:[%s411 + $0x248] sm:$0xff]
    %v6040 = vld [vmem:[%s411 + $0x250] sm:$0xff]
    %v6041 = vld [vmem:[%s411 + $0x258] sm:$0xff]
    %v6042 = vld [vmem:[%s411 + $0x260] sm:$0xff]
    %v6043 = vld [vmem:[%s411 + $0x268] sm:$0xff]
    %v6044 = vld [vmem:[%s411 + $0x270] sm:$0xff]
    %v6045 = vld [vmem:[%s411 + $0x278] sm:$0xff]
    %v6046 = vld [vmem:[%s411 + $0x280] sm:$0xff]
    %v6047 = vld [vmem:[%s411 + $0x288] sm:$0xff]
    %v6048 = vld [vmem:[%s411 + $0x290] sm:$0xff]
    %v6049 = vld [vmem:[%s411 + $0x298] sm:$0xff]
    %v6050 = vld [vmem:[%s411 + $0x2a0] sm:$0xff]
    %v6051 = vld [vmem:[%s411 + $0x2a8] sm:$0xff]
    %v6052 = vld [vmem:[%s411 + $0x2b0] sm:$0xff]
    %v6053 = vld [vmem:[%s411 + $0x2b8] sm:$0xff]
    %v6054 = vld [vmem:[%s411 + $0x2c0] sm:$0xff]
    %v6055 = vld [vmem:[%s411 + $0x2c8] sm:$0xff]
    %v6056 = vld [vmem:[%s411 + $0x2d0] sm:$0xff]
    %v6057 = vld [vmem:[%s411 + $0x2d8] sm:$0xff]
    %v6058 = vld [vmem:[%s411 + $0x2e0] sm:$0xff]
    %v6059 = vld [vmem:[%s411 + $0x2e8] sm:$0xff]
    %v6060 = vld [vmem:[%s411 + $0x2f0] sm:$0xff]
    %v6061 = vld [vmem:[%s411 + $0x2f8] sm:$0xff]
    %v6062 = vld [vmem:[%s411 + $0x300] sm:$0xff]
    %v6063 = vld [vmem:[%s411 + $0x308] sm:$0xff]
    %v6064 = vld [vmem:[%s411 + $0x310] sm:$0xff]
    %v6065 = vld [vmem:[%s411 + $0x318] sm:$0xff]
    %v6066 = vld [vmem:[%s411 + $0x320] sm:$0xff]
    %v6067 = vld [vmem:[%s411 + $0x328] sm:$0xff]
    %v6068 = vld [vmem:[%s411 + $0x330] sm:$0xff]
    %v6069 = vld [vmem:[%s411 + $0x338] sm:$0xff]
    %v6070 = vld [vmem:[%s411 + $0x340] sm:$0xff]
    %v6071 = vld [vmem:[%s411 + $0x348] sm:$0xff]
    %v6072 = vld [vmem:[%s411 + $0x350] sm:$0xff]
    %v6073 = vld [vmem:[%s411 + $0x358] sm:$0xff]
    %v6074 = vld [vmem:[%s411 + $0x360] sm:$0xff]
    %v6075 = vld [vmem:[%s411 + $0x368] sm:$0xff]
    %v6076 = vld [vmem:[%s411 + $0x370] sm:$0xff]
    %v6077 = vld [vmem:[%s411 + $0x378] sm:$0xff]
    %v6078 = vld [vmem:[%s411 + $0x380] sm:$0xff]
    %v6079 = vld [vmem:[%s411 + $0x388] sm:$0xff]
    %v6080 = vld [vmem:[%s411 + $0x390] sm:$0xff]
    %v6081 = vld [vmem:[%s411 + $0x398] sm:$0xff]
    %v6082 = vld [vmem:[%s411 + $0x3a0] sm:$0xff]
    %v6083 = vld [vmem:[%s411 + $0x3a8] sm:$0xff]
    %v6084 = vld [vmem:[%s411 + $0x3b0] sm:$0xff]
    %v6085 = vld [vmem:[%s411 + $0x3b8] sm:$0xff]
    %v6086 = vld [vmem:[%s411 + $0x3c0] sm:$0xff]
    %v6087 = vld [vmem:[%s411 + $0x3c8] sm:$0xff]
    %v6088 = vld [vmem:[%s411 + $0x3d0] sm:$0xff]
    %v6089 = vld [vmem:[%s411 + $0x3d8] sm:$0xff]
    %v6090 = vld [vmem:[%s411 + $0x3e0] sm:$0xff]
    %v6091 = vld [vmem:[%s411 + $0x3e8] sm:$0xff]
    %v6092 = vld [vmem:[%s411 + $0x3f0] sm:$0xff]
    %v6093 = vld [vmem:[%s411 + $0x3f8] sm:$0xff]
    %v6222 = vunpack.c.l.b16 %v5966
    %v6223 = vunpack.c.h.b16 %v5966
    %v6224 = vunpack.c.l.b16 %v5967
    %v6225 = vunpack.c.h.b16 %v5967
    %v6226 = vunpack.c.l.b16 %v5968
    %v6227 = vunpack.c.h.b16 %v5968
    %v6228 = vunpack.c.l.b16 %v5969
    %v6229 = vunpack.c.h.b16 %v5969
    %v6230 = vunpack.c.l.b16 %v5970
    %v6231 = vunpack.c.h.b16 %v5970
    %v6232 = vunpack.c.l.b16 %v5971
    %v6233 = vunpack.c.h.b16 %v5971
    %v6234 = vunpack.c.l.b16 %v5972
    %v6235 = vunpack.c.h.b16 %v5972
    %v6236 = vunpack.c.l.b16 %v5973
    %v6237 = vunpack.c.h.b16 %v5973
    %v6238 = vunpack.c.l.b16 %v5974
    %v6239 = vunpack.c.h.b16 %v5974
    %v6240 = vunpack.c.l.b16 %v5975
    %v6241 = vunpack.c.h.b16 %v5975
    %v6242 = vunpack.c.l.b16 %v5976
    %v6243 = vunpack.c.h.b16 %v5976
    %v6244 = vunpack.c.l.b16 %v5977
    %v6245 = vunpack.c.h.b16 %v5977
    %v6246 = vunpack.c.l.b16 %v5978
    %v6247 = vunpack.c.h.b16 %v5978
    %v6248 = vunpack.c.l.b16 %v5979
    %v6249 = vunpack.c.h.b16 %v5979
    %v6250 = vunpack.c.l.b16 %v5980
    %v6251 = vunpack.c.h.b16 %v5980
    %v6252 = vunpack.c.l.b16 %v5981
    %v6253 = vunpack.c.h.b16 %v5981
    %v6254 = vunpack.c.l.b16 %v5982
    %v6255 = vunpack.c.h.b16 %v5982
    %v6256 = vunpack.c.l.b16 %v5983
    %v6257 = vunpack.c.h.b16 %v5983
    %v6258 = vunpack.c.l.b16 %v5984
    %v6259 = vunpack.c.h.b16 %v5984
    %v6260 = vunpack.c.l.b16 %v5985
    %v6261 = vunpack.c.h.b16 %v5985
    %v6262 = vunpack.c.l.b16 %v5986
    %v6263 = vunpack.c.h.b16 %v5986
    %v6264 = vunpack.c.l.b16 %v5987
    %v6265 = vunpack.c.h.b16 %v5987
    %v6266 = vunpack.c.l.b16 %v5988
    %v6267 = vunpack.c.h.b16 %v5988
    %v6268 = vunpack.c.l.b16 %v5989
    %v6269 = vunpack.c.h.b16 %v5989
    %v6270 = vunpack.c.l.b16 %v5990
    %v6271 = vunpack.c.h.b16 %v5990
    %v6272 = vunpack.c.l.b16 %v5991
    %v6273 = vunpack.c.h.b16 %v5991
    %v6274 = vunpack.c.l.b16 %v5992
    %v6275 = vunpack.c.h.b16 %v5992
    %v6276 = vunpack.c.l.b16 %v5993
    %v6277 = vunpack.c.h.b16 %v5993
    %v6278 = vunpack.c.l.b16 %v5994
    %v6279 = vunpack.c.h.b16 %v5994
    %v6280 = vunpack.c.l.b16 %v5995
    %v6281 = vunpack.c.h.b16 %v5995
    %v6282 = vunpack.c.l.b16 %v5996
    %v6283 = vunpack.c.h.b16 %v5996
    %v6284 = vunpack.c.l.b16 %v5997
    %v6285 = vunpack.c.h.b16 %v5997
    %v6286 = vunpack.c.l.b16 %v5998
    %v6287 = vunpack.c.h.b16 %v5998
    %v6288 = vunpack.c.l.b16 %v5999
    %v6289 = vunpack.c.h.b16 %v5999
    %v6290 = vunpack.c.l.b16 %v6000
    %v6291 = vunpack.c.h.b16 %v6000
    %v6292 = vunpack.c.l.b16 %v6001
    %v6293 = vunpack.c.h.b16 %v6001
    %v6294 = vunpack.c.l.b16 %v6002
    %v6295 = vunpack.c.h.b16 %v6002
    %v6296 = vunpack.c.l.b16 %v6003
    %v6297 = vunpack.c.h.b16 %v6003
    %v6298 = vunpack.c.l.b16 %v6004
    %v6299 = vunpack.c.h.b16 %v6004
    %v6300 = vunpack.c.l.b16 %v6005
    %v6301 = vunpack.c.h.b16 %v6005
    %v6302 = vunpack.c.l.b16 %v6006
    %v6303 = vunpack.c.h.b16 %v6006
    %v6304 = vunpack.c.l.b16 %v6007
    %v6305 = vunpack.c.h.b16 %v6007
    %v6306 = vunpack.c.l.b16 %v6008
    %v6307 = vunpack.c.h.b16 %v6008
    %v6308 = vunpack.c.l.b16 %v6009
    %v6309 = vunpack.c.h.b16 %v6009
    %v6310 = vunpack.c.l.b16 %v6010
    %v6311 = vunpack.c.h.b16 %v6010
    %v6312 = vunpack.c.l.b16 %v6011
    %v6313 = vunpack.c.h.b16 %v6011
    %v6314 = vunpack.c.l.b16 %v6012
    %v6315 = vunpack.c.h.b16 %v6012
    %v6316 = vunpack.c.l.b16 %v6013
    %v6317 = vunpack.c.h.b16 %v6013
    %v6318 = vunpack.c.l.b16 %v6014
    %v6319 = vunpack.c.h.b16 %v6014
    %v6320 = vunpack.c.l.b16 %v6015
    %v6321 = vunpack.c.h.b16 %v6015
    %v6322 = vunpack.c.l.b16 %v6016
    %v6323 = vunpack.c.h.b16 %v6016
    %v6324 = vunpack.c.l.b16 %v6017
    %v6325 = vunpack.c.h.b16 %v6017
    %v6326 = vunpack.c.l.b16 %v6018
    %v6327 = vunpack.c.h.b16 %v6018
    %v6328 = vunpack.c.l.b16 %v6019
    %v6329 = vunpack.c.h.b16 %v6019
    %v6330 = vunpack.c.l.b16 %v6020
    %v6331 = vunpack.c.h.b16 %v6020
    %v6332 = vunpack.c.l.b16 %v6021
    %v6333 = vunpack.c.h.b16 %v6021
    %v6334 = vunpack.c.l.b16 %v6022
    %v6335 = vunpack.c.h.b16 %v6022
    %v6336 = vunpack.c.l.b16 %v6023
    %v6337 = vunpack.c.h.b16 %v6023
    %v6338 = vunpack.c.l.b16 %v6024
    %v6339 = vunpack.c.h.b16 %v6024
    %v6340 = vunpack.c.l.b16 %v6025
    %v6341 = vunpack.c.h.b16 %v6025
    %v6342 = vunpack.c.l.b16 %v6026
    %v6343 = vunpack.c.h.b16 %v6026
    %v6344 = vunpack.c.l.b16 %v6027
    %v6345 = vunpack.c.h.b16 %v6027
    %v6346 = vunpack.c.l.b16 %v6028
    %v6347 = vunpack.c.h.b16 %v6028
    %v6348 = vunpack.c.l.b16 %v6029
    %v6349 = vunpack.c.h.b16 %v6029
    %v6350 = vunpack.c.l.b16 %v6030
    %v6351 = vunpack.c.h.b16 %v6030
    %v6352 = vunpack.c.l.b16 %v6031
    %v6353 = vunpack.c.h.b16 %v6031
    %v6354 = vunpack.c.l.b16 %v6032
    %v6355 = vunpack.c.h.b16 %v6032
    %v6356 = vunpack.c.l.b16 %v6033
    %v6357 = vunpack.c.h.b16 %v6033
    %v6358 = vunpack.c.l.b16 %v6034
    %v6359 = vunpack.c.h.b16 %v6034
    %v6360 = vunpack.c.l.b16 %v6035
    %v6361 = vunpack.c.h.b16 %v6035
    %v6362 = vunpack.c.l.b16 %v6036
    %v6363 = vunpack.c.h.b16 %v6036
    %v6364 = vunpack.c.l.b16 %v6037
    %v6365 = vunpack.c.h.b16 %v6037
    %v6366 = vunpack.c.l.b16 %v6038
    %v6367 = vunpack.c.h.b16 %v6038
    %v6368 = vunpack.c.l.b16 %v6039
    %v6369 = vunpack.c.h.b16 %v6039
    %v6370 = vunpack.c.l.b16 %v6040
    %v6371 = vunpack.c.h.b16 %v6040
    %v6372 = vunpack.c.l.b16 %v6041
    %v6373 = vunpack.c.h.b16 %v6041
    %v6374 = vunpack.c.l.b16 %v6042
    %v6375 = vunpack.c.h.b16 %v6042
    %v6376 = vunpack.c.l.b16 %v6043
    %v6377 = vunpack.c.h.b16 %v6043
    %v6378 = vunpack.c.l.b16 %v6044
    %v6379 = vunpack.c.h.b16 %v6044
    %v6380 = vunpack.c.l.b16 %v6045
    %v6381 = vunpack.c.h.b16 %v6045
    %v6382 = vunpack.c.l.b16 %v6046
    %v6383 = vunpack.c.h.b16 %v6046
    %v6384 = vunpack.c.l.b16 %v6047
    %v6385 = vunpack.c.h.b16 %v6047
    %v6386 = vunpack.c.l.b16 %v6048
    %v6387 = vunpack.c.h.b16 %v6048
    %v6388 = vunpack.c.l.b16 %v6049
    %v6389 = vunpack.c.h.b16 %v6049
    %v6390 = vunpack.c.l.b16 %v6050
    %v6391 = vunpack.c.h.b16 %v6050
    %v6392 = vunpack.c.l.b16 %v6051
    %v6393 = vunpack.c.h.b16 %v6051
    %v6394 = vunpack.c.l.b16 %v6052
    %v6395 = vunpack.c.h.b16 %v6052
    %v6396 = vunpack.c.l.b16 %v6053
    %v6397 = vunpack.c.h.b16 %v6053
    %v6398 = vunpack.c.l.b16 %v6054
    %v6399 = vunpack.c.h.b16 %v6054
    %v6400 = vunpack.c.l.b16 %v6055
    %v6401 = vunpack.c.h.b16 %v6055
    %v6402 = vunpack.c.l.b16 %v6056
    %v6403 = vunpack.c.h.b16 %v6056
    %v6404 = vunpack.c.l.b16 %v6057
    %v6405 = vunpack.c.h.b16 %v6057
    %v6406 = vunpack.c.l.b16 %v6058
    %v6407 = vunpack.c.h.b16 %v6058
    %v6408 = vunpack.c.l.b16 %v6059
    %v6409 = vunpack.c.h.b16 %v6059
    %v6410 = vunpack.c.l.b16 %v6060
    %v6411 = vunpack.c.h.b16 %v6060
    %v6412 = vunpack.c.l.b16 %v6061
    %v6413 = vunpack.c.h.b16 %v6061
    %v6414 = vunpack.c.l.b16 %v6062
    %v6415 = vunpack.c.h.b16 %v6062
    %v6416 = vunpack.c.l.b16 %v6063
    %v6417 = vunpack.c.h.b16 %v6063
    %v6418 = vunpack.c.l.b16 %v6064
    %v6419 = vunpack.c.h.b16 %v6064
    %v6420 = vunpack.c.l.b16 %v6065
    %v6421 = vunpack.c.h.b16 %v6065
    %v6422 = vunpack.c.l.b16 %v6066
    %v6423 = vunpack.c.h.b16 %v6066
    %v6424 = vunpack.c.l.b16 %v6067
    %v6425 = vunpack.c.h.b16 %v6067
    %v6426 = vunpack.c.l.b16 %v6068
    %v6427 = vunpack.c.h.b16 %v6068
    %v6428 = vunpack.c.l.b16 %v6069
    %v6429 = vunpack.c.h.b16 %v6069
    %v6430 = vunpack.c.l.b16 %v6070
    %v6431 = vunpack.c.h.b16 %v6070
    %v6432 = vunpack.c.l.b16 %v6071
    %v6433 = vunpack.c.h.b16 %v6071
    %v6434 = vunpack.c.l.b16 %v6072
    %v6435 = vunpack.c.h.b16 %v6072
    %v6436 = vunpack.c.l.b16 %v6073
    %v6437 = vunpack.c.h.b16 %v6073
    %v6438 = vunpack.c.l.b16 %v6074
    %v6439 = vunpack.c.h.b16 %v6074
    %v6440 = vunpack.c.l.b16 %v6075
    %v6441 = vunpack.c.h.b16 %v6075
    %v6442 = vunpack.c.l.b16 %v6076
    %v6443 = vunpack.c.h.b16 %v6076
    %v6444 = vunpack.c.l.b16 %v6077
    %v6445 = vunpack.c.h.b16 %v6077
    %v6446 = vunpack.c.l.b16 %v6078
    %v6447 = vunpack.c.h.b16 %v6078
    %v6448 = vunpack.c.l.b16 %v6079
    %v6449 = vunpack.c.h.b16 %v6079
    %v6450 = vunpack.c.l.b16 %v6080
    %v6451 = vunpack.c.h.b16 %v6080
    %v6452 = vunpack.c.l.b16 %v6081
    %v6453 = vunpack.c.h.b16 %v6081
    %v6454 = vunpack.c.l.b16 %v6082
    %v6455 = vunpack.c.h.b16 %v6082
    %v6456 = vunpack.c.l.b16 %v6083
    %v6457 = vunpack.c.h.b16 %v6083
    %v6458 = vunpack.c.l.b16 %v6084
    %v6459 = vunpack.c.h.b16 %v6084
    %v6460 = vunpack.c.l.b16 %v6085
    %v6461 = vunpack.c.h.b16 %v6085
    %v6462 = vunpack.c.l.b16 %v6086
    %v6463 = vunpack.c.h.b16 %v6086
    %v6464 = vunpack.c.l.b16 %v6087
    %v6465 = vunpack.c.h.b16 %v6087
    %v6466 = vunpack.c.l.b16 %v6088
    %v6467 = vunpack.c.h.b16 %v6088
    %v6468 = vunpack.c.l.b16 %v6089
    %v6469 = vunpack.c.h.b16 %v6089
    %v6470 = vunpack.c.l.b16 %v6090
    %v6471 = vunpack.c.h.b16 %v6090
    %v6472 = vunpack.c.l.b16 %v6091
    %v6473 = vunpack.c.h.b16 %v6091
    %v6474 = vunpack.c.l.b16 %v6092
    %v6475 = vunpack.c.h.b16 %v6092
    %v6476 = vunpack.c.l.b16 %v6093
    %v6477 = vunpack.c.h.b16 %v6093
    %v6478 = vpack.c.b16 %v6226, %v6222
    %v6479 = vpack.c.b16 %v6227, %v6223
    %v6480 = vpack.c.b16 %v6228, %v6224
    %v6481 = vpack.c.b16 %v6229, %v6225
    %v6482 = vpack.c.b16 %v6234, %v6230
    %v6483 = vpack.c.b16 %v6235, %v6231
    %v6484 = vpack.c.b16 %v6236, %v6232
    %v6485 = vpack.c.b16 %v6237, %v6233
    %v6486 = vpack.c.b16 %v6242, %v6238
    %v6487 = vpack.c.b16 %v6243, %v6239
    %v6488 = vpack.c.b16 %v6244, %v6240
    %v6489 = vpack.c.b16 %v6245, %v6241
    %v6490 = vpack.c.b16 %v6250, %v6246
    %v6491 = vpack.c.b16 %v6251, %v6247
    %v6492 = vpack.c.b16 %v6252, %v6248
    %v6493 = vpack.c.b16 %v6253, %v6249
    %v6494 = vpack.c.b16 %v6258, %v6254
    %v6495 = vpack.c.b16 %v6259, %v6255
    %v6496 = vpack.c.b16 %v6260, %v6256
    %v6497 = vpack.c.b16 %v6261, %v6257
    %v6498 = vpack.c.b16 %v6266, %v6262
    %v6499 = vpack.c.b16 %v6267, %v6263
    %v6500 = vpack.c.b16 %v6268, %v6264
    %v6501 = vpack.c.b16 %v6269, %v6265
    %v6502 = vpack.c.b16 %v6274, %v6270
    %v6503 = vpack.c.b16 %v6275, %v6271
    %v6504 = vpack.c.b16 %v6276, %v6272
    %v6505 = vpack.c.b16 %v6277, %v6273
    %v6506 = vpack.c.b16 %v6282, %v6278
    %v6507 = vpack.c.b16 %v6283, %v6279
    %v6508 = vpack.c.b16 %v6284, %v6280
    %v6509 = vpack.c.b16 %v6285, %v6281
    %v6510 = vpack.c.b16 %v6290, %v6286
    %v6511 = vpack.c.b16 %v6291, %v6287
    %v6512 = vpack.c.b16 %v6292, %v6288
    %v6513 = vpack.c.b16 %v6293, %v6289
    %v6514 = vpack.c.b16 %v6298, %v6294
    %v6515 = vpack.c.b16 %v6299, %v6295
    %v6516 = vpack.c.b16 %v6300, %v6296
    %v6517 = vpack.c.b16 %v6301, %v6297
    %v6518 = vpack.c.b16 %v6306, %v6302
    %v6519 = vpack.c.b16 %v6307, %v6303
    %v6520 = vpack.c.b16 %v6308, %v6304
    %v6521 = vpack.c.b16 %v6309, %v6305
    %v6522 = vpack.c.b16 %v6314, %v6310
    %v6523 = vpack.c.b16 %v6315, %v6311
    %v6524 = vpack.c.b16 %v6316, %v6312
    %v6525 = vpack.c.b16 %v6317, %v6313
    %v6526 = vpack.c.b16 %v6322, %v6318
    %v6527 = vpack.c.b16 %v6323, %v6319
    %v6528 = vpack.c.b16 %v6324, %v6320
    %v6529 = vpack.c.b16 %v6325, %v6321
    %v6530 = vpack.c.b16 %v6330, %v6326
    %v6531 = vpack.c.b16 %v6331, %v6327
    %v6532 = vpack.c.b16 %v6332, %v6328
    %v6533 = vpack.c.b16 %v6333, %v6329
    %v6534 = vpack.c.b16 %v6338, %v6334
    %v6535 = vpack.c.b16 %v6339, %v6335
    %v6536 = vpack.c.b16 %v6340, %v6336
    %v6537 = vpack.c.b16 %v6341, %v6337
    %v6538 = vpack.c.b16 %v6346, %v6342
    %v6539 = vpack.c.b16 %v6347, %v6343
    %v6540 = vpack.c.b16 %v6348, %v6344
    %v6541 = vpack.c.b16 %v6349, %v6345
    %v6542 = vpack.c.b16 %v6354, %v6350
    %v6543 = vpack.c.b16 %v6355, %v6351
    %v6544 = vpack.c.b16 %v6356, %v6352
    %v6545 = vpack.c.b16 %v6357, %v6353
    %v6546 = vpack.c.b16 %v6362, %v6358
    %v6547 = vpack.c.b16 %v6363, %v6359
    %v6548 = vpack.c.b16 %v6364, %v6360
    %v6549 = vpack.c.b16 %v6365, %v6361
    %v6550 = vpack.c.b16 %v6370, %v6366
    %v6551 = vpack.c.b16 %v6371, %v6367
    %v6552 = vpack.c.b16 %v6372, %v6368
    %v6553 = vpack.c.b16 %v6373, %v6369
    %v6554 = vpack.c.b16 %v6378, %v6374
    %v6555 = vpack.c.b16 %v6379, %v6375
    %v6556 = vpack.c.b16 %v6380, %v6376
    %v6557 = vpack.c.b16 %v6381, %v6377
    %v6558 = vpack.c.b16 %v6386, %v6382
    %v6559 = vpack.c.b16 %v6387, %v6383
    %v6560 = vpack.c.b16 %v6388, %v6384
    %v6561 = vpack.c.b16 %v6389, %v6385
    %v6562 = vpack.c.b16 %v6394, %v6390
    %v6563 = vpack.c.b16 %v6395, %v6391
    %v6564 = vpack.c.b16 %v6396, %v6392
    %v6565 = vpack.c.b16 %v6397, %v6393
    %v6566 = vpack.c.b16 %v6402, %v6398
    %v6567 = vpack.c.b16 %v6403, %v6399
    %v6568 = vpack.c.b16 %v6404, %v6400
    %v6569 = vpack.c.b16 %v6405, %v6401
    %v6570 = vpack.c.b16 %v6410, %v6406
    %v6571 = vpack.c.b16 %v6411, %v6407
    %v6572 = vpack.c.b16 %v6412, %v6408
    %v6573 = vpack.c.b16 %v6413, %v6409
    %v6574 = vpack.c.b16 %v6418, %v6414
    %v6575 = vpack.c.b16 %v6419, %v6415
    %v6576 = vpack.c.b16 %v6420, %v6416
    %v6577 = vpack.c.b16 %v6421, %v6417
    %v6578 = vpack.c.b16 %v6426, %v6422
    %v6579 = vpack.c.b16 %v6427, %v6423
    %v6580 = vpack.c.b16 %v6428, %v6424
    %v6581 = vpack.c.b16 %v6429, %v6425
    %v6582 = vpack.c.b16 %v6434, %v6430
    %v6583 = vpack.c.b16 %v6435, %v6431
    %v6584 = vpack.c.b16 %v6436, %v6432
    %v6585 = vpack.c.b16 %v6437, %v6433
    %v6586 = vpack.c.b16 %v6442, %v6438
    %v6587 = vpack.c.b16 %v6443, %v6439
    %v6588 = vpack.c.b16 %v6444, %v6440
    %v6589 = vpack.c.b16 %v6445, %v6441
    %v6590 = vpack.c.b16 %v6450, %v6446
    %v6591 = vpack.c.b16 %v6451, %v6447
    %v6592 = vpack.c.b16 %v6452, %v6448
    %v6593 = vpack.c.b16 %v6453, %v6449
    %v6594 = vpack.c.b16 %v6458, %v6454
    %v6595 = vpack.c.b16 %v6459, %v6455
    %v6596 = vpack.c.b16 %v6460, %v6456
    %v6597 = vpack.c.b16 %v6461, %v6457
    %v6598 = vpack.c.b16 %v6466, %v6462
    %v6599 = vpack.c.b16 %v6467, %v6463
    %v6600 = vpack.c.b16 %v6468, %v6464
    %v6601 = vpack.c.b16 %v6469, %v6465
    %v6602 = vpack.c.b16 %v6474, %v6470
    %v6603 = vpack.c.b16 %v6475, %v6471
    %v6604 = vpack.c.b16 %v6476, %v6472
    %v6605 = vpack.c.b16 %v6477, %v6473
    %6734 = vmatprep.subr.bf16.mxu0 %v6507
    %6735 = vmatpush1.bf16.msra.mxu0 %v6506
    %6736 = vmatprep.subr.bf16.mxu0 %v6503
    %6737 = vmatpush1.bf16.msra.mxu0 %v6502
    %6738 = vmatprep.subr.bf16.mxu0 %v6499
    %6739 = vmatpush1.bf16.msra.mxu0 %v6498
    %6740 = vmatprep.subr.bf16.mxu0 %v6495
    %6741 = vmatpush1.bf16.msra.mxu0 %v6494
    %6742 = vmatprep.subr.bf16.mxu0 %v6491
    %6743 = vmatpush1.bf16.msra.mxu0 %v6490
    %6744 = vmatprep.subr.bf16.mxu0 %v6487
    %6745 = vmatpush1.bf16.msra.mxu0 %v6486
    %6746 = vmatprep.subr.bf16.mxu0 %v6483
    %6747 = vmatpush1.bf16.msra.mxu0 %v6482
    %6748 = vmatprep.subr.bf16.mxu0 %v6479
    %6749 = vmatpush1.bf16.msra.mxu0 %v6478
    %6750 = vmatprep.subr.bf16.mxu0 %v6539
    %6751 = vmatpush2.bf16.msra.mxu0 %v6538
    %6752 = vmatprep.subr.bf16.mxu0 %v6535
    %6753 = vmatpush2.bf16.msra.mxu0 %v6534
    %6754 = vmatprep.subr.bf16.mxu0 %v6531
    %6755 = vmatpush2.bf16.msra.mxu0 %v6530
    %6756 = vmatprep.subr.bf16.mxu0 %v6527
    %6757 = vmatpush2.bf16.msra.mxu0 %v6526
    %6758 = vmatprep.subr.bf16.mxu0 %v6523
    %6759 = vmatpush2.bf16.msra.mxu0 %v6522
    %6760 = vmatprep.subr.bf16.mxu0 %v6519
    %6761 = vmatpush2.bf16.msra.mxu0 %v6518
    %6762 = vmatprep.subr.bf16.mxu0 %v6515
    %6763 = vmatpush2.bf16.msra.mxu0 %v6514
    %6764 = vmatprep.subr.bf16.mxu0 %v6511
    %6765 = vmatpush2.bf16.msra.mxu0 %v6510
    %6766 = vmatprep.mubr.bf16.mxu0 %v5963
    %6767 = vmatmul.mubr.bf16.gmra.mxu0 %v5962
    %v6768 = vpop.f32.mrf.mxu0
    %v6769 = vadd.f32 0.0, %v6768
    %v6770 = vpop.f32.mrf.mxu0
    %v6771 = vadd.f32 0.0, %v6770
    %v6772 = vpop.f32.mrf.mxu0
    %v6773 = vpop.f32.mrf.mxu0
    %6774 = vdwg.mxu0
    %6775 = vmatprep.subr.bf16.mxu0 %v6571
    %6776 = vmatpush1.bf16.msra.mxu0 %v6570
    %6777 = vmatprep.subr.bf16.mxu0 %v6567
    %6778 = vmatpush1.bf16.msra.mxu0 %v6566
    %6779 = vmatprep.subr.bf16.mxu0 %v6563
    %6780 = vmatpush1.bf16.msra.mxu0 %v6562
    %6781 = vmatprep.subr.bf16.mxu0 %v6559
    %6782 = vmatpush1.bf16.msra.mxu0 %v6558
    %6783 = vmatprep.subr.bf16.mxu0 %v6555
    %6784 = vmatpush1.bf16.msra.mxu0 %v6554
    %6785 = vmatprep.subr.bf16.mxu0 %v6551
    %6786 = vmatpush1.bf16.msra.mxu0 %v6550
    %6787 = vmatprep.subr.bf16.mxu0 %v6547
    %6788 = vmatpush1.bf16.msra.mxu0 %v6546
    %6789 = vmatprep.subr.bf16.mxu0 %v6543
    %6790 = vmatpush1.bf16.msra.mxu0 %v6542
    %6791 = vmatprep.subr.bf16.mxu0 %v6603
    %6792 = vmatpush2.bf16.msra.mxu0 %v6602
    %6793 = vmatprep.subr.bf16.mxu0 %v6599
    %6794 = vmatpush2.bf16.msra.mxu0 %v6598
    %6795 = vmatprep.subr.bf16.mxu0 %v6595
    %6796 = vmatpush2.bf16.msra.mxu0 %v6594
    %6797 = vmatprep.subr.bf16.mxu0 %v6591
    %6798 = vmatpush2.bf16.msra.mxu0 %v6590
    %6799 = vmatprep.subr.bf16.mxu0 %v6587
    %6800 = vmatpush2.bf16.msra.mxu0 %v6586
    %6801 = vmatprep.subr.bf16.mxu0 %v6583
    %6802 = vmatpush2.bf16.msra.mxu0 %v6582
    %6803 = vmatprep.subr.bf16.mxu0 %v6579
    %6804 = vmatpush2.bf16.msra.mxu0 %v6578
    %6805 = vmatprep.subr.bf16.mxu0 %v6575
    %6806 = vmatpush2.bf16.msra.mxu0 %v6574
    %6807 = vmatprep.mubr.bf16.mxu0 %v5965
    %6808 = vmatmul.mubr.bf16.gmra.mxu0 %v5964
    %v6809 = vpop.f32.mrf.mxu0
    %v6810 = vadd.f32 %v6769, %v6809
    %v6811 = vpop.f32.mrf.mxu0
    %v6812 = vadd.f32 %v6771, %v6811
    %v6813 = vpop.f32.mrf.mxu0
    %v6814 = vpop.f32.mrf.mxu0
    %6815 = vdwg.mxu0
    %6816 = vmatprep.subr.bf16.mxu0 %v6509
    %6817 = vmatpush1.bf16.msra.mxu0 %v6508
    %6818 = vmatprep.subr.bf16.mxu0 %v6505
    %6819 = vmatpush1.bf16.msra.mxu0 %v6504
    %6820 = vmatprep.subr.bf16.mxu0 %v6501
    %6821 = vmatpush1.bf16.msra.mxu0 %v6500
    %6822 = vmatprep.subr.bf16.mxu0 %v6497
    %6823 = vmatpush1.bf16.msra.mxu0 %v6496
    %6824 = vmatprep.subr.bf16.mxu0 %v6493
    %6825 = vmatpush1.bf16.msra.mxu0 %v6492
    %6826 = vmatprep.subr.bf16.mxu0 %v6489
    %6827 = vmatpush1.bf16.msra.mxu0 %v6488
    %6828 = vmatprep.subr.bf16.mxu0 %v6485
    %6829 = vmatpush1.bf16.msra.mxu0 %v6484
    %6830 = vmatprep.subr.bf16.mxu0 %v6481
    %6831 = vmatpush1.bf16.msra.mxu0 %v6480
    %6832 = vmatprep.subr.bf16.mxu0 %v6541
    %6833 = vmatpush2.bf16.msra.mxu0 %v6540
    %6834 = vmatprep.subr.bf16.mxu0 %v6537
    %6835 = vmatpush2.bf16.msra.mxu0 %v6536
    %6836 = vmatprep.subr.bf16.mxu0 %v6533
    %6837 = vmatpush2.bf16.msra.mxu0 %v6532
    %6838 = vmatprep.subr.bf16.mxu0 %v6529
    %6839 = vmatpush2.bf16.msra.mxu0 %v6528
    %6840 = vmatprep.subr.bf16.mxu0 %v6525
    %6841 = vmatpush2.bf16.msra.mxu0 %v6524
    %6842 = vmatprep.subr.bf16.mxu0 %v6521
    %6843 = vmatpush2.bf16.msra.mxu0 %v6520
    %6844 = vmatprep.subr.bf16.mxu0 %v6517
    %6845 = vmatpush2.bf16.msra.mxu0 %v6516
    %6846 = vmatprep.subr.bf16.mxu0 %v6513
    %6847 = vmatpush2.bf16.msra.mxu0 %v6512
    %6848 = vmatprep.mubr.bf16.mxu0 %v5963
    %6849 = vmatmul.mubr.bf16.gmra.mxu0 %v5962
    %v6850 = vpop.f32.mrf.mxu0
    %v6851 = vadd.f32 0.0, %v6850
    %v6852 = vpop.f32.mrf.mxu0
    %v6853 = vadd.f32 0.0, %v6852
    %v6854 = vpop.f32.mrf.mxu0
    %v6855 = vpop.f32.mrf.mxu0
    %6856 = vdwg.mxu0
    %6857 = vmatprep.subr.bf16.mxu0 %v6573
    %6858 = vmatpush1.bf16.msra.mxu0 %v6572
    %6859 = vmatprep.subr.bf16.mxu0 %v6569
    %6860 = vmatpush1.bf16.msra.mxu0 %v6568
    %6861 = vmatprep.subr.bf16.mxu0 %v6565
    %6862 = vmatpush1.bf16.msra.mxu0 %v6564
    %6863 = vmatprep.subr.bf16.mxu0 %v6561
    %6864 = vmatpush1.bf16.msra.mxu0 %v6560
    %6865 = vmatprep.subr.bf16.mxu0 %v6557
    %6866 = vmatpush1.bf16.msra.mxu0 %v6556
    %6867 = vmatprep.subr.bf16.mxu0 %v6553
    %6868 = vmatpush1.bf16.msra.mxu0 %v6552
    %6869 = vmatprep.subr.bf16.mxu0 %v6549
    %6870 = vmatpush1.bf16.msra.mxu0 %v6548
    %6871 = vmatprep.subr.bf16.mxu0 %v6545
    %6872 = vmatpush1.bf16.msra.mxu0 %v6544
    %6873 = vmatprep.subr.bf16.mxu0 %v6605
    %6874 = vmatpush2.bf16.msra.mxu0 %v6604
    %6875 = vmatprep.subr.bf16.mxu0 %v6601
    %6876 = vmatpush2.bf16.msra.mxu0 %v6600
    %6877 = vmatprep.subr.bf16.mxu0 %v6597
    %6878 = vmatpush2.bf16.msra.mxu0 %v6596
    %6879 = vmatprep.subr.bf16.mxu0 %v6593
    %6880 = vmatpush2.bf16.msra.mxu0 %v6592
    %6881 = vmatprep.subr.bf16.mxu0 %v6589
    %6882 = vmatpush2.bf16.msra.mxu0 %v6588
    %6883 = vmatprep.subr.bf16.mxu0 %v6585
    %6884 = vmatpush2.bf16.msra.mxu0 %v6584
    %6885 = vmatprep.subr.bf16.mxu0 %v6581
    %6886 = vmatpush2.bf16.msra.mxu0 %v6580
    %6887 = vmatprep.subr.bf16.mxu0 %v6577
    %6888 = vmatpush2.bf16.msra.mxu0 %v6576
    %6889 = vmatprep.mubr.bf16.mxu0 %v5965
    %6890 = vmatmul.mubr.bf16.gmra.mxu0 %v5964
    %v6891 = vpop.f32.mrf.mxu0
    %v6892 = vadd.f32 %v6851, %v6891
    %v6893 = vpop.f32.mrf.mxu0
    %v6894 = vadd.f32 %v6853, %v6893
    %v6895 = vpop.f32.mrf.mxu0
    %v6896 = vpop.f32.mrf.mxu0
    %6897 = vdwg.mxu0
    %v6898 = vrot.slane %v6810, 4
    %v6899 = vadd.f32 %v6810, %v6898
    %v6900 = vrot.slane %v6899, 2
    %v6901 = vadd.f32 %v6899, %v6900
    %v6902 = vrot.slane %v6901, 1
    %v6903 = vadd.f32 %v6901, %v6902
    %v6904 = vrot.slane %v6812, 4
    %v6905 = vadd.f32 %v6812, %v6904
    %v6906 = vrot.slane %v6905, 2
    %v6907 = vadd.f32 %v6905, %v6906
    %v6908 = vrot.slane %v6907, 1
    %v6909 = vadd.f32 %v6907, %v6908
    %v6910 = vrot.slane %v6892, 4
    %v6911 = vadd.f32 %v6892, %v6910
    %v6912 = vrot.slane %v6911, 2
    %v6913 = vadd.f32 %v6911, %v6912
    %v6914 = vrot.slane %v6913, 1
    %v6915 = vadd.f32 %v6913, %v6914
    %v6916 = vrot.slane %v6894, 4
    %v6917 = vadd.f32 %v6894, %v6916
    %v6918 = vrot.slane %v6917, 2
    %v6919 = vadd.f32 %v6917, %v6918
    %v6920 = vrot.slane %v6919, 1
    %v6921 = vadd.f32 %v6919, %v6920
    %v6922 = vmul.f32 %v6903, %v271
    %v6923 = vmul.f32 %v6909, %v271
    %v6924 = vmul.f32 %v6915, %v271
    %v6925 = vmul.f32 %v6921, %v271
    %v6926 = vsub.f32 %v6810, %v6922
    %v6927 = vsub.f32 %v6812, %v6923
    %v6928 = vsub.f32 %v6892, %v6924
    %v6929 = vsub.f32 %v6894, %v6925
    %v6930 = vmul.f32 %v6926, %v6926
    %v6931 = vmul.f32 %v6927, %v6927
    %v6932 = vmul.f32 %v6928, %v6928
    %v6933 = vmul.f32 %v6929, %v6929
    %v6934 = vrot.slane %v6930, 4
    %v6935 = vadd.f32 %v6930, %v6934
    %v6936 = vrot.slane %v6935, 2
    %v6937 = vadd.f32 %v6935, %v6936
    %v6938 = vrot.slane %v6937, 1
    %v6939 = vadd.f32 %v6937, %v6938
    %v6940 = vrot.slane %v6931, 4
    %v6941 = vadd.f32 %v6931, %v6940
    %v6942 = vrot.slane %v6941, 2
    %v6943 = vadd.f32 %v6941, %v6942
    %v6944 = vrot.slane %v6943, 1
    %v6945 = vadd.f32 %v6943, %v6944
    %v6946 = vrot.slane %v6932, 4
    %v6947 = vadd.f32 %v6932, %v6946
    %v6948 = vrot.slane %v6947, 2
    %v6949 = vadd.f32 %v6947, %v6948
    %v6950 = vrot.slane %v6949, 1
    %v6951 = vadd.f32 %v6949, %v6950
    %v6952 = vrot.slane %v6933, 4
    %v6953 = vadd.f32 %v6933, %v6952
    %v6954 = vrot.slane %v6953, 2
    %v6955 = vadd.f32 %v6953, %v6954
    %v6956 = vrot.slane %v6955, 1
    %v6957 = vadd.f32 %v6955, %v6956
    %v6958 = vmul.f32 %v6939, %v271
    %v6959 = vmul.f32 %v6945, %v271
    %v6960 = vmul.f32 %v6951, %v271
    %v6961 = vmul.f32 %v6957, %v271
    %s6962 = scalar_lea.vmem [#allocation12], 6
    %v6963 = vld [vmem:[%s6962] ss:$8 sm:$0xf]
    %v6964 = vadd.f32 %v6958, 1e-05
    %v6965 = vadd.f32 %v6959, 1e-05
    %v6966 = vadd.f32 %v6960, 1e-05
    %v6967 = vadd.f32 %v6961, 1e-05
    %v6968 = vrsqrt.pop %v6964
    %v6969 = vrsqrt.pop %v6965
    %v6970 = vrsqrt.pop %v6966
    %v6971 = vrsqrt.pop %v6967
    %v6976 = vcombine.low %v6968, %v6969
    %v6977 = vcombine.low %v6970, %v6971
    %v6979 = vunpack.c.l.s4 1966171168
    %v6980 = vunpack.c.0.s8 %v6979
    %v6981 = vlaneseq
    %v6982 = vshrl.u32 %v6981, 7
    %v6983 = vsub.s32 %v6980, %v6982
    %v6984 = vrot.slane %v6976, %v6983
    %v6986 = vunpack.c.l.s4 1966171168
    %v6987 = vunpack.c.0.s8 %v6986
    %v6988 = vlaneseq
    %v6989 = vshrl.u32 %v6988, 7
    %v6990 = vsub.s32 %v6987, %v6989
    %v6991 = vrot.slane %v6977, %v6990
    %v6992 = vcombine.low %v6984, %v6991
    %v6994 = vunpack.c.l.s4 1966171168
    %v6995 = vunpack.c.0.s8 %v6994
    %v6996 = vlaneseq
    %v6997 = vshrl.u32 %v6996, 7
    %v6998 = vsub.s32 %v6995, %v6997
    %v6999 = vrot.slane %v6992, %v6998
    %v7001 = vmul.f32 %v6963, %v6999
    %v7003 = vlaneseq
    %v7004 = vshrl.u32 %v7003, 7
    %v7005 = vsub.s32 0, %v7004
    %v7006 = vrot.slane %v7001, %v7005
    %v7007 = vlaneseq
    %v7008 = vshrl.u32 %v7007, 7
    %v7009 = vsub.s32 1, %v7008
    %v7010 = vrot.slane %v7001, %v7009
    %v7011 = vlaneseq
    %v7012 = vshrl.u32 %v7011, 7
    %v7013 = vsub.s32 2, %v7012
    %v7014 = vrot.slane %v7001, %v7013
    %v7015 = vlaneseq
    %v7016 = vshrl.u32 %v7015, 7
    %v7017 = vsub.s32 3, %v7016
    %v7018 = vrot.slane %v7001, %v7017
    %v7023 = vmul.f32 %v6926, %v7006
    %v7024 = vmul.f32 %v6927, %v7010
    %v7025 = vmul.f32 %v6928, %v7014
    %v7026 = vmul.f32 %v6929, %v7018
    %s7027 = scalar_lea.vmem [#allocation13], 6
    %v7028 = vld [vmem:[%s7027] ss:$8 sm:$0xf]
    %v7030 = vlaneseq
    %v7031 = vshrl.u32 %v7030, 7
    %v7032 = vsub.s32 0, %v7031
    %v7033 = vrot.slane %v7028, %v7032
    %v7034 = vlaneseq
    %v7035 = vshrl.u32 %v7034, 7
    %v7036 = vsub.s32 1, %v7035
    %v7037 = vrot.slane %v7028, %v7036
    %v7038 = vlaneseq
    %v7039 = vshrl.u32 %v7038, 7
    %v7040 = vsub.s32 2, %v7039
    %v7041 = vrot.slane %v7028, %v7040
    %v7042 = vlaneseq
    %v7043 = vshrl.u32 %v7042, 7
    %v7044 = vsub.s32 3, %v7043
    %v7045 = vrot.slane %v7028, %v7044
    %v7050 = vadd.f32 %v7023, %v7033
    %v7051 = vadd.f32 %v7024, %v7037
    %v7052 = vadd.f32 %v7025, %v7041
    %v7053 = vadd.f32 %v7026, %v7045
    %v7054 = vmax.f32 %v7050, 0.0
    %v7055 = vmax.f32 %v7051, 0.0
    %v7056 = vmax.f32 %v7052, 0.0
    %v7057 = vmax.f32 %v7053, 0.0
    %v7058 = vpack.c.bf16 %v7054, %v7054
    %v7059 = vpack.c.bf16 %v7055, %v7055
    %v7060 = vpack.c.bf16 %v7056, %v7056
    %v7061 = vpack.c.bf16 %v7057, %v7057
    %v7062 = vld [vmem:[#allocation9] sm:$0xff]
    %v7063 = vld [vmem:[#allocation9 + $0x8] sm:$0xff]
    %v7064 = vld [vmem:[#allocation9 + $0x10] sm:$0xff]
    %v7065 = vld [vmem:[#allocation9 + $0x18] sm:$0xf]
    %v7066 = vld [vmem:[#allocation9 + $0x1c] sm:$0xff]
    %v7067 = vld [vmem:[#allocation9 + $0x24] sm:$0xff]
    %v7068 = vld [vmem:[#allocation9 + $0x2c] sm:$0xff]
    %v7069 = vld [vmem:[#allocation9 + $0x34] sm:$0xf]
    %v7070 = vld [vmem:[#allocation9 + $0x38] sm:$0xff]
    %v7071 = vld [vmem:[#allocation9 + $0x40] sm:$0xff]
    %v7072 = vld [vmem:[#allocation9 + $0x48] sm:$0xff]
    %v7073 = vld [vmem:[#allocation9 + $0x50] sm:$0xf]
    %v7074 = vld [vmem:[#allocation9 + $0x54] sm:$0xff]
    %v7075 = vld [vmem:[#allocation9 + $0x5c] sm:$0xff]
    %v7076 = vld [vmem:[#allocation9 + $0x64] sm:$0xff]
    %v7077 = vld [vmem:[#allocation9 + $0x6c] sm:$0xf]
    %v7078 = vld [vmem:[#allocation9 + $0x70] sm:$0xff]
    %v7079 = vld [vmem:[#allocation9 + $0x78] sm:$0xff]
    %v7080 = vld [vmem:[#allocation9 + $0x80] sm:$0xff]
    %v7081 = vld [vmem:[#allocation9 + $0x88] sm:$0xf]
    %v7082 = vld [vmem:[#allocation9 + $0x8c] sm:$0xff]
    %v7083 = vld [vmem:[#allocation9 + $0x94] sm:$0xff]
    %v7084 = vld [vmem:[#allocation9 + $0x9c] sm:$0xff]
    %v7085 = vld [vmem:[#allocation9 + $0xa4] sm:$0xf]
    %v7086 = vld [vmem:[#allocation9 + $0xa8] sm:$0xff]
    %v7087 = vld [vmem:[#allocation9 + $0xb0] sm:$0xff]
    %v7088 = vld [vmem:[#allocation9 + $0xb8] sm:$0xff]
    %v7089 = vld [vmem:[#allocation9 + $0xc0] sm:$0xf]
    %v7090 = vld [vmem:[#allocation9 + $0xc4] sm:$0xff]
    %v7091 = vld [vmem:[#allocation9 + $0xcc] sm:$0xff]
    %v7092 = vld [vmem:[#allocation9 + $0xd4] sm:$0xff]
    %v7093 = vld [vmem:[#allocation9 + $0xdc] sm:$0xf]
    %v7094 = vld [vmem:[#allocation9 + $0xe0] sm:$0xff]
    %v7095 = vld [vmem:[#allocation9 + $0xe8] sm:$0xff]
    %v7096 = vld [vmem:[#allocation9 + $0xf0] sm:$0xff]
    %v7097 = vld [vmem:[#allocation9 + $0xf8] sm:$0xf]
    %v7098 = vld [vmem:[#allocation9 + $0xfc] sm:$0xff]
    %v7099 = vld [vmem:[#allocation9 + $0x104] sm:$0xff]
    %v7100 = vld [vmem:[#allocation9 + $0x10c] sm:$0xff]
    %v7101 = vld [vmem:[#allocation9 + $0x114] sm:$0xf]
    %v7102 = vld [vmem:[#allocation9 + $0x118] sm:$0xff]
    %v7103 = vld [vmem:[#allocation9 + $0x120] sm:$0xff]
    %v7104 = vld [vmem:[#allocation9 + $0x128] sm:$0xff]
    %v7105 = vld [vmem:[#allocation9 + $0x130] sm:$0xf]
    %v7106 = vld [vmem:[#allocation9 + $0x134] sm:$0xff]
    %v7107 = vld [vmem:[#allocation9 + $0x13c] sm:$0xff]
    %v7108 = vld [vmem:[#allocation9 + $0x144] sm:$0xff]
    %v7109 = vld [vmem:[#allocation9 + $0x14c] sm:$0xf]
    %v7110 = vld [vmem:[#allocation9 + $0x150] sm:$0xff]
    %v7111 = vld [vmem:[#allocation9 + $0x158] sm:$0xff]
    %v7112 = vld [vmem:[#allocation9 + $0x160] sm:$0xff]
    %v7113 = vld [vmem:[#allocation9 + $0x168] sm:$0xf]
    %v7114 = vld [vmem:[#allocation9 + $0x16c] sm:$0xff]
    %v7115 = vld [vmem:[#allocation9 + $0x174] sm:$0xff]
    %v7116 = vld [vmem:[#allocation9 + $0x17c] sm:$0xff]
    %v7117 = vld [vmem:[#allocation9 + $0x184] sm:$0xf]
    %v7118 = vld [vmem:[#allocation9 + $0x188] sm:$0xff]
    %v7119 = vld [vmem:[#allocation9 + $0x190] sm:$0xff]
    %v7120 = vld [vmem:[#allocation9 + $0x198] sm:$0xff]
    %v7121 = vld [vmem:[#allocation9 + $0x1a0] sm:$0xf]
    %v7122 = vld [vmem:[#allocation9 + $0x1a4] sm:$0xff]
    %v7123 = vld [vmem:[#allocation9 + $0x1ac] sm:$0xff]
    %v7124 = vld [vmem:[#allocation9 + $0x1b4] sm:$0xff]
    %v7125 = vld [vmem:[#allocation9 + $0x1bc] sm:$0xf]
    %v7126 = vld [vmem:[#allocation9 + $0x1c0] sm:$0xff]
    %v7127 = vld [vmem:[#allocation9 + $0x1c8] sm:$0xff]
    %v7128 = vld [vmem:[#allocation9 + $0x1d0] sm:$0xff]
    %v7129 = vld [vmem:[#allocation9 + $0x1d8] sm:$0xf]
    %v7130 = vld [vmem:[#allocation9 + $0x1dc] sm:$0xff]
    %v7131 = vld [vmem:[#allocation9 + $0x1e4] sm:$0xff]
    %v7132 = vld [vmem:[#allocation9 + $0x1ec] sm:$0xff]
    %v7133 = vld [vmem:[#allocation9 + $0x1f4] sm:$0xf]
    %v7134 = vld [vmem:[#allocation9 + $0x1f8] sm:$0xff]
    %v7135 = vld [vmem:[#allocation9 + $0x200] sm:$0xff]
    %v7136 = vld [vmem:[#allocation9 + $0x208] sm:$0xff]
    %v7137 = vld [vmem:[#allocation9 + $0x210] sm:$0xf]
    %v7138 = vld [vmem:[#allocation9 + $0x214] sm:$0xff]
    %v7139 = vld [vmem:[#allocation9 + $0x21c] sm:$0xff]
    %v7140 = vld [vmem:[#allocation9 + $0x224] sm:$0xff]
    %v7141 = vld [vmem:[#allocation9 + $0x22c] sm:$0xf]
    %v7142 = vld [vmem:[#allocation9 + $0x230] sm:$0xff]
    %v7143 = vld [vmem:[#allocation9 + $0x238] sm:$0xff]
    %v7144 = vld [vmem:[#allocation9 + $0x240] sm:$0xff]
    %v7145 = vld [vmem:[#allocation9 + $0x248] sm:$0xf]
    %v7146 = vld [vmem:[#allocation9 + $0x24c] sm:$0xff]
    %v7147 = vld [vmem:[#allocation9 + $0x254] sm:$0xff]
    %v7148 = vld [vmem:[#allocation9 + $0x25c] sm:$0xff]
    %v7149 = vld [vmem:[#allocation9 + $0x264] sm:$0xf]
    %v7150 = vld [vmem:[#allocation9 + $0x268] sm:$0xff]
    %v7151 = vld [vmem:[#allocation9 + $0x270] sm:$0xff]
    %v7152 = vld [vmem:[#allocation9 + $0x278] sm:$0xff]
    %v7153 = vld [vmem:[#allocation9 + $0x280] sm:$0xf]
    %v7154 = vld [vmem:[#allocation9 + $0x284] sm:$0xff]
    %v7155 = vld [vmem:[#allocation9 + $0x28c] sm:$0xff]
    %v7156 = vld [vmem:[#allocation9 + $0x294] sm:$0xff]
    %v7157 = vld [vmem:[#allocation9 + $0x29c] sm:$0xf]
    %v7158 = vld [vmem:[#allocation9 + $0x2a0] sm:$0xff]
    %v7159 = vld [vmem:[#allocation9 + $0x2a8] sm:$0xff]
    %v7160 = vld [vmem:[#allocation9 + $0x2b0] sm:$0xff]
    %v7161 = vld [vmem:[#allocation9 + $0x2b8] sm:$0xf]
    %v7162 = vld [vmem:[#allocation9 + $0x2bc] sm:$0xff]
    %v7163 = vld [vmem:[#allocation9 + $0x2c4] sm:$0xff]
    %v7164 = vld [vmem:[#allocation9 + $0x2cc] sm:$0xff]
    %v7165 = vld [vmem:[#allocation9 + $0x2d4] sm:$0xf]
    %v7166 = vld [vmem:[#allocation9 + $0x2d8] sm:$0xff]
    %v7167 = vld [vmem:[#allocation9 + $0x2e0] sm:$0xff]
    %v7168 = vld [vmem:[#allocation9 + $0x2e8] sm:$0xff]
    %v7169 = vld [vmem:[#allocation9 + $0x2f0] sm:$0xf]
    %v7170 = vld [vmem:[#allocation9 + $0x2f4] sm:$0xff]
    %v7171 = vld [vmem:[#allocation9 + $0x2fc] sm:$0xff]
    %v7172 = vld [vmem:[#allocation9 + $0x304] sm:$0xff]
    %v7173 = vld [vmem:[#allocation9 + $0x30c] sm:$0xf]
    %v7174 = vld [vmem:[#allocation9 + $0x310] sm:$0xff]
    %v7175 = vld [vmem:[#allocation9 + $0x318] sm:$0xff]
    %v7176 = vld [vmem:[#allocation9 + $0x320] sm:$0xff]
    %v7177 = vld [vmem:[#allocation9 + $0x328] sm:$0xf]
    %v7178 = vld [vmem:[#allocation9 + $0x32c] sm:$0xff]
    %v7179 = vld [vmem:[#allocation9 + $0x334] sm:$0xff]
    %v7180 = vld [vmem:[#allocation9 + $0x33c] sm:$0xff]
    %v7181 = vld [vmem:[#allocation9 + $0x344] sm:$0xf]
    %v7182 = vld [vmem:[#allocation9 + $0x348] sm:$0xff]
    %v7183 = vld [vmem:[#allocation9 + $0x350] sm:$0xff]
    %v7184 = vld [vmem:[#allocation9 + $0x358] sm:$0xff]
    %v7185 = vld [vmem:[#allocation9 + $0x360] sm:$0xf]
    %v7186 = vld [vmem:[#allocation9 + $0x364] sm:$0xff]
    %v7187 = vld [vmem:[#allocation9 + $0x36c] sm:$0xff]
    %v7188 = vld [vmem:[#allocation9 + $0x374] sm:$0xff]
    %v7189 = vld [vmem:[#allocation9 + $0x37c] sm:$0xf]
    %v7190 = vld [vmem:[#allocation9 + $0x380] sm:$0xff]
    %v7191 = vld [vmem:[#allocation9 + $0x388] sm:$0xff]
    %v7192 = vld [vmem:[#allocation9 + $0x390] sm:$0xff]
    %v7193 = vld [vmem:[#allocation9 + $0x398] sm:$0xf]
    %v7194 = vld [vmem:[#allocation9 + $0x39c] sm:$0xff]
    %v7195 = vld [vmem:[#allocation9 + $0x3a4] sm:$0xff]
    %v7196 = vld [vmem:[#allocation9 + $0x3ac] sm:$0xff]
    %v7197 = vld [vmem:[#allocation9 + $0x3b4] sm:$0xf]
    %v7198 = vld [vmem:[#allocation9 + $0x3b8] sm:$0xff]
    %v7199 = vld [vmem:[#allocation9 + $0x3c0] sm:$0xff]
    %v7200 = vld [vmem:[#allocation9 + $0x3c8] sm:$0xff]
    %v7201 = vld [vmem:[#allocation9 + $0x3d0] sm:$0xf]
    %v7202 = vld [vmem:[#allocation9 + $0x3d4] sm:$0xff]
    %v7203 = vld [vmem:[#allocation9 + $0x3dc] sm:$0xff]
    %v7204 = vld [vmem:[#allocation9 + $0x3e4] sm:$0xff]
    %v7205 = vld [vmem:[#allocation9 + $0x3ec] sm:$0xf]
    %v7206 = vld [vmem:[#allocation9 + $0x3f0] sm:$0xff]
    %v7207 = vld [vmem:[#allocation9 + $0x3f8] sm:$0xff]
    %v7208 = vld [vmem:[#allocation9 + $0x400] sm:$0xff]
    %v7209 = vld [vmem:[#allocation9 + $0x408] sm:$0xf]
    %v7210 = vld [vmem:[#allocation9 + $0x40c] sm:$0xff]
    %v7211 = vld [vmem:[#allocation9 + $0x414] sm:$0xff]
    %v7212 = vld [vmem:[#allocation9 + $0x41c] sm:$0xff]
    %v7213 = vld [vmem:[#allocation9 + $0x424] sm:$0xf]
    %v7214 = vld [vmem:[#allocation9 + $0x428] sm:$0xff]
    %v7215 = vld [vmem:[#allocation9 + $0x430] sm:$0xff]
    %v7216 = vld [vmem:[#allocation9 + $0x438] sm:$0xff]
    %v7217 = vld [vmem:[#allocation9 + $0x440] sm:$0xf]
    %v7218 = vld [vmem:[#allocation9 + $0x444] sm:$0xff]
    %v7219 = vld [vmem:[#allocation9 + $0x44c] sm:$0xff]
    %v7220 = vld [vmem:[#allocation9 + $0x454] sm:$0xff]
    %v7221 = vld [vmem:[#allocation9 + $0x45c] sm:$0xf]
    %v7222 = vld [vmem:[#allocation9 + $0x460] sm:$0xff]
    %v7223 = vld [vmem:[#allocation9 + $0x468] sm:$0xff]
    %v7224 = vld [vmem:[#allocation9 + $0x470] sm:$0xff]
    %v7225 = vld [vmem:[#allocation9 + $0x478] sm:$0xf]
    %v7226 = vld [vmem:[#allocation9 + $0x47c] sm:$0xff]
    %v7227 = vld [vmem:[#allocation9 + $0x484] sm:$0xff]
    %v7228 = vld [vmem:[#allocation9 + $0x48c] sm:$0xff]
    %v7229 = vld [vmem:[#allocation9 + $0x494] sm:$0xf]
    %v7230 = vld [vmem:[#allocation9 + $0x498] sm:$0xff]
    %v7231 = vld [vmem:[#allocation9 + $0x4a0] sm:$0xff]
    %v7232 = vld [vmem:[#allocation9 + $0x4a8] sm:$0xff]
    %v7233 = vld [vmem:[#allocation9 + $0x4b0] sm:$0xf]
    %v7234 = vld [vmem:[#allocation9 + $0x4b4] sm:$0xff]
    %v7235 = vld [vmem:[#allocation9 + $0x4bc] sm:$0xff]
    %v7236 = vld [vmem:[#allocation9 + $0x4c4] sm:$0xff]
    %v7237 = vld [vmem:[#allocation9 + $0x4cc] sm:$0xf]
    %v7238 = vld [vmem:[#allocation9 + $0x4d0] sm:$0xff]
    %v7239 = vld [vmem:[#allocation9 + $0x4d8] sm:$0xff]
    %v7240 = vld [vmem:[#allocation9 + $0x4e0] sm:$0xff]
    %v7241 = vld [vmem:[#allocation9 + $0x4e8] sm:$0xf]
    %v7242 = vld [vmem:[#allocation9 + $0x4ec] sm:$0xff]
    %v7243 = vld [vmem:[#allocation9 + $0x4f4] sm:$0xff]
    %v7244 = vld [vmem:[#allocation9 + $0x4fc] sm:$0xff]
    %v7245 = vld [vmem:[#allocation9 + $0x504] sm:$0xf]
    %v7246 = vld [vmem:[#allocation9 + $0x508] sm:$0xff]
    %v7247 = vld [vmem:[#allocation9 + $0x510] sm:$0xff]
    %v7248 = vld [vmem:[#allocation9 + $0x518] sm:$0xff]
    %v7249 = vld [vmem:[#allocation9 + $0x520] sm:$0xf]
    %v7250 = vld [vmem:[#allocation9 + $0x524] sm:$0xff]
    %v7251 = vld [vmem:[#allocation9 + $0x52c] sm:$0xff]
    %v7252 = vld [vmem:[#allocation9 + $0x534] sm:$0xff]
    %v7253 = vld [vmem:[#allocation9 + $0x53c] sm:$0xf]
    %v7254 = vld [vmem:[#allocation9 + $0x540] sm:$0xff]
    %v7255 = vld [vmem:[#allocation9 + $0x548] sm:$0xff]
    %v7256 = vld [vmem:[#allocation9 + $0x550] sm:$0xff]
    %v7257 = vld [vmem:[#allocation9 + $0x558] sm:$0xf]
    %v7258 = vld [vmem:[#allocation9 + $0x55c] sm:$0xff]
    %v7259 = vld [vmem:[#allocation9 + $0x564] sm:$0xff]
    %v7260 = vld [vmem:[#allocation9 + $0x56c] sm:$0xff]
    %v7261 = vld [vmem:[#allocation9 + $0x574] sm:$0xf]
    %v7262 = vld [vmem:[#allocation9 + $0x578] sm:$0xff]
    %v7263 = vld [vmem:[#allocation9 + $0x580] sm:$0xff]
    %v7264 = vld [vmem:[#allocation9 + $0x588] sm:$0xff]
    %v7265 = vld [vmem:[#allocation9 + $0x590] sm:$0xf]
    %v7266 = vld [vmem:[#allocation9 + $0x594] sm:$0xff]
    %v7267 = vld [vmem:[#allocation9 + $0x59c] sm:$0xff]
    %v7268 = vld [vmem:[#allocation9 + $0x5a4] sm:$0xff]
    %v7269 = vld [vmem:[#allocation9 + $0x5ac] sm:$0xf]
    %v7270 = vld [vmem:[#allocation9 + $0x5b0] sm:$0xff]
    %v7271 = vld [vmem:[#allocation9 + $0x5b8] sm:$0xff]
    %v7272 = vld [vmem:[#allocation9 + $0x5c0] sm:$0xff]
    %v7273 = vld [vmem:[#allocation9 + $0x5c8] sm:$0xf]
    %v7274 = vld [vmem:[#allocation9 + $0x5cc] sm:$0xff]
    %v7275 = vld [vmem:[#allocation9 + $0x5d4] sm:$0xff]
    %v7276 = vld [vmem:[#allocation9 + $0x5dc] sm:$0xff]
    %v7277 = vld [vmem:[#allocation9 + $0x5e4] sm:$0xf]
    %v7278 = vld [vmem:[#allocation9 + $0x5e8] sm:$0xff]
    %v7279 = vld [vmem:[#allocation9 + $0x5f0] sm:$0xff]
    %v7280 = vld [vmem:[#allocation9 + $0x5f8] sm:$0xff]
    %v7281 = vld [vmem:[#allocation9 + $0x600] sm:$0xf]
    %v7282 = vld [vmem:[#allocation9 + $0x604] sm:$0xff]
    %v7283 = vld [vmem:[#allocation9 + $0x60c] sm:$0xff]
    %v7284 = vld [vmem:[#allocation9 + $0x614] sm:$0xff]
    %v7285 = vld [vmem:[#allocation9 + $0x61c] sm:$0xf]
    %v7286 = vld [vmem:[#allocation9 + $0x620] sm:$0xff]
    %v7287 = vld [vmem:[#allocation9 + $0x628] sm:$0xff]
    %v7288 = vld [vmem:[#allocation9 + $0x630] sm:$0xff]
    %v7289 = vld [vmem:[#allocation9 + $0x638] sm:$0xf]
    %v7290 = vld [vmem:[#allocation9 + $0x63c] sm:$0xff]
    %v7291 = vld [vmem:[#allocation9 + $0x644] sm:$0xff]
    %v7292 = vld [vmem:[#allocation9 + $0x64c] sm:$0xff]
    %v7293 = vld [vmem:[#allocation9 + $0x654] sm:$0xf]
    %v7294 = vld [vmem:[#allocation9 + $0x658] sm:$0xff]
    %v7295 = vld [vmem:[#allocation9 + $0x660] sm:$0xff]
    %v7296 = vld [vmem:[#allocation9 + $0x668] sm:$0xff]
    %v7297 = vld [vmem:[#allocation9 + $0x670] sm:$0xf]
    %v7298 = vld [vmem:[#allocation9 + $0x674] sm:$0xff]
    %v7299 = vld [vmem:[#allocation9 + $0x67c] sm:$0xff]
    %v7300 = vld [vmem:[#allocation9 + $0x684] sm:$0xff]
    %v7301 = vld [vmem:[#allocation9 + $0x68c] sm:$0xf]
    %v7302 = vld [vmem:[#allocation9 + $0x690] sm:$0xff]
    %v7303 = vld [vmem:[#allocation9 + $0x698] sm:$0xff]
    %v7304 = vld [vmem:[#allocation9 + $0x6a0] sm:$0xff]
    %v7305 = vld [vmem:[#allocation9 + $0x6a8] sm:$0xf]
    %v7306 = vld [vmem:[#allocation9 + $0x6ac] sm:$0xff]
    %v7307 = vld [vmem:[#allocation9 + $0x6b4] sm:$0xff]
    %v7308 = vld [vmem:[#allocation9 + $0x6bc] sm:$0xff]
    %v7309 = vld [vmem:[#allocation9 + $0x6c4] sm:$0xf]
    %v7310 = vld [vmem:[#allocation9 + $0x6c8] sm:$0xff]
    %v7311 = vld [vmem:[#allocation9 + $0x6d0] sm:$0xff]
    %v7312 = vld [vmem:[#allocation9 + $0x6d8] sm:$0xff]
    %v7313 = vld [vmem:[#allocation9 + $0x6e0] sm:$0xf]
    %v7314 = vld [vmem:[#allocation9 + $0x6e4] sm:$0xff]
    %v7315 = vld [vmem:[#allocation9 + $0x6ec] sm:$0xff]
    %v7316 = vld [vmem:[#allocation9 + $0x6f4] sm:$0xff]
    %v7317 = vld [vmem:[#allocation9 + $0x6fc] sm:$0xf]
    %v7318 = vld [vmem:[#allocation10] sm:$0xff]
    %v7320 = vlaneseq
    %v7321 = vshrl.u32 %v7320, 7
    %v7322 = vsub.s32 0, %v7321
    %v7323 = vrot.slane %v7318, %v7322
    %v7324 = vlaneseq
    %v7325 = vshrl.u32 %v7324, 7
    %v7326 = vsub.s32 1, %v7325
    %v7327 = vrot.slane %v7318, %v7326
    %v7328 = vlaneseq
    %v7329 = vshrl.u32 %v7328, 7
    %v7330 = vsub.s32 2, %v7329
    %v7331 = vrot.slane %v7318, %v7330
    %v7332 = vlaneseq
    %v7333 = vshrl.u32 %v7332, 7
    %v7334 = vsub.s32 3, %v7333
    %v7335 = vrot.slane %v7318, %v7334
    %v7336 = vlaneseq
    %v7337 = vshrl.u32 %v7336, 7
    %v7338 = vsub.s32 4, %v7337
    %v7339 = vrot.slane %v7318, %v7338
    %v7340 = vlaneseq
    %v7341 = vshrl.u32 %v7340, 7
    %v7342 = vsub.s32 5, %v7341
    %v7343 = vrot.slane %v7318, %v7342
    %v7344 = vlaneseq
    %v7345 = vshrl.u32 %v7344, 7
    %v7346 = vsub.s32 6, %v7345
    %v7347 = vrot.slane %v7318, %v7346
    %v7611 = vunpack.c.l.b16 %v7062
    %v7612 = vunpack.c.h.b16 %v7062
    %v7613 = vunpack.c.l.b16 %v7063
    %v7614 = vunpack.c.h.b16 %v7063
    %v7615 = vunpack.c.l.b16 %v7064
    %v7616 = vunpack.c.h.b16 %v7064
    %v7617 = vunpack.c.l.b16 %v7065
    %v7618 = vunpack.c.l.b16 %v7066
    %v7619 = vunpack.c.h.b16 %v7066
    %v7620 = vunpack.c.l.b16 %v7067
    %v7621 = vunpack.c.h.b16 %v7067
    %v7622 = vunpack.c.l.b16 %v7068
    %v7623 = vunpack.c.h.b16 %v7068
    %v7624 = vunpack.c.l.b16 %v7069
    %v7625 = vunpack.c.l.b16 %v7070
    %v7626 = vunpack.c.h.b16 %v7070
    %v7627 = vunpack.c.l.b16 %v7071
    %v7628 = vunpack.c.h.b16 %v7071
    %v7629 = vunpack.c.l.b16 %v7072
    %v7630 = vunpack.c.h.b16 %v7072
    %v7631 = vunpack.c.l.b16 %v7073
    %v7632 = vunpack.c.l.b16 %v7074
    %v7633 = vunpack.c.h.b16 %v7074
    %v7634 = vunpack.c.l.b16 %v7075
    %v7635 = vunpack.c.h.b16 %v7075
    %v7636 = vunpack.c.l.b16 %v7076
    %v7637 = vunpack.c.h.b16 %v7076
    %v7638 = vunpack.c.l.b16 %v7077
    %v7639 = vunpack.c.l.b16 %v7078
    %v7640 = vunpack.c.h.b16 %v7078
    %v7641 = vunpack.c.l.b16 %v7079
    %v7642 = vunpack.c.h.b16 %v7079
    %v7643 = vunpack.c.l.b16 %v7080
    %v7644 = vunpack.c.h.b16 %v7080
    %v7645 = vunpack.c.l.b16 %v7081
    %v7646 = vunpack.c.l.b16 %v7082
    %v7647 = vunpack.c.h.b16 %v7082
    %v7648 = vunpack.c.l.b16 %v7083
    %v7649 = vunpack.c.h.b16 %v7083
    %v7650 = vunpack.c.l.b16 %v7084
    %v7651 = vunpack.c.h.b16 %v7084
    %v7652 = vunpack.c.l.b16 %v7085
    %v7653 = vunpack.c.l.b16 %v7086
    %v7654 = vunpack.c.h.b16 %v7086
    %v7655 = vunpack.c.l.b16 %v7087
    %v7656 = vunpack.c.h.b16 %v7087
    %v7657 = vunpack.c.l.b16 %v7088
    %v7658 = vunpack.c.h.b16 %v7088
    %v7659 = vunpack.c.l.b16 %v7089
    %v7660 = vunpack.c.l.b16 %v7090
    %v7661 = vunpack.c.h.b16 %v7090
    %v7662 = vunpack.c.l.b16 %v7091
    %v7663 = vunpack.c.h.b16 %v7091
    %v7664 = vunpack.c.l.b16 %v7092
    %v7665 = vunpack.c.h.b16 %v7092
    %v7666 = vunpack.c.l.b16 %v7093
    %v7667 = vunpack.c.l.b16 %v7094
    %v7668 = vunpack.c.h.b16 %v7094
    %v7669 = vunpack.c.l.b16 %v7095
    %v7670 = vunpack.c.h.b16 %v7095
    %v7671 = vunpack.c.l.b16 %v7096
    %v7672 = vunpack.c.h.b16 %v7096
    %v7673 = vunpack.c.l.b16 %v7097
    %v7674 = vunpack.c.l.b16 %v7098
    %v7675 = vunpack.c.h.b16 %v7098
    %v7676 = vunpack.c.l.b16 %v7099
    %v7677 = vunpack.c.h.b16 %v7099
    %v7678 = vunpack.c.l.b16 %v7100
    %v7679 = vunpack.c.h.b16 %v7100
    %v7680 = vunpack.c.l.b16 %v7101
    %v7681 = vunpack.c.l.b16 %v7102
    %v7682 = vunpack.c.h.b16 %v7102
    %v7683 = vunpack.c.l.b16 %v7103
    %v7684 = vunpack.c.h.b16 %v7103
    %v7685 = vunpack.c.l.b16 %v7104
    %v7686 = vunpack.c.h.b16 %v7104
    %v7687 = vunpack.c.l.b16 %v7105
    %v7688 = vunpack.c.l.b16 %v7106
    %v7689 = vunpack.c.h.b16 %v7106
    %v7690 = vunpack.c.l.b16 %v7107
    %v7691 = vunpack.c.h.b16 %v7107
    %v7692 = vunpack.c.l.b16 %v7108
    %v7693 = vunpack.c.h.b16 %v7108
    %v7694 = vunpack.c.l.b16 %v7109
    %v7695 = vunpack.c.l.b16 %v7110
    %v7696 = vunpack.c.h.b16 %v7110
    %v7697 = vunpack.c.l.b16 %v7111
    %v7698 = vunpack.c.h.b16 %v7111
    %v7699 = vunpack.c.l.b16 %v7112
    %v7700 = vunpack.c.h.b16 %v7112
    %v7701 = vunpack.c.l.b16 %v7113
    %v7702 = vunpack.c.l.b16 %v7114
    %v7703 = vunpack.c.h.b16 %v7114
    %v7704 = vunpack.c.l.b16 %v7115
    %v7705 = vunpack.c.h.b16 %v7115
    %v7706 = vunpack.c.l.b16 %v7116
    %v7707 = vunpack.c.h.b16 %v7116
    %v7708 = vunpack.c.l.b16 %v7117
    %v7709 = vunpack.c.l.b16 %v7118
    %v7710 = vunpack.c.h.b16 %v7118
    %v7711 = vunpack.c.l.b16 %v7119
    %v7712 = vunpack.c.h.b16 %v7119
    %v7713 = vunpack.c.l.b16 %v7120
    %v7714 = vunpack.c.h.b16 %v7120
    %v7715 = vunpack.c.l.b16 %v7121
    %v7716 = vunpack.c.l.b16 %v7122
    %v7717 = vunpack.c.h.b16 %v7122
    %v7718 = vunpack.c.l.b16 %v7123
    %v7719 = vunpack.c.h.b16 %v7123
    %v7720 = vunpack.c.l.b16 %v7124
    %v7721 = vunpack.c.h.b16 %v7124
    %v7722 = vunpack.c.l.b16 %v7125
    %v7723 = vunpack.c.l.b16 %v7126
    %v7724 = vunpack.c.h.b16 %v7126
    %v7725 = vunpack.c.l.b16 %v7127
    %v7726 = vunpack.c.h.b16 %v7127
    %v7727 = vunpack.c.l.b16 %v7128
    %v7728 = vunpack.c.h.b16 %v7128
    %v7729 = vunpack.c.l.b16 %v7129
    %v7730 = vunpack.c.l.b16 %v7130
    %v7731 = vunpack.c.h.b16 %v7130
    %v7732 = vunpack.c.l.b16 %v7131
    %v7733 = vunpack.c.h.b16 %v7131
    %v7734 = vunpack.c.l.b16 %v7132
    %v7735 = vunpack.c.h.b16 %v7132
    %v7736 = vunpack.c.l.b16 %v7133
    %v7737 = vunpack.c.l.b16 %v7134
    %v7738 = vunpack.c.h.b16 %v7134
    %v7739 = vunpack.c.l.b16 %v7135
    %v7740 = vunpack.c.h.b16 %v7135
    %v7741 = vunpack.c.l.b16 %v7136
    %v7742 = vunpack.c.h.b16 %v7136
    %v7743 = vunpack.c.l.b16 %v7137
    %v7744 = vunpack.c.l.b16 %v7138
    %v7745 = vunpack.c.h.b16 %v7138
    %v7746 = vunpack.c.l.b16 %v7139
    %v7747 = vunpack.c.h.b16 %v7139
    %v7748 = vunpack.c.l.b16 %v7140
    %v7749 = vunpack.c.h.b16 %v7140
    %v7750 = vunpack.c.l.b16 %v7141
    %v7751 = vunpack.c.l.b16 %v7142
    %v7752 = vunpack.c.h.b16 %v7142
    %v7753 = vunpack.c.l.b16 %v7143
    %v7754 = vunpack.c.h.b16 %v7143
    %v7755 = vunpack.c.l.b16 %v7144
    %v7756 = vunpack.c.h.b16 %v7144
    %v7757 = vunpack.c.l.b16 %v7145
    %v7758 = vunpack.c.l.b16 %v7146
    %v7759 = vunpack.c.h.b16 %v7146
    %v7760 = vunpack.c.l.b16 %v7147
    %v7761 = vunpack.c.h.b16 %v7147
    %v7762 = vunpack.c.l.b16 %v7148
    %v7763 = vunpack.c.h.b16 %v7148
    %v7764 = vunpack.c.l.b16 %v7149
    %v7765 = vunpack.c.l.b16 %v7150
    %v7766 = vunpack.c.h.b16 %v7150
    %v7767 = vunpack.c.l.b16 %v7151
    %v7768 = vunpack.c.h.b16 %v7151
    %v7769 = vunpack.c.l.b16 %v7152
    %v7770 = vunpack.c.h.b16 %v7152
    %v7771 = vunpack.c.l.b16 %v7153
    %v7772 = vunpack.c.l.b16 %v7154
    %v7773 = vunpack.c.h.b16 %v7154
    %v7774 = vunpack.c.l.b16 %v7155
    %v7775 = vunpack.c.h.b16 %v7155
    %v7776 = vunpack.c.l.b16 %v7156
    %v7777 = vunpack.c.h.b16 %v7156
    %v7778 = vunpack.c.l.b16 %v7157
    %v7779 = vunpack.c.l.b16 %v7158
    %v7780 = vunpack.c.h.b16 %v7158
    %v7781 = vunpack.c.l.b16 %v7159
    %v7782 = vunpack.c.h.b16 %v7159
    %v7783 = vunpack.c.l.b16 %v7160
    %v7784 = vunpack.c.h.b16 %v7160
    %v7785 = vunpack.c.l.b16 %v7161
    %v7786 = vunpack.c.l.b16 %v7162
    %v7787 = vunpack.c.h.b16 %v7162
    %v7788 = vunpack.c.l.b16 %v7163
    %v7789 = vunpack.c.h.b16 %v7163
    %v7790 = vunpack.c.l.b16 %v7164
    %v7791 = vunpack.c.h.b16 %v7164
    %v7792 = vunpack.c.l.b16 %v7165
    %v7793 = vunpack.c.l.b16 %v7166
    %v7794 = vunpack.c.h.b16 %v7166
    %v7795 = vunpack.c.l.b16 %v7167
    %v7796 = vunpack.c.h.b16 %v7167
    %v7797 = vunpack.c.l.b16 %v7168
    %v7798 = vunpack.c.h.b16 %v7168
    %v7799 = vunpack.c.l.b16 %v7169
    %v7800 = vunpack.c.l.b16 %v7170
    %v7801 = vunpack.c.h.b16 %v7170
    %v7802 = vunpack.c.l.b16 %v7171
    %v7803 = vunpack.c.h.b16 %v7171
    %v7804 = vunpack.c.l.b16 %v7172
    %v7805 = vunpack.c.h.b16 %v7172
    %v7806 = vunpack.c.l.b16 %v7173
    %v7807 = vunpack.c.l.b16 %v7174
    %v7808 = vunpack.c.h.b16 %v7174
    %v7809 = vunpack.c.l.b16 %v7175
    %v7810 = vunpack.c.h.b16 %v7175
    %v7811 = vunpack.c.l.b16 %v7176
    %v7812 = vunpack.c.h.b16 %v7176
    %v7813 = vunpack.c.l.b16 %v7177
    %v7814 = vunpack.c.l.b16 %v7178
    %v7815 = vunpack.c.h.b16 %v7178
    %v7816 = vunpack.c.l.b16 %v7179
    %v7817 = vunpack.c.h.b16 %v7179
    %v7818 = vunpack.c.l.b16 %v7180
    %v7819 = vunpack.c.h.b16 %v7180
    %v7820 = vunpack.c.l.b16 %v7181
    %v7821 = vunpack.c.l.b16 %v7182
    %v7822 = vunpack.c.h.b16 %v7182
    %v7823 = vunpack.c.l.b16 %v7183
    %v7824 = vunpack.c.h.b16 %v7183
    %v7825 = vunpack.c.l.b16 %v7184
    %v7826 = vunpack.c.h.b16 %v7184
    %v7827 = vunpack.c.l.b16 %v7185
    %v7828 = vunpack.c.l.b16 %v7186
    %v7829 = vunpack.c.h.b16 %v7186
    %v7830 = vunpack.c.l.b16 %v7187
    %v7831 = vunpack.c.h.b16 %v7187
    %v7832 = vunpack.c.l.b16 %v7188
    %v7833 = vunpack.c.h.b16 %v7188
    %v7834 = vunpack.c.l.b16 %v7189
    %v7835 = vunpack.c.l.b16 %v7190
    %v7836 = vunpack.c.h.b16 %v7190
    %v7837 = vunpack.c.l.b16 %v7191
    %v7838 = vunpack.c.h.b16 %v7191
    %v7839 = vunpack.c.l.b16 %v7192
    %v7840 = vunpack.c.h.b16 %v7192
    %v7841 = vunpack.c.l.b16 %v7193
    %v7842 = vunpack.c.l.b16 %v7194
    %v7843 = vunpack.c.h.b16 %v7194
    %v7844 = vunpack.c.l.b16 %v7195
    %v7845 = vunpack.c.h.b16 %v7195
    %v7846 = vunpack.c.l.b16 %v7196
    %v7847 = vunpack.c.h.b16 %v7196
    %v7848 = vunpack.c.l.b16 %v7197
    %v7849 = vunpack.c.l.b16 %v7198
    %v7850 = vunpack.c.h.b16 %v7198
    %v7851 = vunpack.c.l.b16 %v7199
    %v7852 = vunpack.c.h.b16 %v7199
    %v7853 = vunpack.c.l.b16 %v7200
    %v7854 = vunpack.c.h.b16 %v7200
    %v7855 = vunpack.c.l.b16 %v7201
    %v7856 = vunpack.c.l.b16 %v7202
    %v7857 = vunpack.c.h.b16 %v7202
    %v7858 = vunpack.c.l.b16 %v7203
    %v7859 = vunpack.c.h.b16 %v7203
    %v7860 = vunpack.c.l.b16 %v7204
    %v7861 = vunpack.c.h.b16 %v7204
    %v7862 = vunpack.c.l.b16 %v7205
    %v7863 = vunpack.c.l.b16 %v7206
    %v7864 = vunpack.c.h.b16 %v7206
    %v7865 = vunpack.c.l.b16 %v7207
    %v7866 = vunpack.c.h.b16 %v7207
    %v7867 = vunpack.c.l.b16 %v7208
    %v7868 = vunpack.c.h.b16 %v7208
    %v7869 = vunpack.c.l.b16 %v7209
    %v7870 = vunpack.c.l.b16 %v7210
    %v7871 = vunpack.c.h.b16 %v7210
    %v7872 = vunpack.c.l.b16 %v7211
    %v7873 = vunpack.c.h.b16 %v7211
    %v7874 = vunpack.c.l.b16 %v7212
    %v7875 = vunpack.c.h.b16 %v7212
    %v7876 = vunpack.c.l.b16 %v7213
    %v7877 = vunpack.c.l.b16 %v7214
    %v7878 = vunpack.c.h.b16 %v7214
    %v7879 = vunpack.c.l.b16 %v7215
    %v7880 = vunpack.c.h.b16 %v7215
    %v7881 = vunpack.c.l.b16 %v7216
    %v7882 = vunpack.c.h.b16 %v7216
    %v7883 = vunpack.c.l.b16 %v7217
    %v7884 = vunpack.c.l.b16 %v7218
    %v7885 = vunpack.c.h.b16 %v7218
    %v7886 = vunpack.c.l.b16 %v7219
    %v7887 = vunpack.c.h.b16 %v7219
    %v7888 = vunpack.c.l.b16 %v7220
    %v7889 = vunpack.c.h.b16 %v7220
    %v7890 = vunpack.c.l.b16 %v7221
    %v7891 = vunpack.c.l.b16 %v7222
    %v7892 = vunpack.c.h.b16 %v7222
    %v7893 = vunpack.c.l.b16 %v7223
    %v7894 = vunpack.c.h.b16 %v7223
    %v7895 = vunpack.c.l.b16 %v7224
    %v7896 = vunpack.c.h.b16 %v7224
    %v7897 = vunpack.c.l.b16 %v7225
    %v7898 = vunpack.c.l.b16 %v7226
    %v7899 = vunpack.c.h.b16 %v7226
    %v7900 = vunpack.c.l.b16 %v7227
    %v7901 = vunpack.c.h.b16 %v7227
    %v7902 = vunpack.c.l.b16 %v7228
    %v7903 = vunpack.c.h.b16 %v7228
    %v7904 = vunpack.c.l.b16 %v7229
    %v7905 = vunpack.c.l.b16 %v7230
    %v7906 = vunpack.c.h.b16 %v7230
    %v7907 = vunpack.c.l.b16 %v7231
    %v7908 = vunpack.c.h.b16 %v7231
    %v7909 = vunpack.c.l.b16 %v7232
    %v7910 = vunpack.c.h.b16 %v7232
    %v7911 = vunpack.c.l.b16 %v7233
    %v7912 = vunpack.c.l.b16 %v7234
    %v7913 = vunpack.c.h.b16 %v7234
    %v7914 = vunpack.c.l.b16 %v7235
    %v7915 = vunpack.c.h.b16 %v7235
    %v7916 = vunpack.c.l.b16 %v7236
    %v7917 = vunpack.c.h.b16 %v7236
    %v7918 = vunpack.c.l.b16 %v7237
    %v7919 = vunpack.c.l.b16 %v7238
    %v7920 = vunpack.c.h.b16 %v7238
    %v7921 = vunpack.c.l.b16 %v7239
    %v7922 = vunpack.c.h.b16 %v7239
    %v7923 = vunpack.c.l.b16 %v7240
    %v7924 = vunpack.c.h.b16 %v7240
    %v7925 = vunpack.c.l.b16 %v7241
    %v7926 = vunpack.c.l.b16 %v7242
    %v7927 = vunpack.c.h.b16 %v7242
    %v7928 = vunpack.c.l.b16 %v7243
    %v7929 = vunpack.c.h.b16 %v7243
    %v7930 = vunpack.c.l.b16 %v7244
    %v7931 = vunpack.c.h.b16 %v7244
    %v7932 = vunpack.c.l.b16 %v7245
    %v7933 = vunpack.c.l.b16 %v7246
    %v7934 = vunpack.c.h.b16 %v7246
    %v7935 = vunpack.c.l.b16 %v7247
    %v7936 = vunpack.c.h.b16 %v7247
    %v7937 = vunpack.c.l.b16 %v7248
    %v7938 = vunpack.c.h.b16 %v7248
    %v7939 = vunpack.c.l.b16 %v7249
    %v7940 = vunpack.c.l.b16 %v7250
    %v7941 = vunpack.c.h.b16 %v7250
    %v7942 = vunpack.c.l.b16 %v7251
    %v7943 = vunpack.c.h.b16 %v7251
    %v7944 = vunpack.c.l.b16 %v7252
    %v7945 = vunpack.c.h.b16 %v7252
    %v7946 = vunpack.c.l.b16 %v7253
    %v7947 = vunpack.c.l.b16 %v7254
    %v7948 = vunpack.c.h.b16 %v7254
    %v7949 = vunpack.c.l.b16 %v7255
    %v7950 = vunpack.c.h.b16 %v7255
    %v7951 = vunpack.c.l.b16 %v7256
    %v7952 = vunpack.c.h.b16 %v7256
    %v7953 = vunpack.c.l.b16 %v7257
    %v7954 = vunpack.c.l.b16 %v7258
    %v7955 = vunpack.c.h.b16 %v7258
    %v7956 = vunpack.c.l.b16 %v7259
    %v7957 = vunpack.c.h.b16 %v7259
    %v7958 = vunpack.c.l.b16 %v7260
    %v7959 = vunpack.c.h.b16 %v7260
    %v7960 = vunpack.c.l.b16 %v7261
    %v7961 = vunpack.c.l.b16 %v7262
    %v7962 = vunpack.c.h.b16 %v7262
    %v7963 = vunpack.c.l.b16 %v7263
    %v7964 = vunpack.c.h.b16 %v7263
    %v7965 = vunpack.c.l.b16 %v7264
    %v7966 = vunpack.c.h.b16 %v7264
    %v7967 = vunpack.c.l.b16 %v7265
    %v7968 = vunpack.c.l.b16 %v7266
    %v7969 = vunpack.c.h.b16 %v7266
    %v7970 = vunpack.c.l.b16 %v7267
    %v7971 = vunpack.c.h.b16 %v7267
    %v7972 = vunpack.c.l.b16 %v7268
    %v7973 = vunpack.c.h.b16 %v7268
    %v7974 = vunpack.c.l.b16 %v7269
    %v7975 = vunpack.c.l.b16 %v7270
    %v7976 = vunpack.c.h.b16 %v7270
    %v7977 = vunpack.c.l.b16 %v7271
    %v7978 = vunpack.c.h.b16 %v7271
    %v7979 = vunpack.c.l.b16 %v7272
    %v7980 = vunpack.c.h.b16 %v7272
    %v7981 = vunpack.c.l.b16 %v7273
    %v7982 = vunpack.c.l.b16 %v7274
    %v7983 = vunpack.c.h.b16 %v7274
    %v7984 = vunpack.c.l.b16 %v7275
    %v7985 = vunpack.c.h.b16 %v7275
    %v7986 = vunpack.c.l.b16 %v7276
    %v7987 = vunpack.c.h.b16 %v7276
    %v7988 = vunpack.c.l.b16 %v7277
    %v7989 = vunpack.c.l.b16 %v7278
    %v7990 = vunpack.c.h.b16 %v7278
    %v7991 = vunpack.c.l.b16 %v7279
    %v7992 = vunpack.c.h.b16 %v7279
    %v7993 = vunpack.c.l.b16 %v7280
    %v7994 = vunpack.c.h.b16 %v7280
    %v7995 = vunpack.c.l.b16 %v7281
    %v7996 = vunpack.c.l.b16 %v7282
    %v7997 = vunpack.c.h.b16 %v7282
    %v7998 = vunpack.c.l.b16 %v7283
    %v7999 = vunpack.c.h.b16 %v7283
    %v8000 = vunpack.c.l.b16 %v7284
    %v8001 = vunpack.c.h.b16 %v7284
    %v8002 = vunpack.c.l.b16 %v7285
    %v8003 = vunpack.c.l.b16 %v7286
    %v8004 = vunpack.c.h.b16 %v7286
    %v8005 = vunpack.c.l.b16 %v7287
    %v8006 = vunpack.c.h.b16 %v7287
    %v8007 = vunpack.c.l.b16 %v7288
    %v8008 = vunpack.c.h.b16 %v7288
    %v8009 = vunpack.c.l.b16 %v7289
    %v8010 = vunpack.c.l.b16 %v7290
    %v8011 = vunpack.c.h.b16 %v7290
    %v8012 = vunpack.c.l.b16 %v7291
    %v8013 = vunpack.c.h.b16 %v7291
    %v8014 = vunpack.c.l.b16 %v7292
    %v8015 = vunpack.c.h.b16 %v7292
    %v8016 = vunpack.c.l.b16 %v7293
    %v8017 = vunpack.c.l.b16 %v7294
    %v8018 = vunpack.c.h.b16 %v7294
    %v8019 = vunpack.c.l.b16 %v7295
    %v8020 = vunpack.c.h.b16 %v7295
    %v8021 = vunpack.c.l.b16 %v7296
    %v8022 = vunpack.c.h.b16 %v7296
    %v8023 = vunpack.c.l.b16 %v7297
    %v8024 = vunpack.c.l.b16 %v7298
    %v8025 = vunpack.c.h.b16 %v7298
    %v8026 = vunpack.c.l.b16 %v7299
    %v8027 = vunpack.c.h.b16 %v7299
    %v8028 = vunpack.c.l.b16 %v7300
    %v8029 = vunpack.c.h.b16 %v7300
    %v8030 = vunpack.c.l.b16 %v7301
    %v8031 = vunpack.c.l.b16 %v7302
    %v8032 = vunpack.c.h.b16 %v7302
    %v8033 = vunpack.c.l.b16 %v7303
    %v8034 = vunpack.c.h.b16 %v7303
    %v8035 = vunpack.c.l.b16 %v7304
    %v8036 = vunpack.c.h.b16 %v7304
    %v8037 = vunpack.c.l.b16 %v7305
    %v8038 = vunpack.c.l.b16 %v7306
    %v8039 = vunpack.c.h.b16 %v7306
    %v8040 = vunpack.c.l.b16 %v7307
    %v8041 = vunpack.c.h.b16 %v7307
    %v8042 = vunpack.c.l.b16 %v7308
    %v8043 = vunpack.c.h.b16 %v7308
    %v8044 = vunpack.c.l.b16 %v7309
    %v8045 = vunpack.c.l.b16 %v7310
    %v8046 = vunpack.c.h.b16 %v7310
    %v8047 = vunpack.c.l.b16 %v7311
    %v8048 = vunpack.c.h.b16 %v7311
    %v8049 = vunpack.c.l.b16 %v7312
    %v8050 = vunpack.c.h.b16 %v7312
    %v8051 = vunpack.c.l.b16 %v7313
    %v8052 = vunpack.c.l.b16 %v7314
    %v8053 = vunpack.c.h.b16 %v7314
    %v8054 = vunpack.c.l.b16 %v7315
    %v8055 = vunpack.c.h.b16 %v7315
    %v8056 = vunpack.c.l.b16 %v7316
    %v8057 = vunpack.c.h.b16 %v7316
    %v8058 = vunpack.c.l.b16 %v7317
    %v8059 = vpack.c.b16 %v7618, %v7611
    %v8060 = vpack.c.b16 %v7619, %v7612
    %v8061 = vpack.c.b16 %v7620, %v7613
    %v8062 = vpack.c.b16 %v7621, %v7614
    %v8063 = vpack.c.b16 %v7622, %v7615
    %v8064 = vpack.c.b16 %v7623, %v7616
    %v8065 = vpack.c.b16 %v7624, %v7617
    %v8066 = vpack.c.b16 %v7632, %v7625
    %v8067 = vpack.c.b16 %v7633, %v7626
    %v8068 = vpack.c.b16 %v7634, %v7627
    %v8069 = vpack.c.b16 %v7635, %v7628
    %v8070 = vpack.c.b16 %v7636, %v7629
    %v8071 = vpack.c.b16 %v7637, %v7630
    %v8072 = vpack.c.b16 %v7638, %v7631
    %v8073 = vpack.c.b16 %v7646, %v7639
    %v8074 = vpack.c.b16 %v7647, %v7640
    %v8075 = vpack.c.b16 %v7648, %v7641
    %v8076 = vpack.c.b16 %v7649, %v7642
    %v8077 = vpack.c.b16 %v7650, %v7643
    %v8078 = vpack.c.b16 %v7651, %v7644
    %v8079 = vpack.c.b16 %v7652, %v7645
    %v8080 = vpack.c.b16 %v7660, %v7653
    %v8081 = vpack.c.b16 %v7661, %v7654
    %v8082 = vpack.c.b16 %v7662, %v7655
    %v8083 = vpack.c.b16 %v7663, %v7656
    %v8084 = vpack.c.b16 %v7664, %v7657
    %v8085 = vpack.c.b16 %v7665, %v7658
    %v8086 = vpack.c.b16 %v7666, %v7659
    %v8087 = vpack.c.b16 %v7674, %v7667
    %v8088 = vpack.c.b16 %v7675, %v7668
    %v8089 = vpack.c.b16 %v7676, %v7669
    %v8090 = vpack.c.b16 %v7677, %v7670
    %v8091 = vpack.c.b16 %v7678, %v7671
    %v8092 = vpack.c.b16 %v7679, %v7672
    %v8093 = vpack.c.b16 %v7680, %v7673
    %v8094 = vpack.c.b16 %v7688, %v7681
    %v8095 = vpack.c.b16 %v7689, %v7682
    %v8096 = vpack.c.b16 %v7690, %v7683
    %v8097 = vpack.c.b16 %v7691, %v7684
    %v8098 = vpack.c.b16 %v7692, %v7685
    %v8099 = vpack.c.b16 %v7693, %v7686
    %v8100 = vpack.c.b16 %v7694, %v7687
    %v8101 = vpack.c.b16 %v7702, %v7695
    %v8102 = vpack.c.b16 %v7703, %v7696
    %v8103 = vpack.c.b16 %v7704, %v7697
    %v8104 = vpack.c.b16 %v7705, %v7698
    %v8105 = vpack.c.b16 %v7706, %v7699
    %v8106 = vpack.c.b16 %v7707, %v7700
    %v8107 = vpack.c.b16 %v7708, %v7701
    %v8108 = vpack.c.b16 %v7716, %v7709
    %v8109 = vpack.c.b16 %v7717, %v7710
    %v8110 = vpack.c.b16 %v7718, %v7711
    %v8111 = vpack.c.b16 %v7719, %v7712
    %v8112 = vpack.c.b16 %v7720, %v7713
    %v8113 = vpack.c.b16 %v7721, %v7714
    %v8114 = vpack.c.b16 %v7722, %v7715
    %v8115 = vpack.c.b16 %v7730, %v7723
    %v8116 = vpack.c.b16 %v7731, %v7724
    %v8117 = vpack.c.b16 %v7732, %v7725
    %v8118 = vpack.c.b16 %v7733, %v7726
    %v8119 = vpack.c.b16 %v7734, %v7727
    %v8120 = vpack.c.b16 %v7735, %v7728
    %v8121 = vpack.c.b16 %v7736, %v7729
    %v8122 = vpack.c.b16 %v7744, %v7737
    %v8123 = vpack.c.b16 %v7745, %v7738
    %v8124 = vpack.c.b16 %v7746, %v7739
    %v8125 = vpack.c.b16 %v7747, %v7740
    %v8126 = vpack.c.b16 %v7748, %v7741
    %v8127 = vpack.c.b16 %v7749, %v7742
    %v8128 = vpack.c.b16 %v7750, %v7743
    %v8129 = vpack.c.b16 %v7758, %v7751
    %v8130 = vpack.c.b16 %v7759, %v7752
    %v8131 = vpack.c.b16 %v7760, %v7753
    %v8132 = vpack.c.b16 %v7761, %v7754
    %v8133 = vpack.c.b16 %v7762, %v7755
    %v8134 = vpack.c.b16 %v7763, %v7756
    %v8135 = vpack.c.b16 %v7764, %v7757
    %v8136 = vpack.c.b16 %v7772, %v7765
    %v8137 = vpack.c.b16 %v7773, %v7766
    %v8138 = vpack.c.b16 %v7774, %v7767
    %v8139 = vpack.c.b16 %v7775, %v7768
    %v8140 = vpack.c.b16 %v7776, %v7769
    %v8141 = vpack.c.b16 %v7777, %v7770
    %v8142 = vpack.c.b16 %v7778, %v7771
    %v8143 = vpack.c.b16 %v7786, %v7779
    %v8144 = vpack.c.b16 %v7787, %v7780
    %v8145 = vpack.c.b16 %v7788, %v7781
    %v8146 = vpack.c.b16 %v7789, %v7782
    %v8147 = vpack.c.b16 %v7790, %v7783
    %v8148 = vpack.c.b16 %v7791, %v7784
    %v8149 = vpack.c.b16 %v7792, %v7785
    %v8150 = vpack.c.b16 %v7800, %v7793
    %v8151 = vpack.c.b16 %v7801, %v7794
    %v8152 = vpack.c.b16 %v7802, %v7795
    %v8153 = vpack.c.b16 %v7803, %v7796
    %v8154 = vpack.c.b16 %v7804, %v7797
    %v8155 = vpack.c.b16 %v7805, %v7798
    %v8156 = vpack.c.b16 %v7806, %v7799
    %v8157 = vpack.c.b16 %v7814, %v7807
    %v8158 = vpack.c.b16 %v7815, %v7808
    %v8159 = vpack.c.b16 %v7816, %v7809
    %v8160 = vpack.c.b16 %v7817, %v7810
    %v8161 = vpack.c.b16 %v7818, %v7811
    %v8162 = vpack.c.b16 %v7819, %v7812
    %v8163 = vpack.c.b16 %v7820, %v7813
    %v8164 = vpack.c.b16 %v7828, %v7821
    %v8165 = vpack.c.b16 %v7829, %v7822
    %v8166 = vpack.c.b16 %v7830, %v7823
    %v8167 = vpack.c.b16 %v7831, %v7824
    %v8168 = vpack.c.b16 %v7832, %v7825
    %v8169 = vpack.c.b16 %v7833, %v7826
    %v8170 = vpack.c.b16 %v7834, %v7827
    %v8171 = vpack.c.b16 %v7842, %v7835
    %v8172 = vpack.c.b16 %v7843, %v7836
    %v8173 = vpack.c.b16 %v7844, %v7837
    %v8174 = vpack.c.b16 %v7845, %v7838
    %v8175 = vpack.c.b16 %v7846, %v7839
    %v8176 = vpack.c.b16 %v7847, %v7840
    %v8177 = vpack.c.b16 %v7848, %v7841
    %v8178 = vpack.c.b16 %v7856, %v7849
    %v8179 = vpack.c.b16 %v7857, %v7850
    %v8180 = vpack.c.b16 %v7858, %v7851
    %v8181 = vpack.c.b16 %v7859, %v7852
    %v8182 = vpack.c.b16 %v7860, %v7853
    %v8183 = vpack.c.b16 %v7861, %v7854
    %v8184 = vpack.c.b16 %v7862, %v7855
    %v8185 = vpack.c.b16 %v7870, %v7863
    %v8186 = vpack.c.b16 %v7871, %v7864
    %v8187 = vpack.c.b16 %v7872, %v7865
    %v8188 = vpack.c.b16 %v7873, %v7866
    %v8189 = vpack.c.b16 %v7874, %v7867
    %v8190 = vpack.c.b16 %v7875, %v7868
    %v8191 = vpack.c.b16 %v7876, %v7869
    %v8192 = vpack.c.b16 %v7884, %v7877
    %v8193 = vpack.c.b16 %v7885, %v7878
    %v8194 = vpack.c.b16 %v7886, %v7879
    %v8195 = vpack.c.b16 %v7887, %v7880
    %v8196 = vpack.c.b16 %v7888, %v7881
    %v8197 = vpack.c.b16 %v7889, %v7882
    %v8198 = vpack.c.b16 %v7890, %v7883
    %v8199 = vpack.c.b16 %v7898, %v7891
    %v8200 = vpack.c.b16 %v7899, %v7892
    %v8201 = vpack.c.b16 %v7900, %v7893
    %v8202 = vpack.c.b16 %v7901, %v7894
    %v8203 = vpack.c.b16 %v7902, %v7895
    %v8204 = vpack.c.b16 %v7903, %v7896
    %v8205 = vpack.c.b16 %v7904, %v7897
    %v8206 = vpack.c.b16 %v7912, %v7905
    %v8207 = vpack.c.b16 %v7913, %v7906
    %v8208 = vpack.c.b16 %v7914, %v7907
    %v8209 = vpack.c.b16 %v7915, %v7908
    %v8210 = vpack.c.b16 %v7916, %v7909
    %v8211 = vpack.c.b16 %v7917, %v7910
    %v8212 = vpack.c.b16 %v7918, %v7911
    %v8213 = vpack.c.b16 %v7926, %v7919
    %v8214 = vpack.c.b16 %v7927, %v7920
    %v8215 = vpack.c.b16 %v7928, %v7921
    %v8216 = vpack.c.b16 %v7929, %v7922
    %v8217 = vpack.c.b16 %v7930, %v7923
    %v8218 = vpack.c.b16 %v7931, %v7924
    %v8219 = vpack.c.b16 %v7932, %v7925
    %v8220 = vpack.c.b16 %v7940, %v7933
    %v8221 = vpack.c.b16 %v7941, %v7934
    %v8222 = vpack.c.b16 %v7942, %v7935
    %v8223 = vpack.c.b16 %v7943, %v7936
    %v8224 = vpack.c.b16 %v7944, %v7937
    %v8225 = vpack.c.b16 %v7945, %v7938
    %v8226 = vpack.c.b16 %v7946, %v7939
    %v8227 = vpack.c.b16 %v7954, %v7947
    %v8228 = vpack.c.b16 %v7955, %v7948
    %v8229 = vpack.c.b16 %v7956, %v7949
    %v8230 = vpack.c.b16 %v7957, %v7950
    %v8231 = vpack.c.b16 %v7958, %v7951
    %v8232 = vpack.c.b16 %v7959, %v7952
    %v8233 = vpack.c.b16 %v7960, %v7953
    %v8234 = vpack.c.b16 %v7968, %v7961
    %v8235 = vpack.c.b16 %v7969, %v7962
    %v8236 = vpack.c.b16 %v7970, %v7963
    %v8237 = vpack.c.b16 %v7971, %v7964
    %v8238 = vpack.c.b16 %v7972, %v7965
    %v8239 = vpack.c.b16 %v7973, %v7966
    %v8240 = vpack.c.b16 %v7974, %v7967
    %v8241 = vpack.c.b16 %v7982, %v7975
    %v8242 = vpack.c.b16 %v7983, %v7976
    %v8243 = vpack.c.b16 %v7984, %v7977
    %v8244 = vpack.c.b16 %v7985, %v7978
    %v8245 = vpack.c.b16 %v7986, %v7979
    %v8246 = vpack.c.b16 %v7987, %v7980
    %v8247 = vpack.c.b16 %v7988, %v7981
    %v8248 = vpack.c.b16 %v7996, %v7989
    %v8249 = vpack.c.b16 %v7997, %v7990
    %v8250 = vpack.c.b16 %v7998, %v7991
    %v8251 = vpack.c.b16 %v7999, %v7992
    %v8252 = vpack.c.b16 %v8000, %v7993
    %v8253 = vpack.c.b16 %v8001, %v7994
    %v8254 = vpack.c.b16 %v8002, %v7995
    %v8255 = vpack.c.b16 %v8010, %v8003
    %v8256 = vpack.c.b16 %v8011, %v8004
    %v8257 = vpack.c.b16 %v8012, %v8005
    %v8258 = vpack.c.b16 %v8013, %v8006
    %v8259 = vpack.c.b16 %v8014, %v8007
    %v8260 = vpack.c.b16 %v8015, %v8008
    %v8261 = vpack.c.b16 %v8016, %v8009
    %v8262 = vpack.c.b16 %v8024, %v8017
    %v8263 = vpack.c.b16 %v8025, %v8018
    %v8264 = vpack.c.b16 %v8026, %v8019
    %v8265 = vpack.c.b16 %v8027, %v8020
    %v8266 = vpack.c.b16 %v8028, %v8021
    %v8267 = vpack.c.b16 %v8029, %v8022
    %v8268 = vpack.c.b16 %v8030, %v8023
    %v8269 = vpack.c.b16 %v8038, %v8031
    %v8270 = vpack.c.b16 %v8039, %v8032
    %v8271 = vpack.c.b16 %v8040, %v8033
    %v8272 = vpack.c.b16 %v8041, %v8034
    %v8273 = vpack.c.b16 %v8042, %v8035
    %v8274 = vpack.c.b16 %v8043, %v8036
    %v8275 = vpack.c.b16 %v8044, %v8037
    %v8276 = vpack.c.b16 %v8052, %v8045
    %v8277 = vpack.c.b16 %v8053, %v8046
    %v8278 = vpack.c.b16 %v8054, %v8047
    %v8279 = vpack.c.b16 %v8055, %v8048
    %v8280 = vpack.c.b16 %v8056, %v8049
    %v8281 = vpack.c.b16 %v8057, %v8050
    %v8282 = vpack.c.b16 %v8058, %v8051
    %8507 = vmatprep.subr.bf16.mxu0 %v8109
    %8508 = vmatpush1.bf16.msra.mxu0 %v8108
    %8509 = vmatprep.subr.bf16.mxu0 %v8102
    %8510 = vmatpush1.bf16.msra.mxu0 %v8101
    %8511 = vmatprep.subr.bf16.mxu0 %v8095
    %8512 = vmatpush1.bf16.msra.mxu0 %v8094
    %8513 = vmatprep.subr.bf16.mxu0 %v8088
    %8514 = vmatpush1.bf16.msra.mxu0 %v8087
    %8515 = vmatprep.subr.bf16.mxu0 %v8081
    %8516 = vmatpush1.bf16.msra.mxu0 %v8080
    %8517 = vmatprep.subr.bf16.mxu0 %v8074
    %8518 = vmatpush1.bf16.msra.mxu0 %v8073
    %8519 = vmatprep.subr.bf16.mxu0 %v8067
    %8520 = vmatpush1.bf16.msra.mxu0 %v8066
    %8521 = vmatprep.subr.bf16.mxu0 %v8060
    %8522 = vmatpush1.bf16.msra.mxu0 %v8059
    %8523 = vmatprep.subr.bf16.mxu0 %v8165
    %8524 = vmatpush2.bf16.msra.mxu0 %v8164
    %8525 = vmatprep.subr.bf16.mxu0 %v8158
    %8526 = vmatpush2.bf16.msra.mxu0 %v8157
    %8527 = vmatprep.subr.bf16.mxu0 %v8151
    %8528 = vmatpush2.bf16.msra.mxu0 %v8150
    %8529 = vmatprep.subr.bf16.mxu0 %v8144
    %8530 = vmatpush2.bf16.msra.mxu0 %v8143
    %8531 = vmatprep.subr.bf16.mxu0 %v8137
    %8532 = vmatpush2.bf16.msra.mxu0 %v8136
    %8533 = vmatprep.subr.bf16.mxu0 %v8130
    %8534 = vmatpush2.bf16.msra.mxu0 %v8129
    %8535 = vmatprep.subr.bf16.mxu0 %v8123
    %8536 = vmatpush2.bf16.msra.mxu0 %v8122
    %8537 = vmatprep.subr.bf16.mxu0 %v8116
    %8538 = vmatpush2.bf16.msra.mxu0 %v8115
    %8539 = vmatprep.mubr.bf16.mxu0 %v7059
    %8540 = vmatmul.mubr.bf16.gmra.mxu0 %v7058
    %v8541 = vpop.f32.mrf.mxu0
    %v8542 = vadd.f32 %v7323, %v8541
    %v8543 = vpop.f32.mrf.mxu0
    %v8544 = vadd.f32 %v7327, %v8543
    %v8545 = vpop.f32.mrf.mxu0
    %v8546 = vpop.f32.mrf.mxu0
    %8547 = vdwg.mxu0
    %8548 = vmatprep.subr.bf16.mxu0 %v8221
    %8549 = vmatpush1.bf16.msra.mxu0 %v8220
    %8550 = vmatprep.subr.bf16.mxu0 %v8214
    %8551 = vmatpush1.bf16.msra.mxu0 %v8213
    %8552 = vmatprep.subr.bf16.mxu0 %v8207
    %8553 = vmatpush1.bf16.msra.mxu0 %v8206
    %8554 = vmatprep.subr.bf16.mxu0 %v8200
    %8555 = vmatpush1.bf16.msra.mxu0 %v8199
    %8556 = vmatprep.subr.bf16.mxu0 %v8193
    %8557 = vmatpush1.bf16.msra.mxu0 %v8192
    %8558 = vmatprep.subr.bf16.mxu0 %v8186
    %8559 = vmatpush1.bf16.msra.mxu0 %v8185
    %8560 = vmatprep.subr.bf16.mxu0 %v8179
    %8561 = vmatpush1.bf16.msra.mxu0 %v8178
    %8562 = vmatprep.subr.bf16.mxu0 %v8172
    %8563 = vmatpush1.bf16.msra.mxu0 %v8171
    %8564 = vmatprep.subr.bf16.mxu0 %v8277
    %8565 = vmatpush2.bf16.msra.mxu0 %v8276
    %8566 = vmatprep.subr.bf16.mxu0 %v8270
    %8567 = vmatpush2.bf16.msra.mxu0 %v8269
    %8568 = vmatprep.subr.bf16.mxu0 %v8263
    %8569 = vmatpush2.bf16.msra.mxu0 %v8262
    %8570 = vmatprep.subr.bf16.mxu0 %v8256
    %8571 = vmatpush2.bf16.msra.mxu0 %v8255
    %8572 = vmatprep.subr.bf16.mxu0 %v8249
    %8573 = vmatpush2.bf16.msra.mxu0 %v8248
    %8574 = vmatprep.subr.bf16.mxu0 %v8242
    %8575 = vmatpush2.bf16.msra.mxu0 %v8241
    %8576 = vmatprep.subr.bf16.mxu0 %v8235
    %8577 = vmatpush2.bf16.msra.mxu0 %v8234
    %8578 = vmatprep.subr.bf16.mxu0 %v8228
    %8579 = vmatpush2.bf16.msra.mxu0 %v8227
    %8580 = vmatprep.mubr.bf16.mxu0 %v7061
    %8581 = vmatmul.mubr.bf16.gmra.mxu0 %v7060
    %v8582 = vpop.f32.mrf.mxu0
    %v8583 = vadd.f32 %v8542, %v8582
    %v8584 = vpop.f32.mrf.mxu0
    %v8585 = vadd.f32 %v8544, %v8584
    %v8586 = vpop.f32.mrf.mxu0
    %v8587 = vpop.f32.mrf.mxu0
    %8588 = vdwg.mxu0
    %8589 = vmatprep.subr.bf16.mxu0 %v8111
    %8590 = vmatpush1.bf16.msra.mxu0 %v8110
    %8591 = vmatprep.subr.bf16.mxu0 %v8104
    %8592 = vmatpush1.bf16.msra.mxu0 %v8103
    %8593 = vmatprep.subr.bf16.mxu0 %v8097
    %8594 = vmatpush1.bf16.msra.mxu0 %v8096
    %8595 = vmatprep.subr.bf16.mxu0 %v8090
    %8596 = vmatpush1.bf16.msra.mxu0 %v8089
    %8597 = vmatprep.subr.bf16.mxu0 %v8083
    %8598 = vmatpush1.bf16.msra.mxu0 %v8082
    %8599 = vmatprep.subr.bf16.mxu0 %v8076
    %8600 = vmatpush1.bf16.msra.mxu0 %v8075
    %8601 = vmatprep.subr.bf16.mxu0 %v8069
    %8602 = vmatpush1.bf16.msra.mxu0 %v8068
    %8603 = vmatprep.subr.bf16.mxu0 %v8062
    %8604 = vmatpush1.bf16.msra.mxu0 %v8061
    %8605 = vmatprep.subr.bf16.mxu0 %v8167
    %8606 = vmatpush2.bf16.msra.mxu0 %v8166
    %8607 = vmatprep.subr.bf16.mxu0 %v8160
    %8608 = vmatpush2.bf16.msra.mxu0 %v8159
    %8609 = vmatprep.subr.bf16.mxu0 %v8153
    %8610 = vmatpush2.bf16.msra.mxu0 %v8152
    %8611 = vmatprep.subr.bf16.mxu0 %v8146
    %8612 = vmatpush2.bf16.msra.mxu0 %v8145
    %8613 = vmatprep.subr.bf16.mxu0 %v8139
    %8614 = vmatpush2.bf16.msra.mxu0 %v8138
    %8615 = vmatprep.subr.bf16.mxu0 %v8132
    %8616 = vmatpush2.bf16.msra.mxu0 %v8131
    %8617 = vmatprep.subr.bf16.mxu0 %v8125
    %8618 = vmatpush2.bf16.msra.mxu0 %v8124
    %8619 = vmatprep.subr.bf16.mxu0 %v8118
    %8620 = vmatpush2.bf16.msra.mxu0 %v8117
    %8621 = vmatprep.mubr.bf16.mxu0 %v7059
    %8622 = vmatmul.mubr.bf16.gmra.mxu0 %v7058
    %v8623 = vpop.f32.mrf.mxu0
    %v8624 = vadd.f32 %v7331, %v8623
    %v8625 = vpop.f32.mrf.mxu0
    %v8626 = vadd.f32 %v7335, %v8625
    %v8627 = vpop.f32.mrf.mxu0
    %v8628 = vpop.f32.mrf.mxu0
    %8629 = vdwg.mxu0
    %8630 = vmatprep.subr.bf16.mxu0 %v8223
    %8631 = vmatpush1.bf16.msra.mxu0 %v8222
    %8632 = vmatprep.subr.bf16.mxu0 %v8216
    %8633 = vmatpush1.bf16.msra.mxu0 %v8215
    %8634 = vmatprep.subr.bf16.mxu0 %v8209
    %8635 = vmatpush1.bf16.msra.mxu0 %v8208
    %8636 = vmatprep.subr.bf16.mxu0 %v8202
    %8637 = vmatpush1.bf16.msra.mxu0 %v8201
    %8638 = vmatprep.subr.bf16.mxu0 %v8195
    %8639 = vmatpush1.bf16.msra.mxu0 %v8194
    %8640 = vmatprep.subr.bf16.mxu0 %v8188
    %8641 = vmatpush1.bf16.msra.mxu0 %v8187
    %8642 = vmatprep.subr.bf16.mxu0 %v8181
    %8643 = vmatpush1.bf16.msra.mxu0 %v8180
    %8644 = vmatprep.subr.bf16.mxu0 %v8174
    %8645 = vmatpush1.bf16.msra.mxu0 %v8173
    %8646 = vmatprep.subr.bf16.mxu0 %v8279
    %8647 = vmatpush2.bf16.msra.mxu0 %v8278
    %8648 = vmatprep.subr.bf16.mxu0 %v8272
    %8649 = vmatpush2.bf16.msra.mxu0 %v8271
    %8650 = vmatprep.subr.bf16.mxu0 %v8265
    %8651 = vmatpush2.bf16.msra.mxu0 %v8264
    %8652 = vmatprep.subr.bf16.mxu0 %v8258
    %8653 = vmatpush2.bf16.msra.mxu0 %v8257
    %8654 = vmatprep.subr.bf16.mxu0 %v8251
    %8655 = vmatpush2.bf16.msra.mxu0 %v8250
    %8656 = vmatprep.subr.bf16.mxu0 %v8244
    %8657 = vmatpush2.bf16.msra.mxu0 %v8243
    %8658 = vmatprep.subr.bf16.mxu0 %v8237
    %8659 = vmatpush2.bf16.msra.mxu0 %v8236
    %8660 = vmatprep.subr.bf16.mxu0 %v8230
    %8661 = vmatpush2.bf16.msra.mxu0 %v8229
    %8662 = vmatprep.mubr.bf16.mxu0 %v7061
    %8663 = vmatmul.mubr.bf16.gmra.mxu0 %v7060
    %v8664 = vpop.f32.mrf.mxu0
    %v8665 = vadd.f32 %v8624, %v8664
    %v8666 = vpop.f32.mrf.mxu0
    %v8667 = vadd.f32 %v8626, %v8666
    %v8668 = vpop.f32.mrf.mxu0
    %v8669 = vpop.f32.mrf.mxu0
    %8670 = vdwg.mxu0
    %8671 = vmatprep.subr.bf16.mxu0 %v8113
    %8672 = vmatpush1.bf16.msra.mxu0 %v8112
    %8673 = vmatprep.subr.bf16.mxu0 %v8106
    %8674 = vmatpush1.bf16.msra.mxu0 %v8105
    %8675 = vmatprep.subr.bf16.mxu0 %v8099
    %8676 = vmatpush1.bf16.msra.mxu0 %v8098
    %8677 = vmatprep.subr.bf16.mxu0 %v8092
    %8678 = vmatpush1.bf16.msra.mxu0 %v8091
    %8679 = vmatprep.subr.bf16.mxu0 %v8085
    %8680 = vmatpush1.bf16.msra.mxu0 %v8084
    %8681 = vmatprep.subr.bf16.mxu0 %v8078
    %8682 = vmatpush1.bf16.msra.mxu0 %v8077
    %8683 = vmatprep.subr.bf16.mxu0 %v8071
    %8684 = vmatpush1.bf16.msra.mxu0 %v8070
    %8685 = vmatprep.subr.bf16.mxu0 %v8064
    %8686 = vmatpush1.bf16.msra.mxu0 %v8063
    %8687 = vmatprep.subr.bf16.mxu0 %v8169
    %8688 = vmatpush2.bf16.msra.mxu0 %v8168
    %8689 = vmatprep.subr.bf16.mxu0 %v8162
    %8690 = vmatpush2.bf16.msra.mxu0 %v8161
    %8691 = vmatprep.subr.bf16.mxu0 %v8155
    %8692 = vmatpush2.bf16.msra.mxu0 %v8154
    %8693 = vmatprep.subr.bf16.mxu0 %v8148
    %8694 = vmatpush2.bf16.msra.mxu0 %v8147
    %8695 = vmatprep.subr.bf16.mxu0 %v8141
    %8696 = vmatpush2.bf16.msra.mxu0 %v8140
    %8697 = vmatprep.subr.bf16.mxu0 %v8134
    %8698 = vmatpush2.bf16.msra.mxu0 %v8133
    %8699 = vmatprep.subr.bf16.mxu0 %v8127
    %8700 = vmatpush2.bf16.msra.mxu0 %v8126
    %8701 = vmatprep.subr.bf16.mxu0 %v8120
    %8702 = vmatpush2.bf16.msra.mxu0 %v8119
    %8703 = vmatprep.mubr.bf16.mxu0 %v7059
    %8704 = vmatmul.mubr.bf16.gmra.mxu0 %v7058
    %v8705 = vpop.f32.mrf.mxu0
    %v8706 = vadd.f32 %v7339, %v8705
    %v8707 = vpop.f32.mrf.mxu0
    %v8708 = vadd.f32 %v7343, %v8707
    %v8709 = vpop.f32.mrf.mxu0
    %v8710 = vpop.f32.mrf.mxu0
    %8711 = vdwg.mxu0
    %8712 = vmatprep.subr.bf16.mxu0 %v8225
    %8713 = vmatpush1.bf16.msra.mxu0 %v8224
    %8714 = vmatprep.subr.bf16.mxu0 %v8218
    %8715 = vmatpush1.bf16.msra.mxu0 %v8217
    %8716 = vmatprep.subr.bf16.mxu0 %v8211
    %8717 = vmatpush1.bf16.msra.mxu0 %v8210
    %8718 = vmatprep.subr.bf16.mxu0 %v8204
    %8719 = vmatpush1.bf16.msra.mxu0 %v8203
    %8720 = vmatprep.subr.bf16.mxu0 %v8197
    %8721 = vmatpush1.bf16.msra.mxu0 %v8196
    %8722 = vmatprep.subr.bf16.mxu0 %v8190
    %8723 = vmatpush1.bf16.msra.mxu0 %v8189
    %8724 = vmatprep.subr.bf16.mxu0 %v8183
    %8725 = vmatpush1.bf16.msra.mxu0 %v8182
    %8726 = vmatprep.subr.bf16.mxu0 %v8176
    %8727 = vmatpush1.bf16.msra.mxu0 %v8175
    %8728 = vmatprep.subr.bf16.mxu0 %v8281
    %8729 = vmatpush2.bf16.msra.mxu0 %v8280
    %8730 = vmatprep.subr.bf16.mxu0 %v8274
    %8731 = vmatpush2.bf16.msra.mxu0 %v8273
    %8732 = vmatprep.subr.bf16.mxu0 %v8267
    %8733 = vmatpush2.bf16.msra.mxu0 %v8266
    %8734 = vmatprep.subr.bf16.mxu0 %v8260
    %8735 = vmatpush2.bf16.msra.mxu0 %v8259
    %8736 = vmatprep.subr.bf16.mxu0 %v8253
    %8737 = vmatpush2.bf16.msra.mxu0 %v8252
    %8738 = vmatprep.subr.bf16.mxu0 %v8246
    %8739 = vmatpush2.bf16.msra.mxu0 %v8245
    %8740 = vmatprep.subr.bf16.mxu0 %v8239
    %8741 = vmatpush2.bf16.msra.mxu0 %v8238
    %8742 = vmatprep.subr.bf16.mxu0 %v8232
    %8743 = vmatpush2.bf16.msra.mxu0 %v8231
    %8744 = vmatprep.mubr.bf16.mxu0 %v7061
    %8745 = vmatmul.mubr.bf16.gmra.mxu0 %v7060
    %v8746 = vpop.f32.mrf.mxu0
    %v8747 = vadd.f32 %v8706, %v8746
    %v8748 = vpop.f32.mrf.mxu0
    %v8749 = vadd.f32 %v8708, %v8748
    %v8750 = vpop.f32.mrf.mxu0
    %v8751 = vpop.f32.mrf.mxu0
    %8752 = vdwg.mxu0
    %8753 = vmatprep.subr.bf16.mxu0 0
    %8754 = vmatpush1.bf16.msra.mxu0 %v8114
    %8755 = vmatprep.subr.bf16.mxu0 0
    %8756 = vmatpush1.bf16.msra.mxu0 %v8107
    %8757 = vmatprep.subr.bf16.mxu0 0
    %8758 = vmatpush1.bf16.msra.mxu0 %v8100
    %8759 = vmatprep.subr.bf16.mxu0 0
    %8760 = vmatpush1.bf16.msra.mxu0 %v8093
    %8761 = vmatprep.subr.bf16.mxu0 0
    %8762 = vmatpush1.bf16.msra.mxu0 %v8086
    %8763 = vmatprep.subr.bf16.mxu0 0
    %8764 = vmatpush1.bf16.msra.mxu0 %v8079
    %8765 = vmatprep.subr.bf16.mxu0 0
    %8766 = vmatpush1.bf16.msra.mxu0 %v8072
    %8767 = vmatprep.subr.bf16.mxu0 0
    %8768 = vmatpush1.bf16.msra.mxu0 %v8065
    %8769 = vmatprep.subr.bf16.mxu0 0
    %8770 = vmatpush2.bf16.msra.mxu0 %v8170
    %8771 = vmatprep.subr.bf16.mxu0 0
    %8772 = vmatpush2.bf16.msra.mxu0 %v8163
    %8773 = vmatprep.subr.bf16.mxu0 0
    %8774 = vmatpush2.bf16.msra.mxu0 %v8156
    %8775 = vmatprep.subr.bf16.mxu0 0
    %8776 = vmatpush2.bf16.msra.mxu0 %v8149
    %8777 = vmatprep.subr.bf16.mxu0 0
    %8778 = vmatpush2.bf16.msra.mxu0 %v8142
    %8779 = vmatprep.subr.bf16.mxu0 0
    %8780 = vmatpush2.bf16.msra.mxu0 %v8135
    %8781 = vmatprep.subr.bf16.mxu0 0
    %8782 = vmatpush2.bf16.msra.mxu0 %v8128
    %8783 = vmatprep.subr.bf16.mxu0 0
    %8784 = vmatpush2.bf16.msra.mxu0 %v8121
    %8785 = vmatprep.mubr.bf16.mxu0 %v7059
    %8786 = vmatmul.mubr.bf16.gmra.mxu0 %v7058
    %v8787 = vpop.f32.mrf.mxu0
    %v8788 = vadd.f32 %v7347, %v8787
    %v8789 = vpop.f32.mrf.mxu0
    %v8790 = vpop.f32.mrf.mxu0
    %v8791 = vpop.f32.mrf.mxu0
    %8792 = vdwg.mxu0
    %8793 = vmatprep.subr.bf16.mxu0 0
    %8794 = vmatpush1.bf16.msra.mxu0 %v8226
    %8795 = vmatprep.subr.bf16.mxu0 0
    %8796 = vmatpush1.bf16.msra.mxu0 %v8219
    %8797 = vmatprep.subr.bf16.mxu0 0
    %8798 = vmatpush1.bf16.msra.mxu0 %v8212
    %8799 = vmatprep.subr.bf16.mxu0 0
    %8800 = vmatpush1.bf16.msra.mxu0 %v8205
    %8801 = vmatprep.subr.bf16.mxu0 0
    %8802 = vmatpush1.bf16.msra.mxu0 %v8198
    %8803 = vmatprep.subr.bf16.mxu0 0
    %8804 = vmatpush1.bf16.msra.mxu0 %v8191
    %8805 = vmatprep.subr.bf16.mxu0 0
    %8806 = vmatpush1.bf16.msra.mxu0 %v8184
    %8807 = vmatprep.subr.bf16.mxu0 0
    %8808 = vmatpush1.bf16.msra.mxu0 %v8177
    %8809 = vmatprep.subr.bf16.mxu0 0
    %8810 = vmatpush2.bf16.msra.mxu0 %v8282
    %8811 = vmatprep.subr.bf16.mxu0 0
    %8812 = vmatpush2.bf16.msra.mxu0 %v8275
    %8813 = vmatprep.subr.bf16.mxu0 0
    %8814 = vmatpush2.bf16.msra.mxu0 %v8268
    %8815 = vmatprep.subr.bf16.mxu0 0
    %8816 = vmatpush2.bf16.msra.mxu0 %v8261
    %8817 = vmatprep.subr.bf16.mxu0 0
    %8818 = vmatpush2.bf16.msra.mxu0 %v8254
    %8819 = vmatprep.subr.bf16.mxu0 0
    %8820 = vmatpush2.bf16.msra.mxu0 %v8247
    %8821 = vmatprep.subr.bf16.mxu0 0
    %8822 = vmatpush2.bf16.msra.mxu0 %v8240
    %8823 = vmatprep.subr.bf16.mxu0 0
    %8824 = vmatpush2.bf16.msra.mxu0 %v8233
    %8825 = vmatprep.mubr.bf16.mxu0 %v7061
    %8826 = vmatmul.mubr.bf16.gmra.mxu0 %v7060
    %v8827 = vpop.f32.mrf.mxu0
    %v8828 = vadd.f32 %v8788, %v8827
    %v8829 = vpop.f32.mrf.mxu0
    %v8830 = vpop.f32.mrf.mxu0
    %v8831 = vpop.f32.mrf.mxu0
    %8832 = vdwg.mxu0
    %v8833 = vxor.u32 %v8583, 2147483648
    %v8834 = vxor.u32 %v8585, 2147483648
    %v8835 = vxor.u32 %v8665, 2147483648
    %v8836 = vxor.u32 %v8667, 2147483648
    %v8837 = vxor.u32 %v8747, 2147483648
    %v8838 = vxor.u32 %v8749, 2147483648
    %v8839 = vxor.u32 %v8828, 2147483648
    %v8840 = vmul.f32 %v8833, 1.442695
    %v8841 = vpow.pop %v8840
    %v8842 = vmul.f32 %v8834, 1.442695
    %v8843 = vpow.pop %v8842
    %v8844 = vmul.f32 %v8835, 1.442695
    %v8845 = vpow.pop %v8844
    %v8846 = vmul.f32 %v8836, 1.442695
    %v8847 = vpow.pop %v8846
    %v8848 = vmul.f32 %v8837, 1.442695
    %v8849 = vpow.pop %v8848
    %v8850 = vmul.f32 %v8838, 1.442695
    %v8851 = vpow.pop %v8850
    %v8852 = vmul.f32 %v8839, 1.442695
    %v8853 = vpow.pop %v8852
    %v8854 = vadd.f32 %v8841, 1.0
    %v8855 = vadd.f32 %v8843, 1.0
    %v8856 = vadd.f32 %v8845, 1.0
    %v8857 = vadd.f32 %v8847, 1.0
    %v8858 = vadd.f32 %v8849, 1.0
    %v8859 = vadd.f32 %v8851, 1.0
    %v8860 = vadd.f32 %v8853, 1.0
    %v8861 = vrcp.pop %v8854
    %v8862 = vmul.f32 1.0, %v8861
    %v8863 = vrcp.pop %v8855
    %v8864 = vmul.f32 1.0, %v8863
    %v8865 = vrcp.pop %v8856
    %v8866 = vmul.f32 1.0, %v8865
    %v8867 = vrcp.pop %v8857
    %v8868 = vmul.f32 1.0, %v8867
    %v8869 = vrcp.pop %v8858
    %v8870 = vmul.f32 1.0, %v8869
    %v8871 = vrcp.pop %v8859
    %v8872 = vmul.f32 1.0, %v8871
    %v8873 = vrcp.pop %v8860
    %v8874 = vmul.f32 1.0, %v8873
    %8875 = vst [vmem:[#allocation15] sm:$0xff] %v8862
    %8876 = vst [vmem:[#allocation15 + $0x8] sm:$0xff] %v8864
    %8877 = vst [vmem:[#allocation15 + $0x10] sm:$0xff] %v8866
    %8878 = vst [vmem:[#allocation15 + $0x18] sm:$0xff] %v8868
    %8879 = vst [vmem:[#allocation15 + $0x20] sm:$0xff] %v8870
    %8880 = vst [vmem:[#allocation15 + $0x28] sm:$0xff] %v8872
    %8881 = vst [vmem:[#allocation15 + $0x30] sm:$0xff] %v8874
    // Predicated region
    $region74: #{tpu_custom_call.1} parent=1 // pred_check
      _
    $region75: #{tpu_custom_call.1} parent=1 // pred_check_branch
      %8883 = sbr.rel (0) target = $region77
    $region76: #{tpu_custom_call.1} parent=1 // pred_region
      %s8885 = ssub.s32 896, 896
      %8886 = vsyncadd [#allocation6], %s8885
      %s8888 = sshll.u32 [#allocation15], 4
      %s8889 = int_to_ptr.vmem [resolvable:$true] %s8888
      %8891 = dma.vmem_to_hbm [thread:$0]  %s8889, 896, %s7, [#allocation6]
    $region77: #{tpu_custom_call.1} parent=1 // pred_fallthru
      _
    // Predicated region
    $region78: #{tpu_custom_call.1} parent=1 // pred_check
      _
    $region79: #{tpu_custom_call.1} parent=1 // pred_check_branch
      %8893 = sbr.rel (0) target = $region81
    $region80: #{tpu_custom_call.1} parent=1 // pred_region
      %8894 = dma.done [#allocation6], 896
    $region81: #{tpu_custom_call.1} parent=1 // pred_fallthru
      _
    %8895 = vsyncpa [#allocation5], 1
    %8896 = vsyncpa [#allocation8], 1
    %8897 = vsyncpa [#allocation11], 1
    %8898 = vsyncpa [#allocation14], 1
    %8899 = vsyncpa [#allocation6], 1
  %8900 = vsyncmov [#allocation3]
  %s8901 = vpop.sfrf %8900
  %p8902 = scmp.eq.s32.totalorder %s8901, 0
  %p8903 = pneg %p8902
  %8905 = shalt.err (%p8903)
  %s8906 = scalar_lea.sflag [#allocation3], 1
  %8907 = vsyncmov %s8906
  %s8908 = vpop.sfrf %8907
  %p8909 = scmp.eq.s32.totalorder %s8908, 0
  %p8910 = pneg %p8909
  %8912 = shalt.err (%p8910)

</llo_original>
